<compile_context>
chip_gen: v7x
topology: tpu7x:2x2x1
jax: 0.10.0
libtpu: 0.0.40
codegen_flags: <defaults>
</compile_context>

<pallas_src>
import functools
import math

import jax
import jax.numpy as jnp
from jax import lax
from jax.experimental import pallas as pl
from jax.experimental.pallas import tpu as pltpu


# ------------------------------ fused kernel ------------------------------- #

def _fused_rel_attn_kernel(w_ref, wqkvu_ref, rembT_ref, rbias_ref, wo3_ref,
                           g_ref, beta_ref, o_ref, *, n_head, d_head, qlen, eps):
    H, D = n_head, d_head
    HD = H * D
    Q = qlen
    K = qlen                     # klen == qlen (mems=None); rel-shift relies on it

    x = w_ref[...].astype(jnp.float32)            # (Q, d_model) f32 residual path
    x_b = x.astype(jnp.bfloat16)

    # fused qkv (+ r_w_bias@W_k correction rows) projection, feature-major:
    #   proj[f, i] = sum_m Wqkvu[f, m] * x[i, m]    (bf16 MXU, f32 accumulation)
    proj = lax.dot_general(wqkvu_ref[...], x_b, (((1,), (1,)), ((), ())),
                           preferred_element_type=jnp.float32)     # (3HD+H, Q)
    qT = proj[:HD].reshape(H, D, Q)               # (H, D, Q)  (q pre-scaled)
    kT = proj[HD:2 * HD].reshape(H, D, K)         # (H, D, K)
    vT = proj[2 * HD:3 * HD].reshape(H, D, K)     # (H, D, K)
    rwk = proj[3 * HD:]                           # (H, K) = scale * r_w_bias . k

    # fused AC | B_ score matmul:  q . [k | r_emb]  -> (H, Q, 2K)
    q_hqd = jnp.transpose(qT, (0, 2, 1)).astype(jnp.bfloat16)       # (H, Q, D)
    kr = jnp.concatenate([kT.astype(jnp.bfloat16), rembT_ref[...]],
                         axis=2)                                    # (H, D, 2K)
    s2 = lax.dot_general(q_hqd, kr, (((2,), (1,)), ((0,), (0,))),
                         preferred_element_type=jnp.float32)        # (H, Q, 2K)

    ac = s2[:, :, :K] + rwk[:, None, :]                             # (H, Q, K)
    bd_pre = s2[:, :, K:] + rbias_ref[...]                          # (H, Q, K)

    # _rel_shift via one strided lane rotation + one sublane rotation + selects:
    #   rot1[h,i,j] = bd_pre[h,i,(j-1-i) mod K];  rot2[h,i,:] = rot1[h,i+1,:]
    #   BD = rot1 (j<=i), 0 (j==i+1), rot2 (j>=i+2)
    # (flattening (H,Q,K)->(H*Q,K) is exact because Q == K: shifts wrap mod K;
    #  the head-boundary wrap of rot2 lands only on never-selected entries.)
    bd_flat = bd_pre.reshape(H * Q, K)
    rot1 = pltpu.roll(bd_flat, shift=1, axis=1, stride=1, stride_axis=0)
    rot2 = pltpu.roll(rot1, shift=H * Q - 1, axis=0)   # rows shifted up by one
    rot1 = rot1.reshape(H, Q, K)
    rot2 = rot2.reshape(H, Q, K)
    ii = lax.broadcasted_iota(jnp.int32, (H, Q, K), 1)
    jj = lax.broadcasted_iota(jnp.int32, (H, Q, K), 2)
    bd = jnp.where(jj <= ii, rot1, jnp.where(jj == ii + 1, 0.0, rot2))

    # softmax over keys (1/sqrt(d_head) already folded into q / rwk / rbias)
    score = ac + bd                                                 # (H, Q, K)
    m = jnp.max(score, axis=2, keepdims=True)
    e = jnp.exp(score - m)
    denom = jnp.sum(e, axis=2, keepdims=True)
    prob = (e * pl.reciprocal(denom, approx=True)).astype(jnp.bfloat16)

    # attention output + per-head o_net, summed over heads (no lane interleave)
    attn = lax.dot_general(prob, vT.astype(jnp.bfloat16),
                           (((2,), (2,)), ((0,), (0,))),
                           preferred_element_type=jnp.float32)      # (H, Q, D)
    outh = lax.dot_general(attn.astype(jnp.bfloat16), wo3_ref[...],
                           (((2,), (2,)), ((0,), (0,))),
                           preferred_element_type=jnp.float32)      # (H, Q, M)
    attn_out = jnp.sum(outh, axis=0)                                # (Q, d_model)

    # residual + post-LayerNorm (pre_lnorm=False)
    y = attn_out + x
    mu = jnp.mean(y, axis=-1, keepdims=True)
    var = jnp.mean(jnp.square(y - mu), axis=-1, keepdims=True)
    y = (y - mu) * lax.rsqrt(var + eps)
    y = y * g_ref[...] + beta_ref[...]
    o_ref[...] = y.astype(o_ref.dtype)


# -------------------------------- wrapper ---------------------------------- #

def rel_learnable_mha_forward(w, r_emb, r_w_bias, r_bias, params,
                              *, n_head, d_head, pre_lnorm=False):
    assert not pre_lnorm, "only pre_lnorm=False is implemented"
    qlen, bsz, d_model = w.shape
    klen = qlen                        # TODO(synk): mems (klen > qlen) unsupported
    H, D = n_head, d_head
    HD = H * D
    assert d_model % 128 == 0 or bsz == 1, "d_model must be lane-aligned"
    assert klen == qlen and qlen % 8 == 0
    scale = 1.0 / math.sqrt(d_head)

    # pad / slice learnable relative tables to klen (parameter-sized glue)
    r_len = r_emb.shape[0]
    if klen > r_len:
        r_emb = jnp.concatenate(
            [jnp.broadcast_to(r_emb[0:1], (klen - r_len,) + r_emb.shape[1:]), r_emb], 0)
        r_bias = jnp.concatenate(
            [jnp.broadcast_to(r_bias[0:1], (klen - r_len,) + r_bias.shape[1:]), r_bias], 0)
    else:
        r_emb = r_emb[-klen:]
        r_bias = r_bias[-klen:]

    w_qkv = params["w_qkv"].astype(jnp.float32)                 # (3HD, d_model)
    # fold softmax scale into the q rows of W_qkv
    w_qkv_s = jnp.concatenate([w_qkv[:HD] * scale, w_qkv[HD:]], axis=0)
    # precomputed rank-1 correction rows: U[h] = scale * r_w_bias[h] @ W_k[h]
    wk3 = w_qkv[HD:2 * HD].reshape(H, D, d_model)
    u = scale * jnp.einsum("hd,hdm->hm", r_w_bias.astype(jnp.float32), wk3)
    wqkvu = jnp.concatenate([w_qkv_s, u], axis=0).astype(jnp.bfloat16)  # (3HD+H, M)

    rembT = jnp.transpose(r_emb, (1, 2, 0)).astype(jnp.bfloat16)        # (H, D, K)
    rbias = (scale * jnp.transpose(r_bias, (1, 0))[:, None, :]
             ).astype(jnp.float32)                                      # (H, 1, K)
    wo3 = jnp.transpose(params["w_o"].reshape(d_model, H, D),
                        (1, 0, 2)).astype(jnp.bfloat16)                 # (H, M, D)

    # fold batch into the lane axis (free, contiguous reshape) so the per-batch
    # (qlen, d_model) block is (8,128)-aligned and lane-dense.
    w2 = w.reshape(qlen, bsz * d_model)

    kernel = functools.partial(_fused_rel_attn_kernel, n_head=n_head,
                               d_head=d_head, qlen=qlen, eps=1e-5)
    out2 = pl.pallas_call(
        kernel,
        out_shape=jax.ShapeDtypeStruct((qlen, bsz * d_model), w.dtype),
        grid=(bsz,),
        in_specs=[
            pl.BlockSpec((qlen, d_model), lambda b: (0, b)),            # w (per b)
            pl.BlockSpec((3 * HD + H, d_model), lambda b: (0, 0)),      # W_qkv|U
            pl.BlockSpec((H, D, klen), lambda b: (0, 0, 0)),            # r_emb^T
            pl.BlockSpec((H, 1, klen), lambda b: (0, 0, 0)),            # r_bias
            pl.BlockSpec((H, d_model, D), lambda b: (0, 0, 0)),         # W_o (per head)
            pl.BlockSpec((1, d_model), lambda b: (0, 0)),               # ln gamma
            pl.BlockSpec((1, d_model), lambda b: (0, 0)),               # ln beta
        ],
        out_specs=pl.BlockSpec((qlen, d_model), lambda b: (0, b)),
        compiler_params=pltpu.CompilerParams(
            dimension_semantics=("parallel",)),
    )(w2, wqkvu, rembT, rbias, wo3,
      params["ln_g"].reshape(1, d_model).astype(jnp.float32),
      params["ln_b"].reshape(1, d_model).astype(jnp.float32))

    return out2.reshape(qlen, bsz, d_model)


# ----------------------- pure-JAX reference (validation) ------------------- #

def reference_forward(w, r_emb, r_w_bias, r_bias, params, *, n_head, d_head):
    qlen, bsz, d_model = w.shape
    scale = 1.0 / math.sqrt(d_head)
    w_heads = jnp.einsum("ibm,om->ibo", w, params["w_qkv"])
    w_heads = w_heads.reshape(qlen, bsz, 3, n_head, d_head)
    q, k, v = w_heads[:, :, 0], w_heads[:, :, 1], w_heads[:, :, 2]
    klen = qlen
    r_emb = r_emb[-klen:]
    r_bias = r_bias[-klen:]
    rw_q = q + r_w_bias[None, None]
    AC = jnp.einsum("ibnd,jbnd->ijbn", rw_q, k)
    B_ = jnp.einsum("ibnd,jnd->ijbn", q, r_emb)
    D_ = r_bias[None, :, None]                      # (1, klen, 1, n_head)
    x = B_ + D_
    zero_pad = jnp.zeros((qlen, 1, bsz, n_head), x.dtype)
    xp = jnp.concatenate([zero_pad, x], axis=1).reshape(klen + 1, qlen, bsz, n_head)
    BD = xp[1:].reshape(qlen, klen, bsz, n_head)
    score = (AC + BD) * scale
    prob = jax.nn.softmax(score, axis=1)
    attn_vec = jnp.einsum("ijbn,jbnd->ibnd", prob, v)
    attn_vec = attn_vec.reshape(qlen, bsz, n_head * d_head)
    attn_out = jnp.einsum("ibh,mh->ibm", attn_vec, params["w_o"])
    y = w + attn_out
    mu = y.mean(-1, keepdims=True)
    var = ((y - mu) ** 2).mean(-1, keepdims=True)
    return (y - mu) / jnp.sqrt(var + 1e-5) * params["ln_g"] + params["ln_b"]


# ---------------------------------- main ------------------------------------ #

if __name__ == "__main__":
    # lane-aligned small shapes: qlen=klen=128, d_model=128, 8 heads of 16
    qlen, bsz, n_head, d_head, d_model = 128, 2, 8, 16, 128

    key = jax.random.PRNGKey(0)
    ks = jax.random.split(key, 8)
    w = jax.random.normal(ks[0], (qlen, bsz, d_model), jnp.float32)
    r_emb = 0.5 * jax.random.normal(ks[1], (qlen, n_head, d_head), jnp.float32)
    r_w_bias = 0.1 * jax.random.normal(ks[2], (n_head, d_head), jnp.float32)
    r_bias = 0.5 * jax.random.normal(ks[3], (qlen, n_head), jnp.float32)
    params = {
        "w_qkv": 0.05 * jax.random.normal(
            ks[4], (3 * n_head * d_head, d_model), jnp.float32),
        "w_o": 0.05 * jax.random.normal(
            ks[5], (d_model, n_head * d_head), jnp.float32),
        "ln_g": 1.0 + 0.1 * jax.random.normal(ks[6], (d_model,), jnp.float32),
        "ln_b": 0.1 * jax.random.normal(ks[7], (d_model,), jnp.float32),
    }

    out = rel_learnable_mha_forward(w, r_emb, r_w_bias, r_bias, params,
                                    n_head=n_head, d_head=d_head)
    out = jax.block_until_ready(out)

    ref = reference_forward(w, r_emb, r_w_bias, r_bias, params,
                            n_head=n_head, d_head=d_head)
    err = float(jnp.max(jnp.abs(out - ref)))
    # bf16 MXU path: tolerance loosened vs. the pure-f32 kernel (review note).
    if out.shape == (qlen, bsz, d_model) and err < 3e-2:
        print("KERNEL_OK")
    else:
        print(f"MISMATCH max_abs_err={err}")
</pallas_src>

<mosaic_0001>
module attributes {stable_mosaic.version = 11 : i64} {
  func.func @_fused_rel_attn_kernel(%arg0: i32, %arg1: memref<128x128xf32, #tpu.memory_space<vmem>>, %arg2: memref<392x128xbf16, #tpu.memory_space<vmem>>, %arg3: memref<8x16x128xbf16, #tpu.memory_space<vmem>>, %arg4: memref<8x1x128xf32, #tpu.memory_space<vmem>>, %arg5: memref<8x128x16xbf16, #tpu.memory_space<vmem>>, %arg6: memref<1x128xf32, #tpu.memory_space<vmem>>, %arg7: memref<1x128xf32, #tpu.memory_space<vmem>>, %arg8: memref<128x128xf32, #tpu.memory_space<vmem>>) attributes {dimension_semantics = [#tpu.dimension_semantics<parallel>], iteration_bounds = array<i64: 2>, scalar_prefetch = 0 : i64, scratch_operands = 0 : i64, tpu.core_type = #tpu.core_type<tc>, window_params = [{transform_indices = @transform_0, window_bounds = array<i64: 128, 128>}, {pipeline_mode = #tpu.pipeline_mode<synchronous>, transform_indices = @transform_1, window_bounds = array<i64: 392, 128>}, {pipeline_mode = #tpu.pipeline_mode<synchronous>, transform_indices = @transform_2, window_bounds = array<i64: 8, 16, 128>}, {pipeline_mode = #tpu.pipeline_mode<synchronous>, transform_indices = @transform_3, window_bounds = array<i64: 8, 1, 128>}, {pipeline_mode = #tpu.pipeline_mode<synchronous>, transform_indices = @transform_4, window_bounds = array<i64: 8, 128, 16>}, {pipeline_mode = #tpu.pipeline_mode<synchronous>, transform_indices = @transform_5, window_bounds = array<i64: 1, 128>}, {pipeline_mode = #tpu.pipeline_mode<synchronous>, transform_indices = @transform_6, window_bounds = array<i64: 1, 128>}, {transform_indices = @transform_7, window_bounds = array<i64: 128, 128>}]} {
    %c0 = arith.constant 0 : index
    %c0_0 = arith.constant 0 : index
    %0 = vector.load %arg1[%c0, %c0_0] : memref<128x128xf32, #tpu.memory_space<vmem>>, vector<128x128xf32>
    %1 = arith.truncf %0 : vector<128x128xf32> to vector<128x128xbf16>
    %c0_1 = arith.constant 0 : index
    %c0_2 = arith.constant 0 : index
    %2 = vector.load %arg2[%c0_1, %c0_2] : memref<392x128xbf16, #tpu.memory_space<vmem>>, vector<392x128xbf16>
    %cst = arith.constant dense<0.000000e+00> : vector<392x128xf32>
    %3 = tpu.matmul %2, %1, %cst {dimension_numbers = #tpu.dot_dimension_numbers<[1], [1], [0], [0], [0, 0, 1, 0], [], []>} : vector<392x128xbf16>, vector<128x128xbf16>, vector<392x128xf32> -> vector<392x128xf32>
    %4 = vector.extract_strided_slice %3 {offsets = [0, 0], sizes = [128, 128], strides = [1, 1]} : vector<392x128xf32> to vector<128x128xf32>
    %5 = vector.shape_cast %4 : vector<128x128xf32> to vector<8x16x128xf32>
    %6 = vector.extract_strided_slice %3 {offsets = [128, 0], sizes = [128, 128], strides = [1, 1]} : vector<392x128xf32> to vector<128x128xf32>
    %7 = vector.shape_cast %6 : vector<128x128xf32> to vector<8x16x128xf32>
    %8 = vector.extract_strided_slice %3 {offsets = [256, 0], sizes = [128, 128], strides = [1, 1]} : vector<392x128xf32> to vector<128x128xf32>
    %9 = vector.shape_cast %8 : vector<128x128xf32> to vector<8x16x128xf32>
    %10 = vector.extract_strided_slice %3 {offsets = [384, 0], sizes = [8, 128], strides = [1, 1]} : vector<392x128xf32> to vector<8x128xf32>
    %11 = tpu.transpose %5, [0, 2, 1] : vector<8x16x128xf32> -> vector<8x128x16xf32>
    %12 = arith.truncf %11 : vector<8x128x16xf32> to vector<8x128x16xbf16>
    %13 = arith.truncf %7 : vector<8x16x128xf32> to vector<8x16x128xbf16>
    %c0_3 = arith.constant 0 : index
    %c0_4 = arith.constant 0 : index
    %c0_5 = arith.constant 0 : index
    %14 = vector.load %arg3[%c0_3, %c0_4, %c0_5] : memref<8x16x128xbf16, #tpu.memory_space<vmem>>, vector<8x16x128xbf16>
    %15 = tpu.concatenate %13, %14 in 2 : vector<8x16x128xbf16>, vector<8x16x128xbf16> -> vector<8x16x256xbf16>
    %cst_6 = arith.constant dense<0.000000e+00> : vector<8x128x256xf32>
    %16 = tpu.matmul %12, %15, %cst_6 {dimension_numbers = #tpu.dot_dimension_numbers<[2], [1], [1], [2], [0, 0, 0, 1, 1, 2], [0], [0]>} : vector<8x128x16xbf16>, vector<8x16x256xbf16>, vector<8x128x256xf32> -> vector<8x128x256xf32>
    %17 = vector.extract_strided_slice %16 {offsets = [0, 0, 0], sizes = [8, 128, 128], strides = [1, 1, 1]} : vector<8x128x256xf32> to vector<8x128x128xf32>
    %18 = vector.shape_cast %10 : vector<8x128xf32> to vector<8x1x128xf32>
    %19 = vector.broadcast %18 : vector<8x1x128xf32> to vector<8x128x128xf32>
    %20 = arith.addf %17, %19 : vector<8x128x128xf32>
    %21 = vector.extract_strided_slice %16 {offsets = [0, 0, 128], sizes = [8, 128, 128], strides = [1, 1, 1]} : vector<8x128x256xf32> to vector<8x128x128xf32>
    %c0_7 = arith.constant 0 : index
    %c0_8 = arith.constant 0 : index
    %c0_9 = arith.constant 0 : index
    %22 = vector.load %arg4[%c0_7, %c0_8, %c0_9] : memref<8x1x128xf32, #tpu.memory_space<vmem>>, vector<8x1x128xf32>
    %23 = vector.broadcast %22 : vector<8x1x128xf32> to vector<8x128x128xf32>
    %24 = arith.addf %21, %23 : vector<8x128x128xf32>
    %25 = vector.shape_cast %24 : vector<8x128x128xf32> to vector<1024x128xf32>
    %c1_i32 = arith.constant 1 : i32
    %26 = tpu.dynamic_rotate %25 by %c1_i32 dim 1 {stride = 1 : si32, stride_dimension = 0 : si32} : vector<1024x128xf32>, i32 -> vector<1024x128xf32>
    %c1023_i32 = arith.constant 1023 : i32
    %27 = tpu.dynamic_rotate %26 by %c1023_i32 dim 0 : vector<1024x128xf32>, i32 -> vector<1024x128xf32>
    %28 = vector.shape_cast %26 : vector<1024x128xf32> to vector<8x128x128xf32>
    %29 = vector.shape_cast %27 : vector<1024x128xf32> to vector<8x128x128xf32>
    %30 = tpu.iota {dimensions = array<i32: 1>} : vector<8x128x128xi32>
    %31 = tpu.iota {dimensions = array<i32: 2>} : vector<8x128x128xi32>
    %32 = arith.cmpi sle, %31, %30 : vector<8x128x128xi32>
    %c1_i32_10 = arith.constant 1 : i32
    %33 = vector.broadcast %c1_i32_10 : i32 to vector<8x128x128xi32>
    %34 = arith.addi %30, %33 : vector<8x128x128xi32>
    %35 = arith.cmpi eq, %31, %34 : vector<8x128x128xi32>
    %cst_11 = arith.constant 0.000000e+00 : f32
    %36 = vector.broadcast %cst_11 : f32 to vector<8x128x128xf32>
    %37 = arith.select %35, %36, %29 : vector<8x128x128xi1>, vector<8x128x128xf32>
    %38 = arith.select %32, %28, %37 : vector<8x128x128xi1>, vector<8x128x128xf32>
    %39 = arith.addf %20, %38 : vector<8x128x128xf32>
    %cst_12 = arith.constant dense<0xFF800000> : vector<8x128xf32>
    %40 = vector.multi_reduction <maximumf>, %39, %cst_12 [2] : vector<8x128x128xf32> to vector<8x128xf32>
    %41 = vector.shape_cast %40 : vector<8x128xf32> to vector<8x128x1xf32>
    %42 = vector.broadcast %41 : vector<8x128x1xf32> to vector<8x128x128xf32>
    %43 = arith.subf %39, %42 : vector<8x128x128xf32>
    %44 = math.exp %43 : vector<8x128x128xf32>
    %cst_13 = arith.constant dense<0.000000e+00> : vector<8x128xf32>
    %45 = vector.multi_reduction <add>, %44, %cst_13 [2] : vector<8x128x128xf32> to vector<8x128xf32>
    %46 = vector.shape_cast %45 : vector<8x128xf32> to vector<8x128x1xf32>
    %47 = tpu.reciprocal %46 {approx = true} : vector<8x128x1xf32> -> vector<8x128x1xf32>
    %48 = vector.broadcast %47 : vector<8x128x1xf32> to vector<8x128x128xf32>
    %49 = arith.mulf %44, %48 : vector<8x128x128xf32>
    %50 = arith.truncf %49 : vector<8x128x128xf32> to vector<8x128x128xbf16>
    %51 = arith.truncf %9 : vector<8x16x128xf32> to vector<8x16x128xbf16>
    %cst_14 = arith.constant dense<0.000000e+00> : vector<8x128x16xf32>
    %52 = tpu.matmul %50, %51, %cst_14 {dimension_numbers = #tpu.dot_dimension_numbers<[2], [2], [1], [1], [0, 0, 0, 1, 1, 1], [0], [0]>} : vector<8x128x128xbf16>, vector<8x16x128xbf16>, vector<8x128x16xf32> -> vector<8x128x16xf32>
    %53 = arith.truncf %52 : vector<8x128x16xf32> to vector<8x128x16xbf16>
    %c0_15 = arith.constant 0 : index
    %c0_16 = arith.constant 0 : index
    %c0_17 = arith.constant 0 : index
    %54 = vector.load %arg5[%c0_15, %c0_16, %c0_17] : memref<8x128x16xbf16, #tpu.memory_space<vmem>>, vector<8x128x16xbf16>
    %cst_18 = arith.constant dense<0.000000e+00> : vector<8x128x128xf32>
    %55 = tpu.matmul %53, %54, %cst_18 {dimension_numbers = #tpu.dot_dimension_numbers<[2], [2], [1], [1], [0, 0, 0, 1, 1, 1], [0], [0]>} : vector<8x128x16xbf16>, vector<8x128x16xbf16>, vector<8x128x128xf32> -> vector<8x128x128xf32>
    %cst_19 = arith.constant dense<0.000000e+00> : vector<128x128xf32>
    %56 = vector.multi_reduction <add>, %55, %cst_19 [0] : vector<8x128x128xf32> to vector<128x128xf32>
    %57 = arith.addf %56, %0 : vector<128x128xf32>
    %cst_20 = arith.constant dense<0.000000e+00> : vector<128xf32>
    %58 = vector.multi_reduction <add>, %57, %cst_20 [1] : vector<128x128xf32> to vector<128xf32>
    %59 = vector.shape_cast %58 : vector<128xf32> to vector<128x1xf32>
    %cst_21 = arith.constant 1.280000e+02 : f32
    %60 = vector.broadcast %cst_21 : f32 to vector<128x1xf32>
    %61 = arith.divf %59, %60 : vector<128x1xf32>
    %62 = vector.broadcast %61 : vector<128x1xf32> to vector<128x128xf32>
    %63 = arith.subf %57, %62 : vector<128x128xf32>
    %64 = arith.mulf %63, %63 : vector<128x128xf32>
    %cst_22 = arith.constant dense<0.000000e+00> : vector<128xf32>
    %65 = vector.multi_reduction <add>, %64, %cst_22 [1] : vector<128x128xf32> to vector<128xf32>
    %66 = vector.shape_cast %65 : vector<128xf32> to vector<128x1xf32>
    %cst_23 = arith.constant 1.280000e+02 : f32
    %67 = vector.broadcast %cst_23 : f32 to vector<128x1xf32>
    %68 = arith.divf %66, %67 : vector<128x1xf32>
    %69 = vector.broadcast %61 : vector<128x1xf32> to vector<128x128xf32>
    %70 = arith.subf %57, %69 : vector<128x128xf32>
    %cst_24 = arith.constant 9.99999974E-6 : f32
    %71 = vector.broadcast %cst_24 : f32 to vector<128x1xf32>
    %72 = arith.addf %68, %71 : vector<128x1xf32>
    %73 = math.rsqrt %72 : vector<128x1xf32>
    %74 = vector.broadcast %73 : vector<128x1xf32> to vector<128x128xf32>
    %75 = arith.mulf %70, %74 : vector<128x128xf32>
    %c0_25 = arith.constant 0 : index
    %c0_26 = arith.constant 0 : index
    %76 = vector.load %arg6[%c0_25, %c0_26] : memref<1x128xf32, #tpu.memory_space<vmem>>, vector<1x128xf32>
    %77 = vector.broadcast %76 : vector<1x128xf32> to vector<128x128xf32>
    %78 = arith.mulf %75, %77 : vector<128x128xf32>
    %c0_27 = arith.constant 0 : index
    %c0_28 = arith.constant 0 : index
    %79 = vector.load %arg7[%c0_27, %c0_28] : memref<1x128xf32, #tpu.memory_space<vmem>>, vector<1x128xf32>
    %80 = vector.broadcast %79 : vector<1x128xf32> to vector<128x128xf32>
    %81 = arith.addf %78, %80 : vector<128x128xf32>
    %c0_29 = arith.constant 0 : index
    %c0_30 = arith.constant 0 : index
    %82 = vector.load %arg8[%c0_29, %c0_30] : memref<128x128xf32, #tpu.memory_space<vmem>>, vector<128x128xf32>
    tpu.vector_store %arg8[%c0_29, %c0_30], %81 {strides = array<i32>} : memref<128x128xf32, #tpu.memory_space<vmem>>, vector<128x128xf32>,
    return
  }
  func.func @transform_0(%arg0: i32) -> (i32, i32) {
    %c0_i32 = arith.constant 0 : i32
    %c0_i32_0 = arith.constant 0 : i32
    return %c0_i32, %arg0 : i32, i32
  }
  func.func @transform_1(%arg0: i32) -> (i32, i32) {
    %c0_i32 = arith.constant 0 : i32
    %c0_i32_0 = arith.constant 0 : i32
    %c0_i32_1 = arith.constant 0 : i32
    return %c0_i32, %c0_i32_0 : i32, i32
  }
  func.func @transform_2(%arg0: i32) -> (i32, i32, i32) {
    %c0_i32 = arith.constant 0 : i32
    %c0_i32_0 = arith.constant 0 : i32
    %c0_i32_1 = arith.constant 0 : i32
    %c0_i32_2 = arith.constant 0 : i32
    return %c0_i32, %c0_i32_0, %c0_i32_1 : i32, i32, i32
  }
  func.func @transform_3(%arg0: i32) -> (i32, i32, i32) {
    %c0_i32 = arith.constant 0 : i32
    %c0_i32_0 = arith.constant 0 : i32
    %c0_i32_1 = arith.constant 0 : i32
    %c0_i32_2 = arith.constant 0 : i32
    return %c0_i32, %c0_i32_0, %c0_i32_1 : i32, i32, i32
  }
  func.func @transform_4(%arg0: i32) -> (i32, i32, i32) {
    %c0_i32 = arith.constant 0 : i32
    %c0_i32_0 = arith.constant 0 : i32
    %c0_i32_1 = arith.constant 0 : i32
    %c0_i32_2 = arith.constant 0 : i32
    return %c0_i32, %c0_i32_0, %c0_i32_1 : i32, i32, i32
  }
  func.func @transform_5(%arg0: i32) -> (i32, i32) {
    %c0_i32 = arith.constant 0 : i32
    %c0_i32_0 = arith.constant 0 : i32
    %c0_i32_1 = arith.constant 0 : i32
    return %c0_i32, %c0_i32_0 : i32, i32
  }
  func.func @transform_6(%arg0: i32) -> (i32, i32) {
    %c0_i32 = arith.constant 0 : i32
    %c0_i32_0 = arith.constant 0 : i32
    %c0_i32_1 = arith.constant 0 : i32
    return %c0_i32, %c0_i32_0 : i32, i32
  }
  func.func @transform_7(%arg0: i32) -> (i32, i32) {
    %c0_i32 = arith.constant 0 : i32
    %c0_i32_0 = arith.constant 0 : i32
    return %c0_i32, %arg0 : i32, i32
  }
}

</mosaic_0001>

<llo_original>
// kernel: tpu_custom_call.1
$region0: #{tpu_custom_call.1}
  #allocation0 [shape = 'u32[]', space=smem, size = 0x4, offset = 0x4, fixed_abs, tag = 'smem constant byte address 0x4 - core index']
  #allocation1 [shape = 'u32[144,128]{1,0:T(1,128)}', space=vmem, size = 0x12000, scoped, tag = 'internal scratch']
  %s0 = inlined_call_operand.vmem [shape: f32[128,256], index: 0, kind: input, shape index: {}]
  %s1 = inlined_call_operand.vmem [shape: bf16[392,128], index: 1, kind: input, shape index: {}]
  %s2 = inlined_call_operand.vmem [shape: bf16[8,16,128], index: 2, kind: input, shape index: {}]
  %s3 = inlined_call_operand.vmem [shape: f32[8,1,128], index: 3, kind: input, shape index: {}]
  %s4 = inlined_call_operand.vmem [shape: bf16[8,128,16], index: 4, kind: input, shape index: {}]
  %s5 = inlined_call_operand.vmem [shape: f32[1,128], index: 5, kind: input, shape index: {}]
  %s6 = inlined_call_operand.vmem [shape: f32[1,128], index: 6, kind: input, shape index: {}]
  %s7 = inlined_call_operand.hbm [shape: f32[128,256], index: 7, kind: output, shape index: {}]
  %s8 = sld [smem:[#allocation0]]
  $region99: #{tpu_custom_call.1} parent=0
    _
  %s10 = ssub.s32 1, %s8
  %s11 = scalar_select 0, %s10, %s8
  $region1: #{tpu_custom_call.1} parent=0
    #allocation2 [shape = 'u8[131072]{0}', space=vmem, size = 0x20000, scoped, tag = 'input window, operand 0']
    #allocation3 [shape = 'u8[131072]{0}', space=vmem, size = 0x20000, scoped, tag = 'output window, operand 0']
    #allocation4 [shape = 's32[2]{0}', space=sflag, size = 0x8, scoped, tag = 'scoped memory for tpu_custom_call.1']
    %12 = vsyncpa [#allocation4], 0
    %s13 = scalar_lea.sflag [#allocation4], 1
    %14 = vsyncpa %s13, 0
    loop: start=0, step=1, limit=4
    $region2: #{tpu_custom_call.1} parent=1 // loop_pre_header
      _
    $region3: #{tpu_custom_call.1} parent=1 // loop_header
      %s16 = sphi 0, %s20
      %p17 = scmp.ge.s32.totalorder %s16, 4
      %s26 = sphi 0, %s28
      %s29 = sphi 0, %s26
      %s30 = sphi 0, %s29
      %s46 = sphi 0, %s30
      %s50 = sphi 0, %s50
      %s52 = sphi 0, %s50
      %s53 = sphi 0, %s52
      %s67 = sphi 0, %s53
      %s71 = sphi 0, %s71
      %s73 = sphi 0, %s71
      %s74 = sphi 0, %s73
      %s88 = sphi 0, %s74
      %s92 = sphi 0, %s92
      %s94 = sphi 0, %s92
      %s95 = sphi 0, %s94
      %s109 = sphi 0, %s95
      %s113 = sphi 0, %s113
      %s115 = sphi 0, %s113
      %s116 = sphi 0, %s115
      %s130 = sphi 0, %s116
      %s134 = sphi 0, %s134
      %s136 = sphi 0, %s134
      %s137 = sphi 0, %s136
      %s151 = sphi 0, %s137
      %s155 = sphi 0, %s155
      %s157 = sphi 0, %s155
      %s158 = sphi 0, %s157
      %s172 = sphi 0, %s158
      %s178 = sphi 0, %s180
      %s181 = sphi 0, %s178
      %s182 = sphi 0, %s181
      %s198 = sphi 0, %s182
    $region4: #{tpu_custom_call.1} parent=1 // loop_header_branch
      %19 = sbr.rel (%p17) target = $region8
    $region5: #{tpu_custom_call.1} parent=1 // loop_body
      %s21 = ssub.s32 %s16, 1
      %s22 = ssub.s32 %s16, 2
      %s23 = sadd.s32 %s16, 1
      %s24 = ssub.s32 %s16, %s23
      %p25 = scmp.eq.s32.totalorder %s24, 0
      %s27 = sadd.s32 %s26, 1
      %s28 = scalar_select %p25, %s26, %s27
      %p31 = pneg %p25
      %p32 = scmp.eq.s32.totalorder %s16, 1
      %p33 = por %p31, %p32
      %p34 = scmp.ne.s32.totalorder %s26, %s29
      %p35 = scmp.eq.s32.totalorder %s16, 0
      %p36 = por %p34, %p35
      %p37 = scmp.ne.s32.totalorder %s26, %s29
      %p38 = scmp.eq.s32.totalorder %s21, 1
      %p39 = por %p37, %p38
      %p40 = scmp.ne.s32.totalorder %s29, %s30
      %p41 = scmp.eq.s32.totalorder %s21, 0
      %p42 = por %p40, %p41
      %p43 = scmp.ne.s32.totalorder %s29, %s30
      %p44 = scmp.eq.s32.totalorder %s22, 1
      %p45 = por %p43, %p44
      %p47 = scmp.ne.s32.totalorder %s30, %s46
      %p48 = scmp.eq.s32.totalorder %s22, 0
      %p49 = por %p47, %p48
      %s51 = sadd.s32 %s50, 1
      %p54 = scmp.eq.s32.totalorder %s16, 1
      %p55 = scmp.ne.s32.totalorder %s50, %s52
      %p56 = scmp.eq.s32.totalorder %s16, 0
      %p57 = por %p55, %p56
      %p58 = scmp.ne.s32.totalorder %s50, %s52
      %p59 = scmp.eq.s32.totalorder %s21, 1
      %p60 = por %p58, %p59
      %p61 = scmp.ne.s32.totalorder %s52, %s53
      %p62 = scmp.eq.s32.totalorder %s21, 0
      %p63 = por %p61, %p62
      %p64 = scmp.ne.s32.totalorder %s52, %s53
      %p65 = scmp.eq.s32.totalorder %s22, 1
      %p66 = por %p64, %p65
      %p68 = scmp.ne.s32.totalorder %s53, %s67
      %p69 = scmp.eq.s32.totalorder %s22, 0
      %p70 = por %p68, %p69
      %s72 = sadd.s32 %s71, 1
      %p75 = scmp.eq.s32.totalorder %s16, 1
      %p76 = scmp.ne.s32.totalorder %s71, %s73
      %p77 = scmp.eq.s32.totalorder %s16, 0
      %p78 = por %p76, %p77
      %p79 = scmp.ne.s32.totalorder %s71, %s73
      %p80 = scmp.eq.s32.totalorder %s21, 1
      %p81 = por %p79, %p80
      %p82 = scmp.ne.s32.totalorder %s73, %s74
      %p83 = scmp.eq.s32.totalorder %s21, 0
      %p84 = por %p82, %p83
      %p85 = scmp.ne.s32.totalorder %s73, %s74
      %p86 = scmp.eq.s32.totalorder %s22, 1
      %p87 = por %p85, %p86
      %p89 = scmp.ne.s32.totalorder %s74, %s88
      %p90 = scmp.eq.s32.totalorder %s22, 0
      %p91 = por %p89, %p90
      %s93 = sadd.s32 %s92, 1
      %p96 = scmp.eq.s32.totalorder %s16, 1
      %p97 = scmp.ne.s32.totalorder %s92, %s94
      %p98 = scmp.eq.s32.totalorder %s16, 0
      %p99 = por %p97, %p98
      %p100 = scmp.ne.s32.totalorder %s92, %s94
      %p101 = scmp.eq.s32.totalorder %s21, 1
      %p102 = por %p100, %p101
      %p103 = scmp.ne.s32.totalorder %s94, %s95
      %p104 = scmp.eq.s32.totalorder %s21, 0
      %p105 = por %p103, %p104
      %p106 = scmp.ne.s32.totalorder %s94, %s95
      %p107 = scmp.eq.s32.totalorder %s22, 1
      %p108 = por %p106, %p107
      %p110 = scmp.ne.s32.totalorder %s95, %s109
      %p111 = scmp.eq.s32.totalorder %s22, 0
      %p112 = por %p110, %p111
      %s114 = sadd.s32 %s113, 1
      %p117 = scmp.eq.s32.totalorder %s16, 1
      %p118 = scmp.ne.s32.totalorder %s113, %s115
      %p119 = scmp.eq.s32.totalorder %s16, 0
      %p120 = por %p118, %p119
      %p121 = scmp.ne.s32.totalorder %s113, %s115
      %p122 = scmp.eq.s32.totalorder %s21, 1
      %p123 = por %p121, %p122
      %p124 = scmp.ne.s32.totalorder %s115, %s116
      %p125 = scmp.eq.s32.totalorder %s21, 0
      %p126 = por %p124, %p125
      %p127 = scmp.ne.s32.totalorder %s115, %s116
      %p128 = scmp.eq.s32.totalorder %s22, 1
      %p129 = por %p127, %p128
      %p131 = scmp.ne.s32.totalorder %s116, %s130
      %p132 = scmp.eq.s32.totalorder %s22, 0
      %p133 = por %p131, %p132
      %s135 = sadd.s32 %s134, 1
      %p138 = scmp.eq.s32.totalorder %s16, 1
      %p139 = scmp.ne.s32.totalorder %s134, %s136
      %p140 = scmp.eq.s32.totalorder %s16, 0
      %p141 = por %p139, %p140
      %p142 = scmp.ne.s32.totalorder %s134, %s136
      %p143 = scmp.eq.s32.totalorder %s21, 1
      %p144 = por %p142, %p143
      %p145 = scmp.ne.s32.totalorder %s136, %s137
      %p146 = scmp.eq.s32.totalorder %s21, 0
      %p147 = por %p145, %p146
      %p148 = scmp.ne.s32.totalorder %s136, %s137
      %p149 = scmp.eq.s32.totalorder %s22, 1
      %p150 = por %p148, %p149
      %p152 = scmp.ne.s32.totalorder %s137, %s151
      %p153 = scmp.eq.s32.totalorder %s22, 0
      %p154 = por %p152, %p153
      %s156 = sadd.s32 %s155, 1
      %p159 = scmp.eq.s32.totalorder %s16, 1
      %p160 = scmp.ne.s32.totalorder %s155, %s157
      %p161 = scmp.eq.s32.totalorder %s16, 0
      %p162 = por %p160, %p161
      %p163 = scmp.ne.s32.totalorder %s155, %s157
      %p164 = scmp.eq.s32.totalorder %s21, 1
      %p165 = por %p163, %p164
      %p166 = scmp.ne.s32.totalorder %s157, %s158
      %p167 = scmp.eq.s32.totalorder %s21, 0
      %p168 = por %p166, %p167
      %p169 = scmp.ne.s32.totalorder %s157, %s158
      %p170 = scmp.eq.s32.totalorder %s22, 1
      %p171 = por %p169, %p170
      %p173 = scmp.ne.s32.totalorder %s158, %s172
      %p174 = scmp.eq.s32.totalorder %s22, 0
      %p175 = por %p173, %p174
      %s176 = ssub.s32 %s16, %s23
      %p177 = scmp.eq.s32.totalorder %s176, 0
      %s179 = sadd.s32 %s178, 1
      %s180 = scalar_select %p177, %s178, %s179
      %p183 = pneg %p177
      %p184 = scmp.eq.s32.totalorder %s16, 1
      %p185 = por %p183, %p184
      %p186 = scmp.ne.s32.totalorder %s178, %s181
      %p187 = scmp.eq.s32.totalorder %s16, 0
      %p188 = por %p186, %p187
      %p189 = scmp.ne.s32.totalorder %s178, %s181
      %p190 = scmp.eq.s32.totalorder %s21, 1
      %p191 = por %p189, %p190
      %p192 = scmp.ne.s32.totalorder %s181, %s182
      %p193 = scmp.eq.s32.totalorder %s21, 0
      %p194 = por %p192, %p193
      %p195 = scmp.ne.s32.totalorder %s181, %s182
      %p196 = scmp.eq.s32.totalorder %s22, 1
      %p197 = por %p195, %p196
      %p199 = scmp.ne.s32.totalorder %s182, %s198
      %p200 = scmp.eq.s32.totalorder %s22, 0
      %p201 = por %p199, %p200
      %p202 = scmp.le.s32.totalorder 1, %s16
      %p203 = scmp.lt.s32.totalorder %s16, 3
      %p204 = pnand %p202, %p203
      %p205 = pneg %p204
      // Predicated region
      $region9: #{tpu_custom_call.1} parent=5 // pred_check
        _
      $region10: #{tpu_custom_call.1} parent=5 // pred_check_branch
        %207 = sbr.rel (%p204) target = $region12
      $region11: #{tpu_custom_call.1} parent=5 // pred_region
        %s208 = ssub.s32 %s16, 1
        // Predicated region
        $region13: #{tpu_custom_call.1} parent=11 // pred_check
          %p209 = pneg %p63
        $region14: #{tpu_custom_call.1} parent=11 // pred_check_branch
          %211 = sbr.rel (%p209) target = $region16
        $region15: #{tpu_custom_call.1} parent=11 // pred_region
          _
        $region16: #{tpu_custom_call.1} parent=11 // pred_fallthru
          _
        // Predicated region
        $region17: #{tpu_custom_call.1} parent=11 // pred_check
          %p212 = pneg %p84
        $region18: #{tpu_custom_call.1} parent=11 // pred_check_branch
          %214 = sbr.rel (%p212) target = $region20
        $region19: #{tpu_custom_call.1} parent=11 // pred_region
          _
        $region20: #{tpu_custom_call.1} parent=11 // pred_fallthru
          _
        // Predicated region
        $region21: #{tpu_custom_call.1} parent=11 // pred_check
          %p215 = pneg %p105
        $region22: #{tpu_custom_call.1} parent=11 // pred_check_branch
          %217 = sbr.rel (%p215) target = $region24
        $region23: #{tpu_custom_call.1} parent=11 // pred_region
          _
        $region24: #{tpu_custom_call.1} parent=11 // pred_fallthru
          _
        // Predicated region
        $region25: #{tpu_custom_call.1} parent=11 // pred_check
          %p218 = pneg %p126
        $region26: #{tpu_custom_call.1} parent=11 // pred_check_branch
          %220 = sbr.rel (%p218) target = $region28
        $region27: #{tpu_custom_call.1} parent=11 // pred_region
          _
        $region28: #{tpu_custom_call.1} parent=11 // pred_fallthru
          _
        // Predicated region
        $region29: #{tpu_custom_call.1} parent=11 // pred_check
          %p221 = pneg %p147
        $region30: #{tpu_custom_call.1} parent=11 // pred_check_branch
          %223 = sbr.rel (%p221) target = $region32
        $region31: #{tpu_custom_call.1} parent=11 // pred_region
          _
        $region32: #{tpu_custom_call.1} parent=11 // pred_fallthru
          _
        // Predicated region
        $region33: #{tpu_custom_call.1} parent=11 // pred_check
          %p224 = pneg %p168
        $region34: #{tpu_custom_call.1} parent=11 // pred_check_branch
          %226 = sbr.rel (%p224) target = $region36
        $region35: #{tpu_custom_call.1} parent=11 // pred_region
          _
        $region36: #{tpu_custom_call.1} parent=11 // pred_fallthru
          _
      $region12: #{tpu_custom_call.1} parent=5 // pred_fallthru
        _
      %p227 = scmp.lt.s32.totalorder %s16, 2
      // Predicated region
      $region37: #{tpu_custom_call.1} parent=5 // pred_check
        %p228 = pneg %p227
      $region38: #{tpu_custom_call.1} parent=5 // pred_check_branch
        %230 = sbr.rel (%p228) target = $region40
      $region39: #{tpu_custom_call.1} parent=5 // pred_region
        // Predicated region
        $region41: #{tpu_custom_call.1} parent=39 // pred_check
          %p231 = pneg %p36
        $region42: #{tpu_custom_call.1} parent=39 // pred_check_branch
          %233 = sbr.rel (%p231) target = $region44
        $region43: #{tpu_custom_call.1} parent=39 // pred_region
          %s234 = sand.u32 %s26, 1
          %s235 = sand.u32 %s26, 1
          %s236 = smul.addr %s235, 128
          %s237 = scalar_lea.vmem [#allocation2], %s236
          %s238 = smul.addr %s16, 8
          %s239 = scalar_lea.vmem %s0, %s238
          // Predicated region
          $region45: #{tpu_custom_call.1} parent=43 // pred_check
            _
          $region46: #{tpu_custom_call.1} parent=43 // pred_check_branch
            %241 = sbr.rel (0) target = $region48
          $region47: #{tpu_custom_call.1} parent=43 // pred_region
            // Predicated region
            $region49: #{tpu_custom_call.1} parent=47 // pred_check
              _
            $region50: #{tpu_custom_call.1} parent=47 // pred_check_branch
              %243 = sbr.rel (0) target = $region52
            $region51: #{tpu_custom_call.1} parent=47 // pred_region
              // Predicated region
              $region64: #{tpu_custom_call.1} parent=51 // pred_check
                _
              $region65: #{tpu_custom_call.1} parent=51 // pred_check_branch
                %288 = sbr.rel (0) target = $region67
              $region66: #{tpu_custom_call.1} parent=51 // pred_region
                loop: start=0, step=1, limit=1
                $region68: #{tpu_custom_call.1} parent=66 // loop_pre_header
                  _
                $region69: #{tpu_custom_call.1} parent=66 // loop_header
                  %s290 = sphi 0, %s294
                  %p291 = scmp.ge.s32.totalorder %s290, 1
                  %s295 = sphi %s239, %s239
                  %s296 = sphi %s237, %s237
                $region70: #{tpu_custom_call.1} parent=66 // loop_header_branch
                  %293 = sbr.rel (%p291) target = $region74
                $region71: #{tpu_custom_call.1} parent=66 // loop_body
                  %v297 = vld [vmem:[%s295] sm:$0xff]
                  %298 = vst [vmem:[%s296] sm:$0xff] %v297
                  %v299 = vld [vmem:[%s295 + $0x10] sm:$0xff]
                  %300 = vst [vmem:[%s296 + $0x8] sm:$0xff] %v299
                  %v301 = vld [vmem:[%s295 + $0x20] sm:$0xff]
                  %302 = vst [vmem:[%s296 + $0x10] sm:$0xff] %v301
                  %v303 = vld [vmem:[%s295 + $0x30] sm:$0xff]
                  %304 = vst [vmem:[%s296 + $0x18] sm:$0xff] %v303
                  %v305 = vld [vmem:[%s295 + $0x40] sm:$0xff]
                  %306 = vst [vmem:[%s296 + $0x20] sm:$0xff] %v305
                  %v307 = vld [vmem:[%s295 + $0x50] sm:$0xff]
                  %308 = vst [vmem:[%s296 + $0x28] sm:$0xff] %v307
                  %v309 = vld [vmem:[%s295 + $0x60] sm:$0xff]
                  %310 = vst [vmem:[%s296 + $0x30] sm:$0xff] %v309
                  %v311 = vld [vmem:[%s295 + $0x70] sm:$0xff]
                  %312 = vst [vmem:[%s296 + $0x38] sm:$0xff] %v311
                  %v313 = vld [vmem:[%s295 + $0x80] sm:$0xff]
                  %314 = vst [vmem:[%s296 + $0x40] sm:$0xff] %v313
                  %v315 = vld [vmem:[%s295 + $0x90] sm:$0xff]
                  %316 = vst [vmem:[%s296 + $0x48] sm:$0xff] %v315
                  %v317 = vld [vmem:[%s295 + $0xa0] sm:$0xff]
                  %318 = vst [vmem:[%s296 + $0x50] sm:$0xff] %v317
                  %v319 = vld [vmem:[%s295 + $0xb0] sm:$0xff]
                  %320 = vst [vmem:[%s296 + $0x58] sm:$0xff] %v319
                  %v321 = vld [vmem:[%s295 + $0xc0] sm:$0xff]
                  %322 = vst [vmem:[%s296 + $0x60] sm:$0xff] %v321
                  %v323 = vld [vmem:[%s295 + $0xd0] sm:$0xff]
                  %324 = vst [vmem:[%s296 + $0x68] sm:$0xff] %v323
                  %v325 = vld [vmem:[%s295 + $0xe0] sm:$0xff]
                  %326 = vst [vmem:[%s296 + $0x70] sm:$0xff] %v325
                  %v327 = vld [vmem:[%s295 + $0xf0] sm:$0xff]
                  %328 = vst [vmem:[%s296 + $0x78] sm:$0xff] %v327
                $region72: #{tpu_custom_call.1} parent=66 // loop_footer
                  %s294 = sadd.s32 1, %s290
                $region73: #{tpu_custom_call.1} parent=66 // loop_footer_branch
                  %289 = sbr.rel target = $region69
                $region74: #{tpu_custom_call.1} parent=66 // loop_exit
                  _
              $region67: #{tpu_custom_call.1} parent=51 // pred_fallthru
                _
              // Predicated region
              $region75: #{tpu_custom_call.1} parent=51 // pred_check
                _
              $region76: #{tpu_custom_call.1} parent=51 // pred_check_branch
                %330 = sbr.rel target = $region78
              $region77: #{tpu_custom_call.1} parent=51 // pred_region
                _
              $region78: #{tpu_custom_call.1} parent=51 // pred_fallthru
                _
            $region52: #{tpu_custom_call.1} parent=47 // pred_fallthru
              _
            // Predicated region
            $region53: #{tpu_custom_call.1} parent=47 // pred_check
              _
            $region54: #{tpu_custom_call.1} parent=47 // pred_check_branch
              %245 = sbr.rel target = $region56
            $region55: #{tpu_custom_call.1} parent=47 // pred_region
              loop: start=0, step=1, limit=1
              $region57: #{tpu_custom_call.1} parent=55 // loop_pre_header
                _
              $region58: #{tpu_custom_call.1} parent=55 // loop_header
                %s248 = sphi 0, %s252
                %p249 = scmp.ge.s32.totalorder %s248, 1
                %s253 = sphi %s239, %s239
                %s254 = sphi %s237, %s237
              $region59: #{tpu_custom_call.1} parent=55 // loop_header_branch
                %251 = sbr.rel (%p249) target = $region63
              $region60: #{tpu_custom_call.1} parent=55 // loop_body
                %v255 = vld [vmem:[%s253] sm:$0xff]
                %256 = vst [vmem:[%s254] sm:$0xff] %v255
                %v257 = vld [vmem:[%s253 + $0x10] sm:$0xff]
                %258 = vst [vmem:[%s254 + $0x8] sm:$0xff] %v257
                %v259 = vld [vmem:[%s253 + $0x20] sm:$0xff]
                %260 = vst [vmem:[%s254 + $0x10] sm:$0xff] %v259
                %v261 = vld [vmem:[%s253 + $0x30] sm:$0xff]
                %262 = vst [vmem:[%s254 + $0x18] sm:$0xff] %v261
                %v263 = vld [vmem:[%s253 + $0x40] sm:$0xff]
                %264 = vst [vmem:[%s254 + $0x20] sm:$0xff] %v263
                %v265 = vld [vmem:[%s253 + $0x50] sm:$0xff]
                %266 = vst [vmem:[%s254 + $0x28] sm:$0xff] %v265
                %v267 = vld [vmem:[%s253 + $0x60] sm:$0xff]
                %268 = vst [vmem:[%s254 + $0x30] sm:$0xff] %v267
                %v269 = vld [vmem:[%s253 + $0x70] sm:$0xff]
                %270 = vst [vmem:[%s254 + $0x38] sm:$0xff] %v269
                %v271 = vld [vmem:[%s253 + $0x80] sm:$0xff]
                %272 = vst [vmem:[%s254 + $0x40] sm:$0xff] %v271
                %v273 = vld [vmem:[%s253 + $0x90] sm:$0xff]
                %274 = vst [vmem:[%s254 + $0x48] sm:$0xff] %v273
                %v275 = vld [vmem:[%s253 + $0xa0] sm:$0xff]
                %276 = vst [vmem:[%s254 + $0x50] sm:$0xff] %v275
                %v277 = vld [vmem:[%s253 + $0xb0] sm:$0xff]
                %278 = vst [vmem:[%s254 + $0x58] sm:$0xff] %v277
                %v279 = vld [vmem:[%s253 + $0xc0] sm:$0xff]
                %280 = vst [vmem:[%s254 + $0x60] sm:$0xff] %v279
                %v281 = vld [vmem:[%s253 + $0xd0] sm:$0xff]
                %282 = vst [vmem:[%s254 + $0x68] sm:$0xff] %v281
                %v283 = vld [vmem:[%s253 + $0xe0] sm:$0xff]
                %284 = vst [vmem:[%s254 + $0x70] sm:$0xff] %v283
                %v285 = vld [vmem:[%s253 + $0xf0] sm:$0xff]
                %286 = vst [vmem:[%s254 + $0x78] sm:$0xff] %v285
              $region61: #{tpu_custom_call.1} parent=55 // loop_footer
                %s252 = sadd.s32 1, %s248
              $region62: #{tpu_custom_call.1} parent=55 // loop_footer_branch
                %247 = sbr.rel target = $region58
              $region63: #{tpu_custom_call.1} parent=55 // loop_exit
                _
            $region56: #{tpu_custom_call.1} parent=47 // pred_fallthru
              _
          $region48: #{tpu_custom_call.1} parent=43 // pred_fallthru
            _
          %331 = vnop
        $region44: #{tpu_custom_call.1} parent=39 // pred_fallthru
          _
      $region40: #{tpu_custom_call.1} parent=5 // pred_fallthru
        _
      %p332 = scmp.le.s32.totalorder 1, %s16
      %p333 = scmp.lt.s32.totalorder %s16, 3
      %p334 = pnand %p332, %p333
      %p335 = pneg %p334
      // Predicated region
      $region79: #{tpu_custom_call.1} parent=5 // pred_check
        _
      $region80: #{tpu_custom_call.1} parent=5 // pred_check_branch
        %337 = sbr.rel (%p334) target = $region82
      $region81: #{tpu_custom_call.1} parent=5 // pred_region
        %s338 = ssub.s32 %s16, 1
        %s339 = sand.u32 %s29, 1
        %s340 = sand.u32 %s29, 1
        %s341 = smul.addr %s340, 128
        %s342 = scalar_lea.vmem [#allocation2], %s341
        // Predicated region
        $region83: #{tpu_custom_call.1} parent=81 // pred_check
          %p343 = pneg %p42
        $region84: #{tpu_custom_call.1} parent=81 // pred_check_branch
          %345 = sbr.rel (%p343) target = $region86
        $region85: #{tpu_custom_call.1} parent=81 // pred_region
          _
        $region86: #{tpu_custom_call.1} parent=81 // pred_fallthru
          _
        %s346 = sand.u32 %s29, 1
        %s347 = sand.u32 %s29, 1
        %s348 = smul.addr %s347, 128
        %s349 = scalar_lea.vmem [#allocation2], %s348
        %p350 = pneg %p42
        %p351 = pneg %p39
        %p352 = pneg %p63
        %p353 = pneg %p60
        %p354 = pneg %p84
        %p355 = pneg %p81
        %p356 = pneg %p105
        %p357 = pneg %p102
        %p358 = pneg %p126
        %p359 = pneg %p123
        %p360 = pneg %p147
        %p361 = pneg %p144
        %p362 = pneg %p168
        %p363 = pneg %p165
        %p364 = pneg %p194
        %p365 = pneg %p191
        %s366 = sand.u32 %s181, 1
        %s367 = scalar_lea.sflag [#allocation4], %s366
        %s368 = sand.u32 %s181, 1
        %s369 = smul.addr %s368, 128
        %s370 = scalar_lea.vmem [#allocation3], %s369
        %v372 = vld [vmem:[%s342] sm:$0xff]
        %v373 = vld [vmem:[%s342 + $0x8] sm:$0xff]
        %v374 = vld [vmem:[%s342 + $0x10] sm:$0xff]
        %v375 = vld [vmem:[%s342 + $0x18] sm:$0xff]
        %v376 = vld [vmem:[%s342 + $0x20] sm:$0xff]
        %v377 = vld [vmem:[%s342 + $0x28] sm:$0xff]
        %v378 = vld [vmem:[%s342 + $0x30] sm:$0xff]
        %v379 = vld [vmem:[%s342 + $0x38] sm:$0xff]
        %v380 = vld [vmem:[%s342 + $0x40] sm:$0xff]
        %v381 = vld [vmem:[%s342 + $0x48] sm:$0xff]
        %v382 = vld [vmem:[%s342 + $0x50] sm:$0xff]
        %v383 = vld [vmem:[%s342 + $0x58] sm:$0xff]
        %v384 = vld [vmem:[%s342 + $0x60] sm:$0xff]
        %v385 = vld [vmem:[%s342 + $0x68] sm:$0xff]
        %v386 = vld [vmem:[%s342 + $0x70] sm:$0xff]
        %v387 = vld [vmem:[%s342 + $0x78] sm:$0xff]
        %v388 = vpack.c.bf16 %v373, %v372
        %v389 = vpack.c.bf16 %v375, %v374
        %v390 = vpack.c.bf16 %v377, %v376
        %v391 = vpack.c.bf16 %v379, %v378
        %v392 = vpack.c.bf16 %v381, %v380
        %v393 = vpack.c.bf16 %v383, %v382
        %v394 = vpack.c.bf16 %v385, %v384
        %v395 = vpack.c.bf16 %v387, %v386
        %v396 = vld [vmem:[%s1] sm:$0xf]
        %v397 = vld [vmem:[%s1 + $0x4] sm:$0xf]
        %v398 = vld [vmem:[%s1 + $0x8] sm:$0xf]
        %v399 = vld [vmem:[%s1 + $0xc] sm:$0xf]
        %v400 = vld [vmem:[%s1 + $0x10] sm:$0xf]
        %v401 = vld [vmem:[%s1 + $0x14] sm:$0xf]
        %v402 = vld [vmem:[%s1 + $0x18] sm:$0xf]
        %v403 = vld [vmem:[%s1 + $0x1c] sm:$0xf]
        %v404 = vld [vmem:[%s1 + $0x20] sm:$0xf]
        %v405 = vld [vmem:[%s1 + $0x24] sm:$0xf]
        %v406 = vld [vmem:[%s1 + $0x28] sm:$0xf]
        %v407 = vld [vmem:[%s1 + $0x2c] sm:$0xf]
        %v408 = vld [vmem:[%s1 + $0x30] sm:$0xf]
        %v409 = vld [vmem:[%s1 + $0x34] sm:$0xf]
        %v410 = vld [vmem:[%s1 + $0x38] sm:$0xf]
        %v411 = vld [vmem:[%s1 + $0x3c] sm:$0xf]
        %v412 = vld [vmem:[%s1 + $0x40] sm:$0xf]
        %v413 = vld [vmem:[%s1 + $0x44] sm:$0xf]
        %v414 = vld [vmem:[%s1 + $0x48] sm:$0xf]
        %v415 = vld [vmem:[%s1 + $0x4c] sm:$0xf]
        %v416 = vld [vmem:[%s1 + $0x50] sm:$0xf]
        %v417 = vld [vmem:[%s1 + $0x54] sm:$0xf]
        %v418 = vld [vmem:[%s1 + $0x58] sm:$0xf]
        %v419 = vld [vmem:[%s1 + $0x5c] sm:$0xf]
        %v420 = vld [vmem:[%s1 + $0x60] sm:$0xf]
        %v421 = vld [vmem:[%s1 + $0x64] sm:$0xf]
        %v422 = vld [vmem:[%s1 + $0x68] sm:$0xf]
        %v423 = vld [vmem:[%s1 + $0x6c] sm:$0xf]
        %v424 = vld [vmem:[%s1 + $0x70] sm:$0xf]
        %v425 = vld [vmem:[%s1 + $0x74] sm:$0xf]
        %v426 = vld [vmem:[%s1 + $0x78] sm:$0xf]
        %v427 = vld [vmem:[%s1 + $0x7c] sm:$0xf]
        %v428 = vld [vmem:[%s1 + $0x80] sm:$0xf]
        %v429 = vld [vmem:[%s1 + $0x84] sm:$0xf]
        %v430 = vld [vmem:[%s1 + $0x88] sm:$0xf]
        %v431 = vld [vmem:[%s1 + $0x8c] sm:$0xf]
        %v432 = vld [vmem:[%s1 + $0x90] sm:$0xf]
        %v433 = vld [vmem:[%s1 + $0x94] sm:$0xf]
        %v434 = vld [vmem:[%s1 + $0x98] sm:$0xf]
        %v435 = vld [vmem:[%s1 + $0x9c] sm:$0xf]
        %v436 = vld [vmem:[%s1 + $0xa0] sm:$0xf]
        %v437 = vld [vmem:[%s1 + $0xa4] sm:$0xf]
        %v438 = vld [vmem:[%s1 + $0xa8] sm:$0xf]
        %v439 = vld [vmem:[%s1 + $0xac] sm:$0xf]
        %v440 = vld [vmem:[%s1 + $0xb0] sm:$0xf]
        %v441 = vld [vmem:[%s1 + $0xb4] sm:$0xf]
        %v442 = vld [vmem:[%s1 + $0xb8] sm:$0xf]
        %v443 = vld [vmem:[%s1 + $0xbc] sm:$0xf]
        %v444 = vld [vmem:[%s1 + $0xc0] sm:$0xf]
        %v494 = vunpack.c.l.b16 %v396
        %v495 = vunpack.c.l.b16 %v397
        %v496 = vunpack.c.l.b16 %v398
        %v497 = vunpack.c.l.b16 %v399
        %v498 = vunpack.c.l.b16 %v400
        %v499 = vunpack.c.l.b16 %v401
        %v500 = vunpack.c.l.b16 %v402
        %v501 = vunpack.c.l.b16 %v403
        %v502 = vunpack.c.l.b16 %v404
        %v503 = vunpack.c.l.b16 %v405
        %v504 = vunpack.c.l.b16 %v406
        %v505 = vunpack.c.l.b16 %v407
        %v506 = vunpack.c.l.b16 %v408
        %v507 = vunpack.c.l.b16 %v409
        %v508 = vunpack.c.l.b16 %v410
        %v509 = vunpack.c.l.b16 %v411
        %v510 = vunpack.c.l.b16 %v412
        %v511 = vunpack.c.l.b16 %v413
        %v512 = vunpack.c.l.b16 %v414
        %v513 = vunpack.c.l.b16 %v415
        %v514 = vunpack.c.l.b16 %v416
        %v515 = vunpack.c.l.b16 %v417
        %v516 = vunpack.c.l.b16 %v418
        %v517 = vunpack.c.l.b16 %v419
        %v518 = vunpack.c.l.b16 %v420
        %v519 = vunpack.c.l.b16 %v421
        %v520 = vunpack.c.l.b16 %v422
        %v521 = vunpack.c.l.b16 %v423
        %v522 = vunpack.c.l.b16 %v424
        %v523 = vunpack.c.l.b16 %v425
        %v524 = vunpack.c.l.b16 %v426
        %v525 = vunpack.c.l.b16 %v427
        %v526 = vunpack.c.l.b16 %v428
        %v527 = vunpack.c.l.b16 %v429
        %v528 = vunpack.c.l.b16 %v430
        %v529 = vunpack.c.l.b16 %v431
        %v530 = vunpack.c.l.b16 %v432
        %v531 = vunpack.c.l.b16 %v433
        %v532 = vunpack.c.l.b16 %v434
        %v533 = vunpack.c.l.b16 %v435
        %v534 = vunpack.c.l.b16 %v436
        %v535 = vunpack.c.l.b16 %v437
        %v536 = vunpack.c.l.b16 %v438
        %v537 = vunpack.c.l.b16 %v439
        %v538 = vunpack.c.l.b16 %v440
        %v539 = vunpack.c.l.b16 %v441
        %v540 = vunpack.c.l.b16 %v442
        %v541 = vunpack.c.l.b16 %v443
        %v542 = vunpack.c.l.b16 %v444
        %v543 = vpack.c.b16 %v495, %v494
        %v544 = vpack.c.b16 %v497, %v496
        %v545 = vpack.c.b16 %v499, %v498
        %v546 = vpack.c.b16 %v501, %v500
        %v547 = vpack.c.b16 %v503, %v502
        %v548 = vpack.c.b16 %v505, %v504
        %v549 = vpack.c.b16 %v507, %v506
        %v550 = vpack.c.b16 %v509, %v508
        %v551 = vpack.c.b16 %v511, %v510
        %v552 = vpack.c.b16 %v513, %v512
        %v553 = vpack.c.b16 %v515, %v514
        %v554 = vpack.c.b16 %v517, %v516
        %v555 = vpack.c.b16 %v519, %v518
        %v556 = vpack.c.b16 %v521, %v520
        %v557 = vpack.c.b16 %v523, %v522
        %v558 = vpack.c.b16 %v525, %v524
        %v559 = vpack.c.b16 %v527, %v526
        %v560 = vpack.c.b16 %v529, %v528
        %v561 = vpack.c.b16 %v531, %v530
        %v562 = vpack.c.b16 %v533, %v532
        %v563 = vpack.c.b16 %v535, %v534
        %v564 = vpack.c.b16 %v537, %v536
        %v565 = vpack.c.b16 %v539, %v538
        %v566 = vpack.c.b16 %v541, %v540
        %v567 = vpack.c.b16 %v542, %v542
        %593 = vmatprep.subr.bf16.mxu0 0
        %594 = vmatpush1.bf16.xpose.msra.mxu0 %v388
        %595 = vmatprep.subr.bf16.mxu0 0
        %596 = vmatpush1.bf16.xpose.msra.mxu0 %v389
        %597 = vmatprep.subr.bf16.mxu0 0
        %598 = vmatpush1.bf16.xpose.msra.mxu0 %v390
        %599 = vmatprep.subr.bf16.mxu0 0
        %600 = vmatpush1.bf16.xpose.msra.mxu0 %v391
        %601 = vmatprep.subr.bf16.mxu0 0
        %602 = vmatpush1.bf16.xpose.msra.mxu0 %v392
        %603 = vmatprep.subr.bf16.mxu0 0
        %604 = vmatpush1.bf16.xpose.msra.mxu0 %v393
        %605 = vmatprep.subr.bf16.mxu0 0
        %606 = vmatpush1.bf16.xpose.msra.mxu0 %v394
        %607 = vmatprep.subr.bf16.mxu0 0
        %608 = vmatpush1.bf16.xpose.msra.mxu0 %v395
        %609 = vmatprep.subr.bf16.mxu0 0
        %610 = vmatpush1.bf16.xpose.msra.mxu0 0
        %611 = vmatprep.subr.bf16.mxu0 0
        %612 = vmatpush1.bf16.xpose.msra.mxu0 0
        %613 = vmatprep.subr.bf16.mxu0 0
        %614 = vmatpush1.bf16.xpose.msra.mxu0 0
        %615 = vmatprep.subr.bf16.mxu0 0
        %616 = vmatpush1.bf16.xpose.msra.mxu0 0
        %617 = vmatprep.subr.bf16.mxu0 0
        %618 = vmatpush1.bf16.xpose.msra.mxu0 0
        %619 = vmatprep.subr.bf16.mxu0 0
        %620 = vmatpush1.bf16.xpose.msra.mxu0 0
        %621 = vmatprep.subr.bf16.mxu0 0
        %622 = vmatpush1.bf16.xpose.msra.mxu0 0
        %623 = vmatprep.subr.bf16.mxu0 0
        %624 = vmatpush1.bf16.xpose.msra.mxu0 0
        %625 = vmatprep.mubr.bf16.mxu0 0
        %626 = vmatmul.mubr.bf16.gmra.mrb[0].mxu0 %v543
        %v627 = vpop.f32.mrb[0].mxu0
        %v628 = vadd.f32 0.0, %v627
        %v629 = vpop.f32.mrb[0].mxu0
        %v630 = vpop.f32.mrb[0].mxu0
        %v631 = vadd.f32 0.0, %v630
        %v632 = vpop.f32.mrb[0].mxu0
        %633 = vmatprep.mubr.bf16.mxu0 0
        %634 = vmatmul.mubr.bf16.gmra.mrb[0].mxu0 %v544
        %v635 = vpop.f32.mrb[0].mxu0
        %v636 = vadd.f32 0.0, %v635
        %v637 = vpop.f32.mrb[0].mxu0
        %v638 = vpop.f32.mrb[0].mxu0
        %v639 = vadd.f32 0.0, %v638
        %v640 = vpop.f32.mrb[0].mxu0
        %641 = vmatprep.mubr.bf16.mxu0 0
        %642 = vmatmul.mubr.bf16.gmra.mrb[0].mxu0 %v545
        %v643 = vpop.f32.mrb[0].mxu0
        %v644 = vadd.f32 0.0, %v643
        %v645 = vpop.f32.mrb[0].mxu0
        %v646 = vpop.f32.mrb[0].mxu0
        %v647 = vadd.f32 0.0, %v646
        %v648 = vpop.f32.mrb[0].mxu0
        %649 = vmatprep.mubr.bf16.mxu0 0
        %650 = vmatmul.mubr.bf16.gmra.mrb[0].mxu0 %v546
        %v651 = vpop.f32.mrb[0].mxu0
        %v652 = vadd.f32 0.0, %v651
        %v653 = vpop.f32.mrb[0].mxu0
        %v654 = vpop.f32.mrb[0].mxu0
        %v655 = vadd.f32 0.0, %v654
        %v656 = vpop.f32.mrb[0].mxu0
        %657 = vmatprep.mubr.bf16.mxu0 0
        %658 = vmatmul.mubr.bf16.gmra.mrb[0].mxu0 %v547
        %v659 = vpop.f32.mrb[0].mxu0
        %v660 = vadd.f32 0.0, %v659
        %v661 = vpop.f32.mrb[0].mxu0
        %v662 = vpop.f32.mrb[0].mxu0
        %v663 = vadd.f32 0.0, %v662
        %v664 = vpop.f32.mrb[0].mxu0
        %665 = vmatprep.mubr.bf16.mxu0 0
        %666 = vmatmul.mubr.bf16.gmra.mrb[0].mxu0 %v548
        %v667 = vpop.f32.mrb[0].mxu0
        %v668 = vadd.f32 0.0, %v667
        %v669 = vpop.f32.mrb[0].mxu0
        %v670 = vpop.f32.mrb[0].mxu0
        %v671 = vadd.f32 0.0, %v670
        %v672 = vpop.f32.mrb[0].mxu0
        %673 = vmatprep.mubr.bf16.mxu0 0
        %674 = vmatmul.mubr.bf16.gmra.mrb[0].mxu0 %v549
        %v675 = vpop.f32.mrb[0].mxu0
        %v676 = vadd.f32 0.0, %v675
        %v677 = vpop.f32.mrb[0].mxu0
        %v678 = vpop.f32.mrb[0].mxu0
        %v679 = vadd.f32 0.0, %v678
        %v680 = vpop.f32.mrb[0].mxu0
        %681 = vmatprep.mubr.bf16.mxu0 0
        %682 = vmatmul.mubr.bf16.gmra.mrb[0].mxu0 %v550
        %v683 = vpop.f32.mrb[0].mxu0
        %v684 = vadd.f32 0.0, %v683
        %v685 = vpop.f32.mrb[0].mxu0
        %v686 = vpop.f32.mrb[0].mxu0
        %v687 = vadd.f32 0.0, %v686
        %v688 = vpop.f32.mrb[0].mxu0
        %689 = vmatprep.mubr.bf16.mxu0 0
        %690 = vmatmul.mubr.bf16.gmra.mrb[0].mxu0 %v551
        %v691 = vpop.f32.mrb[0].mxu0
        %v692 = vadd.f32 0.0, %v691
        %v693 = vpop.f32.mrb[0].mxu0
        %v694 = vpop.f32.mrb[0].mxu0
        %v695 = vadd.f32 0.0, %v694
        %v696 = vpop.f32.mrb[0].mxu0
        %697 = vmatprep.mubr.bf16.mxu0 0
        %698 = vmatmul.mubr.bf16.gmra.mrb[0].mxu0 %v552
        %v699 = vpop.f32.mrb[0].mxu0
        %v700 = vadd.f32 0.0, %v699
        %v701 = vpop.f32.mrb[0].mxu0
        %v702 = vpop.f32.mrb[0].mxu0
        %v703 = vadd.f32 0.0, %v702
        %v704 = vpop.f32.mrb[0].mxu0
        %705 = vmatprep.mubr.bf16.mxu0 0
        %706 = vmatmul.mubr.bf16.gmra.mrb[0].mxu0 %v553
        %v707 = vpop.f32.mrb[0].mxu0
        %v708 = vadd.f32 0.0, %v707
        %v709 = vpop.f32.mrb[0].mxu0
        %v710 = vpop.f32.mrb[0].mxu0
        %v711 = vadd.f32 0.0, %v710
        %v712 = vpop.f32.mrb[0].mxu0
        %713 = vmatprep.mubr.bf16.mxu0 0
        %714 = vmatmul.mubr.bf16.gmra.mrb[0].mxu0 %v554
        %v715 = vpop.f32.mrb[0].mxu0
        %v716 = vadd.f32 0.0, %v715
        %v717 = vpop.f32.mrb[0].mxu0
        %v718 = vpop.f32.mrb[0].mxu0
        %v719 = vadd.f32 0.0, %v718
        %v720 = vpop.f32.mrb[0].mxu0
        %721 = vmatprep.mubr.bf16.mxu0 0
        %722 = vmatmul.mubr.bf16.gmra.mrb[0].mxu0 %v555
        %v723 = vpop.f32.mrb[0].mxu0
        %v724 = vadd.f32 0.0, %v723
        %v725 = vpop.f32.mrb[0].mxu0
        %v726 = vpop.f32.mrb[0].mxu0
        %v727 = vadd.f32 0.0, %v726
        %v728 = vpop.f32.mrb[0].mxu0
        %729 = vmatprep.mubr.bf16.mxu0 0
        %730 = vmatmul.mubr.bf16.gmra.mrb[0].mxu0 %v556
        %v731 = vpop.f32.mrb[0].mxu0
        %v732 = vadd.f32 0.0, %v731
        %v733 = vpop.f32.mrb[0].mxu0
        %v734 = vpop.f32.mrb[0].mxu0
        %v735 = vadd.f32 0.0, %v734
        %v736 = vpop.f32.mrb[0].mxu0
        %737 = vmatprep.mubr.bf16.mxu0 0
        %738 = vmatmul.mubr.bf16.gmra.mrb[0].mxu0 %v557
        %v739 = vpop.f32.mrb[0].mxu0
        %v740 = vadd.f32 0.0, %v739
        %v741 = vpop.f32.mrb[0].mxu0
        %v742 = vpop.f32.mrb[0].mxu0
        %v743 = vadd.f32 0.0, %v742
        %v744 = vpop.f32.mrb[0].mxu0
        %745 = vmatprep.mubr.bf16.mxu0 0
        %746 = vmatmul.mubr.bf16.gmra.mrb[0].mxu0 %v558
        %v747 = vpop.f32.mrb[0].mxu0
        %v748 = vadd.f32 0.0, %v747
        %v749 = vpop.f32.mrb[0].mxu0
        %v750 = vpop.f32.mrb[0].mxu0
        %v751 = vadd.f32 0.0, %v750
        %v752 = vpop.f32.mrb[0].mxu0
        %753 = vmatprep.mubr.bf16.mxu0 0
        %754 = vmatmul.mubr.bf16.gmra.mrb[0].mxu0 %v559
        %v755 = vpop.f32.mrb[0].mxu0
        %v756 = vadd.f32 0.0, %v755
        %v757 = vpop.f32.mrb[0].mxu0
        %v758 = vpop.f32.mrb[0].mxu0
        %v759 = vadd.f32 0.0, %v758
        %v760 = vpop.f32.mrb[0].mxu0
        %761 = vmatprep.mubr.bf16.mxu0 0
        %762 = vmatmul.mubr.bf16.gmra.mrb[0].mxu0 %v560
        %v763 = vpop.f32.mrb[0].mxu0
        %v764 = vadd.f32 0.0, %v763
        %v765 = vpop.f32.mrb[0].mxu0
        %v766 = vpop.f32.mrb[0].mxu0
        %v767 = vadd.f32 0.0, %v766
        %v768 = vpop.f32.mrb[0].mxu0
        %769 = vmatprep.mubr.bf16.mxu0 0
        %770 = vmatmul.mubr.bf16.gmra.mrb[0].mxu0 %v561
        %v771 = vpop.f32.mrb[0].mxu0
        %v772 = vadd.f32 0.0, %v771
        %v773 = vpop.f32.mrb[0].mxu0
        %v774 = vpop.f32.mrb[0].mxu0
        %v775 = vadd.f32 0.0, %v774
        %v776 = vpop.f32.mrb[0].mxu0
        %777 = vmatprep.mubr.bf16.mxu0 0
        %778 = vmatmul.mubr.bf16.gmra.mrb[0].mxu0 %v562
        %v779 = vpop.f32.mrb[0].mxu0
        %v780 = vadd.f32 0.0, %v779
        %v781 = vpop.f32.mrb[0].mxu0
        %v782 = vpop.f32.mrb[0].mxu0
        %v783 = vadd.f32 0.0, %v782
        %v784 = vpop.f32.mrb[0].mxu0
        %785 = vmatprep.mubr.bf16.mxu0 0
        %786 = vmatmul.mubr.bf16.gmra.mrb[0].mxu0 %v563
        %v787 = vpop.f32.mrb[0].mxu0
        %v788 = vadd.f32 0.0, %v787
        %v789 = vpop.f32.mrb[0].mxu0
        %v790 = vpop.f32.mrb[0].mxu0
        %v791 = vadd.f32 0.0, %v790
        %v792 = vpop.f32.mrb[0].mxu0
        %793 = vmatprep.mubr.bf16.mxu0 0
        %794 = vmatmul.mubr.bf16.gmra.mrb[0].mxu0 %v564
        %v795 = vpop.f32.mrb[0].mxu0
        %v796 = vadd.f32 0.0, %v795
        %v797 = vpop.f32.mrb[0].mxu0
        %v798 = vpop.f32.mrb[0].mxu0
        %v799 = vadd.f32 0.0, %v798
        %v800 = vpop.f32.mrb[0].mxu0
        %801 = vmatprep.mubr.bf16.mxu0 0
        %802 = vmatmul.mubr.bf16.gmra.mrb[0].mxu0 %v565
        %v803 = vpop.f32.mrb[0].mxu0
        %v804 = vadd.f32 0.0, %v803
        %v805 = vpop.f32.mrb[0].mxu0
        %v806 = vpop.f32.mrb[0].mxu0
        %v807 = vadd.f32 0.0, %v806
        %v808 = vpop.f32.mrb[0].mxu0
        %809 = vmatprep.mubr.bf16.mxu0 0
        %810 = vmatmul.mubr.bf16.gmra.mrb[0].mxu0 %v566
        %v811 = vpop.f32.mrb[0].mxu0
        %v812 = vadd.f32 0.0, %v811
        %v813 = vpop.f32.mrb[0].mxu0
        %v814 = vpop.f32.mrb[0].mxu0
        %v815 = vadd.f32 0.0, %v814
        %v816 = vpop.f32.mrb[0].mxu0
        %817 = vmatprep.mubr.bf16.mxu0 0
        %818 = vmatmul.mubr.bf16.gmra.mrb[0].mxu0 %v567
        %v819 = vpop.f32.mrb[0].mxu0
        %v820 = vadd.f32 0.0, %v819
        %v821 = vpop.f32.mrb[0].mxu0
        %v822 = vpop.f32.mrb[0].mxu0
        %v823 = vpop.f32.mrb[0].mxu0
        %824 = vdwg.mxu0
        %825 = vxpose.xlu0.b32.start [1/16] %v628, 128
        %826 = vxpose.xlu0.b32.cont [2/16] %v631, 128
        %827 = vxpose.xlu0.b32.cont [3/16] 0.0, 128
        %828 = vxpose.xlu0.b32.cont [4/16] 0.0, 128
        %829 = vxpose.xlu0.b32.cont [5/16] 0.0, 128
        %830 = vxpose.xlu0.b32.cont [6/16] 0.0, 128
        %831 = vxpose.xlu0.b32.cont [7/16] 0.0, 128
        %832 = vxpose.xlu0.b32.cont [8/16] 0.0, 128
        %833 = vxpose.xlu0.b32.cont [9/16] 0.0, 128
        %834 = vxpose.xlu0.b32.cont [10/16] 0.0, 128
        %835 = vxpose.xlu0.b32.cont [11/16] 0.0, 128
        %836 = vxpose.xlu0.b32.cont [12/16] 0.0, 128
        %837 = vxpose.xlu0.b32.cont [13/16] 0.0, 128
        %838 = vxpose.xlu0.b32.cont [14/16] 0.0, 128
        %839 = vxpose.xlu0.b32.cont [15/16] 0.0, 128
        %840 = vxpose.xlu0.b32.end [16/16] 0.0, 128
        %v841 = vpop.trf.xlu0
        %v842 = vpop.trf.xlu0
        %v843 = vpop.trf.xlu0
        %v844 = vpop.trf.xlu0
        %v845 = vpop.trf.xlu0
        %v846 = vpop.trf.xlu0
        %v847 = vpop.trf.xlu0
        %v848 = vpop.trf.xlu0
        %v849 = vpop.trf.xlu0
        %v850 = vpop.trf.xlu0
        %v851 = vpop.trf.xlu0
        %v852 = vpop.trf.xlu0
        %v853 = vpop.trf.xlu0
        %v854 = vpop.trf.xlu0
        %v855 = vpop.trf.xlu0
        %v856 = vpop.trf.xlu0
        %857 = vxpose.xlu0.b32.start [1/16] %v636, 128
        %858 = vxpose.xlu0.b32.cont [2/16] %v639, 128
        %859 = vxpose.xlu0.b32.cont [3/16] 0.0, 128
        %860 = vxpose.xlu0.b32.cont [4/16] 0.0, 128
        %861 = vxpose.xlu0.b32.cont [5/16] 0.0, 128
        %862 = vxpose.xlu0.b32.cont [6/16] 0.0, 128
        %863 = vxpose.xlu0.b32.cont [7/16] 0.0, 128
        %864 = vxpose.xlu0.b32.cont [8/16] 0.0, 128
        %865 = vxpose.xlu0.b32.cont [9/16] 0.0, 128
        %866 = vxpose.xlu0.b32.cont [10/16] 0.0, 128
        %867 = vxpose.xlu0.b32.cont [11/16] 0.0, 128
        %868 = vxpose.xlu0.b32.cont [12/16] 0.0, 128
        %869 = vxpose.xlu0.b32.cont [13/16] 0.0, 128
        %870 = vxpose.xlu0.b32.cont [14/16] 0.0, 128
        %871 = vxpose.xlu0.b32.cont [15/16] 0.0, 128
        %872 = vxpose.xlu0.b32.end [16/16] 0.0, 128
        %v873 = vpop.trf.xlu0
        %v874 = vpop.trf.xlu0
        %v875 = vpop.trf.xlu0
        %v876 = vpop.trf.xlu0
        %v877 = vpop.trf.xlu0
        %v878 = vpop.trf.xlu0
        %v879 = vpop.trf.xlu0
        %v880 = vpop.trf.xlu0
        %v881 = vpop.trf.xlu0
        %v882 = vpop.trf.xlu0
        %v883 = vpop.trf.xlu0
        %v884 = vpop.trf.xlu0
        %v885 = vpop.trf.xlu0
        %v886 = vpop.trf.xlu0
        %v887 = vpop.trf.xlu0
        %v888 = vpop.trf.xlu0
        %889 = vxpose.xlu0.b32.start [1/16] %v644, 128
        %890 = vxpose.xlu0.b32.cont [2/16] %v647, 128
        %891 = vxpose.xlu0.b32.cont [3/16] 0.0, 128
        %892 = vxpose.xlu0.b32.cont [4/16] 0.0, 128
        %893 = vxpose.xlu0.b32.cont [5/16] 0.0, 128
        %894 = vxpose.xlu0.b32.cont [6/16] 0.0, 128
        %895 = vxpose.xlu0.b32.cont [7/16] 0.0, 128
        %896 = vxpose.xlu0.b32.cont [8/16] 0.0, 128
        %897 = vxpose.xlu0.b32.cont [9/16] 0.0, 128
        %898 = vxpose.xlu0.b32.cont [10/16] 0.0, 128
        %899 = vxpose.xlu0.b32.cont [11/16] 0.0, 128
        %900 = vxpose.xlu0.b32.cont [12/16] 0.0, 128
        %901 = vxpose.xlu0.b32.cont [13/16] 0.0, 128
        %902 = vxpose.xlu0.b32.cont [14/16] 0.0, 128
        %903 = vxpose.xlu0.b32.cont [15/16] 0.0, 128
        %904 = vxpose.xlu0.b32.end [16/16] 0.0, 128
        %v905 = vpop.trf.xlu0
        %v906 = vpop.trf.xlu0
        %v907 = vpop.trf.xlu0
        %v908 = vpop.trf.xlu0
        %v909 = vpop.trf.xlu0
        %v910 = vpop.trf.xlu0
        %v911 = vpop.trf.xlu0
        %v912 = vpop.trf.xlu0
        %v913 = vpop.trf.xlu0
        %v914 = vpop.trf.xlu0
        %v915 = vpop.trf.xlu0
        %v916 = vpop.trf.xlu0
        %v917 = vpop.trf.xlu0
        %v918 = vpop.trf.xlu0
        %v919 = vpop.trf.xlu0
        %v920 = vpop.trf.xlu0
        %921 = vxpose.xlu0.b32.start [1/16] %v652, 128
        %922 = vxpose.xlu0.b32.cont [2/16] %v655, 128
        %923 = vxpose.xlu0.b32.cont [3/16] 0.0, 128
        %924 = vxpose.xlu0.b32.cont [4/16] 0.0, 128
        %925 = vxpose.xlu0.b32.cont [5/16] 0.0, 128
        %926 = vxpose.xlu0.b32.cont [6/16] 0.0, 128
        %927 = vxpose.xlu0.b32.cont [7/16] 0.0, 128
        %928 = vxpose.xlu0.b32.cont [8/16] 0.0, 128
        %929 = vxpose.xlu0.b32.cont [9/16] 0.0, 128
        %930 = vxpose.xlu0.b32.cont [10/16] 0.0, 128
        %931 = vxpose.xlu0.b32.cont [11/16] 0.0, 128
        %932 = vxpose.xlu0.b32.cont [12/16] 0.0, 128
        %933 = vxpose.xlu0.b32.cont [13/16] 0.0, 128
        %934 = vxpose.xlu0.b32.cont [14/16] 0.0, 128
        %935 = vxpose.xlu0.b32.cont [15/16] 0.0, 128
        %936 = vxpose.xlu0.b32.end [16/16] 0.0, 128
        %v937 = vpop.trf.xlu0
        %v938 = vpop.trf.xlu0
        %v939 = vpop.trf.xlu0
        %v940 = vpop.trf.xlu0
        %v941 = vpop.trf.xlu0
        %v942 = vpop.trf.xlu0
        %v943 = vpop.trf.xlu0
        %v944 = vpop.trf.xlu0
        %v945 = vpop.trf.xlu0
        %v946 = vpop.trf.xlu0
        %v947 = vpop.trf.xlu0
        %v948 = vpop.trf.xlu0
        %v949 = vpop.trf.xlu0
        %v950 = vpop.trf.xlu0
        %v951 = vpop.trf.xlu0
        %v952 = vpop.trf.xlu0
        %953 = vxpose.xlu0.b32.start [1/16] %v660, 128
        %954 = vxpose.xlu0.b32.cont [2/16] %v663, 128
        %955 = vxpose.xlu0.b32.cont [3/16] 0.0, 128
        %956 = vxpose.xlu0.b32.cont [4/16] 0.0, 128
        %957 = vxpose.xlu0.b32.cont [5/16] 0.0, 128
        %958 = vxpose.xlu0.b32.cont [6/16] 0.0, 128
        %959 = vxpose.xlu0.b32.cont [7/16] 0.0, 128
        %960 = vxpose.xlu0.b32.cont [8/16] 0.0, 128
        %961 = vxpose.xlu0.b32.cont [9/16] 0.0, 128
        %962 = vxpose.xlu0.b32.cont [10/16] 0.0, 128
        %963 = vxpose.xlu0.b32.cont [11/16] 0.0, 128
        %964 = vxpose.xlu0.b32.cont [12/16] 0.0, 128
        %965 = vxpose.xlu0.b32.cont [13/16] 0.0, 128
        %966 = vxpose.xlu0.b32.cont [14/16] 0.0, 128
        %967 = vxpose.xlu0.b32.cont [15/16] 0.0, 128
        %968 = vxpose.xlu0.b32.end [16/16] 0.0, 128
        %v969 = vpop.trf.xlu0
        %v970 = vpop.trf.xlu0
        %v971 = vpop.trf.xlu0
        %v972 = vpop.trf.xlu0
        %v973 = vpop.trf.xlu0
        %v974 = vpop.trf.xlu0
        %v975 = vpop.trf.xlu0
        %v976 = vpop.trf.xlu0
        %v977 = vpop.trf.xlu0
        %v978 = vpop.trf.xlu0
        %v979 = vpop.trf.xlu0
        %v980 = vpop.trf.xlu0
        %v981 = vpop.trf.xlu0
        %v982 = vpop.trf.xlu0
        %v983 = vpop.trf.xlu0
        %v984 = vpop.trf.xlu0
        %985 = vxpose.xlu0.b32.start [1/16] %v668, 128
        %986 = vxpose.xlu0.b32.cont [2/16] %v671, 128
        %987 = vxpose.xlu0.b32.cont [3/16] 0.0, 128
        %988 = vxpose.xlu0.b32.cont [4/16] 0.0, 128
        %989 = vxpose.xlu0.b32.cont [5/16] 0.0, 128
        %990 = vxpose.xlu0.b32.cont [6/16] 0.0, 128
        %991 = vxpose.xlu0.b32.cont [7/16] 0.0, 128
        %992 = vxpose.xlu0.b32.cont [8/16] 0.0, 128
        %993 = vxpose.xlu0.b32.cont [9/16] 0.0, 128
        %994 = vxpose.xlu0.b32.cont [10/16] 0.0, 128
        %995 = vxpose.xlu0.b32.cont [11/16] 0.0, 128
        %996 = vxpose.xlu0.b32.cont [12/16] 0.0, 128
        %997 = vxpose.xlu0.b32.cont [13/16] 0.0, 128
        %998 = vxpose.xlu0.b32.cont [14/16] 0.0, 128
        %999 = vxpose.xlu0.b32.cont [15/16] 0.0, 128
        %1000 = vxpose.xlu0.b32.end [16/16] 0.0, 128
        %v1001 = vpop.trf.xlu0
        %v1002 = vpop.trf.xlu0
        %v1003 = vpop.trf.xlu0
        %v1004 = vpop.trf.xlu0
        %v1005 = vpop.trf.xlu0
        %v1006 = vpop.trf.xlu0
        %v1007 = vpop.trf.xlu0
        %v1008 = vpop.trf.xlu0
        %v1009 = vpop.trf.xlu0
        %v1010 = vpop.trf.xlu0
        %v1011 = vpop.trf.xlu0
        %v1012 = vpop.trf.xlu0
        %v1013 = vpop.trf.xlu0
        %v1014 = vpop.trf.xlu0
        %v1015 = vpop.trf.xlu0
        %v1016 = vpop.trf.xlu0
        %1017 = vxpose.xlu0.b32.start [1/16] %v676, 128
        %1018 = vxpose.xlu0.b32.cont [2/16] %v679, 128
        %1019 = vxpose.xlu0.b32.cont [3/16] 0.0, 128
        %1020 = vxpose.xlu0.b32.cont [4/16] 0.0, 128
        %1021 = vxpose.xlu0.b32.cont [5/16] 0.0, 128
        %1022 = vxpose.xlu0.b32.cont [6/16] 0.0, 128
        %1023 = vxpose.xlu0.b32.cont [7/16] 0.0, 128
        %1024 = vxpose.xlu0.b32.cont [8/16] 0.0, 128
        %1025 = vxpose.xlu0.b32.cont [9/16] 0.0, 128
        %1026 = vxpose.xlu0.b32.cont [10/16] 0.0, 128
        %1027 = vxpose.xlu0.b32.cont [11/16] 0.0, 128
        %1028 = vxpose.xlu0.b32.cont [12/16] 0.0, 128
        %1029 = vxpose.xlu0.b32.cont [13/16] 0.0, 128
        %1030 = vxpose.xlu0.b32.cont [14/16] 0.0, 128
        %1031 = vxpose.xlu0.b32.cont [15/16] 0.0, 128
        %1032 = vxpose.xlu0.b32.end [16/16] 0.0, 128
        %v1033 = vpop.trf.xlu0
        %v1034 = vpop.trf.xlu0
        %v1035 = vpop.trf.xlu0
        %v1036 = vpop.trf.xlu0
        %v1037 = vpop.trf.xlu0
        %v1038 = vpop.trf.xlu0
        %v1039 = vpop.trf.xlu0
        %v1040 = vpop.trf.xlu0
        %v1041 = vpop.trf.xlu0
        %v1042 = vpop.trf.xlu0
        %v1043 = vpop.trf.xlu0
        %v1044 = vpop.trf.xlu0
        %v1045 = vpop.trf.xlu0
        %v1046 = vpop.trf.xlu0
        %v1047 = vpop.trf.xlu0
        %v1048 = vpop.trf.xlu0
        %1049 = vxpose.xlu0.b32.start [1/16] %v684, 128
        %1050 = vxpose.xlu0.b32.cont [2/16] %v687, 128
        %1051 = vxpose.xlu0.b32.cont [3/16] 0.0, 128
        %1052 = vxpose.xlu0.b32.cont [4/16] 0.0, 128
        %1053 = vxpose.xlu0.b32.cont [5/16] 0.0, 128
        %1054 = vxpose.xlu0.b32.cont [6/16] 0.0, 128
        %1055 = vxpose.xlu0.b32.cont [7/16] 0.0, 128
        %1056 = vxpose.xlu0.b32.cont [8/16] 0.0, 128
        %1057 = vxpose.xlu0.b32.cont [9/16] 0.0, 128
        %1058 = vxpose.xlu0.b32.cont [10/16] 0.0, 128
        %1059 = vxpose.xlu0.b32.cont [11/16] 0.0, 128
        %1060 = vxpose.xlu0.b32.cont [12/16] 0.0, 128
        %1061 = vxpose.xlu0.b32.cont [13/16] 0.0, 128
        %1062 = vxpose.xlu0.b32.cont [14/16] 0.0, 128
        %1063 = vxpose.xlu0.b32.cont [15/16] 0.0, 128
        %1064 = vxpose.xlu0.b32.end [16/16] 0.0, 128
        %v1065 = vpop.trf.xlu0
        %v1066 = vpop.trf.xlu0
        %v1067 = vpop.trf.xlu0
        %v1068 = vpop.trf.xlu0
        %v1069 = vpop.trf.xlu0
        %v1070 = vpop.trf.xlu0
        %v1071 = vpop.trf.xlu0
        %v1072 = vpop.trf.xlu0
        %v1073 = vpop.trf.xlu0
        %v1074 = vpop.trf.xlu0
        %v1075 = vpop.trf.xlu0
        %v1076 = vpop.trf.xlu0
        %v1077 = vpop.trf.xlu0
        %v1078 = vpop.trf.xlu0
        %v1079 = vpop.trf.xlu0
        %v1080 = vpop.trf.xlu0
        %v1081 = vpack.c.bf16 %v842, %v841
        %v1082 = vpack.c.bf16 %v844, %v843
        %v1083 = vpack.c.bf16 %v846, %v845
        %v1084 = vpack.c.bf16 %v848, %v847
        %v1085 = vpack.c.bf16 %v850, %v849
        %v1086 = vpack.c.bf16 %v852, %v851
        %v1087 = vpack.c.bf16 %v854, %v853
        %v1088 = vpack.c.bf16 %v856, %v855
        %v1089 = vpack.c.bf16 %v874, %v873
        %v1090 = vpack.c.bf16 %v876, %v875
        %v1091 = vpack.c.bf16 %v878, %v877
        %v1092 = vpack.c.bf16 %v880, %v879
        %v1093 = vpack.c.bf16 %v882, %v881
        %v1094 = vpack.c.bf16 %v884, %v883
        %v1095 = vpack.c.bf16 %v886, %v885
        %v1096 = vpack.c.bf16 %v888, %v887
        %v1097 = vpack.c.bf16 %v906, %v905
        %v1098 = vpack.c.bf16 %v908, %v907
        %v1099 = vpack.c.bf16 %v910, %v909
        %v1100 = vpack.c.bf16 %v912, %v911
        %v1101 = vpack.c.bf16 %v914, %v913
        %v1102 = vpack.c.bf16 %v916, %v915
        %v1103 = vpack.c.bf16 %v918, %v917
        %v1104 = vpack.c.bf16 %v920, %v919
        %v1105 = vpack.c.bf16 %v938, %v937
        %v1106 = vpack.c.bf16 %v940, %v939
        %v1107 = vpack.c.bf16 %v942, %v941
        %v1108 = vpack.c.bf16 %v944, %v943
        %v1109 = vpack.c.bf16 %v946, %v945
        %v1110 = vpack.c.bf16 %v948, %v947
        %v1111 = vpack.c.bf16 %v950, %v949
        %v1112 = vpack.c.bf16 %v952, %v951
        %v1113 = vpack.c.bf16 %v970, %v969
        %v1114 = vpack.c.bf16 %v972, %v971
        %v1115 = vpack.c.bf16 %v974, %v973
        %v1116 = vpack.c.bf16 %v976, %v975
        %v1117 = vpack.c.bf16 %v978, %v977
        %v1118 = vpack.c.bf16 %v980, %v979
        %v1119 = vpack.c.bf16 %v982, %v981
        %v1120 = vpack.c.bf16 %v984, %v983
        %v1121 = vpack.c.bf16 %v1002, %v1001
        %v1122 = vpack.c.bf16 %v1004, %v1003
        %v1123 = vpack.c.bf16 %v1006, %v1005
        %v1124 = vpack.c.bf16 %v1008, %v1007
        %v1125 = vpack.c.bf16 %v1010, %v1009
        %v1126 = vpack.c.bf16 %v1012, %v1011
        %v1127 = vpack.c.bf16 %v1014, %v1013
        %v1128 = vpack.c.bf16 %v1016, %v1015
        %v1129 = vpack.c.bf16 %v1034, %v1033
        %v1130 = vpack.c.bf16 %v1036, %v1035
        %v1131 = vpack.c.bf16 %v1038, %v1037
        %v1132 = vpack.c.bf16 %v1040, %v1039
        %v1133 = vpack.c.bf16 %v1042, %v1041
        %v1134 = vpack.c.bf16 %v1044, %v1043
        %v1135 = vpack.c.bf16 %v1046, %v1045
        %v1136 = vpack.c.bf16 %v1048, %v1047
        %v1137 = vpack.c.bf16 %v1066, %v1065
        %v1138 = vpack.c.bf16 %v1068, %v1067
        %v1139 = vpack.c.bf16 %v1070, %v1069
        %v1140 = vpack.c.bf16 %v1072, %v1071
        %v1141 = vpack.c.bf16 %v1074, %v1073
        %v1142 = vpack.c.bf16 %v1076, %v1075
        %v1143 = vpack.c.bf16 %v1078, %v1077
        %v1144 = vpack.c.bf16 %v1080, %v1079
        %v1145 = vpack.c.bf16 %v695, %v692
        %v1146 = vpack.c.bf16 %v703, %v700
        %v1147 = vpack.c.bf16 %v711, %v708
        %v1148 = vpack.c.bf16 %v719, %v716
        %v1149 = vpack.c.bf16 %v727, %v724
        %v1150 = vpack.c.bf16 %v735, %v732
        %v1151 = vpack.c.bf16 %v743, %v740
        %v1152 = vpack.c.bf16 %v751, %v748
        %v1153 = vld [vmem:[%s2] sm:$0xf]
        %v1154 = vld [vmem:[%s2 + $0x4] sm:$0xf]
        %v1155 = vld [vmem:[%s2 + $0x8] sm:$0xf]
        %v1156 = vld [vmem:[%s2 + $0xc] sm:$0xf]
        %v1157 = vld [vmem:[%s2 + $0x10] sm:$0xf]
        %v1158 = vld [vmem:[%s2 + $0x14] sm:$0xf]
        %v1159 = vld [vmem:[%s2 + $0x18] sm:$0xf]
        %v1160 = vld [vmem:[%s2 + $0x1c] sm:$0xf]
        %v1161 = vld [vmem:[%s2 + $0x20] sm:$0xf]
        %v1162 = vld [vmem:[%s2 + $0x24] sm:$0xf]
        %v1163 = vld [vmem:[%s2 + $0x28] sm:$0xf]
        %v1164 = vld [vmem:[%s2 + $0x2c] sm:$0xf]
        %v1165 = vld [vmem:[%s2 + $0x30] sm:$0xf]
        %v1166 = vld [vmem:[%s2 + $0x34] sm:$0xf]
        %v1167 = vld [vmem:[%s2 + $0x38] sm:$0xf]
        %v1168 = vld [vmem:[%s2 + $0x3c] sm:$0xf]
        %v1185 = vunpack.c.l.b16 %v1153
        %v1186 = vunpack.c.l.b16 %v1154
        %v1187 = vunpack.c.l.b16 %v1155
        %v1188 = vunpack.c.l.b16 %v1156
        %v1189 = vunpack.c.l.b16 %v1157
        %v1190 = vunpack.c.l.b16 %v1158
        %v1191 = vunpack.c.l.b16 %v1159
        %v1192 = vunpack.c.l.b16 %v1160
        %v1193 = vunpack.c.l.b16 %v1161
        %v1194 = vunpack.c.l.b16 %v1162
        %v1195 = vunpack.c.l.b16 %v1163
        %v1196 = vunpack.c.l.b16 %v1164
        %v1197 = vunpack.c.l.b16 %v1165
        %v1198 = vunpack.c.l.b16 %v1166
        %v1199 = vunpack.c.l.b16 %v1167
        %v1200 = vunpack.c.l.b16 %v1168
        %v1201 = vpack.c.b16 %v1186, %v1185
        %v1202 = vpack.c.b16 %v1188, %v1187
        %v1203 = vpack.c.b16 %v1190, %v1189
        %v1204 = vpack.c.b16 %v1192, %v1191
        %v1205 = vpack.c.b16 %v1194, %v1193
        %v1206 = vpack.c.b16 %v1196, %v1195
        %v1207 = vpack.c.b16 %v1198, %v1197
        %v1208 = vpack.c.b16 %v1200, %v1199
        %vm1217 = vcmask 130048
        %v1219 = vsel %vm1217, %v1081, 0
        %v1222 = vsel %vm1217, %v1082, 0
        %v1225 = vsel %vm1217, %v1083, 0
        %v1228 = vsel %vm1217, %v1084, 0
        %v1231 = vsel %vm1217, %v1085, 0
        %v1234 = vsel %vm1217, %v1086, 0
        %v1237 = vsel %vm1217, %v1087, 0
        %v1240 = vsel %vm1217, %v1088, 0
        %1242 = vmatprep.subr.bf16.mxu0 %v1201
        %1243 = vmatpush1.bf16.msra.mxu0 %v1145
        %1244 = vmatprep.subr.bf16.mxu0 0
        %1245 = vmatpush1.bf16.msra.mxu0 0
        %1246 = vmatprep.subr.bf16.mxu0 0
        %1247 = vmatpush1.bf16.msra.mxu0 0
        %1248 = vmatprep.subr.bf16.mxu0 0
        %1249 = vmatpush1.bf16.msra.mxu0 0
        %1250 = vmatprep.subr.bf16.mxu0 0
        %1251 = vmatpush1.bf16.msra.mxu0 0
        %1252 = vmatprep.subr.bf16.mxu0 0
        %1253 = vmatpush1.bf16.msra.mxu0 0
        %1254 = vmatprep.subr.bf16.mxu0 0
        %1255 = vmatpush1.bf16.msra.mxu0 0
        %1256 = vmatprep.subr.bf16.mxu0 0
        %1257 = vmatpush1.bf16.msra.mxu0 0
        %1258 = vmatprep.subr.bf16.mxu0 0
        %1259 = vmatpush1.bf16.msra.mxu0 0
        %1260 = vmatprep.subr.bf16.mxu0 0
        %1261 = vmatpush1.bf16.msra.mxu0 0
        %1262 = vmatprep.subr.bf16.mxu0 0
        %1263 = vmatpush1.bf16.msra.mxu0 0
        %1264 = vmatprep.subr.bf16.mxu0 0
        %1265 = vmatpush1.bf16.msra.mxu0 0
        %1266 = vmatprep.subr.bf16.mxu0 0
        %1267 = vmatpush1.bf16.msra.mxu0 0
        %1268 = vmatprep.subr.bf16.mxu0 0
        %1269 = vmatpush1.bf16.msra.mxu0 0
        %1270 = vmatprep.subr.bf16.mxu0 0
        %1271 = vmatpush1.bf16.msra.mxu0 0
        %1272 = vmatprep.subr.bf16.mxu0 0
        %1273 = vmatpush1.bf16.msra.mxu0 0
        %1274 = vmatprep.mubr.bf16.mxu0 0
        %1275 = vmatmul.mubr.bf16.gmra.mrb[0].mxu0 %v1219
        %v1276 = vpop.f32.mrb[0].mxu0
        %v1277 = vadd.f32 0.0, %v1276
        %v1278 = vpop.f32.mrb[0].mxu0
        %v1279 = vadd.f32 0.0, %v1278
        %v1280 = vpop.f32.mrb[0].mxu0
        %v1281 = vadd.f32 0.0, %v1280
        %v1282 = vpop.f32.mrb[0].mxu0
        %v1283 = vadd.f32 0.0, %v1282
        %1284 = vmatprep.mubr.bf16.mxu0 0
        %1285 = vmatmul.mubr.bf16.gmra.mrb[0].mxu0 %v1222
        %v1286 = vpop.f32.mrb[0].mxu0
        %v1287 = vadd.f32 0.0, %v1286
        %v1288 = vpop.f32.mrb[0].mxu0
        %v1289 = vadd.f32 0.0, %v1288
        %v1290 = vpop.f32.mrb[0].mxu0
        %v1291 = vadd.f32 0.0, %v1290
        %v1292 = vpop.f32.mrb[0].mxu0
        %v1293 = vadd.f32 0.0, %v1292
        %1294 = vmatprep.mubr.bf16.mxu0 0
        %1295 = vmatmul.mubr.bf16.gmra.mrb[0].mxu0 %v1225
        %v1296 = vpop.f32.mrb[0].mxu0
        %v1297 = vadd.f32 0.0, %v1296
        %v1298 = vpop.f32.mrb[0].mxu0
        %v1299 = vadd.f32 0.0, %v1298
        %v1300 = vpop.f32.mrb[0].mxu0
        %v1301 = vadd.f32 0.0, %v1300
        %v1302 = vpop.f32.mrb[0].mxu0
        %v1303 = vadd.f32 0.0, %v1302
        %1304 = vmatprep.mubr.bf16.mxu0 0
        %1305 = vmatmul.mubr.bf16.gmra.mrb[0].mxu0 %v1228
        %v1306 = vpop.f32.mrb[0].mxu0
        %v1307 = vadd.f32 0.0, %v1306
        %v1308 = vpop.f32.mrb[0].mxu0
        %v1309 = vadd.f32 0.0, %v1308
        %v1310 = vpop.f32.mrb[0].mxu0
        %v1311 = vadd.f32 0.0, %v1310
        %v1312 = vpop.f32.mrb[0].mxu0
        %v1313 = vadd.f32 0.0, %v1312
        %1314 = vmatprep.mubr.bf16.mxu0 0
        %1315 = vmatmul.mubr.bf16.gmra.mrb[0].mxu0 %v1231
        %v1316 = vpop.f32.mrb[0].mxu0
        %v1317 = vadd.f32 0.0, %v1316
        %v1318 = vpop.f32.mrb[0].mxu0
        %v1319 = vadd.f32 0.0, %v1318
        %v1320 = vpop.f32.mrb[0].mxu0
        %v1321 = vadd.f32 0.0, %v1320
        %v1322 = vpop.f32.mrb[0].mxu0
        %v1323 = vadd.f32 0.0, %v1322
        %1324 = vmatprep.mubr.bf16.mxu0 0
        %1325 = vmatmul.mubr.bf16.gmra.mrb[0].mxu0 %v1234
        %v1326 = vpop.f32.mrb[0].mxu0
        %v1327 = vadd.f32 0.0, %v1326
        %v1328 = vpop.f32.mrb[0].mxu0
        %v1329 = vadd.f32 0.0, %v1328
        %v1330 = vpop.f32.mrb[0].mxu0
        %v1331 = vadd.f32 0.0, %v1330
        %v1332 = vpop.f32.mrb[0].mxu0
        %v1333 = vadd.f32 0.0, %v1332
        %1334 = vmatprep.mubr.bf16.mxu0 0
        %1335 = vmatmul.mubr.bf16.gmra.mrb[0].mxu0 %v1237
        %v1336 = vpop.f32.mrb[0].mxu0
        %v1337 = vadd.f32 0.0, %v1336
        %v1338 = vpop.f32.mrb[0].mxu0
        %v1339 = vadd.f32 0.0, %v1338
        %v1340 = vpop.f32.mrb[0].mxu0
        %v1341 = vadd.f32 0.0, %v1340
        %v1342 = vpop.f32.mrb[0].mxu0
        %v1343 = vadd.f32 0.0, %v1342
        %1344 = vmatprep.mubr.bf16.mxu0 0
        %1345 = vmatmul.mubr.bf16.gmra.mrb[0].mxu0 %v1240
        %v1346 = vpop.f32.mrb[0].mxu0
        %v1347 = vadd.f32 0.0, %v1346
        %v1348 = vpop.f32.mrb[0].mxu0
        %v1349 = vadd.f32 0.0, %v1348
        %v1350 = vpop.f32.mrb[0].mxu0
        %v1351 = vadd.f32 0.0, %v1350
        %v1352 = vpop.f32.mrb[0].mxu0
        %v1353 = vadd.f32 0.0, %v1352
        %1354 = vdwg.mxu0
        %v1356 = vsel %vm1217, %v1089, 0
        %v1359 = vsel %vm1217, %v1090, 0
        %v1362 = vsel %vm1217, %v1091, 0
        %v1365 = vsel %vm1217, %v1092, 0
        %v1368 = vsel %vm1217, %v1093, 0
        %v1371 = vsel %vm1217, %v1094, 0
        %v1374 = vsel %vm1217, %v1095, 0
        %v1377 = vsel %vm1217, %v1096, 0
        %1379 = vmatprep.subr.bf16.mxu0 %v1202
        %1380 = vmatpush1.bf16.msra.mxu0 %v1146
        %1381 = vmatprep.subr.bf16.mxu0 0
        %1382 = vmatpush1.bf16.msra.mxu0 0
        %1383 = vmatprep.subr.bf16.mxu0 0
        %1384 = vmatpush1.bf16.msra.mxu0 0
        %1385 = vmatprep.subr.bf16.mxu0 0
        %1386 = vmatpush1.bf16.msra.mxu0 0
        %1387 = vmatprep.subr.bf16.mxu0 0
        %1388 = vmatpush1.bf16.msra.mxu0 0
        %1389 = vmatprep.subr.bf16.mxu0 0
        %1390 = vmatpush1.bf16.msra.mxu0 0
        %1391 = vmatprep.subr.bf16.mxu0 0
        %1392 = vmatpush1.bf16.msra.mxu0 0
        %1393 = vmatprep.subr.bf16.mxu0 0
        %1394 = vmatpush1.bf16.msra.mxu0 0
        %1395 = vmatprep.subr.bf16.mxu0 0
        %1396 = vmatpush1.bf16.msra.mxu0 0
        %1397 = vmatprep.subr.bf16.mxu0 0
        %1398 = vmatpush1.bf16.msra.mxu0 0
        %1399 = vmatprep.subr.bf16.mxu0 0
        %1400 = vmatpush1.bf16.msra.mxu0 0
        %1401 = vmatprep.subr.bf16.mxu0 0
        %1402 = vmatpush1.bf16.msra.mxu0 0
        %1403 = vmatprep.subr.bf16.mxu0 0
        %1404 = vmatpush1.bf16.msra.mxu0 0
        %1405 = vmatprep.subr.bf16.mxu0 0
        %1406 = vmatpush1.bf16.msra.mxu0 0
        %1407 = vmatprep.subr.bf16.mxu0 0
        %1408 = vmatpush1.bf16.msra.mxu0 0
        %1409 = vmatprep.subr.bf16.mxu0 0
        %1410 = vmatpush1.bf16.msra.mxu0 0
        %1411 = vmatprep.mubr.bf16.mxu0 0
        %1412 = vmatmul.mubr.bf16.gmra.mrb[0].mxu0 %v1356
        %v1413 = vpop.f32.mrb[0].mxu0
        %v1414 = vadd.f32 0.0, %v1413
        %v1415 = vpop.f32.mrb[0].mxu0
        %v1416 = vadd.f32 0.0, %v1415
        %v1417 = vpop.f32.mrb[0].mxu0
        %v1418 = vadd.f32 0.0, %v1417
        %v1419 = vpop.f32.mrb[0].mxu0
        %v1420 = vadd.f32 0.0, %v1419
        %1421 = vmatprep.mubr.bf16.mxu0 0
        %1422 = vmatmul.mubr.bf16.gmra.mrb[0].mxu0 %v1359
        %v1423 = vpop.f32.mrb[0].mxu0
        %v1424 = vadd.f32 0.0, %v1423
        %v1425 = vpop.f32.mrb[0].mxu0
        %v1426 = vadd.f32 0.0, %v1425
        %v1427 = vpop.f32.mrb[0].mxu0
        %v1428 = vadd.f32 0.0, %v1427
        %v1429 = vpop.f32.mrb[0].mxu0
        %v1430 = vadd.f32 0.0, %v1429
        %1431 = vmatprep.mubr.bf16.mxu0 0
        %1432 = vmatmul.mubr.bf16.gmra.mrb[0].mxu0 %v1362
        %v1433 = vpop.f32.mrb[0].mxu0
        %v1434 = vadd.f32 0.0, %v1433
        %v1435 = vpop.f32.mrb[0].mxu0
        %v1436 = vadd.f32 0.0, %v1435
        %v1437 = vpop.f32.mrb[0].mxu0
        %v1438 = vadd.f32 0.0, %v1437
        %v1439 = vpop.f32.mrb[0].mxu0
        %v1440 = vadd.f32 0.0, %v1439
        %1441 = vmatprep.mubr.bf16.mxu0 0
        %1442 = vmatmul.mubr.bf16.gmra.mrb[0].mxu0 %v1365
        %v1443 = vpop.f32.mrb[0].mxu0
        %v1444 = vadd.f32 0.0, %v1443
        %v1445 = vpop.f32.mrb[0].mxu0
        %v1446 = vadd.f32 0.0, %v1445
        %v1447 = vpop.f32.mrb[0].mxu0
        %v1448 = vadd.f32 0.0, %v1447
        %v1449 = vpop.f32.mrb[0].mxu0
        %v1450 = vadd.f32 0.0, %v1449
        %1451 = vmatprep.mubr.bf16.mxu0 0
        %1452 = vmatmul.mubr.bf16.gmra.mrb[0].mxu0 %v1368
        %v1453 = vpop.f32.mrb[0].mxu0
        %v1454 = vadd.f32 0.0, %v1453
        %v1455 = vpop.f32.mrb[0].mxu0
        %v1456 = vadd.f32 0.0, %v1455
        %v1457 = vpop.f32.mrb[0].mxu0
        %v1458 = vadd.f32 0.0, %v1457
        %v1459 = vpop.f32.mrb[0].mxu0
        %v1460 = vadd.f32 0.0, %v1459
        %1461 = vmatprep.mubr.bf16.mxu0 0
        %1462 = vmatmul.mubr.bf16.gmra.mrb[0].mxu0 %v1371
        %v1463 = vpop.f32.mrb[0].mxu0
        %v1464 = vadd.f32 0.0, %v1463
        %v1465 = vpop.f32.mrb[0].mxu0
        %v1466 = vadd.f32 0.0, %v1465
        %v1467 = vpop.f32.mrb[0].mxu0
        %v1468 = vadd.f32 0.0, %v1467
        %v1469 = vpop.f32.mrb[0].mxu0
        %v1470 = vadd.f32 0.0, %v1469
        %1471 = vmatprep.mubr.bf16.mxu0 0
        %1472 = vmatmul.mubr.bf16.gmra.mrb[0].mxu0 %v1374
        %v1473 = vpop.f32.mrb[0].mxu0
        %v1474 = vadd.f32 0.0, %v1473
        %v1475 = vpop.f32.mrb[0].mxu0
        %v1476 = vadd.f32 0.0, %v1475
        %v1477 = vpop.f32.mrb[0].mxu0
        %v1478 = vadd.f32 0.0, %v1477
        %v1479 = vpop.f32.mrb[0].mxu0
        %v1480 = vadd.f32 0.0, %v1479
        %1481 = vmatprep.mubr.bf16.mxu0 0
        %1482 = vmatmul.mubr.bf16.gmra.mrb[0].mxu0 %v1377
        %v1483 = vpop.f32.mrb[0].mxu0
        %v1484 = vadd.f32 0.0, %v1483
        %v1485 = vpop.f32.mrb[0].mxu0
        %v1486 = vadd.f32 0.0, %v1485
        %v1487 = vpop.f32.mrb[0].mxu0
        %v1488 = vadd.f32 0.0, %v1487
        %v1489 = vpop.f32.mrb[0].mxu0
        %v1490 = vadd.f32 0.0, %v1489
        %1491 = vdwg.mxu0
        %v1493 = vsel %vm1217, %v1097, 0
        %v1496 = vsel %vm1217, %v1098, 0
        %v1499 = vsel %vm1217, %v1099, 0
        %v1502 = vsel %vm1217, %v1100, 0
        %v1505 = vsel %vm1217, %v1101, 0
        %v1508 = vsel %vm1217, %v1102, 0
        %v1511 = vsel %vm1217, %v1103, 0
        %v1514 = vsel %vm1217, %v1104, 0
        %1516 = vmatprep.subr.bf16.mxu0 %v1203
        %1517 = vmatpush1.bf16.msra.mxu0 %v1147
        %1518 = vmatprep.subr.bf16.mxu0 0
        %1519 = vmatpush1.bf16.msra.mxu0 0
        %1520 = vmatprep.subr.bf16.mxu0 0
        %1521 = vmatpush1.bf16.msra.mxu0 0
        %1522 = vmatprep.subr.bf16.mxu0 0
        %1523 = vmatpush1.bf16.msra.mxu0 0
        %1524 = vmatprep.subr.bf16.mxu0 0
        %1525 = vmatpush1.bf16.msra.mxu0 0
        %1526 = vmatprep.subr.bf16.mxu0 0
        %1527 = vmatpush1.bf16.msra.mxu0 0
        %1528 = vmatprep.subr.bf16.mxu0 0
        %1529 = vmatpush1.bf16.msra.mxu0 0
        %1530 = vmatprep.subr.bf16.mxu0 0
        %1531 = vmatpush1.bf16.msra.mxu0 0
        %1532 = vmatprep.subr.bf16.mxu0 0
        %1533 = vmatpush1.bf16.msra.mxu0 0
        %1534 = vmatprep.subr.bf16.mxu0 0
        %1535 = vmatpush1.bf16.msra.mxu0 0
        %1536 = vmatprep.subr.bf16.mxu0 0
        %1537 = vmatpush1.bf16.msra.mxu0 0
        %1538 = vmatprep.subr.bf16.mxu0 0
        %1539 = vmatpush1.bf16.msra.mxu0 0
        %1540 = vmatprep.subr.bf16.mxu0 0
        %1541 = vmatpush1.bf16.msra.mxu0 0
        %1542 = vmatprep.subr.bf16.mxu0 0
        %1543 = vmatpush1.bf16.msra.mxu0 0
        %1544 = vmatprep.subr.bf16.mxu0 0
        %1545 = vmatpush1.bf16.msra.mxu0 0
        %1546 = vmatprep.subr.bf16.mxu0 0
        %1547 = vmatpush1.bf16.msra.mxu0 0
        %1548 = vmatprep.mubr.bf16.mxu0 0
        %1549 = vmatmul.mubr.bf16.gmra.mrb[0].mxu0 %v1493
        %v1550 = vpop.f32.mrb[0].mxu0
        %v1551 = vadd.f32 0.0, %v1550
        %v1552 = vpop.f32.mrb[0].mxu0
        %v1553 = vadd.f32 0.0, %v1552
        %v1554 = vpop.f32.mrb[0].mxu0
        %v1555 = vadd.f32 0.0, %v1554
        %v1556 = vpop.f32.mrb[0].mxu0
        %v1557 = vadd.f32 0.0, %v1556
        %1558 = vmatprep.mubr.bf16.mxu0 0
        %1559 = vmatmul.mubr.bf16.gmra.mrb[0].mxu0 %v1496
        %v1560 = vpop.f32.mrb[0].mxu0
        %v1561 = vadd.f32 0.0, %v1560
        %v1562 = vpop.f32.mrb[0].mxu0
        %v1563 = vadd.f32 0.0, %v1562
        %v1564 = vpop.f32.mrb[0].mxu0
        %v1565 = vadd.f32 0.0, %v1564
        %v1566 = vpop.f32.mrb[0].mxu0
        %v1567 = vadd.f32 0.0, %v1566
        %1568 = vmatprep.mubr.bf16.mxu0 0
        %1569 = vmatmul.mubr.bf16.gmra.mrb[0].mxu0 %v1499
        %v1570 = vpop.f32.mrb[0].mxu0
        %v1571 = vadd.f32 0.0, %v1570
        %v1572 = vpop.f32.mrb[0].mxu0
        %v1573 = vadd.f32 0.0, %v1572
        %v1574 = vpop.f32.mrb[0].mxu0
        %v1575 = vadd.f32 0.0, %v1574
        %v1576 = vpop.f32.mrb[0].mxu0
        %v1577 = vadd.f32 0.0, %v1576
        %1578 = vmatprep.mubr.bf16.mxu0 0
        %1579 = vmatmul.mubr.bf16.gmra.mrb[0].mxu0 %v1502
        %v1580 = vpop.f32.mrb[0].mxu0
        %v1581 = vadd.f32 0.0, %v1580
        %v1582 = vpop.f32.mrb[0].mxu0
        %v1583 = vadd.f32 0.0, %v1582
        %v1584 = vpop.f32.mrb[0].mxu0
        %v1585 = vadd.f32 0.0, %v1584
        %v1586 = vpop.f32.mrb[0].mxu0
        %v1587 = vadd.f32 0.0, %v1586
        %1588 = vmatprep.mubr.bf16.mxu0 0
        %1589 = vmatmul.mubr.bf16.gmra.mrb[0].mxu0 %v1505
        %v1590 = vpop.f32.mrb[0].mxu0
        %v1591 = vadd.f32 0.0, %v1590
        %v1592 = vpop.f32.mrb[0].mxu0
        %v1593 = vadd.f32 0.0, %v1592
        %v1594 = vpop.f32.mrb[0].mxu0
        %v1595 = vadd.f32 0.0, %v1594
        %v1596 = vpop.f32.mrb[0].mxu0
        %v1597 = vadd.f32 0.0, %v1596
        %1598 = vmatprep.mubr.bf16.mxu0 0
        %1599 = vmatmul.mubr.bf16.gmra.mrb[0].mxu0 %v1508
        %v1600 = vpop.f32.mrb[0].mxu0
        %v1601 = vadd.f32 0.0, %v1600
        %v1602 = vpop.f32.mrb[0].mxu0
        %v1603 = vadd.f32 0.0, %v1602
        %v1604 = vpop.f32.mrb[0].mxu0
        %v1605 = vadd.f32 0.0, %v1604
        %v1606 = vpop.f32.mrb[0].mxu0
        %v1607 = vadd.f32 0.0, %v1606
        %1608 = vmatprep.mubr.bf16.mxu0 0
        %1609 = vmatmul.mubr.bf16.gmra.mrb[0].mxu0 %v1511
        %v1610 = vpop.f32.mrb[0].mxu0
        %v1611 = vadd.f32 0.0, %v1610
        %v1612 = vpop.f32.mrb[0].mxu0
        %v1613 = vadd.f32 0.0, %v1612
        %v1614 = vpop.f32.mrb[0].mxu0
        %v1615 = vadd.f32 0.0, %v1614
        %v1616 = vpop.f32.mrb[0].mxu0
        %v1617 = vadd.f32 0.0, %v1616
        %1618 = vmatprep.mubr.bf16.mxu0 0
        %1619 = vmatmul.mubr.bf16.gmra.mrb[0].mxu0 %v1514
        %v1620 = vpop.f32.mrb[0].mxu0
        %v1621 = vadd.f32 0.0, %v1620
        %v1622 = vpop.f32.mrb[0].mxu0
        %v1623 = vadd.f32 0.0, %v1622
        %v1624 = vpop.f32.mrb[0].mxu0
        %v1625 = vadd.f32 0.0, %v1624
        %v1626 = vpop.f32.mrb[0].mxu0
        %v1627 = vadd.f32 0.0, %v1626
        %1628 = vdwg.mxu0
        %v1630 = vsel %vm1217, %v1105, 0
        %v1633 = vsel %vm1217, %v1106, 0
        %v1636 = vsel %vm1217, %v1107, 0
        %v1639 = vsel %vm1217, %v1108, 0
        %v1642 = vsel %vm1217, %v1109, 0
        %v1645 = vsel %vm1217, %v1110, 0
        %v1648 = vsel %vm1217, %v1111, 0
        %v1651 = vsel %vm1217, %v1112, 0
        %1653 = vmatprep.subr.bf16.mxu0 %v1204
        %1654 = vmatpush1.bf16.msra.mxu0 %v1148
        %1655 = vmatprep.subr.bf16.mxu0 0
        %1656 = vmatpush1.bf16.msra.mxu0 0
        %1657 = vmatprep.subr.bf16.mxu0 0
        %1658 = vmatpush1.bf16.msra.mxu0 0
        %1659 = vmatprep.subr.bf16.mxu0 0
        %1660 = vmatpush1.bf16.msra.mxu0 0
        %1661 = vmatprep.subr.bf16.mxu0 0
        %1662 = vmatpush1.bf16.msra.mxu0 0
        %1663 = vmatprep.subr.bf16.mxu0 0
        %1664 = vmatpush1.bf16.msra.mxu0 0
        %1665 = vmatprep.subr.bf16.mxu0 0
        %1666 = vmatpush1.bf16.msra.mxu0 0
        %1667 = vmatprep.subr.bf16.mxu0 0
        %1668 = vmatpush1.bf16.msra.mxu0 0
        %1669 = vmatprep.subr.bf16.mxu0 0
        %1670 = vmatpush1.bf16.msra.mxu0 0
        %1671 = vmatprep.subr.bf16.mxu0 0
        %1672 = vmatpush1.bf16.msra.mxu0 0
        %1673 = vmatprep.subr.bf16.mxu0 0
        %1674 = vmatpush1.bf16.msra.mxu0 0
        %1675 = vmatprep.subr.bf16.mxu0 0
        %1676 = vmatpush1.bf16.msra.mxu0 0
        %1677 = vmatprep.subr.bf16.mxu0 0
        %1678 = vmatpush1.bf16.msra.mxu0 0
        %1679 = vmatprep.subr.bf16.mxu0 0
        %1680 = vmatpush1.bf16.msra.mxu0 0
        %1681 = vmatprep.subr.bf16.mxu0 0
        %1682 = vmatpush1.bf16.msra.mxu0 0
        %1683 = vmatprep.subr.bf16.mxu0 0
        %1684 = vmatpush1.bf16.msra.mxu0 0
        %1685 = vmatprep.mubr.bf16.mxu0 0
        %1686 = vmatmul.mubr.bf16.gmra.mrb[0].mxu0 %v1630
        %v1687 = vpop.f32.mrb[0].mxu0
        %v1688 = vadd.f32 0.0, %v1687
        %v1689 = vpop.f32.mrb[0].mxu0
        %v1690 = vadd.f32 0.0, %v1689
        %v1691 = vpop.f32.mrb[0].mxu0
        %v1692 = vadd.f32 0.0, %v1691
        %v1693 = vpop.f32.mrb[0].mxu0
        %v1694 = vadd.f32 0.0, %v1693
        %1695 = vmatprep.mubr.bf16.mxu0 0
        %1696 = vmatmul.mubr.bf16.gmra.mrb[0].mxu0 %v1633
        %v1697 = vpop.f32.mrb[0].mxu0
        %v1698 = vadd.f32 0.0, %v1697
        %v1699 = vpop.f32.mrb[0].mxu0
        %v1700 = vadd.f32 0.0, %v1699
        %v1701 = vpop.f32.mrb[0].mxu0
        %v1702 = vadd.f32 0.0, %v1701
        %v1703 = vpop.f32.mrb[0].mxu0
        %v1704 = vadd.f32 0.0, %v1703
        %1705 = vmatprep.mubr.bf16.mxu0 0
        %1706 = vmatmul.mubr.bf16.gmra.mrb[0].mxu0 %v1636
        %v1707 = vpop.f32.mrb[0].mxu0
        %v1708 = vadd.f32 0.0, %v1707
        %v1709 = vpop.f32.mrb[0].mxu0
        %v1710 = vadd.f32 0.0, %v1709
        %v1711 = vpop.f32.mrb[0].mxu0
        %v1712 = vadd.f32 0.0, %v1711
        %v1713 = vpop.f32.mrb[0].mxu0
        %v1714 = vadd.f32 0.0, %v1713
        %1715 = vmatprep.mubr.bf16.mxu0 0
        %1716 = vmatmul.mubr.bf16.gmra.mrb[0].mxu0 %v1639
        %v1717 = vpop.f32.mrb[0].mxu0
        %v1718 = vadd.f32 0.0, %v1717
        %v1719 = vpop.f32.mrb[0].mxu0
        %v1720 = vadd.f32 0.0, %v1719
        %v1721 = vpop.f32.mrb[0].mxu0
        %v1722 = vadd.f32 0.0, %v1721
        %v1723 = vpop.f32.mrb[0].mxu0
        %v1724 = vadd.f32 0.0, %v1723
        %1725 = vmatprep.mubr.bf16.mxu0 0
        %1726 = vmatmul.mubr.bf16.gmra.mrb[0].mxu0 %v1642
        %v1727 = vpop.f32.mrb[0].mxu0
        %v1728 = vadd.f32 0.0, %v1727
        %v1729 = vpop.f32.mrb[0].mxu0
        %v1730 = vadd.f32 0.0, %v1729
        %v1731 = vpop.f32.mrb[0].mxu0
        %v1732 = vadd.f32 0.0, %v1731
        %v1733 = vpop.f32.mrb[0].mxu0
        %v1734 = vadd.f32 0.0, %v1733
        %1735 = vmatprep.mubr.bf16.mxu0 0
        %1736 = vmatmul.mubr.bf16.gmra.mrb[0].mxu0 %v1645
        %v1737 = vpop.f32.mrb[0].mxu0
        %v1738 = vadd.f32 0.0, %v1737
        %v1739 = vpop.f32.mrb[0].mxu0
        %v1740 = vadd.f32 0.0, %v1739
        %v1741 = vpop.f32.mrb[0].mxu0
        %v1742 = vadd.f32 0.0, %v1741
        %v1743 = vpop.f32.mrb[0].mxu0
        %v1744 = vadd.f32 0.0, %v1743
        %1745 = vmatprep.mubr.bf16.mxu0 0
        %1746 = vmatmul.mubr.bf16.gmra.mrb[0].mxu0 %v1648
        %v1747 = vpop.f32.mrb[0].mxu0
        %v1748 = vadd.f32 0.0, %v1747
        %v1749 = vpop.f32.mrb[0].mxu0
        %v1750 = vadd.f32 0.0, %v1749
        %v1751 = vpop.f32.mrb[0].mxu0
        %v1752 = vadd.f32 0.0, %v1751
        %v1753 = vpop.f32.mrb[0].mxu0
        %v1754 = vadd.f32 0.0, %v1753
        %1755 = vmatprep.mubr.bf16.mxu0 0
        %1756 = vmatmul.mubr.bf16.gmra.mrb[0].mxu0 %v1651
        %v1757 = vpop.f32.mrb[0].mxu0
        %v1758 = vadd.f32 0.0, %v1757
        %v1759 = vpop.f32.mrb[0].mxu0
        %v1760 = vadd.f32 0.0, %v1759
        %v1761 = vpop.f32.mrb[0].mxu0
        %v1762 = vadd.f32 0.0, %v1761
        %v1763 = vpop.f32.mrb[0].mxu0
        %v1764 = vadd.f32 0.0, %v1763
        %1765 = vdwg.mxu0
        %v1767 = vsel %vm1217, %v1113, 0
        %v1770 = vsel %vm1217, %v1114, 0
        %v1773 = vsel %vm1217, %v1115, 0
        %v1776 = vsel %vm1217, %v1116, 0
        %v1779 = vsel %vm1217, %v1117, 0
        %v1782 = vsel %vm1217, %v1118, 0
        %v1785 = vsel %vm1217, %v1119, 0
        %v1788 = vsel %vm1217, %v1120, 0
        %1790 = vmatprep.subr.bf16.mxu0 %v1205
        %1791 = vmatpush1.bf16.msra.mxu0 %v1149
        %1792 = vmatprep.subr.bf16.mxu0 0
        %1793 = vmatpush1.bf16.msra.mxu0 0
        %1794 = vmatprep.subr.bf16.mxu0 0
        %1795 = vmatpush1.bf16.msra.mxu0 0
        %1796 = vmatprep.subr.bf16.mxu0 0
        %1797 = vmatpush1.bf16.msra.mxu0 0
        %1798 = vmatprep.subr.bf16.mxu0 0
        %1799 = vmatpush1.bf16.msra.mxu0 0
        %1800 = vmatprep.subr.bf16.mxu0 0
        %1801 = vmatpush1.bf16.msra.mxu0 0
        %1802 = vmatprep.subr.bf16.mxu0 0
        %1803 = vmatpush1.bf16.msra.mxu0 0
        %1804 = vmatprep.subr.bf16.mxu0 0
        %1805 = vmatpush1.bf16.msra.mxu0 0
        %1806 = vmatprep.subr.bf16.mxu0 0
        %1807 = vmatpush1.bf16.msra.mxu0 0
        %1808 = vmatprep.subr.bf16.mxu0 0
        %1809 = vmatpush1.bf16.msra.mxu0 0
        %1810 = vmatprep.subr.bf16.mxu0 0
        %1811 = vmatpush1.bf16.msra.mxu0 0
        %1812 = vmatprep.subr.bf16.mxu0 0
        %1813 = vmatpush1.bf16.msra.mxu0 0
        %1814 = vmatprep.subr.bf16.mxu0 0
        %1815 = vmatpush1.bf16.msra.mxu0 0
        %1816 = vmatprep.subr.bf16.mxu0 0
        %1817 = vmatpush1.bf16.msra.mxu0 0
        %1818 = vmatprep.subr.bf16.mxu0 0
        %1819 = vmatpush1.bf16.msra.mxu0 0
        %1820 = vmatprep.subr.bf16.mxu0 0
        %1821 = vmatpush1.bf16.msra.mxu0 0
        %1822 = vmatprep.mubr.bf16.mxu0 0
        %1823 = vmatmul.mubr.bf16.gmra.mrb[0].mxu0 %v1767
        %v1824 = vpop.f32.mrb[0].mxu0
        %v1825 = vadd.f32 0.0, %v1824
        %v1826 = vpop.f32.mrb[0].mxu0
        %v1827 = vadd.f32 0.0, %v1826
        %v1828 = vpop.f32.mrb[0].mxu0
        %v1829 = vadd.f32 0.0, %v1828
        %v1830 = vpop.f32.mrb[0].mxu0
        %v1831 = vadd.f32 0.0, %v1830
        %1832 = vmatprep.mubr.bf16.mxu0 0
        %1833 = vmatmul.mubr.bf16.gmra.mrb[0].mxu0 %v1770
        %v1834 = vpop.f32.mrb[0].mxu0
        %v1835 = vadd.f32 0.0, %v1834
        %v1836 = vpop.f32.mrb[0].mxu0
        %v1837 = vadd.f32 0.0, %v1836
        %v1838 = vpop.f32.mrb[0].mxu0
        %v1839 = vadd.f32 0.0, %v1838
        %v1840 = vpop.f32.mrb[0].mxu0
        %v1841 = vadd.f32 0.0, %v1840
        %1842 = vmatprep.mubr.bf16.mxu0 0
        %1843 = vmatmul.mubr.bf16.gmra.mrb[0].mxu0 %v1773
        %v1844 = vpop.f32.mrb[0].mxu0
        %v1845 = vadd.f32 0.0, %v1844
        %v1846 = vpop.f32.mrb[0].mxu0
        %v1847 = vadd.f32 0.0, %v1846
        %v1848 = vpop.f32.mrb[0].mxu0
        %v1849 = vadd.f32 0.0, %v1848
        %v1850 = vpop.f32.mrb[0].mxu0
        %v1851 = vadd.f32 0.0, %v1850
        %1852 = vmatprep.mubr.bf16.mxu0 0
        %1853 = vmatmul.mubr.bf16.gmra.mrb[0].mxu0 %v1776
        %v1854 = vpop.f32.mrb[0].mxu0
        %v1855 = vadd.f32 0.0, %v1854
        %v1856 = vpop.f32.mrb[0].mxu0
        %v1857 = vadd.f32 0.0, %v1856
        %v1858 = vpop.f32.mrb[0].mxu0
        %v1859 = vadd.f32 0.0, %v1858
        %v1860 = vpop.f32.mrb[0].mxu0
        %v1861 = vadd.f32 0.0, %v1860
        %1862 = vmatprep.mubr.bf16.mxu0 0
        %1863 = vmatmul.mubr.bf16.gmra.mrb[0].mxu0 %v1779
        %v1864 = vpop.f32.mrb[0].mxu0
        %v1865 = vadd.f32 0.0, %v1864
        %v1866 = vpop.f32.mrb[0].mxu0
        %v1867 = vadd.f32 0.0, %v1866
        %v1868 = vpop.f32.mrb[0].mxu0
        %v1869 = vadd.f32 0.0, %v1868
        %v1870 = vpop.f32.mrb[0].mxu0
        %v1871 = vadd.f32 0.0, %v1870
        %1872 = vmatprep.mubr.bf16.mxu0 0
        %1873 = vmatmul.mubr.bf16.gmra.mrb[0].mxu0 %v1782
        %v1874 = vpop.f32.mrb[0].mxu0
        %v1875 = vadd.f32 0.0, %v1874
        %v1876 = vpop.f32.mrb[0].mxu0
        %v1877 = vadd.f32 0.0, %v1876
        %v1878 = vpop.f32.mrb[0].mxu0
        %v1879 = vadd.f32 0.0, %v1878
        %v1880 = vpop.f32.mrb[0].mxu0
        %v1881 = vadd.f32 0.0, %v1880
        %1882 = vmatprep.mubr.bf16.mxu0 0
        %1883 = vmatmul.mubr.bf16.gmra.mrb[0].mxu0 %v1785
        %v1884 = vpop.f32.mrb[0].mxu0
        %v1885 = vadd.f32 0.0, %v1884
        %v1886 = vpop.f32.mrb[0].mxu0
        %v1887 = vadd.f32 0.0, %v1886
        %v1888 = vpop.f32.mrb[0].mxu0
        %v1889 = vadd.f32 0.0, %v1888
        %v1890 = vpop.f32.mrb[0].mxu0
        %v1891 = vadd.f32 0.0, %v1890
        %1892 = vmatprep.mubr.bf16.mxu0 0
        %1893 = vmatmul.mubr.bf16.gmra.mrb[0].mxu0 %v1788
        %v1894 = vpop.f32.mrb[0].mxu0
        %v1895 = vadd.f32 0.0, %v1894
        %v1896 = vpop.f32.mrb[0].mxu0
        %v1897 = vadd.f32 0.0, %v1896
        %v1898 = vpop.f32.mrb[0].mxu0
        %v1899 = vadd.f32 0.0, %v1898
        %v1900 = vpop.f32.mrb[0].mxu0
        %v1901 = vadd.f32 0.0, %v1900
        %1902 = vdwg.mxu0
        %v1904 = vsel %vm1217, %v1121, 0
        %v1907 = vsel %vm1217, %v1122, 0
        %v1910 = vsel %vm1217, %v1123, 0
        %v1913 = vsel %vm1217, %v1124, 0
        %v1916 = vsel %vm1217, %v1125, 0
        %v1919 = vsel %vm1217, %v1126, 0
        %v1922 = vsel %vm1217, %v1127, 0
        %v1925 = vsel %vm1217, %v1128, 0
        %1927 = vmatprep.subr.bf16.mxu0 %v1206
        %1928 = vmatpush1.bf16.msra.mxu0 %v1150
        %1929 = vmatprep.subr.bf16.mxu0 0
        %1930 = vmatpush1.bf16.msra.mxu0 0
        %1931 = vmatprep.subr.bf16.mxu0 0
        %1932 = vmatpush1.bf16.msra.mxu0 0
        %1933 = vmatprep.subr.bf16.mxu0 0
        %1934 = vmatpush1.bf16.msra.mxu0 0
        %1935 = vmatprep.subr.bf16.mxu0 0
        %1936 = vmatpush1.bf16.msra.mxu0 0
        %1937 = vmatprep.subr.bf16.mxu0 0
        %1938 = vmatpush1.bf16.msra.mxu0 0
        %1939 = vmatprep.subr.bf16.mxu0 0
        %1940 = vmatpush1.bf16.msra.mxu0 0
        %1941 = vmatprep.subr.bf16.mxu0 0
        %1942 = vmatpush1.bf16.msra.mxu0 0
        %1943 = vmatprep.subr.bf16.mxu0 0
        %1944 = vmatpush1.bf16.msra.mxu0 0
        %1945 = vmatprep.subr.bf16.mxu0 0
        %1946 = vmatpush1.bf16.msra.mxu0 0
        %1947 = vmatprep.subr.bf16.mxu0 0
        %1948 = vmatpush1.bf16.msra.mxu0 0
        %1949 = vmatprep.subr.bf16.mxu0 0
        %1950 = vmatpush1.bf16.msra.mxu0 0
        %1951 = vmatprep.subr.bf16.mxu0 0
        %1952 = vmatpush1.bf16.msra.mxu0 0
        %1953 = vmatprep.subr.bf16.mxu0 0
        %1954 = vmatpush1.bf16.msra.mxu0 0
        %1955 = vmatprep.subr.bf16.mxu0 0
        %1956 = vmatpush1.bf16.msra.mxu0 0
        %1957 = vmatprep.subr.bf16.mxu0 0
        %1958 = vmatpush1.bf16.msra.mxu0 0
        %1959 = vmatprep.mubr.bf16.mxu0 0
        %1960 = vmatmul.mubr.bf16.gmra.mrb[0].mxu0 %v1904
        %v1961 = vpop.f32.mrb[0].mxu0
        %v1962 = vadd.f32 0.0, %v1961
        %v1963 = vpop.f32.mrb[0].mxu0
        %v1964 = vadd.f32 0.0, %v1963
        %v1965 = vpop.f32.mrb[0].mxu0
        %v1966 = vadd.f32 0.0, %v1965
        %v1967 = vpop.f32.mrb[0].mxu0
        %v1968 = vadd.f32 0.0, %v1967
        %1969 = vmatprep.mubr.bf16.mxu0 0
        %1970 = vmatmul.mubr.bf16.gmra.mrb[0].mxu0 %v1907
        %v1971 = vpop.f32.mrb[0].mxu0
        %v1972 = vadd.f32 0.0, %v1971
        %v1973 = vpop.f32.mrb[0].mxu0
        %v1974 = vadd.f32 0.0, %v1973
        %v1975 = vpop.f32.mrb[0].mxu0
        %v1976 = vadd.f32 0.0, %v1975
        %v1977 = vpop.f32.mrb[0].mxu0
        %v1978 = vadd.f32 0.0, %v1977
        %1979 = vmatprep.mubr.bf16.mxu0 0
        %1980 = vmatmul.mubr.bf16.gmra.mrb[0].mxu0 %v1910
        %v1981 = vpop.f32.mrb[0].mxu0
        %v1982 = vadd.f32 0.0, %v1981
        %v1983 = vpop.f32.mrb[0].mxu0
        %v1984 = vadd.f32 0.0, %v1983
        %v1985 = vpop.f32.mrb[0].mxu0
        %v1986 = vadd.f32 0.0, %v1985
        %v1987 = vpop.f32.mrb[0].mxu0
        %v1988 = vadd.f32 0.0, %v1987
        %1989 = vmatprep.mubr.bf16.mxu0 0
        %1990 = vmatmul.mubr.bf16.gmra.mrb[0].mxu0 %v1913
        %v1991 = vpop.f32.mrb[0].mxu0
        %v1992 = vadd.f32 0.0, %v1991
        %v1993 = vpop.f32.mrb[0].mxu0
        %v1994 = vadd.f32 0.0, %v1993
        %v1995 = vpop.f32.mrb[0].mxu0
        %v1996 = vadd.f32 0.0, %v1995
        %v1997 = vpop.f32.mrb[0].mxu0
        %v1998 = vadd.f32 0.0, %v1997
        %1999 = vmatprep.mubr.bf16.mxu0 0
        %2000 = vmatmul.mubr.bf16.gmra.mrb[0].mxu0 %v1916
        %v2001 = vpop.f32.mrb[0].mxu0
        %v2002 = vadd.f32 0.0, %v2001
        %v2003 = vpop.f32.mrb[0].mxu0
        %v2004 = vadd.f32 0.0, %v2003
        %v2005 = vpop.f32.mrb[0].mxu0
        %v2006 = vadd.f32 0.0, %v2005
        %v2007 = vpop.f32.mrb[0].mxu0
        %v2008 = vadd.f32 0.0, %v2007
        %2009 = vmatprep.mubr.bf16.mxu0 0
        %2010 = vmatmul.mubr.bf16.gmra.mrb[0].mxu0 %v1919
        %v2011 = vpop.f32.mrb[0].mxu0
        %v2012 = vadd.f32 0.0, %v2011
        %v2013 = vpop.f32.mrb[0].mxu0
        %v2014 = vadd.f32 0.0, %v2013
        %v2015 = vpop.f32.mrb[0].mxu0
        %v2016 = vadd.f32 0.0, %v2015
        %v2017 = vpop.f32.mrb[0].mxu0
        %v2018 = vadd.f32 0.0, %v2017
        %2019 = vmatprep.mubr.bf16.mxu0 0
        %2020 = vmatmul.mubr.bf16.gmra.mrb[0].mxu0 %v1922
        %v2021 = vpop.f32.mrb[0].mxu0
        %v2022 = vadd.f32 0.0, %v2021
        %v2023 = vpop.f32.mrb[0].mxu0
        %v2024 = vadd.f32 0.0, %v2023
        %v2025 = vpop.f32.mrb[0].mxu0
        %v2026 = vadd.f32 0.0, %v2025
        %v2027 = vpop.f32.mrb[0].mxu0
        %v2028 = vadd.f32 0.0, %v2027
        %2029 = vmatprep.mubr.bf16.mxu0 0
        %2030 = vmatmul.mubr.bf16.gmra.mrb[0].mxu0 %v1925
        %v2031 = vpop.f32.mrb[0].mxu0
        %v2032 = vadd.f32 0.0, %v2031
        %v2033 = vpop.f32.mrb[0].mxu0
        %v2034 = vadd.f32 0.0, %v2033
        %v2035 = vpop.f32.mrb[0].mxu0
        %v2036 = vadd.f32 0.0, %v2035
        %v2037 = vpop.f32.mrb[0].mxu0
        %v2038 = vadd.f32 0.0, %v2037
        %2039 = vdwg.mxu0
        %v2041 = vsel %vm1217, %v1129, 0
        %v2044 = vsel %vm1217, %v1130, 0
        %v2047 = vsel %vm1217, %v1131, 0
        %v2050 = vsel %vm1217, %v1132, 0
        %v2053 = vsel %vm1217, %v1133, 0
        %v2056 = vsel %vm1217, %v1134, 0
        %v2059 = vsel %vm1217, %v1135, 0
        %v2062 = vsel %vm1217, %v1136, 0
        %2064 = vmatprep.subr.bf16.mxu0 %v1207
        %2065 = vmatpush1.bf16.msra.mxu0 %v1151
        %2066 = vmatprep.subr.bf16.mxu0 0
        %2067 = vmatpush1.bf16.msra.mxu0 0
        %2068 = vmatprep.subr.bf16.mxu0 0
        %2069 = vmatpush1.bf16.msra.mxu0 0
        %2070 = vmatprep.subr.bf16.mxu0 0
        %2071 = vmatpush1.bf16.msra.mxu0 0
        %2072 = vmatprep.subr.bf16.mxu0 0
        %2073 = vmatpush1.bf16.msra.mxu0 0
        %2074 = vmatprep.subr.bf16.mxu0 0
        %2075 = vmatpush1.bf16.msra.mxu0 0
        %2076 = vmatprep.subr.bf16.mxu0 0
        %2077 = vmatpush1.bf16.msra.mxu0 0
        %2078 = vmatprep.subr.bf16.mxu0 0
        %2079 = vmatpush1.bf16.msra.mxu0 0
        %2080 = vmatprep.subr.bf16.mxu0 0
        %2081 = vmatpush1.bf16.msra.mxu0 0
        %2082 = vmatprep.subr.bf16.mxu0 0
        %2083 = vmatpush1.bf16.msra.mxu0 0
        %2084 = vmatprep.subr.bf16.mxu0 0
        %2085 = vmatpush1.bf16.msra.mxu0 0
        %2086 = vmatprep.subr.bf16.mxu0 0
        %2087 = vmatpush1.bf16.msra.mxu0 0
        %2088 = vmatprep.subr.bf16.mxu0 0
        %2089 = vmatpush1.bf16.msra.mxu0 0
        %2090 = vmatprep.subr.bf16.mxu0 0
        %2091 = vmatpush1.bf16.msra.mxu0 0
        %2092 = vmatprep.subr.bf16.mxu0 0
        %2093 = vmatpush1.bf16.msra.mxu0 0
        %2094 = vmatprep.subr.bf16.mxu0 0
        %2095 = vmatpush1.bf16.msra.mxu0 0
        %2096 = vmatprep.mubr.bf16.mxu0 0
        %2097 = vmatmul.mubr.bf16.gmra.mrb[0].mxu0 %v2041
        %v2098 = vpop.f32.mrb[0].mxu0
        %v2099 = vadd.f32 0.0, %v2098
        %v2100 = vpop.f32.mrb[0].mxu0
        %v2101 = vadd.f32 0.0, %v2100
        %v2102 = vpop.f32.mrb[0].mxu0
        %v2103 = vadd.f32 0.0, %v2102
        %v2104 = vpop.f32.mrb[0].mxu0
        %v2105 = vadd.f32 0.0, %v2104
        %2106 = vmatprep.mubr.bf16.mxu0 0
        %2107 = vmatmul.mubr.bf16.gmra.mrb[0].mxu0 %v2044
        %v2108 = vpop.f32.mrb[0].mxu0
        %v2109 = vadd.f32 0.0, %v2108
        %v2110 = vpop.f32.mrb[0].mxu0
        %v2111 = vadd.f32 0.0, %v2110
        %v2112 = vpop.f32.mrb[0].mxu0
        %v2113 = vadd.f32 0.0, %v2112
        %v2114 = vpop.f32.mrb[0].mxu0
        %v2115 = vadd.f32 0.0, %v2114
        %2116 = vmatprep.mubr.bf16.mxu0 0
        %2117 = vmatmul.mubr.bf16.gmra.mrb[0].mxu0 %v2047
        %v2118 = vpop.f32.mrb[0].mxu0
        %v2119 = vadd.f32 0.0, %v2118
        %v2120 = vpop.f32.mrb[0].mxu0
        %v2121 = vadd.f32 0.0, %v2120
        %v2122 = vpop.f32.mrb[0].mxu0
        %v2123 = vadd.f32 0.0, %v2122
        %v2124 = vpop.f32.mrb[0].mxu0
        %v2125 = vadd.f32 0.0, %v2124
        %2126 = vmatprep.mubr.bf16.mxu0 0
        %2127 = vmatmul.mubr.bf16.gmra.mrb[0].mxu0 %v2050
        %v2128 = vpop.f32.mrb[0].mxu0
        %v2129 = vadd.f32 0.0, %v2128
        %v2130 = vpop.f32.mrb[0].mxu0
        %v2131 = vadd.f32 0.0, %v2130
        %v2132 = vpop.f32.mrb[0].mxu0
        %v2133 = vadd.f32 0.0, %v2132
        %v2134 = vpop.f32.mrb[0].mxu0
        %v2135 = vadd.f32 0.0, %v2134
        %2136 = vmatprep.mubr.bf16.mxu0 0
        %2137 = vmatmul.mubr.bf16.gmra.mrb[0].mxu0 %v2053
        %v2138 = vpop.f32.mrb[0].mxu0
        %v2139 = vadd.f32 0.0, %v2138
        %v2140 = vpop.f32.mrb[0].mxu0
        %v2141 = vadd.f32 0.0, %v2140
        %v2142 = vpop.f32.mrb[0].mxu0
        %v2143 = vadd.f32 0.0, %v2142
        %v2144 = vpop.f32.mrb[0].mxu0
        %v2145 = vadd.f32 0.0, %v2144
        %2146 = vmatprep.mubr.bf16.mxu0 0
        %2147 = vmatmul.mubr.bf16.gmra.mrb[0].mxu0 %v2056
        %v2148 = vpop.f32.mrb[0].mxu0
        %v2149 = vadd.f32 0.0, %v2148
        %v2150 = vpop.f32.mrb[0].mxu0
        %v2151 = vadd.f32 0.0, %v2150
        %v2152 = vpop.f32.mrb[0].mxu0
        %v2153 = vadd.f32 0.0, %v2152
        %v2154 = vpop.f32.mrb[0].mxu0
        %v2155 = vadd.f32 0.0, %v2154
        %2156 = vmatprep.mubr.bf16.mxu0 0
        %2157 = vmatmul.mubr.bf16.gmra.mrb[0].mxu0 %v2059
        %v2158 = vpop.f32.mrb[0].mxu0
        %v2159 = vadd.f32 0.0, %v2158
        %v2160 = vpop.f32.mrb[0].mxu0
        %v2161 = vadd.f32 0.0, %v2160
        %v2162 = vpop.f32.mrb[0].mxu0
        %v2163 = vadd.f32 0.0, %v2162
        %v2164 = vpop.f32.mrb[0].mxu0
        %v2165 = vadd.f32 0.0, %v2164
        %2166 = vmatprep.mubr.bf16.mxu0 0
        %2167 = vmatmul.mubr.bf16.gmra.mrb[0].mxu0 %v2062
        %v2168 = vpop.f32.mrb[0].mxu0
        %v2169 = vadd.f32 0.0, %v2168
        %v2170 = vpop.f32.mrb[0].mxu0
        %v2171 = vadd.f32 0.0, %v2170
        %v2172 = vpop.f32.mrb[0].mxu0
        %v2173 = vadd.f32 0.0, %v2172
        %v2174 = vpop.f32.mrb[0].mxu0
        %v2175 = vadd.f32 0.0, %v2174
        %2176 = vdwg.mxu0
        %v2178 = vsel %vm1217, %v1137, 0
        %v2181 = vsel %vm1217, %v1138, 0
        %v2184 = vsel %vm1217, %v1139, 0
        %v2187 = vsel %vm1217, %v1140, 0
        %v2190 = vsel %vm1217, %v1141, 0
        %v2193 = vsel %vm1217, %v1142, 0
        %v2196 = vsel %vm1217, %v1143, 0
        %v2199 = vsel %vm1217, %v1144, 0
        %2201 = vmatprep.subr.bf16.mxu0 %v1208
        %2202 = vmatpush1.bf16.msra.mxu0 %v1152
        %2203 = vmatprep.subr.bf16.mxu0 0
        %2204 = vmatpush1.bf16.msra.mxu0 0
        %2205 = vmatprep.subr.bf16.mxu0 0
        %2206 = vmatpush1.bf16.msra.mxu0 0
        %2207 = vmatprep.subr.bf16.mxu0 0
        %2208 = vmatpush1.bf16.msra.mxu0 0
        %2209 = vmatprep.subr.bf16.mxu0 0
        %2210 = vmatpush1.bf16.msra.mxu0 0
        %2211 = vmatprep.subr.bf16.mxu0 0
        %2212 = vmatpush1.bf16.msra.mxu0 0
        %2213 = vmatprep.subr.bf16.mxu0 0
        %2214 = vmatpush1.bf16.msra.mxu0 0
        %2215 = vmatprep.subr.bf16.mxu0 0
        %2216 = vmatpush1.bf16.msra.mxu0 0
        %2217 = vmatprep.subr.bf16.mxu0 0
        %2218 = vmatpush1.bf16.msra.mxu0 0
        %2219 = vmatprep.subr.bf16.mxu0 0
        %2220 = vmatpush1.bf16.msra.mxu0 0
        %2221 = vmatprep.subr.bf16.mxu0 0
        %2222 = vmatpush1.bf16.msra.mxu0 0
        %2223 = vmatprep.subr.bf16.mxu0 0
        %2224 = vmatpush1.bf16.msra.mxu0 0
        %2225 = vmatprep.subr.bf16.mxu0 0
        %2226 = vmatpush1.bf16.msra.mxu0 0
        %2227 = vmatprep.subr.bf16.mxu0 0
        %2228 = vmatpush1.bf16.msra.mxu0 0
        %2229 = vmatprep.subr.bf16.mxu0 0
        %2230 = vmatpush1.bf16.msra.mxu0 0
        %2231 = vmatprep.subr.bf16.mxu0 0
        %2232 = vmatpush1.bf16.msra.mxu0 0
        %2233 = vmatprep.mubr.bf16.mxu0 0
        %2234 = vmatmul.mubr.bf16.gmra.mrb[0].mxu0 %v2178
        %v2235 = vpop.f32.mrb[0].mxu0
        %v2236 = vadd.f32 0.0, %v2235
        %v2237 = vpop.f32.mrb[0].mxu0
        %v2238 = vadd.f32 0.0, %v2237
        %v2239 = vpop.f32.mrb[0].mxu0
        %v2240 = vadd.f32 0.0, %v2239
        %v2241 = vpop.f32.mrb[0].mxu0
        %v2242 = vadd.f32 0.0, %v2241
        %2243 = vmatprep.mubr.bf16.mxu0 0
        %2244 = vmatmul.mubr.bf16.gmra.mrb[0].mxu0 %v2181
        %v2245 = vpop.f32.mrb[0].mxu0
        %v2246 = vadd.f32 0.0, %v2245
        %v2247 = vpop.f32.mrb[0].mxu0
        %v2248 = vadd.f32 0.0, %v2247
        %v2249 = vpop.f32.mrb[0].mxu0
        %v2250 = vadd.f32 0.0, %v2249
        %v2251 = vpop.f32.mrb[0].mxu0
        %v2252 = vadd.f32 0.0, %v2251
        %2253 = vmatprep.mubr.bf16.mxu0 0
        %2254 = vmatmul.mubr.bf16.gmra.mrb[0].mxu0 %v2184
        %v2255 = vpop.f32.mrb[0].mxu0
        %v2256 = vadd.f32 0.0, %v2255
        %v2257 = vpop.f32.mrb[0].mxu0
        %v2258 = vadd.f32 0.0, %v2257
        %v2259 = vpop.f32.mrb[0].mxu0
        %v2260 = vadd.f32 0.0, %v2259
        %v2261 = vpop.f32.mrb[0].mxu0
        %v2262 = vadd.f32 0.0, %v2261
        %2263 = vmatprep.mubr.bf16.mxu0 0
        %2264 = vmatmul.mubr.bf16.gmra.mrb[0].mxu0 %v2187
        %v2265 = vpop.f32.mrb[0].mxu0
        %v2266 = vadd.f32 0.0, %v2265
        %v2267 = vpop.f32.mrb[0].mxu0
        %v2268 = vadd.f32 0.0, %v2267
        %v2269 = vpop.f32.mrb[0].mxu0
        %v2270 = vadd.f32 0.0, %v2269
        %v2271 = vpop.f32.mrb[0].mxu0
        %v2272 = vadd.f32 0.0, %v2271
        %2273 = vmatprep.mubr.bf16.mxu0 0
        %2274 = vmatmul.mubr.bf16.gmra.mrb[0].mxu0 %v2190
        %v2275 = vpop.f32.mrb[0].mxu0
        %v2276 = vadd.f32 0.0, %v2275
        %v2277 = vpop.f32.mrb[0].mxu0
        %v2278 = vadd.f32 0.0, %v2277
        %v2279 = vpop.f32.mrb[0].mxu0
        %v2280 = vadd.f32 0.0, %v2279
        %v2281 = vpop.f32.mrb[0].mxu0
        %v2282 = vadd.f32 0.0, %v2281
        %2283 = vmatprep.mubr.bf16.mxu0 0
        %2284 = vmatmul.mubr.bf16.gmra.mrb[0].mxu0 %v2193
        %v2285 = vpop.f32.mrb[0].mxu0
        %v2286 = vadd.f32 0.0, %v2285
        %v2287 = vpop.f32.mrb[0].mxu0
        %v2288 = vadd.f32 0.0, %v2287
        %v2289 = vpop.f32.mrb[0].mxu0
        %v2290 = vadd.f32 0.0, %v2289
        %v2291 = vpop.f32.mrb[0].mxu0
        %v2292 = vadd.f32 0.0, %v2291
        %2293 = vmatprep.mubr.bf16.mxu0 0
        %2294 = vmatmul.mubr.bf16.gmra.mrb[0].mxu0 %v2196
        %v2295 = vpop.f32.mrb[0].mxu0
        %v2296 = vadd.f32 0.0, %v2295
        %v2297 = vpop.f32.mrb[0].mxu0
        %v2298 = vadd.f32 0.0, %v2297
        %v2299 = vpop.f32.mrb[0].mxu0
        %v2300 = vadd.f32 0.0, %v2299
        %v2301 = vpop.f32.mrb[0].mxu0
        %v2302 = vadd.f32 0.0, %v2301
        %2303 = vmatprep.mubr.bf16.mxu0 0
        %2304 = vmatmul.mubr.bf16.gmra.mrb[0].mxu0 %v2199
        %v2305 = vpop.f32.mrb[0].mxu0
        %v2306 = vadd.f32 0.0, %v2305
        %v2307 = vpop.f32.mrb[0].mxu0
        %v2308 = vadd.f32 0.0, %v2307
        %v2309 = vpop.f32.mrb[0].mxu0
        %v2310 = vadd.f32 0.0, %v2309
        %v2311 = vpop.f32.mrb[0].mxu0
        %v2312 = vadd.f32 0.0, %v2311
        %2313 = vdwg.mxu0
        %v2315 = vcombine.high %v820, %v820
        %v2317 = vunpack.c.l.s4 1966171168
        %v2318 = vunpack.c.0.s8 %v2317
        %v2319 = vlaneseq
        %v2320 = vshrl.u32 %v2319, 7
        %v2321 = vsub.s32 %v2318, %v2320
        %v2322 = vrot.slane %v820, %v2321
        %v2324 = vunpack.c.l.s4 1966171168
        %v2325 = vunpack.c.0.s8 %v2324
        %v2326 = vlaneseq
        %v2327 = vshrl.u32 %v2326, 7
        %v2328 = vsub.s32 %v2325, %v2327
        %v2329 = vrot.slane %v2315, %v2328
        %v2330 = vcombine.high %v2322, %v2322
        %v2331 = vcombine.high %v2329, %v2329
        %v2333 = vunpack.c.l.s4 1966171168
        %v2334 = vunpack.c.0.s8 %v2333
        %v2335 = vlaneseq
        %v2336 = vshrl.u32 %v2335, 7
        %v2337 = vsub.s32 %v2334, %v2336
        %v2338 = vrot.slane %v2322, %v2337
        %v2340 = vunpack.c.l.s4 1966171168
        %v2341 = vunpack.c.0.s8 %v2340
        %v2342 = vlaneseq
        %v2343 = vshrl.u32 %v2342, 7
        %v2344 = vsub.s32 %v2341, %v2343
        %v2345 = vrot.slane %v2329, %v2344
        %v2347 = vunpack.c.l.s4 1966171168
        %v2348 = vunpack.c.0.s8 %v2347
        %v2349 = vlaneseq
        %v2350 = vshrl.u32 %v2349, 7
        %v2351 = vsub.s32 %v2348, %v2350
        %v2352 = vrot.slane %v2330, %v2351
        %v2354 = vunpack.c.l.s4 1966171168
        %v2355 = vunpack.c.0.s8 %v2354
        %v2356 = vlaneseq
        %v2357 = vshrl.u32 %v2356, 7
        %v2358 = vsub.s32 %v2355, %v2357
        %v2359 = vrot.slane %v2331, %v2358
        %v2360 = vcombine.high %v2338, %v2338
        %v2361 = vcombine.high %v2345, %v2345
        %v2362 = vcombine.high %v2352, %v2352
        %v2363 = vcombine.high %v2359, %v2359
        %v2364 = vlaneseq
        %v2365 = vshrl.u32 %v2364, 7
        %v2366 = vsub.s32 0, %v2365
        %v2367 = vrot.slane %v2338, %v2366
        %v2368 = vlaneseq
        %v2369 = vshrl.u32 %v2368, 7
        %v2370 = vsub.s32 0, %v2369
        %v2371 = vrot.slane %v2352, %v2370
        %v2372 = vlaneseq
        %v2373 = vshrl.u32 %v2372, 7
        %v2374 = vsub.s32 0, %v2373
        %v2375 = vrot.slane %v2360, %v2374
        %v2376 = vlaneseq
        %v2377 = vshrl.u32 %v2376, 7
        %v2378 = vsub.s32 0, %v2377
        %v2379 = vrot.slane %v2362, %v2378
        %v2380 = vlaneseq
        %v2381 = vshrl.u32 %v2380, 7
        %v2382 = vsub.s32 0, %v2381
        %v2383 = vrot.slane %v2345, %v2382
        %v2384 = vlaneseq
        %v2385 = vshrl.u32 %v2384, 7
        %v2386 = vsub.s32 0, %v2385
        %v2387 = vrot.slane %v2359, %v2386
        %v2388 = vlaneseq
        %v2389 = vshrl.u32 %v2388, 7
        %v2390 = vsub.s32 0, %v2389
        %v2391 = vrot.slane %v2361, %v2390
        %v2392 = vlaneseq
        %v2393 = vshrl.u32 %v2392, 7
        %v2394 = vsub.s32 0, %v2393
        %v2395 = vrot.slane %v2363, %v2394
        %v2404 = vadd.f32 %v1277, %v2367
        %v2405 = vadd.f32 %v1281, %v2367
        %v2406 = vadd.f32 %v1287, %v2367
        %v2407 = vadd.f32 %v1291, %v2367
        %v2408 = vadd.f32 %v1297, %v2367
        %v2409 = vadd.f32 %v1301, %v2367
        %v2410 = vadd.f32 %v1307, %v2367
        %v2411 = vadd.f32 %v1311, %v2367
        %v2412 = vadd.f32 %v1317, %v2367
        %v2413 = vadd.f32 %v1321, %v2367
        %v2414 = vadd.f32 %v1327, %v2367
        %v2415 = vadd.f32 %v1331, %v2367
        %v2416 = vadd.f32 %v1337, %v2367
        %v2417 = vadd.f32 %v1341, %v2367
        %v2418 = vadd.f32 %v1347, %v2367
        %v2419 = vadd.f32 %v1351, %v2367
        %v2420 = vadd.f32 %v1414, %v2371
        %v2421 = vadd.f32 %v1418, %v2371
        %v2422 = vadd.f32 %v1424, %v2371
        %v2423 = vadd.f32 %v1428, %v2371
        %v2424 = vadd.f32 %v1434, %v2371
        %v2425 = vadd.f32 %v1438, %v2371
        %v2426 = vadd.f32 %v1444, %v2371
        %v2427 = vadd.f32 %v1448, %v2371
        %v2428 = vadd.f32 %v1454, %v2371
        %v2429 = vadd.f32 %v1458, %v2371
        %v2430 = vadd.f32 %v1464, %v2371
        %v2431 = vadd.f32 %v1468, %v2371
        %v2432 = vadd.f32 %v1474, %v2371
        %v2433 = vadd.f32 %v1478, %v2371
        %v2434 = vadd.f32 %v1484, %v2371
        %v2435 = vadd.f32 %v1488, %v2371
        %v2436 = vadd.f32 %v1551, %v2375
        %v2437 = vadd.f32 %v1555, %v2375
        %v2438 = vadd.f32 %v1561, %v2375
        %v2439 = vadd.f32 %v1565, %v2375
        %v2440 = vadd.f32 %v1571, %v2375
        %v2441 = vadd.f32 %v1575, %v2375
        %v2442 = vadd.f32 %v1581, %v2375
        %v2443 = vadd.f32 %v1585, %v2375
        %v2444 = vadd.f32 %v1591, %v2375
        %v2445 = vadd.f32 %v1595, %v2375
        %v2446 = vadd.f32 %v1601, %v2375
        %v2447 = vadd.f32 %v1605, %v2375
        %v2448 = vadd.f32 %v1611, %v2375
        %v2449 = vadd.f32 %v1615, %v2375
        %v2450 = vadd.f32 %v1621, %v2375
        %v2451 = vadd.f32 %v1625, %v2375
        %v2452 = vadd.f32 %v1688, %v2379
        %v2453 = vadd.f32 %v1692, %v2379
        %v2454 = vadd.f32 %v1698, %v2379
        %v2455 = vadd.f32 %v1702, %v2379
        %v2456 = vadd.f32 %v1708, %v2379
        %v2457 = vadd.f32 %v1712, %v2379
        %v2458 = vadd.f32 %v1718, %v2379
        %v2459 = vadd.f32 %v1722, %v2379
        %v2460 = vadd.f32 %v1728, %v2379
        %v2461 = vadd.f32 %v1732, %v2379
        %v2462 = vadd.f32 %v1738, %v2379
        %v2463 = vadd.f32 %v1742, %v2379
        %v2464 = vadd.f32 %v1748, %v2379
        %v2465 = vadd.f32 %v1752, %v2379
        %v2466 = vadd.f32 %v1758, %v2379
        %v2467 = vadd.f32 %v1762, %v2379
        %v2468 = vadd.f32 %v1825, %v2383
        %v2469 = vadd.f32 %v1829, %v2383
        %v2470 = vadd.f32 %v1835, %v2383
        %v2471 = vadd.f32 %v1839, %v2383
        %v2472 = vadd.f32 %v1845, %v2383
        %v2473 = vadd.f32 %v1849, %v2383
        %v2474 = vadd.f32 %v1855, %v2383
        %v2475 = vadd.f32 %v1859, %v2383
        %v2476 = vadd.f32 %v1865, %v2383
        %v2477 = vadd.f32 %v1869, %v2383
        %v2478 = vadd.f32 %v1875, %v2383
        %v2479 = vadd.f32 %v1879, %v2383
        %v2480 = vadd.f32 %v1885, %v2383
        %v2481 = vadd.f32 %v1889, %v2383
        %v2482 = vadd.f32 %v1895, %v2383
        %v2483 = vadd.f32 %v1899, %v2383
        %v2484 = vadd.f32 %v1962, %v2387
        %v2485 = vadd.f32 %v1966, %v2387
        %v2486 = vadd.f32 %v1972, %v2387
        %v2487 = vadd.f32 %v1976, %v2387
        %v2488 = vadd.f32 %v1982, %v2387
        %v2489 = vadd.f32 %v1986, %v2387
        %v2490 = vadd.f32 %v1992, %v2387
        %v2491 = vadd.f32 %v1996, %v2387
        %v2492 = vadd.f32 %v2002, %v2387
        %v2493 = vadd.f32 %v2006, %v2387
        %v2494 = vadd.f32 %v2012, %v2387
        %v2495 = vadd.f32 %v2016, %v2387
        %v2496 = vadd.f32 %v2022, %v2387
        %v2497 = vadd.f32 %v2026, %v2387
        %v2498 = vadd.f32 %v2032, %v2387
        %v2499 = vadd.f32 %v2036, %v2387
        %v2500 = vadd.f32 %v2099, %v2391
        %v2501 = vadd.f32 %v2103, %v2391
        %v2502 = vadd.f32 %v2109, %v2391
        %v2503 = vadd.f32 %v2113, %v2391
        %v2504 = vadd.f32 %v2119, %v2391
        %v2505 = vadd.f32 %v2123, %v2391
        %v2506 = vadd.f32 %v2129, %v2391
        %v2507 = vadd.f32 %v2133, %v2391
        %v2508 = vadd.f32 %v2139, %v2391
        %v2509 = vadd.f32 %v2143, %v2391
        %v2510 = vadd.f32 %v2149, %v2391
        %v2511 = vadd.f32 %v2153, %v2391
        %v2512 = vadd.f32 %v2159, %v2391
        %v2513 = vadd.f32 %v2163, %v2391
        %v2514 = vadd.f32 %v2169, %v2391
        %v2515 = vadd.f32 %v2173, %v2391
        %v2516 = vadd.f32 %v2236, %v2395
        %v2517 = vadd.f32 %v2240, %v2395
        %v2518 = vadd.f32 %v2246, %v2395
        %v2519 = vadd.f32 %v2250, %v2395
        %v2520 = vadd.f32 %v2256, %v2395
        %v2521 = vadd.f32 %v2260, %v2395
        %v2522 = vadd.f32 %v2266, %v2395
        %v2523 = vadd.f32 %v2270, %v2395
        %v2524 = vadd.f32 %v2276, %v2395
        %v2525 = vadd.f32 %v2280, %v2395
        %v2526 = vadd.f32 %v2286, %v2395
        %v2527 = vadd.f32 %v2290, %v2395
        %v2528 = vadd.f32 %v2296, %v2395
        %v2529 = vadd.f32 %v2300, %v2395
        %v2530 = vadd.f32 %v2306, %v2395
        %v2531 = vadd.f32 %v2310, %v2395
        %v2532 = vld [vmem:[%s3] sm:$0x1]
        %v2533 = vld [vmem:[%s3 + $0x1] sm:$0x1]
        %v2534 = vld [vmem:[%s3 + $0x2] sm:$0x1]
        %v2535 = vld [vmem:[%s3 + $0x3] sm:$0x1]
        %v2536 = vld [vmem:[%s3 + $0x4] sm:$0x1]
        %v2537 = vld [vmem:[%s3 + $0x5] sm:$0x1]
        %v2538 = vld [vmem:[%s3 + $0x6] sm:$0x1]
        %v2539 = vld [vmem:[%s3 + $0x7] sm:$0x1]
        %v2548 = vlaneseq
        %v2549 = vshrl.u32 %v2548, 7
        %v2550 = vsub.s32 0, %v2549
        %v2551 = vrot.slane %v2532, %v2550
        %v2552 = vlaneseq
        %v2553 = vshrl.u32 %v2552, 7
        %v2554 = vsub.s32 0, %v2553
        %v2555 = vrot.slane %v2533, %v2554
        %v2556 = vlaneseq
        %v2557 = vshrl.u32 %v2556, 7
        %v2558 = vsub.s32 0, %v2557
        %v2559 = vrot.slane %v2534, %v2558
        %v2560 = vlaneseq
        %v2561 = vshrl.u32 %v2560, 7
        %v2562 = vsub.s32 0, %v2561
        %v2563 = vrot.slane %v2535, %v2562
        %v2564 = vlaneseq
        %v2565 = vshrl.u32 %v2564, 7
        %v2566 = vsub.s32 0, %v2565
        %v2567 = vrot.slane %v2536, %v2566
        %v2568 = vlaneseq
        %v2569 = vshrl.u32 %v2568, 7
        %v2570 = vsub.s32 0, %v2569
        %v2571 = vrot.slane %v2537, %v2570
        %v2572 = vlaneseq
        %v2573 = vshrl.u32 %v2572, 7
        %v2574 = vsub.s32 0, %v2573
        %v2575 = vrot.slane %v2538, %v2574
        %v2576 = vlaneseq
        %v2577 = vshrl.u32 %v2576, 7
        %v2578 = vsub.s32 0, %v2577
        %v2579 = vrot.slane %v2539, %v2578
        %v2588 = vadd.f32 %v1279, %v2551
        %v2589 = vadd.f32 %v1283, %v2551
        %v2590 = vadd.f32 %v1289, %v2551
        %v2591 = vadd.f32 %v1293, %v2551
        %v2592 = vadd.f32 %v1299, %v2551
        %v2593 = vadd.f32 %v1303, %v2551
        %v2594 = vadd.f32 %v1309, %v2551
        %v2595 = vadd.f32 %v1313, %v2551
        %v2596 = vadd.f32 %v1319, %v2551
        %v2597 = vadd.f32 %v1323, %v2551
        %v2598 = vadd.f32 %v1329, %v2551
        %v2599 = vadd.f32 %v1333, %v2551
        %v2600 = vadd.f32 %v1339, %v2551
        %v2601 = vadd.f32 %v1343, %v2551
        %v2602 = vadd.f32 %v1349, %v2551
        %v2603 = vadd.f32 %v1353, %v2551
        %v2604 = vadd.f32 %v1416, %v2555
        %v2605 = vadd.f32 %v1420, %v2555
        %v2606 = vadd.f32 %v1426, %v2555
        %v2607 = vadd.f32 %v1430, %v2555
        %v2608 = vadd.f32 %v1436, %v2555
        %v2609 = vadd.f32 %v1440, %v2555
        %v2610 = vadd.f32 %v1446, %v2555
        %v2611 = vadd.f32 %v1450, %v2555
        %v2612 = vadd.f32 %v1456, %v2555
        %v2613 = vadd.f32 %v1460, %v2555
        %v2614 = vadd.f32 %v1466, %v2555
        %v2615 = vadd.f32 %v1470, %v2555
        %v2616 = vadd.f32 %v1476, %v2555
        %v2617 = vadd.f32 %v1480, %v2555
        %v2618 = vadd.f32 %v1486, %v2555
        %v2619 = vadd.f32 %v1490, %v2555
        %v2620 = vadd.f32 %v1553, %v2559
        %v2621 = vadd.f32 %v1557, %v2559
        %v2622 = vadd.f32 %v1563, %v2559
        %v2623 = vadd.f32 %v1567, %v2559
        %v2624 = vadd.f32 %v1573, %v2559
        %v2625 = vadd.f32 %v1577, %v2559
        %v2626 = vadd.f32 %v1583, %v2559
        %v2627 = vadd.f32 %v1587, %v2559
        %v2628 = vadd.f32 %v1593, %v2559
        %v2629 = vadd.f32 %v1597, %v2559
        %v2630 = vadd.f32 %v1603, %v2559
        %v2631 = vadd.f32 %v1607, %v2559
        %v2632 = vadd.f32 %v1613, %v2559
        %v2633 = vadd.f32 %v1617, %v2559
        %v2634 = vadd.f32 %v1623, %v2559
        %v2635 = vadd.f32 %v1627, %v2559
        %v2636 = vadd.f32 %v1690, %v2563
        %v2637 = vadd.f32 %v1694, %v2563
        %v2638 = vadd.f32 %v1700, %v2563
        %v2639 = vadd.f32 %v1704, %v2563
        %v2640 = vadd.f32 %v1710, %v2563
        %v2641 = vadd.f32 %v1714, %v2563
        %v2642 = vadd.f32 %v1720, %v2563
        %v2643 = vadd.f32 %v1724, %v2563
        %v2644 = vadd.f32 %v1730, %v2563
        %v2645 = vadd.f32 %v1734, %v2563
        %v2646 = vadd.f32 %v1740, %v2563
        %v2647 = vadd.f32 %v1744, %v2563
        %v2648 = vadd.f32 %v1750, %v2563
        %v2649 = vadd.f32 %v1754, %v2563
        %v2650 = vadd.f32 %v1760, %v2563
        %v2651 = vadd.f32 %v1764, %v2563
        %v2652 = vadd.f32 %v1827, %v2567
        %v2653 = vadd.f32 %v1831, %v2567
        %v2654 = vadd.f32 %v1837, %v2567
        %v2655 = vadd.f32 %v1841, %v2567
        %v2656 = vadd.f32 %v1847, %v2567
        %v2657 = vadd.f32 %v1851, %v2567
        %v2658 = vadd.f32 %v1857, %v2567
        %v2659 = vadd.f32 %v1861, %v2567
        %v2660 = vadd.f32 %v1867, %v2567
        %v2661 = vadd.f32 %v1871, %v2567
        %v2662 = vadd.f32 %v1877, %v2567
        %v2663 = vadd.f32 %v1881, %v2567
        %v2664 = vadd.f32 %v1887, %v2567
        %v2665 = vadd.f32 %v1891, %v2567
        %v2666 = vadd.f32 %v1897, %v2567
        %v2667 = vadd.f32 %v1901, %v2567
        %v2668 = vadd.f32 %v1964, %v2571
        %v2669 = vadd.f32 %v1968, %v2571
        %v2670 = vadd.f32 %v1974, %v2571
        %v2671 = vadd.f32 %v1978, %v2571
        %v2672 = vadd.f32 %v1984, %v2571
        %v2673 = vadd.f32 %v1988, %v2571
        %v2674 = vadd.f32 %v1994, %v2571
        %v2675 = vadd.f32 %v1998, %v2571
        %v2676 = vadd.f32 %v2004, %v2571
        %v2677 = vadd.f32 %v2008, %v2571
        %v2678 = vadd.f32 %v2014, %v2571
        %v2679 = vadd.f32 %v2018, %v2571
        %v2680 = vadd.f32 %v2024, %v2571
        %v2681 = vadd.f32 %v2028, %v2571
        %v2682 = vadd.f32 %v2034, %v2571
        %v2683 = vadd.f32 %v2038, %v2571
        %v2684 = vadd.f32 %v2101, %v2575
        %v2685 = vadd.f32 %v2105, %v2575
        %v2686 = vadd.f32 %v2111, %v2575
        %v2687 = vadd.f32 %v2115, %v2575
        %v2688 = vadd.f32 %v2121, %v2575
        %v2689 = vadd.f32 %v2125, %v2575
        %v2690 = vadd.f32 %v2131, %v2575
        %v2691 = vadd.f32 %v2135, %v2575
        %v2692 = vadd.f32 %v2141, %v2575
        %v2693 = vadd.f32 %v2145, %v2575
        %v2694 = vadd.f32 %v2151, %v2575
        %v2695 = vadd.f32 %v2155, %v2575
        %v2696 = vadd.f32 %v2161, %v2575
        %v2697 = vadd.f32 %v2165, %v2575
        %v2698 = vadd.f32 %v2171, %v2575
        %v2699 = vadd.f32 %v2175, %v2575
        %v2700 = vadd.f32 %v2238, %v2579
        %v2701 = vadd.f32 %v2242, %v2579
        %v2702 = vadd.f32 %v2248, %v2579
        %v2703 = vadd.f32 %v2252, %v2579
        %v2704 = vadd.f32 %v2258, %v2579
        %v2705 = vadd.f32 %v2262, %v2579
        %v2706 = vadd.f32 %v2268, %v2579
        %v2707 = vadd.f32 %v2272, %v2579
        %v2708 = vadd.f32 %v2278, %v2579
        %v2709 = vadd.f32 %v2282, %v2579
        %v2710 = vadd.f32 %v2288, %v2579
        %v2711 = vadd.f32 %v2292, %v2579
        %v2712 = vadd.f32 %v2298, %v2579
        %v2713 = vadd.f32 %v2302, %v2579
        %v2714 = vadd.f32 %v2308, %v2579
        %v2715 = vadd.f32 %v2312, %v2579
        %s2717 = sor.u32 256, 1
        %2718 = vrot.lane.b32.xlu0 %v2588, %s2717
        %v2719 = vpop.permute.xlu0 %2718
        %s2721 = sor.u32 256, 9
        %2722 = vrot.lane.b32.xlu0 %v2589, %s2721
        %v2723 = vpop.permute.xlu0 %2722
        %s2725 = sor.u32 256, 17
        %2726 = vrot.lane.b32.xlu0 %v2590, %s2725
        %v2727 = vpop.permute.xlu0 %2726
        %s2729 = sor.u32 256, 25
        %2730 = vrot.lane.b32.xlu0 %v2591, %s2729
        %v2731 = vpop.permute.xlu0 %2730
        %s2733 = sor.u32 256, 33
        %2734 = vrot.lane.b32.xlu0 %v2592, %s2733
        %v2735 = vpop.permute.xlu0 %2734
        %s2737 = sor.u32 256, 41
        %2738 = vrot.lane.b32.xlu0 %v2593, %s2737
        %v2739 = vpop.permute.xlu0 %2738
        %s2741 = sor.u32 256, 49
        %2742 = vrot.lane.b32.xlu0 %v2594, %s2741
        %v2743 = vpop.permute.xlu0 %2742
        %s2745 = sor.u32 256, 57
        %2746 = vrot.lane.b32.xlu0 %v2595, %s2745
        %v2747 = vpop.permute.xlu0 %2746
        %s2749 = sor.u32 256, 65
        %2750 = vrot.lane.b32.xlu0 %v2596, %s2749
        %v2751 = vpop.permute.xlu0 %2750
        %s2753 = sor.u32 256, 73
        %2754 = vrot.lane.b32.xlu0 %v2597, %s2753
        %v2755 = vpop.permute.xlu0 %2754
        %s2757 = sor.u32 256, 81
        %2758 = vrot.lane.b32.xlu0 %v2598, %s2757
        %v2759 = vpop.permute.xlu0 %2758
        %s2761 = sor.u32 256, 89
        %2762 = vrot.lane.b32.xlu0 %v2599, %s2761
        %v2763 = vpop.permute.xlu0 %2762
        %s2765 = sor.u32 256, 97
        %2766 = vrot.lane.b32.xlu0 %v2600, %s2765
        %v2767 = vpop.permute.xlu0 %2766
        %s2769 = sor.u32 256, 105
        %2770 = vrot.lane.b32.xlu0 %v2601, %s2769
        %v2771 = vpop.permute.xlu0 %2770
        %s2773 = sor.u32 256, 113
        %2774 = vrot.lane.b32.xlu0 %v2602, %s2773
        %v2775 = vpop.permute.xlu0 %2774
        %s2777 = sor.u32 256, 121
        %2778 = vrot.lane.b32.xlu0 %v2603, %s2777
        %v2779 = vpop.permute.xlu0 %2778
        %s2781 = sor.u32 256, 1
        %2782 = vrot.lane.b32.xlu0 %v2604, %s2781
        %v2783 = vpop.permute.xlu0 %2782
        %s2785 = sor.u32 256, 9
        %2786 = vrot.lane.b32.xlu0 %v2605, %s2785
        %v2787 = vpop.permute.xlu0 %2786
        %s2789 = sor.u32 256, 17
        %2790 = vrot.lane.b32.xlu0 %v2606, %s2789
        %v2791 = vpop.permute.xlu0 %2790
        %s2793 = sor.u32 256, 25
        %2794 = vrot.lane.b32.xlu0 %v2607, %s2793
        %v2795 = vpop.permute.xlu0 %2794
        %s2797 = sor.u32 256, 33
        %2798 = vrot.lane.b32.xlu0 %v2608, %s2797
        %v2799 = vpop.permute.xlu0 %2798
        %s2801 = sor.u32 256, 41
        %2802 = vrot.lane.b32.xlu0 %v2609, %s2801
        %v2803 = vpop.permute.xlu0 %2802
        %s2805 = sor.u32 256, 49
        %2806 = vrot.lane.b32.xlu0 %v2610, %s2805
        %v2807 = vpop.permute.xlu0 %2806
        %s2809 = sor.u32 256, 57
        %2810 = vrot.lane.b32.xlu0 %v2611, %s2809
        %v2811 = vpop.permute.xlu0 %2810
        %s2813 = sor.u32 256, 65
        %2814 = vrot.lane.b32.xlu0 %v2612, %s2813
        %v2815 = vpop.permute.xlu0 %2814
        %s2817 = sor.u32 256, 73
        %2818 = vrot.lane.b32.xlu0 %v2613, %s2817
        %v2819 = vpop.permute.xlu0 %2818
        %s2821 = sor.u32 256, 81
        %2822 = vrot.lane.b32.xlu0 %v2614, %s2821
        %v2823 = vpop.permute.xlu0 %2822
        %s2825 = sor.u32 256, 89
        %2826 = vrot.lane.b32.xlu0 %v2615, %s2825
        %v2827 = vpop.permute.xlu0 %2826
        %s2829 = sor.u32 256, 97
        %2830 = vrot.lane.b32.xlu0 %v2616, %s2829
        %v2831 = vpop.permute.xlu0 %2830
        %s2833 = sor.u32 256, 105
        %2834 = vrot.lane.b32.xlu0 %v2617, %s2833
        %v2835 = vpop.permute.xlu0 %2834
        %s2837 = sor.u32 256, 113
        %2838 = vrot.lane.b32.xlu0 %v2618, %s2837
        %v2839 = vpop.permute.xlu0 %2838
        %s2841 = sor.u32 256, 121
        %2842 = vrot.lane.b32.xlu0 %v2619, %s2841
        %v2843 = vpop.permute.xlu0 %2842
        %s2845 = sor.u32 256, 1
        %2846 = vrot.lane.b32.xlu0 %v2620, %s2845
        %v2847 = vpop.permute.xlu0 %2846
        %s2849 = sor.u32 256, 9
        %2850 = vrot.lane.b32.xlu0 %v2621, %s2849
        %v2851 = vpop.permute.xlu0 %2850
        %s2853 = sor.u32 256, 17
        %2854 = vrot.lane.b32.xlu0 %v2622, %s2853
        %v2855 = vpop.permute.xlu0 %2854
        %s2857 = sor.u32 256, 25
        %2858 = vrot.lane.b32.xlu0 %v2623, %s2857
        %v2859 = vpop.permute.xlu0 %2858
        %s2861 = sor.u32 256, 33
        %2862 = vrot.lane.b32.xlu0 %v2624, %s2861
        %v2863 = vpop.permute.xlu0 %2862
        %s2865 = sor.u32 256, 41
        %2866 = vrot.lane.b32.xlu0 %v2625, %s2865
        %v2867 = vpop.permute.xlu0 %2866
        %s2869 = sor.u32 256, 49
        %2870 = vrot.lane.b32.xlu0 %v2626, %s2869
        %v2871 = vpop.permute.xlu0 %2870
        %s2873 = sor.u32 256, 57
        %2874 = vrot.lane.b32.xlu0 %v2627, %s2873
        %v2875 = vpop.permute.xlu0 %2874
        %s2877 = sor.u32 256, 65
        %2878 = vrot.lane.b32.xlu0 %v2628, %s2877
        %v2879 = vpop.permute.xlu0 %2878
        %s2881 = sor.u32 256, 73
        %2882 = vrot.lane.b32.xlu0 %v2629, %s2881
        %v2883 = vpop.permute.xlu0 %2882
        %s2885 = sor.u32 256, 81
        %2886 = vrot.lane.b32.xlu0 %v2630, %s2885
        %v2887 = vpop.permute.xlu0 %2886
        %s2889 = sor.u32 256, 89
        %2890 = vrot.lane.b32.xlu0 %v2631, %s2889
        %v2891 = vpop.permute.xlu0 %2890
        %s2893 = sor.u32 256, 97
        %2894 = vrot.lane.b32.xlu0 %v2632, %s2893
        %v2895 = vpop.permute.xlu0 %2894
        %s2897 = sor.u32 256, 105
        %2898 = vrot.lane.b32.xlu0 %v2633, %s2897
        %v2899 = vpop.permute.xlu0 %2898
        %s2901 = sor.u32 256, 113
        %2902 = vrot.lane.b32.xlu0 %v2634, %s2901
        %v2903 = vpop.permute.xlu0 %2902
        %s2905 = sor.u32 256, 121
        %2906 = vrot.lane.b32.xlu0 %v2635, %s2905
        %v2907 = vpop.permute.xlu0 %2906
        %s2909 = sor.u32 256, 1
        %2910 = vrot.lane.b32.xlu0 %v2636, %s2909
        %v2911 = vpop.permute.xlu0 %2910
        %s2913 = sor.u32 256, 9
        %2914 = vrot.lane.b32.xlu0 %v2637, %s2913
        %v2915 = vpop.permute.xlu0 %2914
        %s2917 = sor.u32 256, 17
        %2918 = vrot.lane.b32.xlu0 %v2638, %s2917
        %v2919 = vpop.permute.xlu0 %2918
        %s2921 = sor.u32 256, 25
        %2922 = vrot.lane.b32.xlu0 %v2639, %s2921
        %v2923 = vpop.permute.xlu0 %2922
        %s2925 = sor.u32 256, 33
        %2926 = vrot.lane.b32.xlu0 %v2640, %s2925
        %v2927 = vpop.permute.xlu0 %2926
        %s2929 = sor.u32 256, 41
        %2930 = vrot.lane.b32.xlu0 %v2641, %s2929
        %v2931 = vpop.permute.xlu0 %2930
        %s2933 = sor.u32 256, 49
        %2934 = vrot.lane.b32.xlu0 %v2642, %s2933
        %v2935 = vpop.permute.xlu0 %2934
        %s2937 = sor.u32 256, 57
        %2938 = vrot.lane.b32.xlu0 %v2643, %s2937
        %v2939 = vpop.permute.xlu0 %2938
        %s2941 = sor.u32 256, 65
        %2942 = vrot.lane.b32.xlu0 %v2644, %s2941
        %v2943 = vpop.permute.xlu0 %2942
        %s2945 = sor.u32 256, 73
        %2946 = vrot.lane.b32.xlu0 %v2645, %s2945
        %v2947 = vpop.permute.xlu0 %2946
        %s2949 = sor.u32 256, 81
        %2950 = vrot.lane.b32.xlu0 %v2646, %s2949
        %v2951 = vpop.permute.xlu0 %2950
        %s2953 = sor.u32 256, 89
        %2954 = vrot.lane.b32.xlu0 %v2647, %s2953
        %v2955 = vpop.permute.xlu0 %2954
        %s2957 = sor.u32 256, 97
        %2958 = vrot.lane.b32.xlu0 %v2648, %s2957
        %v2959 = vpop.permute.xlu0 %2958
        %s2961 = sor.u32 256, 105
        %2962 = vrot.lane.b32.xlu0 %v2649, %s2961
        %v2963 = vpop.permute.xlu0 %2962
        %s2965 = sor.u32 256, 113
        %2966 = vrot.lane.b32.xlu0 %v2650, %s2965
        %v2967 = vpop.permute.xlu0 %2966
        %s2969 = sor.u32 256, 121
        %2970 = vrot.lane.b32.xlu0 %v2651, %s2969
        %v2971 = vpop.permute.xlu0 %2970
        %s2973 = sor.u32 256, 1
        %2974 = vrot.lane.b32.xlu0 %v2652, %s2973
        %v2975 = vpop.permute.xlu0 %2974
        %s2977 = sor.u32 256, 9
        %2978 = vrot.lane.b32.xlu0 %v2653, %s2977
        %v2979 = vpop.permute.xlu0 %2978
        %s2981 = sor.u32 256, 17
        %2982 = vrot.lane.b32.xlu0 %v2654, %s2981
        %v2983 = vpop.permute.xlu0 %2982
        %s2985 = sor.u32 256, 25
        %2986 = vrot.lane.b32.xlu0 %v2655, %s2985
        %v2987 = vpop.permute.xlu0 %2986
        %s2989 = sor.u32 256, 33
        %2990 = vrot.lane.b32.xlu0 %v2656, %s2989
        %v2991 = vpop.permute.xlu0 %2990
        %s2993 = sor.u32 256, 41
        %2994 = vrot.lane.b32.xlu0 %v2657, %s2993
        %v2995 = vpop.permute.xlu0 %2994
        %s2997 = sor.u32 256, 49
        %2998 = vrot.lane.b32.xlu0 %v2658, %s2997
        %v2999 = vpop.permute.xlu0 %2998
        %s3001 = sor.u32 256, 57
        %3002 = vrot.lane.b32.xlu0 %v2659, %s3001
        %v3003 = vpop.permute.xlu0 %3002
        %s3005 = sor.u32 256, 65
        %3006 = vrot.lane.b32.xlu0 %v2660, %s3005
        %v3007 = vpop.permute.xlu0 %3006
        %s3009 = sor.u32 256, 73
        %3010 = vrot.lane.b32.xlu0 %v2661, %s3009
        %v3011 = vpop.permute.xlu0 %3010
        %s3013 = sor.u32 256, 81
        %3014 = vrot.lane.b32.xlu0 %v2662, %s3013
        %v3015 = vpop.permute.xlu0 %3014
        %s3017 = sor.u32 256, 89
        %3018 = vrot.lane.b32.xlu0 %v2663, %s3017
        %v3019 = vpop.permute.xlu0 %3018
        %s3021 = sor.u32 256, 97
        %3022 = vrot.lane.b32.xlu0 %v2664, %s3021
        %v3023 = vpop.permute.xlu0 %3022
        %s3025 = sor.u32 256, 105
        %3026 = vrot.lane.b32.xlu0 %v2665, %s3025
        %v3027 = vpop.permute.xlu0 %3026
        %s3029 = sor.u32 256, 113
        %3030 = vrot.lane.b32.xlu0 %v2666, %s3029
        %v3031 = vpop.permute.xlu0 %3030
        %s3033 = sor.u32 256, 121
        %3034 = vrot.lane.b32.xlu0 %v2667, %s3033
        %v3035 = vpop.permute.xlu0 %3034
        %s3037 = sor.u32 256, 1
        %3038 = vrot.lane.b32.xlu0 %v2668, %s3037
        %v3039 = vpop.permute.xlu0 %3038
        %s3041 = sor.u32 256, 9
        %3042 = vrot.lane.b32.xlu0 %v2669, %s3041
        %v3043 = vpop.permute.xlu0 %3042
        %s3045 = sor.u32 256, 17
        %3046 = vrot.lane.b32.xlu0 %v2670, %s3045
        %v3047 = vpop.permute.xlu0 %3046
        %s3049 = sor.u32 256, 25
        %3050 = vrot.lane.b32.xlu0 %v2671, %s3049
        %v3051 = vpop.permute.xlu0 %3050
        %s3053 = sor.u32 256, 33
        %3054 = vrot.lane.b32.xlu0 %v2672, %s3053
        %v3055 = vpop.permute.xlu0 %3054
        %s3057 = sor.u32 256, 41
        %3058 = vrot.lane.b32.xlu0 %v2673, %s3057
        %v3059 = vpop.permute.xlu0 %3058
        %s3061 = sor.u32 256, 49
        %3062 = vrot.lane.b32.xlu0 %v2674, %s3061
        %v3063 = vpop.permute.xlu0 %3062
        %s3065 = sor.u32 256, 57
        %3066 = vrot.lane.b32.xlu0 %v2675, %s3065
        %v3067 = vpop.permute.xlu0 %3066
        %s3069 = sor.u32 256, 65
        %3070 = vrot.lane.b32.xlu0 %v2676, %s3069
        %v3071 = vpop.permute.xlu0 %3070
        %s3073 = sor.u32 256, 73
        %3074 = vrot.lane.b32.xlu0 %v2677, %s3073
        %v3075 = vpop.permute.xlu0 %3074
        %s3077 = sor.u32 256, 81
        %3078 = vrot.lane.b32.xlu0 %v2678, %s3077
        %v3079 = vpop.permute.xlu0 %3078
        %s3081 = sor.u32 256, 89
        %3082 = vrot.lane.b32.xlu0 %v2679, %s3081
        %v3083 = vpop.permute.xlu0 %3082
        %s3085 = sor.u32 256, 97
        %3086 = vrot.lane.b32.xlu0 %v2680, %s3085
        %v3087 = vpop.permute.xlu0 %3086
        %s3089 = sor.u32 256, 105
        %3090 = vrot.lane.b32.xlu0 %v2681, %s3089
        %v3091 = vpop.permute.xlu0 %3090
        %s3093 = sor.u32 256, 113
        %3094 = vrot.lane.b32.xlu0 %v2682, %s3093
        %v3095 = vpop.permute.xlu0 %3094
        %s3097 = sor.u32 256, 121
        %3098 = vrot.lane.b32.xlu0 %v2683, %s3097
        %v3099 = vpop.permute.xlu0 %3098
        %s3101 = sor.u32 256, 1
        %3102 = vrot.lane.b32.xlu0 %v2684, %s3101
        %v3103 = vpop.permute.xlu0 %3102
        %s3105 = sor.u32 256, 9
        %3106 = vrot.lane.b32.xlu0 %v2685, %s3105
        %v3107 = vpop.permute.xlu0 %3106
        %s3109 = sor.u32 256, 17
        %3110 = vrot.lane.b32.xlu0 %v2686, %s3109
        %v3111 = vpop.permute.xlu0 %3110
        %s3113 = sor.u32 256, 25
        %3114 = vrot.lane.b32.xlu0 %v2687, %s3113
        %v3115 = vpop.permute.xlu0 %3114
        %s3117 = sor.u32 256, 33
        %3118 = vrot.lane.b32.xlu0 %v2688, %s3117
        %v3119 = vpop.permute.xlu0 %3118
        %s3121 = sor.u32 256, 41
        %3122 = vrot.lane.b32.xlu0 %v2689, %s3121
        %v3123 = vpop.permute.xlu0 %3122
        %s3125 = sor.u32 256, 49
        %3126 = vrot.lane.b32.xlu0 %v2690, %s3125
        %v3127 = vpop.permute.xlu0 %3126
        %s3129 = sor.u32 256, 57
        %3130 = vrot.lane.b32.xlu0 %v2691, %s3129
        %v3131 = vpop.permute.xlu0 %3130
        %s3133 = sor.u32 256, 65
        %3134 = vrot.lane.b32.xlu0 %v2692, %s3133
        %v3135 = vpop.permute.xlu0 %3134
        %s3137 = sor.u32 256, 73
        %3138 = vrot.lane.b32.xlu0 %v2693, %s3137
        %v3139 = vpop.permute.xlu0 %3138
        %s3141 = sor.u32 256, 81
        %3142 = vrot.lane.b32.xlu0 %v2694, %s3141
        %v3143 = vpop.permute.xlu0 %3142
        %s3145 = sor.u32 256, 89
        %3146 = vrot.lane.b32.xlu0 %v2695, %s3145
        %v3147 = vpop.permute.xlu0 %3146
        %s3149 = sor.u32 256, 97
        %3150 = vrot.lane.b32.xlu0 %v2696, %s3149
        %v3151 = vpop.permute.xlu0 %3150
        %s3153 = sor.u32 256, 105
        %3154 = vrot.lane.b32.xlu0 %v2697, %s3153
        %v3155 = vpop.permute.xlu0 %3154
        %s3157 = sor.u32 256, 113
        %3158 = vrot.lane.b32.xlu0 %v2698, %s3157
        %v3159 = vpop.permute.xlu0 %3158
        %s3161 = sor.u32 256, 121
        %3162 = vrot.lane.b32.xlu0 %v2699, %s3161
        %v3163 = vpop.permute.xlu0 %3162
        %s3165 = sor.u32 256, 1
        %3166 = vrot.lane.b32.xlu0 %v2700, %s3165
        %v3167 = vpop.permute.xlu0 %3166
        %s3169 = sor.u32 256, 9
        %3170 = vrot.lane.b32.xlu0 %v2701, %s3169
        %v3171 = vpop.permute.xlu0 %3170
        %s3173 = sor.u32 256, 17
        %3174 = vrot.lane.b32.xlu0 %v2702, %s3173
        %v3175 = vpop.permute.xlu0 %3174
        %s3177 = sor.u32 256, 25
        %3178 = vrot.lane.b32.xlu0 %v2703, %s3177
        %v3179 = vpop.permute.xlu0 %3178
        %s3181 = sor.u32 256, 33
        %3182 = vrot.lane.b32.xlu0 %v2704, %s3181
        %v3183 = vpop.permute.xlu0 %3182
        %s3185 = sor.u32 256, 41
        %3186 = vrot.lane.b32.xlu0 %v2705, %s3185
        %v3187 = vpop.permute.xlu0 %3186
        %s3189 = sor.u32 256, 49
        %3190 = vrot.lane.b32.xlu0 %v2706, %s3189
        %v3191 = vpop.permute.xlu0 %3190
        %s3193 = sor.u32 256, 57
        %3194 = vrot.lane.b32.xlu0 %v2707, %s3193
        %v3195 = vpop.permute.xlu0 %3194
        %s3197 = sor.u32 256, 65
        %3198 = vrot.lane.b32.xlu0 %v2708, %s3197
        %v3199 = vpop.permute.xlu0 %3198
        %s3201 = sor.u32 256, 73
        %3202 = vrot.lane.b32.xlu0 %v2709, %s3201
        %v3203 = vpop.permute.xlu0 %3202
        %s3205 = sor.u32 256, 81
        %3206 = vrot.lane.b32.xlu0 %v2710, %s3205
        %v3207 = vpop.permute.xlu0 %3206
        %s3209 = sor.u32 256, 89
        %3210 = vrot.lane.b32.xlu0 %v2711, %s3209
        %v3211 = vpop.permute.xlu0 %3210
        %s3213 = sor.u32 256, 97
        %3214 = vrot.lane.b32.xlu0 %v2712, %s3213
        %v3215 = vpop.permute.xlu0 %3214
        %s3217 = sor.u32 256, 105
        %3218 = vrot.lane.b32.xlu0 %v2713, %s3217
        %v3219 = vpop.permute.xlu0 %3218
        %s3221 = sor.u32 256, 113
        %3222 = vrot.lane.b32.xlu0 %v2714, %s3221
        %v3223 = vpop.permute.xlu0 %3222
        %s3225 = sor.u32 256, 121
        %3226 = vrot.lane.b32.xlu0 %v2715, %s3225
        %v3227 = vpop.permute.xlu0 %3226
        %v3228 = vrot.slane %v2719, 1
        %v3229 = vrot.slane %v2723, 1
        %v3230 = vrot.slane %v2727, 1
        %v3231 = vrot.slane %v2731, 1
        %v3232 = vrot.slane %v2735, 1
        %v3233 = vrot.slane %v2739, 1
        %v3234 = vrot.slane %v2743, 1
        %v3235 = vrot.slane %v2747, 1
        %v3236 = vrot.slane %v2751, 1
        %v3237 = vrot.slane %v2755, 1
        %v3238 = vrot.slane %v2759, 1
        %v3239 = vrot.slane %v2763, 1
        %v3240 = vrot.slane %v2767, 1
        %v3241 = vrot.slane %v2771, 1
        %v3242 = vrot.slane %v2775, 1
        %v3243 = vrot.slane %v2779, 1
        %v3244 = vrot.slane %v2783, 1
        %v3245 = vrot.slane %v2787, 1
        %v3246 = vrot.slane %v2791, 1
        %v3247 = vrot.slane %v2795, 1
        %v3248 = vrot.slane %v2799, 1
        %v3249 = vrot.slane %v2803, 1
        %v3250 = vrot.slane %v2807, 1
        %v3251 = vrot.slane %v2811, 1
        %v3252 = vrot.slane %v2815, 1
        %v3253 = vrot.slane %v2819, 1
        %v3254 = vrot.slane %v2823, 1
        %v3255 = vrot.slane %v2827, 1
        %v3256 = vrot.slane %v2831, 1
        %v3257 = vrot.slane %v2835, 1
        %v3258 = vrot.slane %v2839, 1
        %v3259 = vrot.slane %v2843, 1
        %v3260 = vrot.slane %v2847, 1
        %v3261 = vrot.slane %v2851, 1
        %v3262 = vrot.slane %v2855, 1
        %v3263 = vrot.slane %v2859, 1
        %v3264 = vrot.slane %v2863, 1
        %v3265 = vrot.slane %v2867, 1
        %v3266 = vrot.slane %v2871, 1
        %v3267 = vrot.slane %v2875, 1
        %v3268 = vrot.slane %v2879, 1
        %v3269 = vrot.slane %v2883, 1
        %v3270 = vrot.slane %v2887, 1
        %v3271 = vrot.slane %v2891, 1
        %v3272 = vrot.slane %v2895, 1
        %v3273 = vrot.slane %v2899, 1
        %v3274 = vrot.slane %v2903, 1
        %v3275 = vrot.slane %v2907, 1
        %v3276 = vrot.slane %v2911, 1
        %v3277 = vrot.slane %v2915, 1
        %v3278 = vrot.slane %v2919, 1
        %v3279 = vrot.slane %v2923, 1
        %v3280 = vrot.slane %v2927, 1
        %v3281 = vrot.slane %v2931, 1
        %v3282 = vrot.slane %v2935, 1
        %v3283 = vrot.slane %v2939, 1
        %v3284 = vrot.slane %v2943, 1
        %v3285 = vrot.slane %v2947, 1
        %v3286 = vrot.slane %v2951, 1
        %v3287 = vrot.slane %v2955, 1
        %v3288 = vrot.slane %v2959, 1
        %v3289 = vrot.slane %v2963, 1
        %v3290 = vrot.slane %v2967, 1
        %v3291 = vrot.slane %v2971, 1
        %v3292 = vrot.slane %v2975, 1
        %v3293 = vrot.slane %v2979, 1
        %v3294 = vrot.slane %v2983, 1
        %v3295 = vrot.slane %v2987, 1
        %v3296 = vrot.slane %v2991, 1
        %v3297 = vrot.slane %v2995, 1
        %v3298 = vrot.slane %v2999, 1
        %v3299 = vrot.slane %v3003, 1
        %v3300 = vrot.slane %v3007, 1
        %v3301 = vrot.slane %v3011, 1
        %v3302 = vrot.slane %v3015, 1
        %v3303 = vrot.slane %v3019, 1
        %v3304 = vrot.slane %v3023, 1
        %v3305 = vrot.slane %v3027, 1
        %v3306 = vrot.slane %v3031, 1
        %v3307 = vrot.slane %v3035, 1
        %v3308 = vrot.slane %v3039, 1
        %v3309 = vrot.slane %v3043, 1
        %v3310 = vrot.slane %v3047, 1
        %v3311 = vrot.slane %v3051, 1
        %v3312 = vrot.slane %v3055, 1
        %v3313 = vrot.slane %v3059, 1
        %v3314 = vrot.slane %v3063, 1
        %v3315 = vrot.slane %v3067, 1
        %v3316 = vrot.slane %v3071, 1
        %v3317 = vrot.slane %v3075, 1
        %v3318 = vrot.slane %v3079, 1
        %v3319 = vrot.slane %v3083, 1
        %v3320 = vrot.slane %v3087, 1
        %v3321 = vrot.slane %v3091, 1
        %v3322 = vrot.slane %v3095, 1
        %v3323 = vrot.slane %v3099, 1
        %v3324 = vrot.slane %v3103, 1
        %v3325 = vrot.slane %v3107, 1
        %v3326 = vrot.slane %v3111, 1
        %v3327 = vrot.slane %v3115, 1
        %v3328 = vrot.slane %v3119, 1
        %v3329 = vrot.slane %v3123, 1
        %v3330 = vrot.slane %v3127, 1
        %v3331 = vrot.slane %v3131, 1
        %v3332 = vrot.slane %v3135, 1
        %v3333 = vrot.slane %v3139, 1
        %v3334 = vrot.slane %v3143, 1
        %v3335 = vrot.slane %v3147, 1
        %v3336 = vrot.slane %v3151, 1
        %v3337 = vrot.slane %v3155, 1
        %v3338 = vrot.slane %v3159, 1
        %v3339 = vrot.slane %v3163, 1
        %v3340 = vrot.slane %v3167, 1
        %v3341 = vrot.slane %v3171, 1
        %v3342 = vrot.slane %v3175, 1
        %v3343 = vrot.slane %v3179, 1
        %v3344 = vrot.slane %v3183, 1
        %v3345 = vrot.slane %v3187, 1
        %v3346 = vrot.slane %v3191, 1
        %v3347 = vrot.slane %v3195, 1
        %v3348 = vrot.slane %v3199, 1
        %v3349 = vrot.slane %v3203, 1
        %v3350 = vrot.slane %v3207, 1
        %v3351 = vrot.slane %v3211, 1
        %v3352 = vrot.slane %v3215, 1
        %v3353 = vrot.slane %v3219, 1
        %v3354 = vrot.slane %v3223, 1
        %v3355 = vrot.slane %v3227, 1
        %v3356 = vlaneseq
        %v3357 = vshrl.u32 %v3356, 7
        %vm3358 = vcmp.lt.s32.totalorder %v3357, 7
        %v3359 = vsel %vm3358, %v3354, %v3355
        %v3360 = vsel %vm3358, %v3353, %v3354
        %v3361 = vsel %vm3358, %v3352, %v3353
        %v3362 = vsel %vm3358, %v3351, %v3352
        %v3363 = vsel %vm3358, %v3350, %v3351
        %v3364 = vsel %vm3358, %v3349, %v3350
        %v3365 = vsel %vm3358, %v3348, %v3349
        %v3366 = vsel %vm3358, %v3347, %v3348
        %v3367 = vsel %vm3358, %v3346, %v3347
        %v3368 = vsel %vm3358, %v3345, %v3346
        %v3369 = vsel %vm3358, %v3344, %v3345
        %v3370 = vsel %vm3358, %v3343, %v3344
        %v3371 = vsel %vm3358, %v3342, %v3343
        %v3372 = vsel %vm3358, %v3341, %v3342
        %v3373 = vsel %vm3358, %v3340, %v3341
        %v3374 = vsel %vm3358, %v3339, %v3340
        %v3375 = vsel %vm3358, %v3338, %v3339
        %v3376 = vsel %vm3358, %v3337, %v3338
        %v3377 = vsel %vm3358, %v3336, %v3337
        %v3378 = vsel %vm3358, %v3335, %v3336
        %v3379 = vsel %vm3358, %v3334, %v3335
        %v3380 = vsel %vm3358, %v3333, %v3334
        %v3381 = vsel %vm3358, %v3332, %v3333
        %v3382 = vsel %vm3358, %v3331, %v3332
        %v3383 = vsel %vm3358, %v3330, %v3331
        %v3384 = vsel %vm3358, %v3329, %v3330
        %v3385 = vsel %vm3358, %v3328, %v3329
        %v3386 = vsel %vm3358, %v3327, %v3328
        %v3387 = vsel %vm3358, %v3326, %v3327
        %v3388 = vsel %vm3358, %v3325, %v3326
        %v3389 = vsel %vm3358, %v3324, %v3325
        %v3390 = vsel %vm3358, %v3323, %v3324
        %v3391 = vsel %vm3358, %v3322, %v3323
        %v3392 = vsel %vm3358, %v3321, %v3322
        %v3393 = vsel %vm3358, %v3320, %v3321
        %v3394 = vsel %vm3358, %v3319, %v3320
        %v3395 = vsel %vm3358, %v3318, %v3319
        %v3396 = vsel %vm3358, %v3317, %v3318
        %v3397 = vsel %vm3358, %v3316, %v3317
        %v3398 = vsel %vm3358, %v3315, %v3316
        %v3399 = vsel %vm3358, %v3314, %v3315
        %v3400 = vsel %vm3358, %v3313, %v3314
        %v3401 = vsel %vm3358, %v3312, %v3313
        %v3402 = vsel %vm3358, %v3311, %v3312
        %v3403 = vsel %vm3358, %v3310, %v3311
        %v3404 = vsel %vm3358, %v3309, %v3310
        %v3405 = vsel %vm3358, %v3308, %v3309
        %v3406 = vsel %vm3358, %v3307, %v3308
        %v3407 = vsel %vm3358, %v3306, %v3307
        %v3408 = vsel %vm3358, %v3305, %v3306
        %v3409 = vsel %vm3358, %v3304, %v3305
        %v3410 = vsel %vm3358, %v3303, %v3304
        %v3411 = vsel %vm3358, %v3302, %v3303
        %v3412 = vsel %vm3358, %v3301, %v3302
        %v3413 = vsel %vm3358, %v3300, %v3301
        %v3414 = vsel %vm3358, %v3299, %v3300
        %v3415 = vsel %vm3358, %v3298, %v3299
        %v3416 = vsel %vm3358, %v3297, %v3298
        %v3417 = vsel %vm3358, %v3296, %v3297
        %v3418 = vsel %vm3358, %v3295, %v3296
        %v3419 = vsel %vm3358, %v3294, %v3295
        %v3420 = vsel %vm3358, %v3293, %v3294
        %v3421 = vsel %vm3358, %v3292, %v3293
        %v3422 = vsel %vm3358, %v3291, %v3292
        %v3423 = vsel %vm3358, %v3290, %v3291
        %v3424 = vsel %vm3358, %v3289, %v3290
        %v3425 = vsel %vm3358, %v3288, %v3289
        %v3426 = vsel %vm3358, %v3287, %v3288
        %v3427 = vsel %vm3358, %v3286, %v3287
        %v3428 = vsel %vm3358, %v3285, %v3286
        %v3429 = vsel %vm3358, %v3284, %v3285
        %v3430 = vsel %vm3358, %v3283, %v3284
        %v3431 = vsel %vm3358, %v3282, %v3283
        %v3432 = vsel %vm3358, %v3281, %v3282
        %v3433 = vsel %vm3358, %v3280, %v3281
        %v3434 = vsel %vm3358, %v3279, %v3280
        %v3435 = vsel %vm3358, %v3278, %v3279
        %v3436 = vsel %vm3358, %v3277, %v3278
        %v3437 = vsel %vm3358, %v3276, %v3277
        %v3438 = vsel %vm3358, %v3275, %v3276
        %v3439 = vsel %vm3358, %v3274, %v3275
        %v3440 = vsel %vm3358, %v3273, %v3274
        %v3441 = vsel %vm3358, %v3272, %v3273
        %v3442 = vsel %vm3358, %v3271, %v3272
        %v3443 = vsel %vm3358, %v3270, %v3271
        %v3444 = vsel %vm3358, %v3269, %v3270
        %v3445 = vsel %vm3358, %v3268, %v3269
        %v3446 = vsel %vm3358, %v3267, %v3268
        %v3447 = vsel %vm3358, %v3266, %v3267
        %v3448 = vsel %vm3358, %v3265, %v3266
        %v3449 = vsel %vm3358, %v3264, %v3265
        %v3450 = vsel %vm3358, %v3263, %v3264
        %v3451 = vsel %vm3358, %v3262, %v3263
        %v3452 = vsel %vm3358, %v3261, %v3262
        %v3453 = vsel %vm3358, %v3260, %v3261
        %v3454 = vsel %vm3358, %v3259, %v3260
        %v3455 = vsel %vm3358, %v3258, %v3259
        %v3456 = vsel %vm3358, %v3257, %v3258
        %v3457 = vsel %vm3358, %v3256, %v3257
        %v3458 = vsel %vm3358, %v3255, %v3256
        %v3459 = vsel %vm3358, %v3254, %v3255
        %v3460 = vsel %vm3358, %v3253, %v3254
        %v3461 = vsel %vm3358, %v3252, %v3253
        %v3462 = vsel %vm3358, %v3251, %v3252
        %v3463 = vsel %vm3358, %v3250, %v3251
        %v3464 = vsel %vm3358, %v3249, %v3250
        %v3465 = vsel %vm3358, %v3248, %v3249
        %v3466 = vsel %vm3358, %v3247, %v3248
        %v3467 = vsel %vm3358, %v3246, %v3247
        %v3468 = vsel %vm3358, %v3245, %v3246
        %v3469 = vsel %vm3358, %v3244, %v3245
        %v3470 = vsel %vm3358, %v3243, %v3244
        %v3471 = vsel %vm3358, %v3242, %v3243
        %v3472 = vsel %vm3358, %v3241, %v3242
        %v3473 = vsel %vm3358, %v3240, %v3241
        %v3474 = vsel %vm3358, %v3239, %v3240
        %v3475 = vsel %vm3358, %v3238, %v3239
        %v3476 = vsel %vm3358, %v3237, %v3238
        %v3477 = vsel %vm3358, %v3236, %v3237
        %v3478 = vsel %vm3358, %v3235, %v3236
        %v3479 = vsel %vm3358, %v3234, %v3235
        %v3480 = vsel %vm3358, %v3233, %v3234
        %v3481 = vsel %vm3358, %v3232, %v3233
        %v3482 = vsel %vm3358, %v3231, %v3232
        %v3483 = vsel %vm3358, %v3230, %v3231
        %v3484 = vsel %vm3358, %v3229, %v3230
        %v3485 = vsel %vm3358, %v3228, %v3229
        %v3486 = vsel %vm3358, %v3355, %v3228
        %v3487 = vadd.s32 %v3357, 8
        %v3488 = vadd.s32 %v3357, 16
        %v3489 = vadd.s32 %v3357, 24
        %v3490 = vadd.s32 %v3357, 32
        %v3491 = vadd.s32 %v3357, 40
        %v3492 = vadd.s32 %v3357, 48
        %v3493 = vadd.s32 %v3357, 56
        %v3494 = vadd.s32 %v3357, 64
        %v3495 = vadd.s32 %v3357, 72
        %v3496 = vadd.s32 %v3357, 80
        %v3497 = vadd.s32 %v3357, 88
        %v3498 = vadd.s32 %v3357, 96
        %v3499 = vadd.s32 %v3357, 104
        %v3500 = vadd.s32 %v3357, 112
        %v3501 = vadd.s32 %v3357, 120
        %v3502 = vlaneseq
        %v3503 = vand.u32 %v3502, 127
        %vm3504 = vcmp.le.s32.totalorder %v3503, %v3357
        %vm3505 = vcmp.le.s32.totalorder %v3503, %v3487
        %vm3506 = vcmp.le.s32.totalorder %v3503, %v3488
        %vm3507 = vcmp.le.s32.totalorder %v3503, %v3489
        %vm3508 = vcmp.le.s32.totalorder %v3503, %v3490
        %vm3509 = vcmp.le.s32.totalorder %v3503, %v3491
        %vm3510 = vcmp.le.s32.totalorder %v3503, %v3492
        %vm3511 = vcmp.le.s32.totalorder %v3503, %v3493
        %vm3512 = vcmp.le.s32.totalorder %v3503, %v3494
        %vm3513 = vcmp.le.s32.totalorder %v3503, %v3495
        %vm3514 = vcmp.le.s32.totalorder %v3503, %v3496
        %vm3515 = vcmp.le.s32.totalorder %v3503, %v3497
        %vm3516 = vcmp.le.s32.totalorder %v3503, %v3498
        %vm3517 = vcmp.le.s32.totalorder %v3503, %v3499
        %vm3518 = vcmp.le.s32.totalorder %v3503, %v3500
        %vm3519 = vcmp.le.s32.totalorder %v3503, %v3501
        %v3520 = vadd.s32 %v3357, 1
        %v3521 = vadd.s32 %v3487, 1
        %v3522 = vadd.s32 %v3488, 1
        %v3523 = vadd.s32 %v3489, 1
        %v3524 = vadd.s32 %v3490, 1
        %v3525 = vadd.s32 %v3491, 1
        %v3526 = vadd.s32 %v3492, 1
        %v3527 = vadd.s32 %v3493, 1
        %v3528 = vadd.s32 %v3494, 1
        %v3529 = vadd.s32 %v3495, 1
        %v3530 = vadd.s32 %v3496, 1
        %v3531 = vadd.s32 %v3497, 1
        %v3532 = vadd.s32 %v3498, 1
        %v3533 = vadd.s32 %v3499, 1
        %v3534 = vadd.s32 %v3500, 1
        %v3535 = vadd.s32 %v3501, 1
        %vm3536 = vcmp.eq.s32.totalorder %v3503, %v3520
        %vm3537 = vcmp.eq.s32.totalorder %v3503, %v3521
        %vm3538 = vcmp.eq.s32.totalorder %v3503, %v3522
        %vm3539 = vcmp.eq.s32.totalorder %v3503, %v3523
        %vm3540 = vcmp.eq.s32.totalorder %v3503, %v3524
        %vm3541 = vcmp.eq.s32.totalorder %v3503, %v3525
        %vm3542 = vcmp.eq.s32.totalorder %v3503, %v3526
        %vm3543 = vcmp.eq.s32.totalorder %v3503, %v3527
        %vm3544 = vcmp.eq.s32.totalorder %v3503, %v3528
        %vm3545 = vcmp.eq.s32.totalorder %v3503, %v3529
        %vm3546 = vcmp.eq.s32.totalorder %v3503, %v3530
        %vm3547 = vcmp.eq.s32.totalorder %v3503, %v3531
        %vm3548 = vcmp.eq.s32.totalorder %v3503, %v3532
        %vm3549 = vcmp.eq.s32.totalorder %v3503, %v3533
        %vm3550 = vcmp.eq.s32.totalorder %v3503, %v3534
        %vm3551 = vcmp.eq.s32.totalorder %v3503, %v3535
        %v3552 = vsel %vm3536, 0.0, %v3485
        %v3553 = vsel %vm3537, 0.0, %v3484
        %v3554 = vsel %vm3538, 0.0, %v3483
        %v3555 = vsel %vm3539, 0.0, %v3482
        %v3556 = vsel %vm3540, 0.0, %v3481
        %v3557 = vsel %vm3541, 0.0, %v3480
        %v3558 = vsel %vm3542, 0.0, %v3479
        %v3559 = vsel %vm3543, 0.0, %v3478
        %v3560 = vsel %vm3544, 0.0, %v3477
        %v3561 = vsel %vm3545, 0.0, %v3476
        %v3562 = vsel %vm3546, 0.0, %v3475
        %v3563 = vsel %vm3547, 0.0, %v3474
        %v3564 = vsel %vm3548, 0.0, %v3473
        %v3565 = vsel %vm3549, 0.0, %v3472
        %v3566 = vsel %vm3550, 0.0, %v3471
        %v3567 = vsel %vm3551, 0.0, %v3470
        %v3568 = vsel %vm3536, 0.0, %v3469
        %v3569 = vsel %vm3537, 0.0, %v3468
        %v3570 = vsel %vm3538, 0.0, %v3467
        %v3571 = vsel %vm3539, 0.0, %v3466
        %v3572 = vsel %vm3540, 0.0, %v3465
        %v3573 = vsel %vm3541, 0.0, %v3464
        %v3574 = vsel %vm3542, 0.0, %v3463
        %v3575 = vsel %vm3543, 0.0, %v3462
        %v3576 = vsel %vm3544, 0.0, %v3461
        %v3577 = vsel %vm3545, 0.0, %v3460
        %v3578 = vsel %vm3546, 0.0, %v3459
        %v3579 = vsel %vm3547, 0.0, %v3458
        %v3580 = vsel %vm3548, 0.0, %v3457
        %v3581 = vsel %vm3549, 0.0, %v3456
        %v3582 = vsel %vm3550, 0.0, %v3455
        %v3583 = vsel %vm3551, 0.0, %v3454
        %v3584 = vsel %vm3536, 0.0, %v3453
        %v3585 = vsel %vm3537, 0.0, %v3452
        %v3586 = vsel %vm3538, 0.0, %v3451
        %v3587 = vsel %vm3539, 0.0, %v3450
        %v3588 = vsel %vm3540, 0.0, %v3449
        %v3589 = vsel %vm3541, 0.0, %v3448
        %v3590 = vsel %vm3542, 0.0, %v3447
        %v3591 = vsel %vm3543, 0.0, %v3446
        %v3592 = vsel %vm3544, 0.0, %v3445
        %v3593 = vsel %vm3545, 0.0, %v3444
        %v3594 = vsel %vm3546, 0.0, %v3443
        %v3595 = vsel %vm3547, 0.0, %v3442
        %v3596 = vsel %vm3548, 0.0, %v3441
        %v3597 = vsel %vm3549, 0.0, %v3440
        %v3598 = vsel %vm3550, 0.0, %v3439
        %v3599 = vsel %vm3551, 0.0, %v3438
        %v3600 = vsel %vm3536, 0.0, %v3437
        %v3601 = vsel %vm3537, 0.0, %v3436
        %v3602 = vsel %vm3538, 0.0, %v3435
        %v3603 = vsel %vm3539, 0.0, %v3434
        %v3604 = vsel %vm3540, 0.0, %v3433
        %v3605 = vsel %vm3541, 0.0, %v3432
        %v3606 = vsel %vm3542, 0.0, %v3431
        %v3607 = vsel %vm3543, 0.0, %v3430
        %v3608 = vsel %vm3544, 0.0, %v3429
        %v3609 = vsel %vm3545, 0.0, %v3428
        %v3610 = vsel %vm3546, 0.0, %v3427
        %v3611 = vsel %vm3547, 0.0, %v3426
        %v3612 = vsel %vm3548, 0.0, %v3425
        %v3613 = vsel %vm3549, 0.0, %v3424
        %v3614 = vsel %vm3550, 0.0, %v3423
        %v3615 = vsel %vm3551, 0.0, %v3422
        %v3616 = vsel %vm3536, 0.0, %v3421
        %v3617 = vsel %vm3537, 0.0, %v3420
        %v3618 = vsel %vm3538, 0.0, %v3419
        %v3619 = vsel %vm3539, 0.0, %v3418
        %v3620 = vsel %vm3540, 0.0, %v3417
        %v3621 = vsel %vm3541, 0.0, %v3416
        %v3622 = vsel %vm3542, 0.0, %v3415
        %v3623 = vsel %vm3543, 0.0, %v3414
        %v3624 = vsel %vm3544, 0.0, %v3413
        %v3625 = vsel %vm3545, 0.0, %v3412
        %v3626 = vsel %vm3546, 0.0, %v3411
        %v3627 = vsel %vm3547, 0.0, %v3410
        %v3628 = vsel %vm3548, 0.0, %v3409
        %v3629 = vsel %vm3549, 0.0, %v3408
        %v3630 = vsel %vm3550, 0.0, %v3407
        %v3631 = vsel %vm3551, 0.0, %v3406
        %v3632 = vsel %vm3536, 0.0, %v3405
        %v3633 = vsel %vm3537, 0.0, %v3404
        %v3634 = vsel %vm3538, 0.0, %v3403
        %v3635 = vsel %vm3539, 0.0, %v3402
        %v3636 = vsel %vm3540, 0.0, %v3401
        %v3637 = vsel %vm3541, 0.0, %v3400
        %v3638 = vsel %vm3542, 0.0, %v3399
        %v3639 = vsel %vm3543, 0.0, %v3398
        %v3640 = vsel %vm3544, 0.0, %v3397
        %v3641 = vsel %vm3545, 0.0, %v3396
        %v3642 = vsel %vm3546, 0.0, %v3395
        %v3643 = vsel %vm3547, 0.0, %v3394
        %v3644 = vsel %vm3548, 0.0, %v3393
        %v3645 = vsel %vm3549, 0.0, %v3392
        %v3646 = vsel %vm3550, 0.0, %v3391
        %v3647 = vsel %vm3551, 0.0, %v3390
        %v3648 = vsel %vm3536, 0.0, %v3389
        %v3649 = vsel %vm3537, 0.0, %v3388
        %v3650 = vsel %vm3538, 0.0, %v3387
        %v3651 = vsel %vm3539, 0.0, %v3386
        %v3652 = vsel %vm3540, 0.0, %v3385
        %v3653 = vsel %vm3541, 0.0, %v3384
        %v3654 = vsel %vm3542, 0.0, %v3383
        %v3655 = vsel %vm3543, 0.0, %v3382
        %v3656 = vsel %vm3544, 0.0, %v3381
        %v3657 = vsel %vm3545, 0.0, %v3380
        %v3658 = vsel %vm3546, 0.0, %v3379
        %v3659 = vsel %vm3547, 0.0, %v3378
        %v3660 = vsel %vm3548, 0.0, %v3377
        %v3661 = vsel %vm3549, 0.0, %v3376
        %v3662 = vsel %vm3550, 0.0, %v3375
        %v3663 = vsel %vm3551, 0.0, %v3374
        %v3664 = vsel %vm3536, 0.0, %v3373
        %v3665 = vsel %vm3537, 0.0, %v3372
        %v3666 = vsel %vm3538, 0.0, %v3371
        %v3667 = vsel %vm3539, 0.0, %v3370
        %v3668 = vsel %vm3540, 0.0, %v3369
        %v3669 = vsel %vm3541, 0.0, %v3368
        %v3670 = vsel %vm3542, 0.0, %v3367
        %v3671 = vsel %vm3543, 0.0, %v3366
        %v3672 = vsel %vm3544, 0.0, %v3365
        %v3673 = vsel %vm3545, 0.0, %v3364
        %v3674 = vsel %vm3546, 0.0, %v3363
        %v3675 = vsel %vm3547, 0.0, %v3362
        %v3676 = vsel %vm3548, 0.0, %v3361
        %v3677 = vsel %vm3549, 0.0, %v3360
        %v3678 = vsel %vm3550, 0.0, %v3359
        %v3679 = vsel %vm3551, 0.0, %v3486
        %v3680 = vsel %vm3504, %v2719, %v3552
        %v3681 = vsel %vm3505, %v2723, %v3553
        %v3682 = vsel %vm3506, %v2727, %v3554
        %v3683 = vsel %vm3507, %v2731, %v3555
        %v3684 = vsel %vm3508, %v2735, %v3556
        %v3685 = vsel %vm3509, %v2739, %v3557
        %v3686 = vsel %vm3510, %v2743, %v3558
        %v3687 = vsel %vm3511, %v2747, %v3559
        %v3688 = vsel %vm3512, %v2751, %v3560
        %v3689 = vsel %vm3513, %v2755, %v3561
        %v3690 = vsel %vm3514, %v2759, %v3562
        %v3691 = vsel %vm3515, %v2763, %v3563
        %v3692 = vsel %vm3516, %v2767, %v3564
        %v3693 = vsel %vm3517, %v2771, %v3565
        %v3694 = vsel %vm3518, %v2775, %v3566
        %v3695 = vsel %vm3519, %v2779, %v3567
        %v3696 = vsel %vm3504, %v2783, %v3568
        %v3697 = vsel %vm3505, %v2787, %v3569
        %v3698 = vsel %vm3506, %v2791, %v3570
        %v3699 = vsel %vm3507, %v2795, %v3571
        %v3700 = vsel %vm3508, %v2799, %v3572
        %v3701 = vsel %vm3509, %v2803, %v3573
        %v3702 = vsel %vm3510, %v2807, %v3574
        %v3703 = vsel %vm3511, %v2811, %v3575
        %v3704 = vsel %vm3512, %v2815, %v3576
        %v3705 = vsel %vm3513, %v2819, %v3577
        %v3706 = vsel %vm3514, %v2823, %v3578
        %v3707 = vsel %vm3515, %v2827, %v3579
        %v3708 = vsel %vm3516, %v2831, %v3580
        %v3709 = vsel %vm3517, %v2835, %v3581
        %v3710 = vsel %vm3518, %v2839, %v3582
        %v3711 = vsel %vm3519, %v2843, %v3583
        %v3712 = vsel %vm3504, %v2847, %v3584
        %v3713 = vsel %vm3505, %v2851, %v3585
        %v3714 = vsel %vm3506, %v2855, %v3586
        %v3715 = vsel %vm3507, %v2859, %v3587
        %v3716 = vsel %vm3508, %v2863, %v3588
        %v3717 = vsel %vm3509, %v2867, %v3589
        %v3718 = vsel %vm3510, %v2871, %v3590
        %v3719 = vsel %vm3511, %v2875, %v3591
        %v3720 = vsel %vm3512, %v2879, %v3592
        %v3721 = vsel %vm3513, %v2883, %v3593
        %v3722 = vsel %vm3514, %v2887, %v3594
        %v3723 = vsel %vm3515, %v2891, %v3595
        %v3724 = vsel %vm3516, %v2895, %v3596
        %v3725 = vsel %vm3517, %v2899, %v3597
        %v3726 = vsel %vm3518, %v2903, %v3598
        %v3727 = vsel %vm3519, %v2907, %v3599
        %v3728 = vsel %vm3504, %v2911, %v3600
        %v3729 = vsel %vm3505, %v2915, %v3601
        %v3730 = vsel %vm3506, %v2919, %v3602
        %v3731 = vsel %vm3507, %v2923, %v3603
        %v3732 = vsel %vm3508, %v2927, %v3604
        %v3733 = vsel %vm3509, %v2931, %v3605
        %v3734 = vsel %vm3510, %v2935, %v3606
        %v3735 = vsel %vm3511, %v2939, %v3607
        %v3736 = vsel %vm3512, %v2943, %v3608
        %v3737 = vsel %vm3513, %v2947, %v3609
        %v3738 = vsel %vm3514, %v2951, %v3610
        %v3739 = vsel %vm3515, %v2955, %v3611
        %v3740 = vsel %vm3516, %v2959, %v3612
        %v3741 = vsel %vm3517, %v2963, %v3613
        %v3742 = vsel %vm3518, %v2967, %v3614
        %v3743 = vsel %vm3519, %v2971, %v3615
        %v3744 = vsel %vm3504, %v2975, %v3616
        %v3745 = vsel %vm3505, %v2979, %v3617
        %v3746 = vsel %vm3506, %v2983, %v3618
        %v3747 = vsel %vm3507, %v2987, %v3619
        %v3748 = vsel %vm3508, %v2991, %v3620
        %v3749 = vsel %vm3509, %v2995, %v3621
        %v3750 = vsel %vm3510, %v2999, %v3622
        %v3751 = vsel %vm3511, %v3003, %v3623
        %v3752 = vsel %vm3512, %v3007, %v3624
        %v3753 = vsel %vm3513, %v3011, %v3625
        %v3754 = vsel %vm3514, %v3015, %v3626
        %v3755 = vsel %vm3515, %v3019, %v3627
        %v3756 = vsel %vm3516, %v3023, %v3628
        %v3757 = vsel %vm3517, %v3027, %v3629
        %v3758 = vsel %vm3518, %v3031, %v3630
        %v3759 = vsel %vm3519, %v3035, %v3631
        %v3760 = vsel %vm3504, %v3039, %v3632
        %v3761 = vsel %vm3505, %v3043, %v3633
        %v3762 = vsel %vm3506, %v3047, %v3634
        %v3763 = vsel %vm3507, %v3051, %v3635
        %v3764 = vsel %vm3508, %v3055, %v3636
        %v3765 = vsel %vm3509, %v3059, %v3637
        %v3766 = vsel %vm3510, %v3063, %v3638
        %v3767 = vsel %vm3511, %v3067, %v3639
        %v3768 = vsel %vm3512, %v3071, %v3640
        %v3769 = vsel %vm3513, %v3075, %v3641
        %v3770 = vsel %vm3514, %v3079, %v3642
        %v3771 = vsel %vm3515, %v3083, %v3643
        %v3772 = vsel %vm3516, %v3087, %v3644
        %v3773 = vsel %vm3517, %v3091, %v3645
        %v3774 = vsel %vm3518, %v3095, %v3646
        %v3775 = vsel %vm3519, %v3099, %v3647
        %v3776 = vsel %vm3504, %v3103, %v3648
        %v3777 = vsel %vm3505, %v3107, %v3649
        %v3778 = vsel %vm3506, %v3111, %v3650
        %v3779 = vsel %vm3507, %v3115, %v3651
        %v3780 = vsel %vm3508, %v3119, %v3652
        %v3781 = vsel %vm3509, %v3123, %v3653
        %v3782 = vsel %vm3510, %v3127, %v3654
        %v3783 = vsel %vm3511, %v3131, %v3655
        %v3784 = vsel %vm3512, %v3135, %v3656
        %v3785 = vsel %vm3513, %v3139, %v3657
        %v3786 = vsel %vm3514, %v3143, %v3658
        %v3787 = vsel %vm3515, %v3147, %v3659
        %v3788 = vsel %vm3516, %v3151, %v3660
        %v3789 = vsel %vm3517, %v3155, %v3661
        %v3790 = vsel %vm3518, %v3159, %v3662
        %v3791 = vsel %vm3519, %v3163, %v3663
        %v3792 = vsel %vm3504, %v3167, %v3664
        %v3793 = vsel %vm3505, %v3171, %v3665
        %v3794 = vsel %vm3506, %v3175, %v3666
        %v3795 = vsel %vm3507, %v3179, %v3667
        %v3796 = vsel %vm3508, %v3183, %v3668
        %v3797 = vsel %vm3509, %v3187, %v3669
        %v3798 = vsel %vm3510, %v3191, %v3670
        %v3799 = vsel %vm3511, %v3195, %v3671
        %v3800 = vsel %vm3512, %v3199, %v3672
        %v3801 = vsel %vm3513, %v3203, %v3673
        %v3802 = vsel %vm3514, %v3207, %v3674
        %v3803 = vsel %vm3515, %v3211, %v3675
        %v3804 = vsel %vm3516, %v3215, %v3676
        %v3805 = vsel %vm3517, %v3219, %v3677
        %v3806 = vsel %vm3518, %v3223, %v3678
        %v3807 = vsel %vm3519, %v3227, %v3679
        %v3808 = vadd.f32 %v2404, %v3680
        %v3809 = vadd.f32 %v2405, %v3681
        %v3810 = vadd.f32 %v2406, %v3682
        %v3811 = vadd.f32 %v2407, %v3683
        %v3812 = vadd.f32 %v2408, %v3684
        %v3813 = vadd.f32 %v2409, %v3685
        %v3814 = vadd.f32 %v2410, %v3686
        %v3815 = vadd.f32 %v2411, %v3687
        %v3816 = vadd.f32 %v2412, %v3688
        %v3817 = vadd.f32 %v2413, %v3689
        %v3818 = vadd.f32 %v2414, %v3690
        %v3819 = vadd.f32 %v2415, %v3691
        %v3820 = vadd.f32 %v2416, %v3692
        %v3821 = vadd.f32 %v2417, %v3693
        %v3822 = vadd.f32 %v2418, %v3694
        %v3823 = vadd.f32 %v2419, %v3695
        %v3824 = vadd.f32 %v2420, %v3696
        %v3825 = vadd.f32 %v2421, %v3697
        %v3826 = vadd.f32 %v2422, %v3698
        %v3827 = vadd.f32 %v2423, %v3699
        %v3828 = vadd.f32 %v2424, %v3700
        %v3829 = vadd.f32 %v2425, %v3701
        %v3830 = vadd.f32 %v2426, %v3702
        %v3831 = vadd.f32 %v2427, %v3703
        %v3832 = vadd.f32 %v2428, %v3704
        %v3833 = vadd.f32 %v2429, %v3705
        %v3834 = vadd.f32 %v2430, %v3706
        %v3835 = vadd.f32 %v2431, %v3707
        %v3836 = vadd.f32 %v2432, %v3708
        %v3837 = vadd.f32 %v2433, %v3709
        %v3838 = vadd.f32 %v2434, %v3710
        %v3839 = vadd.f32 %v2435, %v3711
        %v3840 = vadd.f32 %v2436, %v3712
        %v3841 = vadd.f32 %v2437, %v3713
        %v3842 = vadd.f32 %v2438, %v3714
        %v3843 = vadd.f32 %v2439, %v3715
        %v3844 = vadd.f32 %v2440, %v3716
        %v3845 = vadd.f32 %v2441, %v3717
        %v3846 = vadd.f32 %v2442, %v3718
        %v3847 = vadd.f32 %v2443, %v3719
        %v3848 = vadd.f32 %v2444, %v3720
        %v3849 = vadd.f32 %v2445, %v3721
        %v3850 = vadd.f32 %v2446, %v3722
        %v3851 = vadd.f32 %v2447, %v3723
        %v3852 = vadd.f32 %v2448, %v3724
        %v3853 = vadd.f32 %v2449, %v3725
        %v3854 = vadd.f32 %v2450, %v3726
        %v3855 = vadd.f32 %v2451, %v3727
        %v3856 = vadd.f32 %v2452, %v3728
        %v3857 = vadd.f32 %v2453, %v3729
        %v3858 = vadd.f32 %v2454, %v3730
        %v3859 = vadd.f32 %v2455, %v3731
        %v3860 = vadd.f32 %v2456, %v3732
        %v3861 = vadd.f32 %v2457, %v3733
        %v3862 = vadd.f32 %v2458, %v3734
        %v3863 = vadd.f32 %v2459, %v3735
        %v3864 = vadd.f32 %v2460, %v3736
        %v3865 = vadd.f32 %v2461, %v3737
        %v3866 = vadd.f32 %v2462, %v3738
        %v3867 = vadd.f32 %v2463, %v3739
        %v3868 = vadd.f32 %v2464, %v3740
        %v3869 = vadd.f32 %v2465, %v3741
        %v3870 = vadd.f32 %v2466, %v3742
        %v3871 = vadd.f32 %v2467, %v3743
        %v3872 = vadd.f32 %v2468, %v3744
        %v3873 = vadd.f32 %v2469, %v3745
        %v3874 = vadd.f32 %v2470, %v3746
        %v3875 = vadd.f32 %v2471, %v3747
        %v3876 = vadd.f32 %v2472, %v3748
        %v3877 = vadd.f32 %v2473, %v3749
        %v3878 = vadd.f32 %v2474, %v3750
        %v3879 = vadd.f32 %v2475, %v3751
        %v3880 = vadd.f32 %v2476, %v3752
        %v3881 = vadd.f32 %v2477, %v3753
        %v3882 = vadd.f32 %v2478, %v3754
        %v3883 = vadd.f32 %v2479, %v3755
        %v3884 = vadd.f32 %v2480, %v3756
        %v3885 = vadd.f32 %v2481, %v3757
        %v3886 = vadd.f32 %v2482, %v3758
        %v3887 = vadd.f32 %v2483, %v3759
        %v3888 = vadd.f32 %v2484, %v3760
        %v3889 = vadd.f32 %v2485, %v3761
        %v3890 = vadd.f32 %v2486, %v3762
        %v3891 = vadd.f32 %v2487, %v3763
        %v3892 = vadd.f32 %v2488, %v3764
        %v3893 = vadd.f32 %v2489, %v3765
        %v3894 = vadd.f32 %v2490, %v3766
        %v3895 = vadd.f32 %v2491, %v3767
        %v3896 = vadd.f32 %v2492, %v3768
        %v3897 = vadd.f32 %v2493, %v3769
        %v3898 = vadd.f32 %v2494, %v3770
        %v3899 = vadd.f32 %v2495, %v3771
        %v3900 = vadd.f32 %v2496, %v3772
        %v3901 = vadd.f32 %v2497, %v3773
        %v3902 = vadd.f32 %v2498, %v3774
        %v3903 = vadd.f32 %v2499, %v3775
        %v3904 = vadd.f32 %v2500, %v3776
        %v3905 = vadd.f32 %v2501, %v3777
        %v3906 = vadd.f32 %v2502, %v3778
        %v3907 = vadd.f32 %v2503, %v3779
        %v3908 = vadd.f32 %v2504, %v3780
        %v3909 = vadd.f32 %v2505, %v3781
        %v3910 = vadd.f32 %v2506, %v3782
        %v3911 = vadd.f32 %v2507, %v3783
        %v3912 = vadd.f32 %v2508, %v3784
        %v3913 = vadd.f32 %v2509, %v3785
        %v3914 = vadd.f32 %v2510, %v3786
        %v3915 = vadd.f32 %v2511, %v3787
        %v3916 = vadd.f32 %v2512, %v3788
        %v3917 = vadd.f32 %v2513, %v3789
        %v3918 = vadd.f32 %v2514, %v3790
        %v3919 = vadd.f32 %v2515, %v3791
        %v3920 = vadd.f32 %v2516, %v3792
        %v3921 = vadd.f32 %v2517, %v3793
        %v3922 = vadd.f32 %v2518, %v3794
        %v3923 = vadd.f32 %v2519, %v3795
        %v3924 = vadd.f32 %v2520, %v3796
        %v3925 = vadd.f32 %v2521, %v3797
        %v3926 = vadd.f32 %v2522, %v3798
        %v3927 = vadd.f32 %v2523, %v3799
        %v3928 = vadd.f32 %v2524, %v3800
        %v3929 = vadd.f32 %v2525, %v3801
        %v3930 = vadd.f32 %v2526, %v3802
        %v3931 = vadd.f32 %v2527, %v3803
        %v3932 = vadd.f32 %v2528, %v3804
        %v3933 = vadd.f32 %v2529, %v3805
        %v3934 = vadd.f32 %v2530, %v3806
        %v3935 = vadd.f32 %v2531, %v3807
        %3936 = vmax.xlane.f32.xlu0 %v3808
        %v3937 = vpop.xlane.xlu0 %3936
        %3938 = vmax.xlane.f32.xlu0 %v3809
        %v3939 = vpop.xlane.xlu0 %3938
        %3940 = vmax.xlane.f32.xlu0 %v3810
        %v3941 = vpop.xlane.xlu0 %3940
        %3942 = vmax.xlane.f32.xlu0 %v3811
        %v3943 = vpop.xlane.xlu0 %3942
        %3944 = vmax.xlane.f32.xlu0 %v3812
        %v3945 = vpop.xlane.xlu0 %3944
        %3946 = vmax.xlane.f32.xlu0 %v3813
        %v3947 = vpop.xlane.xlu0 %3946
        %3948 = vmax.xlane.f32.xlu0 %v3814
        %v3949 = vpop.xlane.xlu0 %3948
        %3950 = vmax.xlane.f32.xlu0 %v3815
        %v3951 = vpop.xlane.xlu0 %3950
        %3952 = vmax.xlane.f32.xlu0 %v3816
        %v3953 = vpop.xlane.xlu0 %3952
        %3954 = vmax.xlane.f32.xlu0 %v3817
        %v3955 = vpop.xlane.xlu0 %3954
        %3956 = vmax.xlane.f32.xlu0 %v3818
        %v3957 = vpop.xlane.xlu0 %3956
        %3958 = vmax.xlane.f32.xlu0 %v3819
        %v3959 = vpop.xlane.xlu0 %3958
        %3960 = vmax.xlane.f32.xlu0 %v3820
        %v3961 = vpop.xlane.xlu0 %3960
        %3962 = vmax.xlane.f32.xlu0 %v3821
        %v3963 = vpop.xlane.xlu0 %3962
        %3964 = vmax.xlane.f32.xlu0 %v3822
        %v3965 = vpop.xlane.xlu0 %3964
        %3966 = vmax.xlane.f32.xlu0 %v3823
        %v3967 = vpop.xlane.xlu0 %3966
        %3968 = vmax.xlane.f32.xlu0 %v3824
        %v3969 = vpop.xlane.xlu0 %3968
        %3970 = vmax.xlane.f32.xlu0 %v3825
        %v3971 = vpop.xlane.xlu0 %3970
        %3972 = vmax.xlane.f32.xlu0 %v3826
        %v3973 = vpop.xlane.xlu0 %3972
        %3974 = vmax.xlane.f32.xlu0 %v3827
        %v3975 = vpop.xlane.xlu0 %3974
        %3976 = vmax.xlane.f32.xlu0 %v3828
        %v3977 = vpop.xlane.xlu0 %3976
        %3978 = vmax.xlane.f32.xlu0 %v3829
        %v3979 = vpop.xlane.xlu0 %3978
        %3980 = vmax.xlane.f32.xlu0 %v3830
        %v3981 = vpop.xlane.xlu0 %3980
        %3982 = vmax.xlane.f32.xlu0 %v3831
        %v3983 = vpop.xlane.xlu0 %3982
        %3984 = vmax.xlane.f32.xlu0 %v3832
        %v3985 = vpop.xlane.xlu0 %3984
        %3986 = vmax.xlane.f32.xlu0 %v3833
        %v3987 = vpop.xlane.xlu0 %3986
        %3988 = vmax.xlane.f32.xlu0 %v3834
        %v3989 = vpop.xlane.xlu0 %3988
        %3990 = vmax.xlane.f32.xlu0 %v3835
        %v3991 = vpop.xlane.xlu0 %3990
        %3992 = vmax.xlane.f32.xlu0 %v3836
        %v3993 = vpop.xlane.xlu0 %3992
        %3994 = vmax.xlane.f32.xlu0 %v3837
        %v3995 = vpop.xlane.xlu0 %3994
        %3996 = vmax.xlane.f32.xlu0 %v3838
        %v3997 = vpop.xlane.xlu0 %3996
        %3998 = vmax.xlane.f32.xlu0 %v3839
        %v3999 = vpop.xlane.xlu0 %3998
        %4000 = vmax.xlane.f32.xlu0 %v3840
        %v4001 = vpop.xlane.xlu0 %4000
        %4002 = vmax.xlane.f32.xlu0 %v3841
        %v4003 = vpop.xlane.xlu0 %4002
        %4004 = vmax.xlane.f32.xlu0 %v3842
        %v4005 = vpop.xlane.xlu0 %4004
        %4006 = vmax.xlane.f32.xlu0 %v3843
        %v4007 = vpop.xlane.xlu0 %4006
        %4008 = vmax.xlane.f32.xlu0 %v3844
        %v4009 = vpop.xlane.xlu0 %4008
        %4010 = vmax.xlane.f32.xlu0 %v3845
        %v4011 = vpop.xlane.xlu0 %4010
        %4012 = vmax.xlane.f32.xlu0 %v3846
        %v4013 = vpop.xlane.xlu0 %4012
        %4014 = vmax.xlane.f32.xlu0 %v3847
        %v4015 = vpop.xlane.xlu0 %4014
        %4016 = vmax.xlane.f32.xlu0 %v3848
        %v4017 = vpop.xlane.xlu0 %4016
        %4018 = vmax.xlane.f32.xlu0 %v3849
        %v4019 = vpop.xlane.xlu0 %4018
        %4020 = vmax.xlane.f32.xlu0 %v3850
        %v4021 = vpop.xlane.xlu0 %4020
        %4022 = vmax.xlane.f32.xlu0 %v3851
        %v4023 = vpop.xlane.xlu0 %4022
        %4024 = vmax.xlane.f32.xlu0 %v3852
        %v4025 = vpop.xlane.xlu0 %4024
        %4026 = vmax.xlane.f32.xlu0 %v3853
        %v4027 = vpop.xlane.xlu0 %4026
        %4028 = vmax.xlane.f32.xlu0 %v3854
        %v4029 = vpop.xlane.xlu0 %4028
        %4030 = vmax.xlane.f32.xlu0 %v3855
        %v4031 = vpop.xlane.xlu0 %4030
        %4032 = vmax.xlane.f32.xlu0 %v3856
        %v4033 = vpop.xlane.xlu0 %4032
        %4034 = vmax.xlane.f32.xlu0 %v3857
        %v4035 = vpop.xlane.xlu0 %4034
        %4036 = vmax.xlane.f32.xlu0 %v3858
        %v4037 = vpop.xlane.xlu0 %4036
        %4038 = vmax.xlane.f32.xlu0 %v3859
        %v4039 = vpop.xlane.xlu0 %4038
        %4040 = vmax.xlane.f32.xlu0 %v3860
        %v4041 = vpop.xlane.xlu0 %4040
        %4042 = vmax.xlane.f32.xlu0 %v3861
        %v4043 = vpop.xlane.xlu0 %4042
        %4044 = vmax.xlane.f32.xlu0 %v3862
        %v4045 = vpop.xlane.xlu0 %4044
        %4046 = vmax.xlane.f32.xlu0 %v3863
        %v4047 = vpop.xlane.xlu0 %4046
        %4048 = vmax.xlane.f32.xlu0 %v3864
        %v4049 = vpop.xlane.xlu0 %4048
        %4050 = vmax.xlane.f32.xlu0 %v3865
        %v4051 = vpop.xlane.xlu0 %4050
        %4052 = vmax.xlane.f32.xlu0 %v3866
        %v4053 = vpop.xlane.xlu0 %4052
        %4054 = vmax.xlane.f32.xlu0 %v3867
        %v4055 = vpop.xlane.xlu0 %4054
        %4056 = vmax.xlane.f32.xlu0 %v3868
        %v4057 = vpop.xlane.xlu0 %4056
        %4058 = vmax.xlane.f32.xlu0 %v3869
        %v4059 = vpop.xlane.xlu0 %4058
        %4060 = vmax.xlane.f32.xlu0 %v3870
        %v4061 = vpop.xlane.xlu0 %4060
        %4062 = vmax.xlane.f32.xlu0 %v3871
        %v4063 = vpop.xlane.xlu0 %4062
        %4064 = vmax.xlane.f32.xlu0 %v3872
        %v4065 = vpop.xlane.xlu0 %4064
        %4066 = vmax.xlane.f32.xlu0 %v3873
        %v4067 = vpop.xlane.xlu0 %4066
        %4068 = vmax.xlane.f32.xlu0 %v3874
        %v4069 = vpop.xlane.xlu0 %4068
        %4070 = vmax.xlane.f32.xlu0 %v3875
        %v4071 = vpop.xlane.xlu0 %4070
        %4072 = vmax.xlane.f32.xlu0 %v3876
        %v4073 = vpop.xlane.xlu0 %4072
        %4074 = vmax.xlane.f32.xlu0 %v3877
        %v4075 = vpop.xlane.xlu0 %4074
        %4076 = vmax.xlane.f32.xlu0 %v3878
        %v4077 = vpop.xlane.xlu0 %4076
        %4078 = vmax.xlane.f32.xlu0 %v3879
        %v4079 = vpop.xlane.xlu0 %4078
        %4080 = vmax.xlane.f32.xlu0 %v3880
        %v4081 = vpop.xlane.xlu0 %4080
        %4082 = vmax.xlane.f32.xlu0 %v3881
        %v4083 = vpop.xlane.xlu0 %4082
        %4084 = vmax.xlane.f32.xlu0 %v3882
        %v4085 = vpop.xlane.xlu0 %4084
        %4086 = vmax.xlane.f32.xlu0 %v3883
        %v4087 = vpop.xlane.xlu0 %4086
        %4088 = vmax.xlane.f32.xlu0 %v3884
        %v4089 = vpop.xlane.xlu0 %4088
        %4090 = vmax.xlane.f32.xlu0 %v3885
        %v4091 = vpop.xlane.xlu0 %4090
        %4092 = vmax.xlane.f32.xlu0 %v3886
        %v4093 = vpop.xlane.xlu0 %4092
        %4094 = vmax.xlane.f32.xlu0 %v3887
        %v4095 = vpop.xlane.xlu0 %4094
        %4096 = vmax.xlane.f32.xlu0 %v3888
        %v4097 = vpop.xlane.xlu0 %4096
        %4098 = vmax.xlane.f32.xlu0 %v3889
        %v4099 = vpop.xlane.xlu0 %4098
        %4100 = vmax.xlane.f32.xlu0 %v3890
        %v4101 = vpop.xlane.xlu0 %4100
        %4102 = vmax.xlane.f32.xlu0 %v3891
        %v4103 = vpop.xlane.xlu0 %4102
        %4104 = vmax.xlane.f32.xlu0 %v3892
        %v4105 = vpop.xlane.xlu0 %4104
        %4106 = vmax.xlane.f32.xlu0 %v3893
        %v4107 = vpop.xlane.xlu0 %4106
        %4108 = vmax.xlane.f32.xlu0 %v3894
        %v4109 = vpop.xlane.xlu0 %4108
        %4110 = vmax.xlane.f32.xlu0 %v3895
        %v4111 = vpop.xlane.xlu0 %4110
        %4112 = vmax.xlane.f32.xlu0 %v3896
        %v4113 = vpop.xlane.xlu0 %4112
        %4114 = vmax.xlane.f32.xlu0 %v3897
        %v4115 = vpop.xlane.xlu0 %4114
        %4116 = vmax.xlane.f32.xlu0 %v3898
        %v4117 = vpop.xlane.xlu0 %4116
        %4118 = vmax.xlane.f32.xlu0 %v3899
        %v4119 = vpop.xlane.xlu0 %4118
        %4120 = vmax.xlane.f32.xlu0 %v3900
        %v4121 = vpop.xlane.xlu0 %4120
        %4122 = vmax.xlane.f32.xlu0 %v3901
        %v4123 = vpop.xlane.xlu0 %4122
        %4124 = vmax.xlane.f32.xlu0 %v3902
        %v4125 = vpop.xlane.xlu0 %4124
        %4126 = vmax.xlane.f32.xlu0 %v3903
        %v4127 = vpop.xlane.xlu0 %4126
        %4128 = vmax.xlane.f32.xlu0 %v3904
        %v4129 = vpop.xlane.xlu0 %4128
        %4130 = vmax.xlane.f32.xlu0 %v3905
        %v4131 = vpop.xlane.xlu0 %4130
        %4132 = vmax.xlane.f32.xlu0 %v3906
        %v4133 = vpop.xlane.xlu0 %4132
        %4134 = vmax.xlane.f32.xlu0 %v3907
        %v4135 = vpop.xlane.xlu0 %4134
        %4136 = vmax.xlane.f32.xlu0 %v3908
        %v4137 = vpop.xlane.xlu0 %4136
        %4138 = vmax.xlane.f32.xlu0 %v3909
        %v4139 = vpop.xlane.xlu0 %4138
        %4140 = vmax.xlane.f32.xlu0 %v3910
        %v4141 = vpop.xlane.xlu0 %4140
        %4142 = vmax.xlane.f32.xlu0 %v3911
        %v4143 = vpop.xlane.xlu0 %4142
        %4144 = vmax.xlane.f32.xlu0 %v3912
        %v4145 = vpop.xlane.xlu0 %4144
        %4146 = vmax.xlane.f32.xlu0 %v3913
        %v4147 = vpop.xlane.xlu0 %4146
        %4148 = vmax.xlane.f32.xlu0 %v3914
        %v4149 = vpop.xlane.xlu0 %4148
        %4150 = vmax.xlane.f32.xlu0 %v3915
        %v4151 = vpop.xlane.xlu0 %4150
        %4152 = vmax.xlane.f32.xlu0 %v3916
        %v4153 = vpop.xlane.xlu0 %4152
        %4154 = vmax.xlane.f32.xlu0 %v3917
        %v4155 = vpop.xlane.xlu0 %4154
        %4156 = vmax.xlane.f32.xlu0 %v3918
        %v4157 = vpop.xlane.xlu0 %4156
        %4158 = vmax.xlane.f32.xlu0 %v3919
        %v4159 = vpop.xlane.xlu0 %4158
        %4160 = vmax.xlane.f32.xlu0 %v3920
        %v4161 = vpop.xlane.xlu0 %4160
        %4162 = vmax.xlane.f32.xlu0 %v3921
        %v4163 = vpop.xlane.xlu0 %4162
        %4164 = vmax.xlane.f32.xlu0 %v3922
        %v4165 = vpop.xlane.xlu0 %4164
        %4166 = vmax.xlane.f32.xlu0 %v3923
        %v4167 = vpop.xlane.xlu0 %4166
        %4168 = vmax.xlane.f32.xlu0 %v3924
        %v4169 = vpop.xlane.xlu0 %4168
        %4170 = vmax.xlane.f32.xlu0 %v3925
        %v4171 = vpop.xlane.xlu0 %4170
        %4172 = vmax.xlane.f32.xlu0 %v3926
        %v4173 = vpop.xlane.xlu0 %4172
        %4174 = vmax.xlane.f32.xlu0 %v3927
        %v4175 = vpop.xlane.xlu0 %4174
        %4176 = vmax.xlane.f32.xlu0 %v3928
        %v4177 = vpop.xlane.xlu0 %4176
        %4178 = vmax.xlane.f32.xlu0 %v3929
        %v4179 = vpop.xlane.xlu0 %4178
        %4180 = vmax.xlane.f32.xlu0 %v3930
        %v4181 = vpop.xlane.xlu0 %4180
        %4182 = vmax.xlane.f32.xlu0 %v3931
        %v4183 = vpop.xlane.xlu0 %4182
        %4184 = vmax.xlane.f32.xlu0 %v3932
        %v4185 = vpop.xlane.xlu0 %4184
        %4186 = vmax.xlane.f32.xlu0 %v3933
        %v4187 = vpop.xlane.xlu0 %4186
        %4188 = vmax.xlane.f32.xlu0 %v3934
        %v4189 = vpop.xlane.xlu0 %4188
        %4190 = vmax.xlane.f32.xlu0 %v3935
        %v4191 = vpop.xlane.xlu0 %4190
        %v4192 = vsub.f32 %v3808, %v3937
        %v4193 = vsub.f32 %v3809, %v3939
        %v4194 = vsub.f32 %v3810, %v3941
        %v4195 = vsub.f32 %v3811, %v3943
        %v4196 = vsub.f32 %v3812, %v3945
        %v4197 = vsub.f32 %v3813, %v3947
        %v4198 = vsub.f32 %v3814, %v3949
        %v4199 = vsub.f32 %v3815, %v3951
        %v4200 = vsub.f32 %v3816, %v3953
        %v4201 = vsub.f32 %v3817, %v3955
        %v4202 = vsub.f32 %v3818, %v3957
        %v4203 = vsub.f32 %v3819, %v3959
        %v4204 = vsub.f32 %v3820, %v3961
        %v4205 = vsub.f32 %v3821, %v3963
        %v4206 = vsub.f32 %v3822, %v3965
        %v4207 = vsub.f32 %v3823, %v3967
        %v4208 = vsub.f32 %v3824, %v3969
        %v4209 = vsub.f32 %v3825, %v3971
        %v4210 = vsub.f32 %v3826, %v3973
        %v4211 = vsub.f32 %v3827, %v3975
        %v4212 = vsub.f32 %v3828, %v3977
        %v4213 = vsub.f32 %v3829, %v3979
        %v4214 = vsub.f32 %v3830, %v3981
        %v4215 = vsub.f32 %v3831, %v3983
        %v4216 = vsub.f32 %v3832, %v3985
        %v4217 = vsub.f32 %v3833, %v3987
        %v4218 = vsub.f32 %v3834, %v3989
        %v4219 = vsub.f32 %v3835, %v3991
        %v4220 = vsub.f32 %v3836, %v3993
        %v4221 = vsub.f32 %v3837, %v3995
        %v4222 = vsub.f32 %v3838, %v3997
        %v4223 = vsub.f32 %v3839, %v3999
        %v4224 = vsub.f32 %v3840, %v4001
        %v4225 = vsub.f32 %v3841, %v4003
        %v4226 = vsub.f32 %v3842, %v4005
        %v4227 = vsub.f32 %v3843, %v4007
        %v4228 = vsub.f32 %v3844, %v4009
        %v4229 = vsub.f32 %v3845, %v4011
        %v4230 = vsub.f32 %v3846, %v4013
        %v4231 = vsub.f32 %v3847, %v4015
        %v4232 = vsub.f32 %v3848, %v4017
        %v4233 = vsub.f32 %v3849, %v4019
        %v4234 = vsub.f32 %v3850, %v4021
        %v4235 = vsub.f32 %v3851, %v4023
        %v4236 = vsub.f32 %v3852, %v4025
        %v4237 = vsub.f32 %v3853, %v4027
        %v4238 = vsub.f32 %v3854, %v4029
        %v4239 = vsub.f32 %v3855, %v4031
        %v4240 = vsub.f32 %v3856, %v4033
        %v4241 = vsub.f32 %v3857, %v4035
        %v4242 = vsub.f32 %v3858, %v4037
        %v4243 = vsub.f32 %v3859, %v4039
        %v4244 = vsub.f32 %v3860, %v4041
        %v4245 = vsub.f32 %v3861, %v4043
        %v4246 = vsub.f32 %v3862, %v4045
        %v4247 = vsub.f32 %v3863, %v4047
        %v4248 = vsub.f32 %v3864, %v4049
        %v4249 = vsub.f32 %v3865, %v4051
        %v4250 = vsub.f32 %v3866, %v4053
        %v4251 = vsub.f32 %v3867, %v4055
        %v4252 = vsub.f32 %v3868, %v4057
        %v4253 = vsub.f32 %v3869, %v4059
        %v4254 = vsub.f32 %v3870, %v4061
        %v4255 = vsub.f32 %v3871, %v4063
        %v4256 = vsub.f32 %v3872, %v4065
        %v4257 = vsub.f32 %v3873, %v4067
        %v4258 = vsub.f32 %v3874, %v4069
        %v4259 = vsub.f32 %v3875, %v4071
        %v4260 = vsub.f32 %v3876, %v4073
        %v4261 = vsub.f32 %v3877, %v4075
        %v4262 = vsub.f32 %v3878, %v4077
        %v4263 = vsub.f32 %v3879, %v4079
        %v4264 = vsub.f32 %v3880, %v4081
        %v4265 = vsub.f32 %v3881, %v4083
        %v4266 = vsub.f32 %v3882, %v4085
        %v4267 = vsub.f32 %v3883, %v4087
        %v4268 = vsub.f32 %v3884, %v4089
        %v4269 = vsub.f32 %v3885, %v4091
        %v4270 = vsub.f32 %v3886, %v4093
        %v4271 = vsub.f32 %v3887, %v4095
        %v4272 = vsub.f32 %v3888, %v4097
        %v4273 = vsub.f32 %v3889, %v4099
        %v4274 = vsub.f32 %v3890, %v4101
        %v4275 = vsub.f32 %v3891, %v4103
        %v4276 = vsub.f32 %v3892, %v4105
        %v4277 = vsub.f32 %v3893, %v4107
        %v4278 = vsub.f32 %v3894, %v4109
        %v4279 = vsub.f32 %v3895, %v4111
        %v4280 = vsub.f32 %v3896, %v4113
        %v4281 = vsub.f32 %v3897, %v4115
        %v4282 = vsub.f32 %v3898, %v4117
        %v4283 = vsub.f32 %v3899, %v4119
        %v4284 = vsub.f32 %v3900, %v4121
        %v4285 = vsub.f32 %v3901, %v4123
        %v4286 = vsub.f32 %v3902, %v4125
        %v4287 = vsub.f32 %v3903, %v4127
        %v4288 = vsub.f32 %v3904, %v4129
        %v4289 = vsub.f32 %v3905, %v4131
        %v4290 = vsub.f32 %v3906, %v4133
        %v4291 = vsub.f32 %v3907, %v4135
        %v4292 = vsub.f32 %v3908, %v4137
        %v4293 = vsub.f32 %v3909, %v4139
        %v4294 = vsub.f32 %v3910, %v4141
        %v4295 = vsub.f32 %v3911, %v4143
        %v4296 = vsub.f32 %v3912, %v4145
        %v4297 = vsub.f32 %v3913, %v4147
        %v4298 = vsub.f32 %v3914, %v4149
        %v4299 = vsub.f32 %v3915, %v4151
        %v4300 = vsub.f32 %v3916, %v4153
        %v4301 = vsub.f32 %v3917, %v4155
        %v4302 = vsub.f32 %v3918, %v4157
        %v4303 = vsub.f32 %v3919, %v4159
        %v4304 = vsub.f32 %v3920, %v4161
        %v4305 = vsub.f32 %v3921, %v4163
        %v4306 = vsub.f32 %v3922, %v4165
        %v4307 = vsub.f32 %v3923, %v4167
        %v4308 = vsub.f32 %v3924, %v4169
        %v4309 = vsub.f32 %v3925, %v4171
        %v4310 = vsub.f32 %v3926, %v4173
        %v4311 = vsub.f32 %v3927, %v4175
        %v4312 = vsub.f32 %v3928, %v4177
        %v4313 = vsub.f32 %v3929, %v4179
        %v4314 = vsub.f32 %v3930, %v4181
        %v4315 = vsub.f32 %v3931, %v4183
        %v4316 = vsub.f32 %v3932, %v4185
        %v4317 = vsub.f32 %v3933, %v4187
        %v4318 = vsub.f32 %v3934, %v4189
        %v4319 = vsub.f32 %v3935, %v4191
        %v4320 = vmul.f32 %v4192, 1.442695
        %v4321 = vpow.pop %v4320
        %v4322 = vmul.f32 %v4193, 1.442695
        %v4323 = vpow.pop %v4322
        %v4324 = vmul.f32 %v4194, 1.442695
        %v4325 = vpow.pop %v4324
        %v4326 = vmul.f32 %v4195, 1.442695
        %v4327 = vpow.pop %v4326
        %v4328 = vmul.f32 %v4196, 1.442695
        %v4329 = vpow.pop %v4328
        %v4330 = vmul.f32 %v4197, 1.442695
        %v4331 = vpow.pop %v4330
        %v4332 = vmul.f32 %v4198, 1.442695
        %v4333 = vpow.pop %v4332
        %v4334 = vmul.f32 %v4199, 1.442695
        %v4335 = vpow.pop %v4334
        %v4336 = vmul.f32 %v4200, 1.442695
        %v4337 = vpow.pop %v4336
        %v4338 = vmul.f32 %v4201, 1.442695
        %v4339 = vpow.pop %v4338
        %v4340 = vmul.f32 %v4202, 1.442695
        %v4341 = vpow.pop %v4340
        %v4342 = vmul.f32 %v4203, 1.442695
        %v4343 = vpow.pop %v4342
        %v4344 = vmul.f32 %v4204, 1.442695
        %v4345 = vpow.pop %v4344
        %v4346 = vmul.f32 %v4205, 1.442695
        %v4347 = vpow.pop %v4346
        %v4348 = vmul.f32 %v4206, 1.442695
        %v4349 = vpow.pop %v4348
        %v4350 = vmul.f32 %v4207, 1.442695
        %v4351 = vpow.pop %v4350
        %v4352 = vmul.f32 %v4208, 1.442695
        %v4353 = vpow.pop %v4352
        %v4354 = vmul.f32 %v4209, 1.442695
        %v4355 = vpow.pop %v4354
        %v4356 = vmul.f32 %v4210, 1.442695
        %v4357 = vpow.pop %v4356
        %v4358 = vmul.f32 %v4211, 1.442695
        %v4359 = vpow.pop %v4358
        %v4360 = vmul.f32 %v4212, 1.442695
        %v4361 = vpow.pop %v4360
        %v4362 = vmul.f32 %v4213, 1.442695
        %v4363 = vpow.pop %v4362
        %v4364 = vmul.f32 %v4214, 1.442695
        %v4365 = vpow.pop %v4364
        %v4366 = vmul.f32 %v4215, 1.442695
        %v4367 = vpow.pop %v4366
        %v4368 = vmul.f32 %v4216, 1.442695
        %v4369 = vpow.pop %v4368
        %v4370 = vmul.f32 %v4217, 1.442695
        %v4371 = vpow.pop %v4370
        %v4372 = vmul.f32 %v4218, 1.442695
        %v4373 = vpow.pop %v4372
        %v4374 = vmul.f32 %v4219, 1.442695
        %v4375 = vpow.pop %v4374
        %v4376 = vmul.f32 %v4220, 1.442695
        %v4377 = vpow.pop %v4376
        %v4378 = vmul.f32 %v4221, 1.442695
        %v4379 = vpow.pop %v4378
        %v4380 = vmul.f32 %v4222, 1.442695
        %v4381 = vpow.pop %v4380
        %v4382 = vmul.f32 %v4223, 1.442695
        %v4383 = vpow.pop %v4382
        %v4384 = vmul.f32 %v4224, 1.442695
        %v4385 = vpow.pop %v4384
        %v4386 = vmul.f32 %v4225, 1.442695
        %v4387 = vpow.pop %v4386
        %v4388 = vmul.f32 %v4226, 1.442695
        %v4389 = vpow.pop %v4388
        %v4390 = vmul.f32 %v4227, 1.442695
        %v4391 = vpow.pop %v4390
        %v4392 = vmul.f32 %v4228, 1.442695
        %v4393 = vpow.pop %v4392
        %v4394 = vmul.f32 %v4229, 1.442695
        %v4395 = vpow.pop %v4394
        %v4396 = vmul.f32 %v4230, 1.442695
        %v4397 = vpow.pop %v4396
        %v4398 = vmul.f32 %v4231, 1.442695
        %v4399 = vpow.pop %v4398
        %v4400 = vmul.f32 %v4232, 1.442695
        %v4401 = vpow.pop %v4400
        %v4402 = vmul.f32 %v4233, 1.442695
        %v4403 = vpow.pop %v4402
        %v4404 = vmul.f32 %v4234, 1.442695
        %v4405 = vpow.pop %v4404
        %v4406 = vmul.f32 %v4235, 1.442695
        %v4407 = vpow.pop %v4406
        %v4408 = vmul.f32 %v4236, 1.442695
        %v4409 = vpow.pop %v4408
        %v4410 = vmul.f32 %v4237, 1.442695
        %v4411 = vpow.pop %v4410
        %v4412 = vmul.f32 %v4238, 1.442695
        %v4413 = vpow.pop %v4412
        %v4414 = vmul.f32 %v4239, 1.442695
        %v4415 = vpow.pop %v4414
        %v4416 = vmul.f32 %v4240, 1.442695
        %v4417 = vpow.pop %v4416
        %v4418 = vmul.f32 %v4241, 1.442695
        %v4419 = vpow.pop %v4418
        %v4420 = vmul.f32 %v4242, 1.442695
        %v4421 = vpow.pop %v4420
        %v4422 = vmul.f32 %v4243, 1.442695
        %v4423 = vpow.pop %v4422
        %v4424 = vmul.f32 %v4244, 1.442695
        %v4425 = vpow.pop %v4424
        %v4426 = vmul.f32 %v4245, 1.442695
        %v4427 = vpow.pop %v4426
        %v4428 = vmul.f32 %v4246, 1.442695
        %v4429 = vpow.pop %v4428
        %v4430 = vmul.f32 %v4247, 1.442695
        %v4431 = vpow.pop %v4430
        %v4432 = vmul.f32 %v4248, 1.442695
        %v4433 = vpow.pop %v4432
        %v4434 = vmul.f32 %v4249, 1.442695
        %v4435 = vpow.pop %v4434
        %v4436 = vmul.f32 %v4250, 1.442695
        %v4437 = vpow.pop %v4436
        %v4438 = vmul.f32 %v4251, 1.442695
        %v4439 = vpow.pop %v4438
        %v4440 = vmul.f32 %v4252, 1.442695
        %v4441 = vpow.pop %v4440
        %v4442 = vmul.f32 %v4253, 1.442695
        %v4443 = vpow.pop %v4442
        %v4444 = vmul.f32 %v4254, 1.442695
        %v4445 = vpow.pop %v4444
        %v4446 = vmul.f32 %v4255, 1.442695
        %v4447 = vpow.pop %v4446
        %v4448 = vmul.f32 %v4256, 1.442695
        %v4449 = vpow.pop %v4448
        %v4450 = vmul.f32 %v4257, 1.442695
        %v4451 = vpow.pop %v4450
        %v4452 = vmul.f32 %v4258, 1.442695
        %v4453 = vpow.pop %v4452
        %v4454 = vmul.f32 %v4259, 1.442695
        %v4455 = vpow.pop %v4454
        %v4456 = vmul.f32 %v4260, 1.442695
        %v4457 = vpow.pop %v4456
        %v4458 = vmul.f32 %v4261, 1.442695
        %v4459 = vpow.pop %v4458
        %v4460 = vmul.f32 %v4262, 1.442695
        %v4461 = vpow.pop %v4460
        %v4462 = vmul.f32 %v4263, 1.442695
        %v4463 = vpow.pop %v4462
        %v4464 = vmul.f32 %v4264, 1.442695
        %v4465 = vpow.pop %v4464
        %v4466 = vmul.f32 %v4265, 1.442695
        %v4467 = vpow.pop %v4466
        %v4468 = vmul.f32 %v4266, 1.442695
        %v4469 = vpow.pop %v4468
        %v4470 = vmul.f32 %v4267, 1.442695
        %v4471 = vpow.pop %v4470
        %v4472 = vmul.f32 %v4268, 1.442695
        %v4473 = vpow.pop %v4472
        %v4474 = vmul.f32 %v4269, 1.442695
        %v4475 = vpow.pop %v4474
        %v4476 = vmul.f32 %v4270, 1.442695
        %v4477 = vpow.pop %v4476
        %v4478 = vmul.f32 %v4271, 1.442695
        %v4479 = vpow.pop %v4478
        %v4480 = vmul.f32 %v4272, 1.442695
        %v4481 = vpow.pop %v4480
        %v4482 = vmul.f32 %v4273, 1.442695
        %v4483 = vpow.pop %v4482
        %v4484 = vmul.f32 %v4274, 1.442695
        %v4485 = vpow.pop %v4484
        %v4486 = vmul.f32 %v4275, 1.442695
        %v4487 = vpow.pop %v4486
        %v4488 = vmul.f32 %v4276, 1.442695
        %v4489 = vpow.pop %v4488
        %v4490 = vmul.f32 %v4277, 1.442695
        %v4491 = vpow.pop %v4490
        %v4492 = vmul.f32 %v4278, 1.442695
        %v4493 = vpow.pop %v4492
        %v4494 = vmul.f32 %v4279, 1.442695
        %v4495 = vpow.pop %v4494
        %v4496 = vmul.f32 %v4280, 1.442695
        %v4497 = vpow.pop %v4496
        %v4498 = vmul.f32 %v4281, 1.442695
        %v4499 = vpow.pop %v4498
        %v4500 = vmul.f32 %v4282, 1.442695
        %v4501 = vpow.pop %v4500
        %v4502 = vmul.f32 %v4283, 1.442695
        %v4503 = vpow.pop %v4502
        %v4504 = vmul.f32 %v4284, 1.442695
        %v4505 = vpow.pop %v4504
        %v4506 = vmul.f32 %v4285, 1.442695
        %v4507 = vpow.pop %v4506
        %v4508 = vmul.f32 %v4286, 1.442695
        %v4509 = vpow.pop %v4508
        %v4510 = vmul.f32 %v4287, 1.442695
        %v4511 = vpow.pop %v4510
        %v4512 = vmul.f32 %v4288, 1.442695
        %v4513 = vpow.pop %v4512
        %v4514 = vmul.f32 %v4289, 1.442695
        %v4515 = vpow.pop %v4514
        %v4516 = vmul.f32 %v4290, 1.442695
        %v4517 = vpow.pop %v4516
        %v4518 = vmul.f32 %v4291, 1.442695
        %v4519 = vpow.pop %v4518
        %v4520 = vmul.f32 %v4292, 1.442695
        %v4521 = vpow.pop %v4520
        %v4522 = vmul.f32 %v4293, 1.442695
        %v4523 = vpow.pop %v4522
        %v4524 = vmul.f32 %v4294, 1.442695
        %v4525 = vpow.pop %v4524
        %v4526 = vmul.f32 %v4295, 1.442695
        %v4527 = vpow.pop %v4526
        %v4528 = vmul.f32 %v4296, 1.442695
        %v4529 = vpow.pop %v4528
        %v4530 = vmul.f32 %v4297, 1.442695
        %v4531 = vpow.pop %v4530
        %v4532 = vmul.f32 %v4298, 1.442695
        %v4533 = vpow.pop %v4532
        %v4534 = vmul.f32 %v4299, 1.442695
        %v4535 = vpow.pop %v4534
        %v4536 = vmul.f32 %v4300, 1.442695
        %v4537 = vpow.pop %v4536
        %v4538 = vmul.f32 %v4301, 1.442695
        %v4539 = vpow.pop %v4538
        %v4540 = vmul.f32 %v4302, 1.442695
        %v4541 = vpow.pop %v4540
        %v4542 = vmul.f32 %v4303, 1.442695
        %v4543 = vpow.pop %v4542
        %v4544 = vmul.f32 %v4304, 1.442695
        %v4545 = vpow.pop %v4544
        %v4546 = vmul.f32 %v4305, 1.442695
        %v4547 = vpow.pop %v4546
        %v4548 = vmul.f32 %v4306, 1.442695
        %v4549 = vpow.pop %v4548
        %v4550 = vmul.f32 %v4307, 1.442695
        %v4551 = vpow.pop %v4550
        %v4552 = vmul.f32 %v4308, 1.442695
        %v4553 = vpow.pop %v4552
        %v4554 = vmul.f32 %v4309, 1.442695
        %v4555 = vpow.pop %v4554
        %v4556 = vmul.f32 %v4310, 1.442695
        %v4557 = vpow.pop %v4556
        %v4558 = vmul.f32 %v4311, 1.442695
        %v4559 = vpow.pop %v4558
        %v4560 = vmul.f32 %v4312, 1.442695
        %v4561 = vpow.pop %v4560
        %v4562 = vmul.f32 %v4313, 1.442695
        %v4563 = vpow.pop %v4562
        %v4564 = vmul.f32 %v4314, 1.442695
        %v4565 = vpow.pop %v4564
        %v4566 = vmul.f32 %v4315, 1.442695
        %v4567 = vpow.pop %v4566
        %v4568 = vmul.f32 %v4316, 1.442695
        %v4569 = vpow.pop %v4568
        %v4570 = vmul.f32 %v4317, 1.442695
        %v4571 = vpow.pop %v4570
        %v4572 = vmul.f32 %v4318, 1.442695
        %v4573 = vpow.pop %v4572
        %v4574 = vmul.f32 %v4319, 1.442695
        %v4575 = vpow.pop %v4574
        %4576 = vadd.xlane.f32.xlu0 %v4321
        %v4577 = vpop.xlane.xlu0 %4576
        %4578 = vadd.xlane.f32.xlu0 %v4323
        %v4579 = vpop.xlane.xlu0 %4578
        %4580 = vadd.xlane.f32.xlu0 %v4325
        %v4581 = vpop.xlane.xlu0 %4580
        %4582 = vadd.xlane.f32.xlu0 %v4327
        %v4583 = vpop.xlane.xlu0 %4582
        %4584 = vadd.xlane.f32.xlu0 %v4329
        %v4585 = vpop.xlane.xlu0 %4584
        %4586 = vadd.xlane.f32.xlu0 %v4331
        %v4587 = vpop.xlane.xlu0 %4586
        %4588 = vadd.xlane.f32.xlu0 %v4333
        %v4589 = vpop.xlane.xlu0 %4588
        %4590 = vadd.xlane.f32.xlu0 %v4335
        %v4591 = vpop.xlane.xlu0 %4590
        %4592 = vadd.xlane.f32.xlu0 %v4337
        %v4593 = vpop.xlane.xlu0 %4592
        %4594 = vadd.xlane.f32.xlu0 %v4339
        %v4595 = vpop.xlane.xlu0 %4594
        %4596 = vadd.xlane.f32.xlu0 %v4341
        %v4597 = vpop.xlane.xlu0 %4596
        %4598 = vadd.xlane.f32.xlu0 %v4343
        %v4599 = vpop.xlane.xlu0 %4598
        %4600 = vadd.xlane.f32.xlu0 %v4345
        %v4601 = vpop.xlane.xlu0 %4600
        %4602 = vadd.xlane.f32.xlu0 %v4347
        %v4603 = vpop.xlane.xlu0 %4602
        %4604 = vadd.xlane.f32.xlu0 %v4349
        %v4605 = vpop.xlane.xlu0 %4604
        %4606 = vadd.xlane.f32.xlu0 %v4351
        %v4607 = vpop.xlane.xlu0 %4606
        %4608 = vadd.xlane.f32.xlu0 %v4353
        %v4609 = vpop.xlane.xlu0 %4608
        %4610 = vadd.xlane.f32.xlu0 %v4355
        %v4611 = vpop.xlane.xlu0 %4610
        %4612 = vadd.xlane.f32.xlu0 %v4357
        %v4613 = vpop.xlane.xlu0 %4612
        %4614 = vadd.xlane.f32.xlu0 %v4359
        %v4615 = vpop.xlane.xlu0 %4614
        %4616 = vadd.xlane.f32.xlu0 %v4361
        %v4617 = vpop.xlane.xlu0 %4616
        %4618 = vadd.xlane.f32.xlu0 %v4363
        %v4619 = vpop.xlane.xlu0 %4618
        %4620 = vadd.xlane.f32.xlu0 %v4365
        %v4621 = vpop.xlane.xlu0 %4620
        %4622 = vadd.xlane.f32.xlu0 %v4367
        %v4623 = vpop.xlane.xlu0 %4622
        %4624 = vadd.xlane.f32.xlu0 %v4369
        %v4625 = vpop.xlane.xlu0 %4624
        %4626 = vadd.xlane.f32.xlu0 %v4371
        %v4627 = vpop.xlane.xlu0 %4626
        %4628 = vadd.xlane.f32.xlu0 %v4373
        %v4629 = vpop.xlane.xlu0 %4628
        %4630 = vadd.xlane.f32.xlu0 %v4375
        %v4631 = vpop.xlane.xlu0 %4630
        %4632 = vadd.xlane.f32.xlu0 %v4377
        %v4633 = vpop.xlane.xlu0 %4632
        %4634 = vadd.xlane.f32.xlu0 %v4379
        %v4635 = vpop.xlane.xlu0 %4634
        %4636 = vadd.xlane.f32.xlu0 %v4381
        %v4637 = vpop.xlane.xlu0 %4636
        %4638 = vadd.xlane.f32.xlu0 %v4383
        %v4639 = vpop.xlane.xlu0 %4638
        %4640 = vadd.xlane.f32.xlu0 %v4385
        %v4641 = vpop.xlane.xlu0 %4640
        %4642 = vadd.xlane.f32.xlu0 %v4387
        %v4643 = vpop.xlane.xlu0 %4642
        %4644 = vadd.xlane.f32.xlu0 %v4389
        %v4645 = vpop.xlane.xlu0 %4644
        %4646 = vadd.xlane.f32.xlu0 %v4391
        %v4647 = vpop.xlane.xlu0 %4646
        %4648 = vadd.xlane.f32.xlu0 %v4393
        %v4649 = vpop.xlane.xlu0 %4648
        %4650 = vadd.xlane.f32.xlu0 %v4395
        %v4651 = vpop.xlane.xlu0 %4650
        %4652 = vadd.xlane.f32.xlu0 %v4397
        %v4653 = vpop.xlane.xlu0 %4652
        %4654 = vadd.xlane.f32.xlu0 %v4399
        %v4655 = vpop.xlane.xlu0 %4654
        %4656 = vadd.xlane.f32.xlu0 %v4401
        %v4657 = vpop.xlane.xlu0 %4656
        %4658 = vadd.xlane.f32.xlu0 %v4403
        %v4659 = vpop.xlane.xlu0 %4658
        %4660 = vadd.xlane.f32.xlu0 %v4405
        %v4661 = vpop.xlane.xlu0 %4660
        %4662 = vadd.xlane.f32.xlu0 %v4407
        %v4663 = vpop.xlane.xlu0 %4662
        %4664 = vadd.xlane.f32.xlu0 %v4409
        %v4665 = vpop.xlane.xlu0 %4664
        %4666 = vadd.xlane.f32.xlu0 %v4411
        %v4667 = vpop.xlane.xlu0 %4666
        %4668 = vadd.xlane.f32.xlu0 %v4413
        %v4669 = vpop.xlane.xlu0 %4668
        %4670 = vadd.xlane.f32.xlu0 %v4415
        %v4671 = vpop.xlane.xlu0 %4670
        %4672 = vadd.xlane.f32.xlu0 %v4417
        %v4673 = vpop.xlane.xlu0 %4672
        %4674 = vadd.xlane.f32.xlu0 %v4419
        %v4675 = vpop.xlane.xlu0 %4674
        %4676 = vadd.xlane.f32.xlu0 %v4421
        %v4677 = vpop.xlane.xlu0 %4676
        %4678 = vadd.xlane.f32.xlu0 %v4423
        %v4679 = vpop.xlane.xlu0 %4678
        %4680 = vadd.xlane.f32.xlu0 %v4425
        %v4681 = vpop.xlane.xlu0 %4680
        %4682 = vadd.xlane.f32.xlu0 %v4427
        %v4683 = vpop.xlane.xlu0 %4682
        %4684 = vadd.xlane.f32.xlu0 %v4429
        %v4685 = vpop.xlane.xlu0 %4684
        %4686 = vadd.xlane.f32.xlu0 %v4431
        %v4687 = vpop.xlane.xlu0 %4686
        %4688 = vadd.xlane.f32.xlu0 %v4433
        %v4689 = vpop.xlane.xlu0 %4688
        %4690 = vadd.xlane.f32.xlu0 %v4435
        %v4691 = vpop.xlane.xlu0 %4690
        %4692 = vadd.xlane.f32.xlu0 %v4437
        %v4693 = vpop.xlane.xlu0 %4692
        %4694 = vadd.xlane.f32.xlu0 %v4439
        %v4695 = vpop.xlane.xlu0 %4694
        %4696 = vadd.xlane.f32.xlu0 %v4441
        %v4697 = vpop.xlane.xlu0 %4696
        %4698 = vadd.xlane.f32.xlu0 %v4443
        %v4699 = vpop.xlane.xlu0 %4698
        %4700 = vadd.xlane.f32.xlu0 %v4445
        %v4701 = vpop.xlane.xlu0 %4700
        %4702 = vadd.xlane.f32.xlu0 %v4447
        %v4703 = vpop.xlane.xlu0 %4702
        %4704 = vadd.xlane.f32.xlu0 %v4449
        %v4705 = vpop.xlane.xlu0 %4704
        %4706 = vadd.xlane.f32.xlu0 %v4451
        %v4707 = vpop.xlane.xlu0 %4706
        %4708 = vadd.xlane.f32.xlu0 %v4453
        %v4709 = vpop.xlane.xlu0 %4708
        %4710 = vadd.xlane.f32.xlu0 %v4455
        %v4711 = vpop.xlane.xlu0 %4710
        %4712 = vadd.xlane.f32.xlu0 %v4457
        %v4713 = vpop.xlane.xlu0 %4712
        %4714 = vadd.xlane.f32.xlu0 %v4459
        %v4715 = vpop.xlane.xlu0 %4714
        %4716 = vadd.xlane.f32.xlu0 %v4461
        %v4717 = vpop.xlane.xlu0 %4716
        %4718 = vadd.xlane.f32.xlu0 %v4463
        %v4719 = vpop.xlane.xlu0 %4718
        %4720 = vadd.xlane.f32.xlu0 %v4465
        %v4721 = vpop.xlane.xlu0 %4720
        %4722 = vadd.xlane.f32.xlu0 %v4467
        %v4723 = vpop.xlane.xlu0 %4722
        %4724 = vadd.xlane.f32.xlu0 %v4469
        %v4725 = vpop.xlane.xlu0 %4724
        %4726 = vadd.xlane.f32.xlu0 %v4471
        %v4727 = vpop.xlane.xlu0 %4726
        %4728 = vadd.xlane.f32.xlu0 %v4473
        %v4729 = vpop.xlane.xlu0 %4728
        %4730 = vadd.xlane.f32.xlu0 %v4475
        %v4731 = vpop.xlane.xlu0 %4730
        %4732 = vadd.xlane.f32.xlu0 %v4477
        %v4733 = vpop.xlane.xlu0 %4732
        %4734 = vadd.xlane.f32.xlu0 %v4479
        %v4735 = vpop.xlane.xlu0 %4734
        %4736 = vadd.xlane.f32.xlu0 %v4481
        %v4737 = vpop.xlane.xlu0 %4736
        %4738 = vadd.xlane.f32.xlu0 %v4483
        %v4739 = vpop.xlane.xlu0 %4738
        %4740 = vadd.xlane.f32.xlu0 %v4485
        %v4741 = vpop.xlane.xlu0 %4740
        %4742 = vadd.xlane.f32.xlu0 %v4487
        %v4743 = vpop.xlane.xlu0 %4742
        %4744 = vadd.xlane.f32.xlu0 %v4489
        %v4745 = vpop.xlane.xlu0 %4744
        %4746 = vadd.xlane.f32.xlu0 %v4491
        %v4747 = vpop.xlane.xlu0 %4746
        %4748 = vadd.xlane.f32.xlu0 %v4493
        %v4749 = vpop.xlane.xlu0 %4748
        %4750 = vadd.xlane.f32.xlu0 %v4495
        %v4751 = vpop.xlane.xlu0 %4750
        %4752 = vadd.xlane.f32.xlu0 %v4497
        %v4753 = vpop.xlane.xlu0 %4752
        %4754 = vadd.xlane.f32.xlu0 %v4499
        %v4755 = vpop.xlane.xlu0 %4754
        %4756 = vadd.xlane.f32.xlu0 %v4501
        %v4757 = vpop.xlane.xlu0 %4756
        %4758 = vadd.xlane.f32.xlu0 %v4503
        %v4759 = vpop.xlane.xlu0 %4758
        %4760 = vadd.xlane.f32.xlu0 %v4505
        %v4761 = vpop.xlane.xlu0 %4760
        %4762 = vadd.xlane.f32.xlu0 %v4507
        %v4763 = vpop.xlane.xlu0 %4762
        %4764 = vadd.xlane.f32.xlu0 %v4509
        %v4765 = vpop.xlane.xlu0 %4764
        %4766 = vadd.xlane.f32.xlu0 %v4511
        %v4767 = vpop.xlane.xlu0 %4766
        %4768 = vadd.xlane.f32.xlu0 %v4513
        %v4769 = vpop.xlane.xlu0 %4768
        %4770 = vadd.xlane.f32.xlu0 %v4515
        %v4771 = vpop.xlane.xlu0 %4770
        %4772 = vadd.xlane.f32.xlu0 %v4517
        %v4773 = vpop.xlane.xlu0 %4772
        %4774 = vadd.xlane.f32.xlu0 %v4519
        %v4775 = vpop.xlane.xlu0 %4774
        %4776 = vadd.xlane.f32.xlu0 %v4521
        %v4777 = vpop.xlane.xlu0 %4776
        %4778 = vadd.xlane.f32.xlu0 %v4523
        %v4779 = vpop.xlane.xlu0 %4778
        %4780 = vadd.xlane.f32.xlu0 %v4525
        %v4781 = vpop.xlane.xlu0 %4780
        %4782 = vadd.xlane.f32.xlu0 %v4527
        %v4783 = vpop.xlane.xlu0 %4782
        %4784 = vadd.xlane.f32.xlu0 %v4529
        %v4785 = vpop.xlane.xlu0 %4784
        %4786 = vadd.xlane.f32.xlu0 %v4531
        %v4787 = vpop.xlane.xlu0 %4786
        %4788 = vadd.xlane.f32.xlu0 %v4533
        %v4789 = vpop.xlane.xlu0 %4788
        %4790 = vadd.xlane.f32.xlu0 %v4535
        %v4791 = vpop.xlane.xlu0 %4790
        %4792 = vadd.xlane.f32.xlu0 %v4537
        %v4793 = vpop.xlane.xlu0 %4792
        %4794 = vadd.xlane.f32.xlu0 %v4539
        %v4795 = vpop.xlane.xlu0 %4794
        %4796 = vadd.xlane.f32.xlu0 %v4541
        %v4797 = vpop.xlane.xlu0 %4796
        %4798 = vadd.xlane.f32.xlu0 %v4543
        %v4799 = vpop.xlane.xlu0 %4798
        %4800 = vadd.xlane.f32.xlu0 %v4545
        %v4801 = vpop.xlane.xlu0 %4800
        %4802 = vadd.xlane.f32.xlu0 %v4547
        %v4803 = vpop.xlane.xlu0 %4802
        %4804 = vadd.xlane.f32.xlu0 %v4549
        %v4805 = vpop.xlane.xlu0 %4804
        %4806 = vadd.xlane.f32.xlu0 %v4551
        %v4807 = vpop.xlane.xlu0 %4806
        %4808 = vadd.xlane.f32.xlu0 %v4553
        %v4809 = vpop.xlane.xlu0 %4808
        %4810 = vadd.xlane.f32.xlu0 %v4555
        %v4811 = vpop.xlane.xlu0 %4810
        %4812 = vadd.xlane.f32.xlu0 %v4557
        %v4813 = vpop.xlane.xlu0 %4812
        %4814 = vadd.xlane.f32.xlu0 %v4559
        %v4815 = vpop.xlane.xlu0 %4814
        %4816 = vadd.xlane.f32.xlu0 %v4561
        %v4817 = vpop.xlane.xlu0 %4816
        %4818 = vadd.xlane.f32.xlu0 %v4563
        %v4819 = vpop.xlane.xlu0 %4818
        %4820 = vadd.xlane.f32.xlu0 %v4565
        %v4821 = vpop.xlane.xlu0 %4820
        %4822 = vadd.xlane.f32.xlu0 %v4567
        %v4823 = vpop.xlane.xlu0 %4822
        %4824 = vadd.xlane.f32.xlu0 %v4569
        %v4825 = vpop.xlane.xlu0 %4824
        %4826 = vadd.xlane.f32.xlu0 %v4571
        %v4827 = vpop.xlane.xlu0 %4826
        %4828 = vadd.xlane.f32.xlu0 %v4573
        %v4829 = vpop.xlane.xlu0 %4828
        %4830 = vadd.xlane.f32.xlu0 %v4575
        %v4831 = vpop.xlane.xlu0 %4830
        %v4832 = vrcp.pop %v4577
        %v4833 = vrcp.pop %v4579
        %v4834 = vrcp.pop %v4581
        %v4835 = vrcp.pop %v4583
        %v4836 = vrcp.pop %v4585
        %v4837 = vrcp.pop %v4587
        %v4838 = vrcp.pop %v4589
        %v4839 = vrcp.pop %v4591
        %v4840 = vrcp.pop %v4593
        %v4841 = vrcp.pop %v4595
        %v4842 = vrcp.pop %v4597
        %v4843 = vrcp.pop %v4599
        %v4844 = vrcp.pop %v4601
        %v4845 = vrcp.pop %v4603
        %v4846 = vrcp.pop %v4605
        %v4847 = vrcp.pop %v4607
        %v4848 = vrcp.pop %v4609
        %v4849 = vrcp.pop %v4611
        %v4850 = vrcp.pop %v4613
        %v4851 = vrcp.pop %v4615
        %v4852 = vrcp.pop %v4617
        %v4853 = vrcp.pop %v4619
        %v4854 = vrcp.pop %v4621
        %v4855 = vrcp.pop %v4623
        %v4856 = vrcp.pop %v4625
        %v4857 = vrcp.pop %v4627
        %v4858 = vrcp.pop %v4629
        %v4859 = vrcp.pop %v4631
        %v4860 = vrcp.pop %v4633
        %v4861 = vrcp.pop %v4635
        %v4862 = vrcp.pop %v4637
        %v4863 = vrcp.pop %v4639
        %v4864 = vrcp.pop %v4641
        %v4865 = vrcp.pop %v4643
        %v4866 = vrcp.pop %v4645
        %v4867 = vrcp.pop %v4647
        %v4868 = vrcp.pop %v4649
        %v4869 = vrcp.pop %v4651
        %v4870 = vrcp.pop %v4653
        %v4871 = vrcp.pop %v4655
        %v4872 = vrcp.pop %v4657
        %v4873 = vrcp.pop %v4659
        %v4874 = vrcp.pop %v4661
        %v4875 = vrcp.pop %v4663
        %v4876 = vrcp.pop %v4665
        %v4877 = vrcp.pop %v4667
        %v4878 = vrcp.pop %v4669
        %v4879 = vrcp.pop %v4671
        %v4880 = vrcp.pop %v4673
        %v4881 = vrcp.pop %v4675
        %v4882 = vrcp.pop %v4677
        %v4883 = vrcp.pop %v4679
        %v4884 = vrcp.pop %v4681
        %v4885 = vrcp.pop %v4683
        %v4886 = vrcp.pop %v4685
        %v4887 = vrcp.pop %v4687
        %v4888 = vrcp.pop %v4689
        %v4889 = vrcp.pop %v4691
        %v4890 = vrcp.pop %v4693
        %v4891 = vrcp.pop %v4695
        %v4892 = vrcp.pop %v4697
        %v4893 = vrcp.pop %v4699
        %v4894 = vrcp.pop %v4701
        %v4895 = vrcp.pop %v4703
        %v4896 = vrcp.pop %v4705
        %v4897 = vrcp.pop %v4707
        %v4898 = vrcp.pop %v4709
        %v4899 = vrcp.pop %v4711
        %v4900 = vrcp.pop %v4713
        %v4901 = vrcp.pop %v4715
        %v4902 = vrcp.pop %v4717
        %v4903 = vrcp.pop %v4719
        %v4904 = vrcp.pop %v4721
        %v4905 = vrcp.pop %v4723
        %v4906 = vrcp.pop %v4725
        %v4907 = vrcp.pop %v4727
        %v4908 = vrcp.pop %v4729
        %v4909 = vrcp.pop %v4731
        %v4910 = vrcp.pop %v4733
        %v4911 = vrcp.pop %v4735
        %v4912 = vrcp.pop %v4737
        %v4913 = vrcp.pop %v4739
        %v4914 = vrcp.pop %v4741
        %v4915 = vrcp.pop %v4743
        %v4916 = vrcp.pop %v4745
        %v4917 = vrcp.pop %v4747
        %v4918 = vrcp.pop %v4749
        %v4919 = vrcp.pop %v4751
        %v4920 = vrcp.pop %v4753
        %v4921 = vrcp.pop %v4755
        %v4922 = vrcp.pop %v4757
        %v4923 = vrcp.pop %v4759
        %v4924 = vrcp.pop %v4761
        %v4925 = vrcp.pop %v4763
        %v4926 = vrcp.pop %v4765
        %v4927 = vrcp.pop %v4767
        %v4928 = vrcp.pop %v4769
        %v4929 = vrcp.pop %v4771
        %v4930 = vrcp.pop %v4773
        %v4931 = vrcp.pop %v4775
        %v4932 = vrcp.pop %v4777
        %v4933 = vrcp.pop %v4779
        %v4934 = vrcp.pop %v4781
        %v4935 = vrcp.pop %v4783
        %v4936 = vrcp.pop %v4785
        %v4937 = vrcp.pop %v4787
        %v4938 = vrcp.pop %v4789
        %v4939 = vrcp.pop %v4791
        %v4940 = vrcp.pop %v4793
        %v4941 = vrcp.pop %v4795
        %v4942 = vrcp.pop %v4797
        %v4943 = vrcp.pop %v4799
        %v4944 = vrcp.pop %v4801
        %v4945 = vrcp.pop %v4803
        %v4946 = vrcp.pop %v4805
        %v4947 = vrcp.pop %v4807
        %v4948 = vrcp.pop %v4809
        %v4949 = vrcp.pop %v4811
        %v4950 = vrcp.pop %v4813
        %v4951 = vrcp.pop %v4815
        %v4952 = vrcp.pop %v4817
        %v4953 = vrcp.pop %v4819
        %v4954 = vrcp.pop %v4821
        %v4955 = vrcp.pop %v4823
        %v4956 = vrcp.pop %v4825
        %v4957 = vrcp.pop %v4827
        %v4958 = vrcp.pop %v4829
        %v4959 = vrcp.pop %v4831
        %v4960 = vmul.f32 %v4321, %v4832
        %v4961 = vmul.f32 %v4323, %v4833
        %v4962 = vmul.f32 %v4325, %v4834
        %v4963 = vmul.f32 %v4327, %v4835
        %v4964 = vmul.f32 %v4329, %v4836
        %v4965 = vmul.f32 %v4331, %v4837
        %v4966 = vmul.f32 %v4333, %v4838
        %v4967 = vmul.f32 %v4335, %v4839
        %v4968 = vmul.f32 %v4337, %v4840
        %v4969 = vmul.f32 %v4339, %v4841
        %v4970 = vmul.f32 %v4341, %v4842
        %v4971 = vmul.f32 %v4343, %v4843
        %v4972 = vmul.f32 %v4345, %v4844
        %v4973 = vmul.f32 %v4347, %v4845
        %v4974 = vmul.f32 %v4349, %v4846
        %v4975 = vmul.f32 %v4351, %v4847
        %v4976 = vmul.f32 %v4353, %v4848
        %v4977 = vmul.f32 %v4355, %v4849
        %v4978 = vmul.f32 %v4357, %v4850
        %v4979 = vmul.f32 %v4359, %v4851
        %v4980 = vmul.f32 %v4361, %v4852
        %v4981 = vmul.f32 %v4363, %v4853
        %v4982 = vmul.f32 %v4365, %v4854
        %v4983 = vmul.f32 %v4367, %v4855
        %v4984 = vmul.f32 %v4369, %v4856
        %v4985 = vmul.f32 %v4371, %v4857
        %v4986 = vmul.f32 %v4373, %v4858
        %v4987 = vmul.f32 %v4375, %v4859
        %v4988 = vmul.f32 %v4377, %v4860
        %v4989 = vmul.f32 %v4379, %v4861
        %v4990 = vmul.f32 %v4381, %v4862
        %v4991 = vmul.f32 %v4383, %v4863
        %v4992 = vmul.f32 %v4385, %v4864
        %v4993 = vmul.f32 %v4387, %v4865
        %v4994 = vmul.f32 %v4389, %v4866
        %v4995 = vmul.f32 %v4391, %v4867
        %v4996 = vmul.f32 %v4393, %v4868
        %v4997 = vmul.f32 %v4395, %v4869
        %v4998 = vmul.f32 %v4397, %v4870
        %v4999 = vmul.f32 %v4399, %v4871
        %v5000 = vmul.f32 %v4401, %v4872
        %v5001 = vmul.f32 %v4403, %v4873
        %v5002 = vmul.f32 %v4405, %v4874
        %v5003 = vmul.f32 %v4407, %v4875
        %v5004 = vmul.f32 %v4409, %v4876
        %v5005 = vmul.f32 %v4411, %v4877
        %v5006 = vmul.f32 %v4413, %v4878
        %v5007 = vmul.f32 %v4415, %v4879
        %v5008 = vmul.f32 %v4417, %v4880
        %v5009 = vmul.f32 %v4419, %v4881
        %v5010 = vmul.f32 %v4421, %v4882
        %v5011 = vmul.f32 %v4423, %v4883
        %v5012 = vmul.f32 %v4425, %v4884
        %v5013 = vmul.f32 %v4427, %v4885
        %v5014 = vmul.f32 %v4429, %v4886
        %v5015 = vmul.f32 %v4431, %v4887
        %v5016 = vmul.f32 %v4433, %v4888
        %v5017 = vmul.f32 %v4435, %v4889
        %v5018 = vmul.f32 %v4437, %v4890
        %v5019 = vmul.f32 %v4439, %v4891
        %v5020 = vmul.f32 %v4441, %v4892
        %v5021 = vmul.f32 %v4443, %v4893
        %v5022 = vmul.f32 %v4445, %v4894
        %v5023 = vmul.f32 %v4447, %v4895
        %v5024 = vmul.f32 %v4449, %v4896
        %v5025 = vmul.f32 %v4451, %v4897
        %v5026 = vmul.f32 %v4453, %v4898
        %v5027 = vmul.f32 %v4455, %v4899
        %v5028 = vmul.f32 %v4457, %v4900
        %v5029 = vmul.f32 %v4459, %v4901
        %v5030 = vmul.f32 %v4461, %v4902
        %v5031 = vmul.f32 %v4463, %v4903
        %v5032 = vmul.f32 %v4465, %v4904
        %v5033 = vmul.f32 %v4467, %v4905
        %v5034 = vmul.f32 %v4469, %v4906
        %v5035 = vmul.f32 %v4471, %v4907
        %v5036 = vmul.f32 %v4473, %v4908
        %v5037 = vmul.f32 %v4475, %v4909
        %v5038 = vmul.f32 %v4477, %v4910
        %v5039 = vmul.f32 %v4479, %v4911
        %v5040 = vmul.f32 %v4481, %v4912
        %v5041 = vmul.f32 %v4483, %v4913
        %v5042 = vmul.f32 %v4485, %v4914
        %v5043 = vmul.f32 %v4487, %v4915
        %v5044 = vmul.f32 %v4489, %v4916
        %v5045 = vmul.f32 %v4491, %v4917
        %v5046 = vmul.f32 %v4493, %v4918
        %v5047 = vmul.f32 %v4495, %v4919
        %v5048 = vmul.f32 %v4497, %v4920
        %v5049 = vmul.f32 %v4499, %v4921
        %v5050 = vmul.f32 %v4501, %v4922
        %v5051 = vmul.f32 %v4503, %v4923
        %v5052 = vmul.f32 %v4505, %v4924
        %v5053 = vmul.f32 %v4507, %v4925
        %v5054 = vmul.f32 %v4509, %v4926
        %v5055 = vmul.f32 %v4511, %v4927
        %v5056 = vmul.f32 %v4513, %v4928
        %v5057 = vmul.f32 %v4515, %v4929
        %v5058 = vmul.f32 %v4517, %v4930
        %v5059 = vmul.f32 %v4519, %v4931
        %v5060 = vmul.f32 %v4521, %v4932
        %v5061 = vmul.f32 %v4523, %v4933
        %v5062 = vmul.f32 %v4525, %v4934
        %v5063 = vmul.f32 %v4527, %v4935
        %v5064 = vmul.f32 %v4529, %v4936
        %v5065 = vmul.f32 %v4531, %v4937
        %v5066 = vmul.f32 %v4533, %v4938
        %v5067 = vmul.f32 %v4535, %v4939
        %v5068 = vmul.f32 %v4537, %v4940
        %v5069 = vmul.f32 %v4539, %v4941
        %v5070 = vmul.f32 %v4541, %v4942
        %v5071 = vmul.f32 %v4543, %v4943
        %v5072 = vmul.f32 %v4545, %v4944
        %v5073 = vmul.f32 %v4547, %v4945
        %v5074 = vmul.f32 %v4549, %v4946
        %v5075 = vmul.f32 %v4551, %v4947
        %v5076 = vmul.f32 %v4553, %v4948
        %v5077 = vmul.f32 %v4555, %v4949
        %v5078 = vmul.f32 %v4557, %v4950
        %v5079 = vmul.f32 %v4559, %v4951
        %v5080 = vmul.f32 %v4561, %v4952
        %v5081 = vmul.f32 %v4563, %v4953
        %v5082 = vmul.f32 %v4565, %v4954
        %v5083 = vmul.f32 %v4567, %v4955
        %v5084 = vmul.f32 %v4569, %v4956
        %v5085 = vmul.f32 %v4571, %v4957
        %v5086 = vmul.f32 %v4573, %v4958
        %v5087 = vmul.f32 %v4575, %v4959
        %v5088 = vpack.c.bf16 %v4961, %v4960
        %v5089 = vpack.c.bf16 %v4963, %v4962
        %v5090 = vpack.c.bf16 %v4965, %v4964
        %v5091 = vpack.c.bf16 %v4967, %v4966
        %v5092 = vpack.c.bf16 %v4969, %v4968
        %v5093 = vpack.c.bf16 %v4971, %v4970
        %v5094 = vpack.c.bf16 %v4973, %v4972
        %v5095 = vpack.c.bf16 %v4975, %v4974
        %v5096 = vpack.c.bf16 %v4977, %v4976
        %v5097 = vpack.c.bf16 %v4979, %v4978
        %v5098 = vpack.c.bf16 %v4981, %v4980
        %v5099 = vpack.c.bf16 %v4983, %v4982
        %v5100 = vpack.c.bf16 %v4985, %v4984
        %v5101 = vpack.c.bf16 %v4987, %v4986
        %v5102 = vpack.c.bf16 %v4989, %v4988
        %v5103 = vpack.c.bf16 %v4991, %v4990
        %v5104 = vpack.c.bf16 %v4993, %v4992
        %v5105 = vpack.c.bf16 %v4995, %v4994
        %v5106 = vpack.c.bf16 %v4997, %v4996
        %v5107 = vpack.c.bf16 %v4999, %v4998
        %v5108 = vpack.c.bf16 %v5001, %v5000
        %v5109 = vpack.c.bf16 %v5003, %v5002
        %v5110 = vpack.c.bf16 %v5005, %v5004
        %v5111 = vpack.c.bf16 %v5007, %v5006
        %v5112 = vpack.c.bf16 %v5009, %v5008
        %v5113 = vpack.c.bf16 %v5011, %v5010
        %v5114 = vpack.c.bf16 %v5013, %v5012
        %v5115 = vpack.c.bf16 %v5015, %v5014
        %v5116 = vpack.c.bf16 %v5017, %v5016
        %v5117 = vpack.c.bf16 %v5019, %v5018
        %v5118 = vpack.c.bf16 %v5021, %v5020
        %v5119 = vpack.c.bf16 %v5023, %v5022
        %v5120 = vpack.c.bf16 %v5025, %v5024
        %v5121 = vpack.c.bf16 %v5027, %v5026
        %v5122 = vpack.c.bf16 %v5029, %v5028
        %v5123 = vpack.c.bf16 %v5031, %v5030
        %v5124 = vpack.c.bf16 %v5033, %v5032
        %v5125 = vpack.c.bf16 %v5035, %v5034
        %v5126 = vpack.c.bf16 %v5037, %v5036
        %v5127 = vpack.c.bf16 %v5039, %v5038
        %v5128 = vpack.c.bf16 %v5041, %v5040
        %v5129 = vpack.c.bf16 %v5043, %v5042
        %v5130 = vpack.c.bf16 %v5045, %v5044
        %v5131 = vpack.c.bf16 %v5047, %v5046
        %v5132 = vpack.c.bf16 %v5049, %v5048
        %v5133 = vpack.c.bf16 %v5051, %v5050
        %v5134 = vpack.c.bf16 %v5053, %v5052
        %v5135 = vpack.c.bf16 %v5055, %v5054
        %v5136 = vpack.c.bf16 %v5057, %v5056
        %v5137 = vpack.c.bf16 %v5059, %v5058
        %v5138 = vpack.c.bf16 %v5061, %v5060
        %v5139 = vpack.c.bf16 %v5063, %v5062
        %v5140 = vpack.c.bf16 %v5065, %v5064
        %v5141 = vpack.c.bf16 %v5067, %v5066
        %v5142 = vpack.c.bf16 %v5069, %v5068
        %v5143 = vpack.c.bf16 %v5071, %v5070
        %v5144 = vpack.c.bf16 %v5073, %v5072
        %v5145 = vpack.c.bf16 %v5075, %v5074
        %v5146 = vpack.c.bf16 %v5077, %v5076
        %v5147 = vpack.c.bf16 %v5079, %v5078
        %v5148 = vpack.c.bf16 %v5081, %v5080
        %v5149 = vpack.c.bf16 %v5083, %v5082
        %v5150 = vpack.c.bf16 %v5085, %v5084
        %v5151 = vpack.c.bf16 %v5087, %v5086
        %v5152 = vpack.c.bf16 %v759, %v756
        %v5153 = vpack.c.bf16 %v767, %v764
        %v5154 = vpack.c.bf16 %v775, %v772
        %v5155 = vpack.c.bf16 %v783, %v780
        %v5156 = vpack.c.bf16 %v791, %v788
        %v5157 = vpack.c.bf16 %v799, %v796
        %v5158 = vpack.c.bf16 %v807, %v804
        %v5159 = vpack.c.bf16 %v815, %v812
        %5160 = vmatprep.subr.bf16.mxu0 0
        %5161 = vmatpush1.bf16.xpose.msra.mxu0 %v5152
        %5162 = vmatprep.subr.bf16.mxu0 0
        %5163 = vmatpush1.bf16.xpose.msra.mxu0 0
        %5164 = vmatprep.subr.bf16.mxu0 0
        %5165 = vmatpush1.bf16.xpose.msra.mxu0 0
        %5166 = vmatprep.subr.bf16.mxu0 0
        %5167 = vmatpush1.bf16.xpose.msra.mxu0 0
        %5168 = vmatprep.subr.bf16.mxu0 0
        %5169 = vmatpush1.bf16.xpose.msra.mxu0 0
        %5170 = vmatprep.subr.bf16.mxu0 0
        %5171 = vmatpush1.bf16.xpose.msra.mxu0 0
        %5172 = vmatprep.subr.bf16.mxu0 0
        %5173 = vmatpush1.bf16.xpose.msra.mxu0 0
        %5174 = vmatprep.subr.bf16.mxu0 0
        %5175 = vmatpush1.bf16.xpose.msra.mxu0 0
        %5176 = vmatprep.subr.bf16.mxu0 0
        %5177 = vmatpush1.bf16.xpose.msra.mxu0 0
        %5178 = vmatprep.subr.bf16.mxu0 0
        %5179 = vmatpush1.bf16.xpose.msra.mxu0 0
        %5180 = vmatprep.subr.bf16.mxu0 0
        %5181 = vmatpush1.bf16.xpose.msra.mxu0 0
        %5182 = vmatprep.subr.bf16.mxu0 0
        %5183 = vmatpush1.bf16.xpose.msra.mxu0 0
        %5184 = vmatprep.subr.bf16.mxu0 0
        %5185 = vmatpush1.bf16.xpose.msra.mxu0 0
        %5186 = vmatprep.subr.bf16.mxu0 0
        %5187 = vmatpush1.bf16.xpose.msra.mxu0 0
        %5188 = vmatprep.subr.bf16.mxu0 0
        %5189 = vmatpush1.bf16.xpose.msra.mxu0 0
        %5190 = vmatprep.subr.bf16.mxu0 0
        %5191 = vmatpush1.bf16.xpose.msra.mxu0 0
        %5192 = vmatprep.mubr.bf16.mxu0 0
        %5193 = vmatmul.mubr.bf16.gmra.mrb[0].mxu0 %v5088
        %v5194 = vpop.f32.mrb[0].mxu0
        %v5195 = vadd.f32 0.0, %v5194
        %v5196 = vpop.f32.mrb[0].mxu0
        %v5197 = vpop.f32.mrb[0].mxu0
        %v5198 = vadd.f32 0.0, %v5197
        %v5199 = vpop.f32.mrb[0].mxu0
        %5200 = vmatprep.mubr.bf16.mxu0 0
        %5201 = vmatmul.mubr.bf16.gmra.mrb[0].mxu0 %v5089
        %v5202 = vpop.f32.mrb[0].mxu0
        %v5203 = vadd.f32 0.0, %v5202
        %v5204 = vpop.f32.mrb[0].mxu0
        %v5205 = vpop.f32.mrb[0].mxu0
        %v5206 = vadd.f32 0.0, %v5205
        %v5207 = vpop.f32.mrb[0].mxu0
        %5208 = vmatprep.mubr.bf16.mxu0 0
        %5209 = vmatmul.mubr.bf16.gmra.mrb[0].mxu0 %v5090
        %v5210 = vpop.f32.mrb[0].mxu0
        %v5211 = vadd.f32 0.0, %v5210
        %v5212 = vpop.f32.mrb[0].mxu0
        %v5213 = vpop.f32.mrb[0].mxu0
        %v5214 = vadd.f32 0.0, %v5213
        %v5215 = vpop.f32.mrb[0].mxu0
        %5216 = vmatprep.mubr.bf16.mxu0 0
        %5217 = vmatmul.mubr.bf16.gmra.mrb[0].mxu0 %v5091
        %v5218 = vpop.f32.mrb[0].mxu0
        %v5219 = vadd.f32 0.0, %v5218
        %v5220 = vpop.f32.mrb[0].mxu0
        %v5221 = vpop.f32.mrb[0].mxu0
        %v5222 = vadd.f32 0.0, %v5221
        %v5223 = vpop.f32.mrb[0].mxu0
        %5224 = vmatprep.mubr.bf16.mxu0 0
        %5225 = vmatmul.mubr.bf16.gmra.mrb[0].mxu0 %v5092
        %v5226 = vpop.f32.mrb[0].mxu0
        %v5227 = vadd.f32 0.0, %v5226
        %v5228 = vpop.f32.mrb[0].mxu0
        %v5229 = vpop.f32.mrb[0].mxu0
        %v5230 = vadd.f32 0.0, %v5229
        %v5231 = vpop.f32.mrb[0].mxu0
        %5232 = vmatprep.mubr.bf16.mxu0 0
        %5233 = vmatmul.mubr.bf16.gmra.mrb[0].mxu0 %v5093
        %v5234 = vpop.f32.mrb[0].mxu0
        %v5235 = vadd.f32 0.0, %v5234
        %v5236 = vpop.f32.mrb[0].mxu0
        %v5237 = vpop.f32.mrb[0].mxu0
        %v5238 = vadd.f32 0.0, %v5237
        %v5239 = vpop.f32.mrb[0].mxu0
        %5240 = vmatprep.mubr.bf16.mxu0 0
        %5241 = vmatmul.mubr.bf16.gmra.mrb[0].mxu0 %v5094
        %v5242 = vpop.f32.mrb[0].mxu0
        %v5243 = vadd.f32 0.0, %v5242
        %v5244 = vpop.f32.mrb[0].mxu0
        %v5245 = vpop.f32.mrb[0].mxu0
        %v5246 = vadd.f32 0.0, %v5245
        %v5247 = vpop.f32.mrb[0].mxu0
        %5248 = vmatprep.mubr.bf16.mxu0 0
        %5249 = vmatmul.mubr.bf16.gmra.mrb[0].mxu0 %v5095
        %v5250 = vpop.f32.mrb[0].mxu0
        %v5251 = vadd.f32 0.0, %v5250
        %v5252 = vpop.f32.mrb[0].mxu0
        %v5253 = vpop.f32.mrb[0].mxu0
        %v5254 = vadd.f32 0.0, %v5253
        %v5255 = vpop.f32.mrb[0].mxu0
        %5256 = vdwg.mxu0
        %5257 = vmatprep.subr.bf16.mxu0 0
        %5258 = vmatpush1.bf16.xpose.msra.mxu0 %v5153
        %5259 = vmatprep.subr.bf16.mxu0 0
        %5260 = vmatpush1.bf16.xpose.msra.mxu0 0
        %5261 = vmatprep.subr.bf16.mxu0 0
        %5262 = vmatpush1.bf16.xpose.msra.mxu0 0
        %5263 = vmatprep.subr.bf16.mxu0 0
        %5264 = vmatpush1.bf16.xpose.msra.mxu0 0
        %5265 = vmatprep.subr.bf16.mxu0 0
        %5266 = vmatpush1.bf16.xpose.msra.mxu0 0
        %5267 = vmatprep.subr.bf16.mxu0 0
        %5268 = vmatpush1.bf16.xpose.msra.mxu0 0
        %5269 = vmatprep.subr.bf16.mxu0 0
        %5270 = vmatpush1.bf16.xpose.msra.mxu0 0
        %5271 = vmatprep.subr.bf16.mxu0 0
        %5272 = vmatpush1.bf16.xpose.msra.mxu0 0
        %5273 = vmatprep.subr.bf16.mxu0 0
        %5274 = vmatpush1.bf16.xpose.msra.mxu0 0
        %5275 = vmatprep.subr.bf16.mxu0 0
        %5276 = vmatpush1.bf16.xpose.msra.mxu0 0
        %5277 = vmatprep.subr.bf16.mxu0 0
        %5278 = vmatpush1.bf16.xpose.msra.mxu0 0
        %5279 = vmatprep.subr.bf16.mxu0 0
        %5280 = vmatpush1.bf16.xpose.msra.mxu0 0
        %5281 = vmatprep.subr.bf16.mxu0 0
        %5282 = vmatpush1.bf16.xpose.msra.mxu0 0
        %5283 = vmatprep.subr.bf16.mxu0 0
        %5284 = vmatpush1.bf16.xpose.msra.mxu0 0
        %5285 = vmatprep.subr.bf16.mxu0 0
        %5286 = vmatpush1.bf16.xpose.msra.mxu0 0
        %5287 = vmatprep.subr.bf16.mxu0 0
        %5288 = vmatpush1.bf16.xpose.msra.mxu0 0
        %5289 = vmatprep.mubr.bf16.mxu0 0
        %5290 = vmatmul.mubr.bf16.gmra.mrb[0].mxu0 %v5096
        %v5291 = vpop.f32.mrb[0].mxu0
        %v5292 = vadd.f32 0.0, %v5291
        %v5293 = vpop.f32.mrb[0].mxu0
        %v5294 = vpop.f32.mrb[0].mxu0
        %v5295 = vadd.f32 0.0, %v5294
        %v5296 = vpop.f32.mrb[0].mxu0
        %5297 = vmatprep.mubr.bf16.mxu0 0
        %5298 = vmatmul.mubr.bf16.gmra.mrb[0].mxu0 %v5097
        %v5299 = vpop.f32.mrb[0].mxu0
        %v5300 = vadd.f32 0.0, %v5299
        %v5301 = vpop.f32.mrb[0].mxu0
        %v5302 = vpop.f32.mrb[0].mxu0
        %v5303 = vadd.f32 0.0, %v5302
        %v5304 = vpop.f32.mrb[0].mxu0
        %5305 = vmatprep.mubr.bf16.mxu0 0
        %5306 = vmatmul.mubr.bf16.gmra.mrb[0].mxu0 %v5098
        %v5307 = vpop.f32.mrb[0].mxu0
        %v5308 = vadd.f32 0.0, %v5307
        %v5309 = vpop.f32.mrb[0].mxu0
        %v5310 = vpop.f32.mrb[0].mxu0
        %v5311 = vadd.f32 0.0, %v5310
        %v5312 = vpop.f32.mrb[0].mxu0
        %5313 = vmatprep.mubr.bf16.mxu0 0
        %5314 = vmatmul.mubr.bf16.gmra.mrb[0].mxu0 %v5099
        %v5315 = vpop.f32.mrb[0].mxu0
        %v5316 = vadd.f32 0.0, %v5315
        %v5317 = vpop.f32.mrb[0].mxu0
        %v5318 = vpop.f32.mrb[0].mxu0
        %v5319 = vadd.f32 0.0, %v5318
        %v5320 = vpop.f32.mrb[0].mxu0
        %5321 = vmatprep.mubr.bf16.mxu0 0
        %5322 = vmatmul.mubr.bf16.gmra.mrb[0].mxu0 %v5100
        %v5323 = vpop.f32.mrb[0].mxu0
        %v5324 = vadd.f32 0.0, %v5323
        %v5325 = vpop.f32.mrb[0].mxu0
        %v5326 = vpop.f32.mrb[0].mxu0
        %v5327 = vadd.f32 0.0, %v5326
        %v5328 = vpop.f32.mrb[0].mxu0
        %5329 = vmatprep.mubr.bf16.mxu0 0
        %5330 = vmatmul.mubr.bf16.gmra.mrb[0].mxu0 %v5101
        %v5331 = vpop.f32.mrb[0].mxu0
        %v5332 = vadd.f32 0.0, %v5331
        %v5333 = vpop.f32.mrb[0].mxu0
        %v5334 = vpop.f32.mrb[0].mxu0
        %v5335 = vadd.f32 0.0, %v5334
        %v5336 = vpop.f32.mrb[0].mxu0
        %5337 = vmatprep.mubr.bf16.mxu0 0
        %5338 = vmatmul.mubr.bf16.gmra.mrb[0].mxu0 %v5102
        %v5339 = vpop.f32.mrb[0].mxu0
        %v5340 = vadd.f32 0.0, %v5339
        %v5341 = vpop.f32.mrb[0].mxu0
        %v5342 = vpop.f32.mrb[0].mxu0
        %v5343 = vadd.f32 0.0, %v5342
        %v5344 = vpop.f32.mrb[0].mxu0
        %5345 = vmatprep.mubr.bf16.mxu0 0
        %5346 = vmatmul.mubr.bf16.gmra.mrb[0].mxu0 %v5103
        %v5347 = vpop.f32.mrb[0].mxu0
        %v5348 = vadd.f32 0.0, %v5347
        %v5349 = vpop.f32.mrb[0].mxu0
        %v5350 = vpop.f32.mrb[0].mxu0
        %v5351 = vadd.f32 0.0, %v5350
        %v5352 = vpop.f32.mrb[0].mxu0
        %5353 = vdwg.mxu0
        %5354 = vmatprep.subr.bf16.mxu0 0
        %5355 = vmatpush1.bf16.xpose.msra.mxu0 %v5154
        %5356 = vmatprep.subr.bf16.mxu0 0
        %5357 = vmatpush1.bf16.xpose.msra.mxu0 0
        %5358 = vmatprep.subr.bf16.mxu0 0
        %5359 = vmatpush1.bf16.xpose.msra.mxu0 0
        %5360 = vmatprep.subr.bf16.mxu0 0
        %5361 = vmatpush1.bf16.xpose.msra.mxu0 0
        %5362 = vmatprep.subr.bf16.mxu0 0
        %5363 = vmatpush1.bf16.xpose.msra.mxu0 0
        %5364 = vmatprep.subr.bf16.mxu0 0
        %5365 = vmatpush1.bf16.xpose.msra.mxu0 0
        %5366 = vmatprep.subr.bf16.mxu0 0
        %5367 = vmatpush1.bf16.xpose.msra.mxu0 0
        %5368 = vmatprep.subr.bf16.mxu0 0
        %5369 = vmatpush1.bf16.xpose.msra.mxu0 0
        %5370 = vmatprep.subr.bf16.mxu0 0
        %5371 = vmatpush1.bf16.xpose.msra.mxu0 0
        %5372 = vmatprep.subr.bf16.mxu0 0
        %5373 = vmatpush1.bf16.xpose.msra.mxu0 0
        %5374 = vmatprep.subr.bf16.mxu0 0
        %5375 = vmatpush1.bf16.xpose.msra.mxu0 0
        %5376 = vmatprep.subr.bf16.mxu0 0
        %5377 = vmatpush1.bf16.xpose.msra.mxu0 0
        %5378 = vmatprep.subr.bf16.mxu0 0
        %5379 = vmatpush1.bf16.xpose.msra.mxu0 0
        %5380 = vmatprep.subr.bf16.mxu0 0
        %5381 = vmatpush1.bf16.xpose.msra.mxu0 0
        %5382 = vmatprep.subr.bf16.mxu0 0
        %5383 = vmatpush1.bf16.xpose.msra.mxu0 0
        %5384 = vmatprep.subr.bf16.mxu0 0
        %5385 = vmatpush1.bf16.xpose.msra.mxu0 0
        %5386 = vmatprep.mubr.bf16.mxu0 0
        %5387 = vmatmul.mubr.bf16.gmra.mrb[0].mxu0 %v5104
        %v5388 = vpop.f32.mrb[0].mxu0
        %v5389 = vadd.f32 0.0, %v5388
        %v5390 = vpop.f32.mrb[0].mxu0
        %v5391 = vpop.f32.mrb[0].mxu0
        %v5392 = vadd.f32 0.0, %v5391
        %v5393 = vpop.f32.mrb[0].mxu0
        %5394 = vmatprep.mubr.bf16.mxu0 0
        %5395 = vmatmul.mubr.bf16.gmra.mrb[0].mxu0 %v5105
        %v5396 = vpop.f32.mrb[0].mxu0
        %v5397 = vadd.f32 0.0, %v5396
        %v5398 = vpop.f32.mrb[0].mxu0
        %v5399 = vpop.f32.mrb[0].mxu0
        %v5400 = vadd.f32 0.0, %v5399
        %v5401 = vpop.f32.mrb[0].mxu0
        %5402 = vmatprep.mubr.bf16.mxu0 0
        %5403 = vmatmul.mubr.bf16.gmra.mrb[0].mxu0 %v5106
        %v5404 = vpop.f32.mrb[0].mxu0
        %v5405 = vadd.f32 0.0, %v5404
        %v5406 = vpop.f32.mrb[0].mxu0
        %v5407 = vpop.f32.mrb[0].mxu0
        %v5408 = vadd.f32 0.0, %v5407
        %v5409 = vpop.f32.mrb[0].mxu0
        %5410 = vmatprep.mubr.bf16.mxu0 0
        %5411 = vmatmul.mubr.bf16.gmra.mrb[0].mxu0 %v5107
        %v5412 = vpop.f32.mrb[0].mxu0
        %v5413 = vadd.f32 0.0, %v5412
        %v5414 = vpop.f32.mrb[0].mxu0
        %v5415 = vpop.f32.mrb[0].mxu0
        %v5416 = vadd.f32 0.0, %v5415
        %v5417 = vpop.f32.mrb[0].mxu0
        %5418 = vmatprep.mubr.bf16.mxu0 0
        %5419 = vmatmul.mubr.bf16.gmra.mrb[0].mxu0 %v5108
        %v5420 = vpop.f32.mrb[0].mxu0
        %v5421 = vadd.f32 0.0, %v5420
        %v5422 = vpop.f32.mrb[0].mxu0
        %v5423 = vpop.f32.mrb[0].mxu0
        %v5424 = vadd.f32 0.0, %v5423
        %v5425 = vpop.f32.mrb[0].mxu0
        %5426 = vmatprep.mubr.bf16.mxu0 0
        %5427 = vmatmul.mubr.bf16.gmra.mrb[0].mxu0 %v5109
        %v5428 = vpop.f32.mrb[0].mxu0
        %v5429 = vadd.f32 0.0, %v5428
        %v5430 = vpop.f32.mrb[0].mxu0
        %v5431 = vpop.f32.mrb[0].mxu0
        %v5432 = vadd.f32 0.0, %v5431
        %v5433 = vpop.f32.mrb[0].mxu0
        %5434 = vmatprep.mubr.bf16.mxu0 0
        %5435 = vmatmul.mubr.bf16.gmra.mrb[0].mxu0 %v5110
        %v5436 = vpop.f32.mrb[0].mxu0
        %v5437 = vadd.f32 0.0, %v5436
        %v5438 = vpop.f32.mrb[0].mxu0
        %v5439 = vpop.f32.mrb[0].mxu0
        %v5440 = vadd.f32 0.0, %v5439
        %v5441 = vpop.f32.mrb[0].mxu0
        %5442 = vmatprep.mubr.bf16.mxu0 0
        %5443 = vmatmul.mubr.bf16.gmra.mrb[0].mxu0 %v5111
        %v5444 = vpop.f32.mrb[0].mxu0
        %v5445 = vadd.f32 0.0, %v5444
        %v5446 = vpop.f32.mrb[0].mxu0
        %v5447 = vpop.f32.mrb[0].mxu0
        %v5448 = vadd.f32 0.0, %v5447
        %v5449 = vpop.f32.mrb[0].mxu0
        %5450 = vdwg.mxu0
        %5451 = vmatprep.subr.bf16.mxu0 0
        %5452 = vmatpush1.bf16.xpose.msra.mxu0 %v5155
        %5453 = vmatprep.subr.bf16.mxu0 0
        %5454 = vmatpush1.bf16.xpose.msra.mxu0 0
        %5455 = vmatprep.subr.bf16.mxu0 0
        %5456 = vmatpush1.bf16.xpose.msra.mxu0 0
        %5457 = vmatprep.subr.bf16.mxu0 0
        %5458 = vmatpush1.bf16.xpose.msra.mxu0 0
        %5459 = vmatprep.subr.bf16.mxu0 0
        %5460 = vmatpush1.bf16.xpose.msra.mxu0 0
        %5461 = vmatprep.subr.bf16.mxu0 0
        %5462 = vmatpush1.bf16.xpose.msra.mxu0 0
        %5463 = vmatprep.subr.bf16.mxu0 0
        %5464 = vmatpush1.bf16.xpose.msra.mxu0 0
        %5465 = vmatprep.subr.bf16.mxu0 0
        %5466 = vmatpush1.bf16.xpose.msra.mxu0 0
        %5467 = vmatprep.subr.bf16.mxu0 0
        %5468 = vmatpush1.bf16.xpose.msra.mxu0 0
        %5469 = vmatprep.subr.bf16.mxu0 0
        %5470 = vmatpush1.bf16.xpose.msra.mxu0 0
        %5471 = vmatprep.subr.bf16.mxu0 0
        %5472 = vmatpush1.bf16.xpose.msra.mxu0 0
        %5473 = vmatprep.subr.bf16.mxu0 0
        %5474 = vmatpush1.bf16.xpose.msra.mxu0 0
        %5475 = vmatprep.subr.bf16.mxu0 0
        %5476 = vmatpush1.bf16.xpose.msra.mxu0 0
        %5477 = vmatprep.subr.bf16.mxu0 0
        %5478 = vmatpush1.bf16.xpose.msra.mxu0 0
        %5479 = vmatprep.subr.bf16.mxu0 0
        %5480 = vmatpush1.bf16.xpose.msra.mxu0 0
        %5481 = vmatprep.subr.bf16.mxu0 0
        %5482 = vmatpush1.bf16.xpose.msra.mxu0 0
        %5483 = vmatprep.mubr.bf16.mxu0 0
        %5484 = vmatmul.mubr.bf16.gmra.mrb[0].mxu0 %v5112
        %v5485 = vpop.f32.mrb[0].mxu0
        %v5486 = vadd.f32 0.0, %v5485
        %v5487 = vpop.f32.mrb[0].mxu0
        %v5488 = vpop.f32.mrb[0].mxu0
        %v5489 = vadd.f32 0.0, %v5488
        %v5490 = vpop.f32.mrb[0].mxu0
        %5491 = vmatprep.mubr.bf16.mxu0 0
        %5492 = vmatmul.mubr.bf16.gmra.mrb[0].mxu0 %v5113
        %v5493 = vpop.f32.mrb[0].mxu0
        %v5494 = vadd.f32 0.0, %v5493
        %v5495 = vpop.f32.mrb[0].mxu0
        %v5496 = vpop.f32.mrb[0].mxu0
        %v5497 = vadd.f32 0.0, %v5496
        %v5498 = vpop.f32.mrb[0].mxu0
        %5499 = vmatprep.mubr.bf16.mxu0 0
        %5500 = vmatmul.mubr.bf16.gmra.mrb[0].mxu0 %v5114
        %v5501 = vpop.f32.mrb[0].mxu0
        %v5502 = vadd.f32 0.0, %v5501
        %v5503 = vpop.f32.mrb[0].mxu0
        %v5504 = vpop.f32.mrb[0].mxu0
        %v5505 = vadd.f32 0.0, %v5504
        %v5506 = vpop.f32.mrb[0].mxu0
        %5507 = vmatprep.mubr.bf16.mxu0 0
        %5508 = vmatmul.mubr.bf16.gmra.mrb[0].mxu0 %v5115
        %v5509 = vpop.f32.mrb[0].mxu0
        %v5510 = vadd.f32 0.0, %v5509
        %v5511 = vpop.f32.mrb[0].mxu0
        %v5512 = vpop.f32.mrb[0].mxu0
        %v5513 = vadd.f32 0.0, %v5512
        %v5514 = vpop.f32.mrb[0].mxu0
        %5515 = vmatprep.mubr.bf16.mxu0 0
        %5516 = vmatmul.mubr.bf16.gmra.mrb[0].mxu0 %v5116
        %v5517 = vpop.f32.mrb[0].mxu0
        %v5518 = vadd.f32 0.0, %v5517
        %v5519 = vpop.f32.mrb[0].mxu0
        %v5520 = vpop.f32.mrb[0].mxu0
        %v5521 = vadd.f32 0.0, %v5520
        %v5522 = vpop.f32.mrb[0].mxu0
        %5523 = vmatprep.mubr.bf16.mxu0 0
        %5524 = vmatmul.mubr.bf16.gmra.mrb[0].mxu0 %v5117
        %v5525 = vpop.f32.mrb[0].mxu0
        %v5526 = vadd.f32 0.0, %v5525
        %v5527 = vpop.f32.mrb[0].mxu0
        %v5528 = vpop.f32.mrb[0].mxu0
        %v5529 = vadd.f32 0.0, %v5528
        %v5530 = vpop.f32.mrb[0].mxu0
        %5531 = vmatprep.mubr.bf16.mxu0 0
        %5532 = vmatmul.mubr.bf16.gmra.mrb[0].mxu0 %v5118
        %v5533 = vpop.f32.mrb[0].mxu0
        %v5534 = vadd.f32 0.0, %v5533
        %v5535 = vpop.f32.mrb[0].mxu0
        %v5536 = vpop.f32.mrb[0].mxu0
        %v5537 = vadd.f32 0.0, %v5536
        %v5538 = vpop.f32.mrb[0].mxu0
        %5539 = vmatprep.mubr.bf16.mxu0 0
        %5540 = vmatmul.mubr.bf16.gmra.mrb[0].mxu0 %v5119
        %v5541 = vpop.f32.mrb[0].mxu0
        %v5542 = vadd.f32 0.0, %v5541
        %v5543 = vpop.f32.mrb[0].mxu0
        %v5544 = vpop.f32.mrb[0].mxu0
        %v5545 = vadd.f32 0.0, %v5544
        %v5546 = vpop.f32.mrb[0].mxu0
        %5547 = vdwg.mxu0
        %5548 = vmatprep.subr.bf16.mxu0 0
        %5549 = vmatpush1.bf16.xpose.msra.mxu0 %v5156
        %5550 = vmatprep.subr.bf16.mxu0 0
        %5551 = vmatpush1.bf16.xpose.msra.mxu0 0
        %5552 = vmatprep.subr.bf16.mxu0 0
        %5553 = vmatpush1.bf16.xpose.msra.mxu0 0
        %5554 = vmatprep.subr.bf16.mxu0 0
        %5555 = vmatpush1.bf16.xpose.msra.mxu0 0
        %5556 = vmatprep.subr.bf16.mxu0 0
        %5557 = vmatpush1.bf16.xpose.msra.mxu0 0
        %5558 = vmatprep.subr.bf16.mxu0 0
        %5559 = vmatpush1.bf16.xpose.msra.mxu0 0
        %5560 = vmatprep.subr.bf16.mxu0 0
        %5561 = vmatpush1.bf16.xpose.msra.mxu0 0
        %5562 = vmatprep.subr.bf16.mxu0 0
        %5563 = vmatpush1.bf16.xpose.msra.mxu0 0
        %5564 = vmatprep.subr.bf16.mxu0 0
        %5565 = vmatpush1.bf16.xpose.msra.mxu0 0
        %5566 = vmatprep.subr.bf16.mxu0 0
        %5567 = vmatpush1.bf16.xpose.msra.mxu0 0
        %5568 = vmatprep.subr.bf16.mxu0 0
        %5569 = vmatpush1.bf16.xpose.msra.mxu0 0
        %5570 = vmatprep.subr.bf16.mxu0 0
        %5571 = vmatpush1.bf16.xpose.msra.mxu0 0
        %5572 = vmatprep.subr.bf16.mxu0 0
        %5573 = vmatpush1.bf16.xpose.msra.mxu0 0
        %5574 = vmatprep.subr.bf16.mxu0 0
        %5575 = vmatpush1.bf16.xpose.msra.mxu0 0
        %5576 = vmatprep.subr.bf16.mxu0 0
        %5577 = vmatpush1.bf16.xpose.msra.mxu0 0
        %5578 = vmatprep.subr.bf16.mxu0 0
        %5579 = vmatpush1.bf16.xpose.msra.mxu0 0
        %5580 = vmatprep.mubr.bf16.mxu0 0
        %5581 = vmatmul.mubr.bf16.gmra.mrb[0].mxu0 %v5120
        %v5582 = vpop.f32.mrb[0].mxu0
        %v5583 = vadd.f32 0.0, %v5582
        %v5584 = vpop.f32.mrb[0].mxu0
        %v5585 = vpop.f32.mrb[0].mxu0
        %v5586 = vadd.f32 0.0, %v5585
        %v5587 = vpop.f32.mrb[0].mxu0
        %5588 = vmatprep.mubr.bf16.mxu0 0
        %5589 = vmatmul.mubr.bf16.gmra.mrb[0].mxu0 %v5121
        %v5590 = vpop.f32.mrb[0].mxu0
        %v5591 = vadd.f32 0.0, %v5590
        %v5592 = vpop.f32.mrb[0].mxu0
        %v5593 = vpop.f32.mrb[0].mxu0
        %v5594 = vadd.f32 0.0, %v5593
        %v5595 = vpop.f32.mrb[0].mxu0
        %5596 = vmatprep.mubr.bf16.mxu0 0
        %5597 = vmatmul.mubr.bf16.gmra.mrb[0].mxu0 %v5122
        %v5598 = vpop.f32.mrb[0].mxu0
        %v5599 = vadd.f32 0.0, %v5598
        %v5600 = vpop.f32.mrb[0].mxu0
        %v5601 = vpop.f32.mrb[0].mxu0
        %v5602 = vadd.f32 0.0, %v5601
        %v5603 = vpop.f32.mrb[0].mxu0
        %5604 = vmatprep.mubr.bf16.mxu0 0
        %5605 = vmatmul.mubr.bf16.gmra.mrb[0].mxu0 %v5123
        %v5606 = vpop.f32.mrb[0].mxu0
        %v5607 = vadd.f32 0.0, %v5606
        %v5608 = vpop.f32.mrb[0].mxu0
        %v5609 = vpop.f32.mrb[0].mxu0
        %v5610 = vadd.f32 0.0, %v5609
        %v5611 = vpop.f32.mrb[0].mxu0
        %5612 = vmatprep.mubr.bf16.mxu0 0
        %5613 = vmatmul.mubr.bf16.gmra.mrb[0].mxu0 %v5124
        %v5614 = vpop.f32.mrb[0].mxu0
        %v5615 = vadd.f32 0.0, %v5614
        %v5616 = vpop.f32.mrb[0].mxu0
        %v5617 = vpop.f32.mrb[0].mxu0
        %v5618 = vadd.f32 0.0, %v5617
        %v5619 = vpop.f32.mrb[0].mxu0
        %5620 = vmatprep.mubr.bf16.mxu0 0
        %5621 = vmatmul.mubr.bf16.gmra.mrb[0].mxu0 %v5125
        %v5622 = vpop.f32.mrb[0].mxu0
        %v5623 = vadd.f32 0.0, %v5622
        %v5624 = vpop.f32.mrb[0].mxu0
        %v5625 = vpop.f32.mrb[0].mxu0
        %v5626 = vadd.f32 0.0, %v5625
        %v5627 = vpop.f32.mrb[0].mxu0
        %5628 = vmatprep.mubr.bf16.mxu0 0
        %5629 = vmatmul.mubr.bf16.gmra.mrb[0].mxu0 %v5126
        %v5630 = vpop.f32.mrb[0].mxu0
        %v5631 = vadd.f32 0.0, %v5630
        %v5632 = vpop.f32.mrb[0].mxu0
        %v5633 = vpop.f32.mrb[0].mxu0
        %v5634 = vadd.f32 0.0, %v5633
        %v5635 = vpop.f32.mrb[0].mxu0
        %5636 = vmatprep.mubr.bf16.mxu0 0
        %5637 = vmatmul.mubr.bf16.gmra.mrb[0].mxu0 %v5127
        %v5638 = vpop.f32.mrb[0].mxu0
        %v5639 = vadd.f32 0.0, %v5638
        %v5640 = vpop.f32.mrb[0].mxu0
        %v5641 = vpop.f32.mrb[0].mxu0
        %v5642 = vadd.f32 0.0, %v5641
        %v5643 = vpop.f32.mrb[0].mxu0
        %5644 = vdwg.mxu0
        %5645 = vmatprep.subr.bf16.mxu0 0
        %5646 = vmatpush1.bf16.xpose.msra.mxu0 %v5157
        %5647 = vmatprep.subr.bf16.mxu0 0
        %5648 = vmatpush1.bf16.xpose.msra.mxu0 0
        %5649 = vmatprep.subr.bf16.mxu0 0
        %5650 = vmatpush1.bf16.xpose.msra.mxu0 0
        %5651 = vmatprep.subr.bf16.mxu0 0
        %5652 = vmatpush1.bf16.xpose.msra.mxu0 0
        %5653 = vmatprep.subr.bf16.mxu0 0
        %5654 = vmatpush1.bf16.xpose.msra.mxu0 0
        %5655 = vmatprep.subr.bf16.mxu0 0
        %5656 = vmatpush1.bf16.xpose.msra.mxu0 0
        %5657 = vmatprep.subr.bf16.mxu0 0
        %5658 = vmatpush1.bf16.xpose.msra.mxu0 0
        %5659 = vmatprep.subr.bf16.mxu0 0
        %5660 = vmatpush1.bf16.xpose.msra.mxu0 0
        %5661 = vmatprep.subr.bf16.mxu0 0
        %5662 = vmatpush1.bf16.xpose.msra.mxu0 0
        %5663 = vmatprep.subr.bf16.mxu0 0
        %5664 = vmatpush1.bf16.xpose.msra.mxu0 0
        %5665 = vmatprep.subr.bf16.mxu0 0
        %5666 = vmatpush1.bf16.xpose.msra.mxu0 0
        %5667 = vmatprep.subr.bf16.mxu0 0
        %5668 = vmatpush1.bf16.xpose.msra.mxu0 0
        %5669 = vmatprep.subr.bf16.mxu0 0
        %5670 = vmatpush1.bf16.xpose.msra.mxu0 0
        %5671 = vmatprep.subr.bf16.mxu0 0
        %5672 = vmatpush1.bf16.xpose.msra.mxu0 0
        %5673 = vmatprep.subr.bf16.mxu0 0
        %5674 = vmatpush1.bf16.xpose.msra.mxu0 0
        %5675 = vmatprep.subr.bf16.mxu0 0
        %5676 = vmatpush1.bf16.xpose.msra.mxu0 0
        %5677 = vmatprep.mubr.bf16.mxu0 0
        %5678 = vmatmul.mubr.bf16.gmra.mrb[0].mxu0 %v5128
        %v5679 = vpop.f32.mrb[0].mxu0
        %v5680 = vadd.f32 0.0, %v5679
        %v5681 = vpop.f32.mrb[0].mxu0
        %v5682 = vpop.f32.mrb[0].mxu0
        %v5683 = vadd.f32 0.0, %v5682
        %v5684 = vpop.f32.mrb[0].mxu0
        %5685 = vmatprep.mubr.bf16.mxu0 0
        %5686 = vmatmul.mubr.bf16.gmra.mrb[0].mxu0 %v5129
        %v5687 = vpop.f32.mrb[0].mxu0
        %v5688 = vadd.f32 0.0, %v5687
        %v5689 = vpop.f32.mrb[0].mxu0
        %v5690 = vpop.f32.mrb[0].mxu0
        %v5691 = vadd.f32 0.0, %v5690
        %v5692 = vpop.f32.mrb[0].mxu0
        %5693 = vmatprep.mubr.bf16.mxu0 0
        %5694 = vmatmul.mubr.bf16.gmra.mrb[0].mxu0 %v5130
        %v5695 = vpop.f32.mrb[0].mxu0
        %v5696 = vadd.f32 0.0, %v5695
        %v5697 = vpop.f32.mrb[0].mxu0
        %v5698 = vpop.f32.mrb[0].mxu0
        %v5699 = vadd.f32 0.0, %v5698
        %v5700 = vpop.f32.mrb[0].mxu0
        %5701 = vmatprep.mubr.bf16.mxu0 0
        %5702 = vmatmul.mubr.bf16.gmra.mrb[0].mxu0 %v5131
        %v5703 = vpop.f32.mrb[0].mxu0
        %v5704 = vadd.f32 0.0, %v5703
        %v5705 = vpop.f32.mrb[0].mxu0
        %v5706 = vpop.f32.mrb[0].mxu0
        %v5707 = vadd.f32 0.0, %v5706
        %v5708 = vpop.f32.mrb[0].mxu0
        %5709 = vmatprep.mubr.bf16.mxu0 0
        %5710 = vmatmul.mubr.bf16.gmra.mrb[0].mxu0 %v5132
        %v5711 = vpop.f32.mrb[0].mxu0
        %v5712 = vadd.f32 0.0, %v5711
        %v5713 = vpop.f32.mrb[0].mxu0
        %v5714 = vpop.f32.mrb[0].mxu0
        %v5715 = vadd.f32 0.0, %v5714
        %v5716 = vpop.f32.mrb[0].mxu0
        %5717 = vmatprep.mubr.bf16.mxu0 0
        %5718 = vmatmul.mubr.bf16.gmra.mrb[0].mxu0 %v5133
        %v5719 = vpop.f32.mrb[0].mxu0
        %v5720 = vadd.f32 0.0, %v5719
        %v5721 = vpop.f32.mrb[0].mxu0
        %v5722 = vpop.f32.mrb[0].mxu0
        %v5723 = vadd.f32 0.0, %v5722
        %v5724 = vpop.f32.mrb[0].mxu0
        %5725 = vmatprep.mubr.bf16.mxu0 0
        %5726 = vmatmul.mubr.bf16.gmra.mrb[0].mxu0 %v5134
        %v5727 = vpop.f32.mrb[0].mxu0
        %v5728 = vadd.f32 0.0, %v5727
        %v5729 = vpop.f32.mrb[0].mxu0
        %v5730 = vpop.f32.mrb[0].mxu0
        %v5731 = vadd.f32 0.0, %v5730
        %v5732 = vpop.f32.mrb[0].mxu0
        %5733 = vmatprep.mubr.bf16.mxu0 0
        %5734 = vmatmul.mubr.bf16.gmra.mrb[0].mxu0 %v5135
        %v5735 = vpop.f32.mrb[0].mxu0
        %v5736 = vadd.f32 0.0, %v5735
        %v5737 = vpop.f32.mrb[0].mxu0
        %v5738 = vpop.f32.mrb[0].mxu0
        %v5739 = vadd.f32 0.0, %v5738
        %v5740 = vpop.f32.mrb[0].mxu0
        %5741 = vdwg.mxu0
        %5742 = vmatprep.subr.bf16.mxu0 0
        %5743 = vmatpush1.bf16.xpose.msra.mxu0 %v5158
        %5744 = vmatprep.subr.bf16.mxu0 0
        %5745 = vmatpush1.bf16.xpose.msra.mxu0 0
        %5746 = vmatprep.subr.bf16.mxu0 0
        %5747 = vmatpush1.bf16.xpose.msra.mxu0 0
        %5748 = vmatprep.subr.bf16.mxu0 0
        %5749 = vmatpush1.bf16.xpose.msra.mxu0 0
        %5750 = vmatprep.subr.bf16.mxu0 0
        %5751 = vmatpush1.bf16.xpose.msra.mxu0 0
        %5752 = vmatprep.subr.bf16.mxu0 0
        %5753 = vmatpush1.bf16.xpose.msra.mxu0 0
        %5754 = vmatprep.subr.bf16.mxu0 0
        %5755 = vmatpush1.bf16.xpose.msra.mxu0 0
        %5756 = vmatprep.subr.bf16.mxu0 0
        %5757 = vmatpush1.bf16.xpose.msra.mxu0 0
        %5758 = vmatprep.subr.bf16.mxu0 0
        %5759 = vmatpush1.bf16.xpose.msra.mxu0 0
        %5760 = vmatprep.subr.bf16.mxu0 0
        %5761 = vmatpush1.bf16.xpose.msra.mxu0 0
        %5762 = vmatprep.subr.bf16.mxu0 0
        %5763 = vmatpush1.bf16.xpose.msra.mxu0 0
        %5764 = vmatprep.subr.bf16.mxu0 0
        %5765 = vmatpush1.bf16.xpose.msra.mxu0 0
        %5766 = vmatprep.subr.bf16.mxu0 0
        %5767 = vmatpush1.bf16.xpose.msra.mxu0 0
        %5768 = vmatprep.subr.bf16.mxu0 0
        %5769 = vmatpush1.bf16.xpose.msra.mxu0 0
        %5770 = vmatprep.subr.bf16.mxu0 0
        %5771 = vmatpush1.bf16.xpose.msra.mxu0 0
        %5772 = vmatprep.subr.bf16.mxu0 0
        %5773 = vmatpush1.bf16.xpose.msra.mxu0 0
        %5774 = vmatprep.mubr.bf16.mxu0 0
        %5775 = vmatmul.mubr.bf16.gmra.mrb[0].mxu0 %v5136
        %v5776 = vpop.f32.mrb[0].mxu0
        %v5777 = vadd.f32 0.0, %v5776
        %v5778 = vpop.f32.mrb[0].mxu0
        %v5779 = vpop.f32.mrb[0].mxu0
        %v5780 = vadd.f32 0.0, %v5779
        %v5781 = vpop.f32.mrb[0].mxu0
        %5782 = vmatprep.mubr.bf16.mxu0 0
        %5783 = vmatmul.mubr.bf16.gmra.mrb[0].mxu0 %v5137
        %v5784 = vpop.f32.mrb[0].mxu0
        %v5785 = vadd.f32 0.0, %v5784
        %v5786 = vpop.f32.mrb[0].mxu0
        %v5787 = vpop.f32.mrb[0].mxu0
        %v5788 = vadd.f32 0.0, %v5787
        %v5789 = vpop.f32.mrb[0].mxu0
        %5790 = vmatprep.mubr.bf16.mxu0 0
        %5791 = vmatmul.mubr.bf16.gmra.mrb[0].mxu0 %v5138
        %v5792 = vpop.f32.mrb[0].mxu0
        %v5793 = vadd.f32 0.0, %v5792
        %v5794 = vpop.f32.mrb[0].mxu0
        %v5795 = vpop.f32.mrb[0].mxu0
        %v5796 = vadd.f32 0.0, %v5795
        %v5797 = vpop.f32.mrb[0].mxu0
        %5798 = vmatprep.mubr.bf16.mxu0 0
        %5799 = vmatmul.mubr.bf16.gmra.mrb[0].mxu0 %v5139
        %v5800 = vpop.f32.mrb[0].mxu0
        %v5801 = vadd.f32 0.0, %v5800
        %v5802 = vpop.f32.mrb[0].mxu0
        %v5803 = vpop.f32.mrb[0].mxu0
        %v5804 = vadd.f32 0.0, %v5803
        %v5805 = vpop.f32.mrb[0].mxu0
        %5806 = vmatprep.mubr.bf16.mxu0 0
        %5807 = vmatmul.mubr.bf16.gmra.mrb[0].mxu0 %v5140
        %v5808 = vpop.f32.mrb[0].mxu0
        %v5809 = vadd.f32 0.0, %v5808
        %v5810 = vpop.f32.mrb[0].mxu0
        %v5811 = vpop.f32.mrb[0].mxu0
        %v5812 = vadd.f32 0.0, %v5811
        %v5813 = vpop.f32.mrb[0].mxu0
        %5814 = vmatprep.mubr.bf16.mxu0 0
        %5815 = vmatmul.mubr.bf16.gmra.mrb[0].mxu0 %v5141
        %v5816 = vpop.f32.mrb[0].mxu0
        %v5817 = vadd.f32 0.0, %v5816
        %v5818 = vpop.f32.mrb[0].mxu0
        %v5819 = vpop.f32.mrb[0].mxu0
        %v5820 = vadd.f32 0.0, %v5819
        %v5821 = vpop.f32.mrb[0].mxu0
        %5822 = vmatprep.mubr.bf16.mxu0 0
        %5823 = vmatmul.mubr.bf16.gmra.mrb[0].mxu0 %v5142
        %v5824 = vpop.f32.mrb[0].mxu0
        %v5825 = vadd.f32 0.0, %v5824
        %v5826 = vpop.f32.mrb[0].mxu0
        %v5827 = vpop.f32.mrb[0].mxu0
        %v5828 = vadd.f32 0.0, %v5827
        %v5829 = vpop.f32.mrb[0].mxu0
        %5830 = vmatprep.mubr.bf16.mxu0 0
        %5831 = vmatmul.mubr.bf16.gmra.mrb[0].mxu0 %v5143
        %v5832 = vpop.f32.mrb[0].mxu0
        %v5833 = vadd.f32 0.0, %v5832
        %v5834 = vpop.f32.mrb[0].mxu0
        %v5835 = vpop.f32.mrb[0].mxu0
        %v5836 = vadd.f32 0.0, %v5835
        %v5837 = vpop.f32.mrb[0].mxu0
        %5838 = vdwg.mxu0
        %5839 = vmatprep.subr.bf16.mxu0 0
        %5840 = vmatpush1.bf16.xpose.msra.mxu0 %v5159
        %5841 = vmatprep.subr.bf16.mxu0 0
        %5842 = vmatpush1.bf16.xpose.msra.mxu0 0
        %5843 = vmatprep.subr.bf16.mxu0 0
        %5844 = vmatpush1.bf16.xpose.msra.mxu0 0
        %5845 = vmatprep.subr.bf16.mxu0 0
        %5846 = vmatpush1.bf16.xpose.msra.mxu0 0
        %5847 = vmatprep.subr.bf16.mxu0 0
        %5848 = vmatpush1.bf16.xpose.msra.mxu0 0
        %5849 = vmatprep.subr.bf16.mxu0 0
        %5850 = vmatpush1.bf16.xpose.msra.mxu0 0
        %5851 = vmatprep.subr.bf16.mxu0 0
        %5852 = vmatpush1.bf16.xpose.msra.mxu0 0
        %5853 = vmatprep.subr.bf16.mxu0 0
        %5854 = vmatpush1.bf16.xpose.msra.mxu0 0
        %5855 = vmatprep.subr.bf16.mxu0 0
        %5856 = vmatpush1.bf16.xpose.msra.mxu0 0
        %5857 = vmatprep.subr.bf16.mxu0 0
        %5858 = vmatpush1.bf16.xpose.msra.mxu0 0
        %5859 = vmatprep.subr.bf16.mxu0 0
        %5860 = vmatpush1.bf16.xpose.msra.mxu0 0
        %5861 = vmatprep.subr.bf16.mxu0 0
        %5862 = vmatpush1.bf16.xpose.msra.mxu0 0
        %5863 = vmatprep.subr.bf16.mxu0 0
        %5864 = vmatpush1.bf16.xpose.msra.mxu0 0
        %5865 = vmatprep.subr.bf16.mxu0 0
        %5866 = vmatpush1.bf16.xpose.msra.mxu0 0
        %5867 = vmatprep.subr.bf16.mxu0 0
        %5868 = vmatpush1.bf16.xpose.msra.mxu0 0
        %5869 = vmatprep.subr.bf16.mxu0 0
        %5870 = vmatpush1.bf16.xpose.msra.mxu0 0
        %5871 = vmatprep.mubr.bf16.mxu0 0
        %5872 = vmatmul.mubr.bf16.gmra.mrb[0].mxu0 %v5144
        %v5873 = vpop.f32.mrb[0].mxu0
        %v5874 = vadd.f32 0.0, %v5873
        %v5875 = vpop.f32.mrb[0].mxu0
        %v5876 = vpop.f32.mrb[0].mxu0
        %v5877 = vadd.f32 0.0, %v5876
        %v5878 = vpop.f32.mrb[0].mxu0
        %5879 = vmatprep.mubr.bf16.mxu0 0
        %5880 = vmatmul.mubr.bf16.gmra.mrb[0].mxu0 %v5145
        %v5881 = vpop.f32.mrb[0].mxu0
        %v5882 = vadd.f32 0.0, %v5881
        %v5883 = vpop.f32.mrb[0].mxu0
        %v5884 = vpop.f32.mrb[0].mxu0
        %v5885 = vadd.f32 0.0, %v5884
        %v5886 = vpop.f32.mrb[0].mxu0
        %5887 = vmatprep.mubr.bf16.mxu0 0
        %5888 = vmatmul.mubr.bf16.gmra.mrb[0].mxu0 %v5146
        %v5889 = vpop.f32.mrb[0].mxu0
        %v5890 = vadd.f32 0.0, %v5889
        %v5891 = vpop.f32.mrb[0].mxu0
        %v5892 = vpop.f32.mrb[0].mxu0
        %v5893 = vadd.f32 0.0, %v5892
        %v5894 = vpop.f32.mrb[0].mxu0
        %5895 = vmatprep.mubr.bf16.mxu0 0
        %5896 = vmatmul.mubr.bf16.gmra.mrb[0].mxu0 %v5147
        %v5897 = vpop.f32.mrb[0].mxu0
        %v5898 = vadd.f32 0.0, %v5897
        %v5899 = vpop.f32.mrb[0].mxu0
        %v5900 = vpop.f32.mrb[0].mxu0
        %v5901 = vadd.f32 0.0, %v5900
        %v5902 = vpop.f32.mrb[0].mxu0
        %5903 = vmatprep.mubr.bf16.mxu0 0
        %5904 = vmatmul.mubr.bf16.gmra.mrb[0].mxu0 %v5148
        %v5905 = vpop.f32.mrb[0].mxu0
        %v5906 = vadd.f32 0.0, %v5905
        %v5907 = vpop.f32.mrb[0].mxu0
        %v5908 = vpop.f32.mrb[0].mxu0
        %v5909 = vadd.f32 0.0, %v5908
        %v5910 = vpop.f32.mrb[0].mxu0
        %5911 = vmatprep.mubr.bf16.mxu0 0
        %5912 = vmatmul.mubr.bf16.gmra.mrb[0].mxu0 %v5149
        %v5913 = vpop.f32.mrb[0].mxu0
        %v5914 = vadd.f32 0.0, %v5913
        %v5915 = vpop.f32.mrb[0].mxu0
        %v5916 = vpop.f32.mrb[0].mxu0
        %v5917 = vadd.f32 0.0, %v5916
        %v5918 = vpop.f32.mrb[0].mxu0
        %5919 = vmatprep.mubr.bf16.mxu0 0
        %5920 = vmatmul.mubr.bf16.gmra.mrb[0].mxu0 %v5150
        %v5921 = vpop.f32.mrb[0].mxu0
        %v5922 = vadd.f32 0.0, %v5921
        %v5923 = vpop.f32.mrb[0].mxu0
        %v5924 = vpop.f32.mrb[0].mxu0
        %v5925 = vadd.f32 0.0, %v5924
        %v5926 = vpop.f32.mrb[0].mxu0
        %5927 = vmatprep.mubr.bf16.mxu0 0
        %5928 = vmatmul.mubr.bf16.gmra.mrb[0].mxu0 %v5151
        %v5929 = vpop.f32.mrb[0].mxu0
        %v5930 = vadd.f32 0.0, %v5929
        %v5931 = vpop.f32.mrb[0].mxu0
        %v5932 = vpop.f32.mrb[0].mxu0
        %v5933 = vadd.f32 0.0, %v5932
        %v5934 = vpop.f32.mrb[0].mxu0
        %5935 = vdwg.mxu0
        %v5936 = vpack.c.bf16 %v5198, %v5195
        %v5937 = vpack.c.bf16 %v5206, %v5203
        %v5938 = vpack.c.bf16 %v5214, %v5211
        %v5939 = vpack.c.bf16 %v5222, %v5219
        %v5940 = vpack.c.bf16 %v5230, %v5227
        %v5941 = vpack.c.bf16 %v5238, %v5235
        %v5942 = vpack.c.bf16 %v5246, %v5243
        %v5943 = vpack.c.bf16 %v5254, %v5251
        %v5944 = vpack.c.bf16 %v5295, %v5292
        %v5945 = vpack.c.bf16 %v5303, %v5300
        %v5946 = vpack.c.bf16 %v5311, %v5308
        %v5947 = vpack.c.bf16 %v5319, %v5316
        %v5948 = vpack.c.bf16 %v5327, %v5324
        %v5949 = vpack.c.bf16 %v5335, %v5332
        %v5950 = vpack.c.bf16 %v5343, %v5340
        %v5951 = vpack.c.bf16 %v5351, %v5348
        %v5952 = vpack.c.bf16 %v5392, %v5389
        %v5953 = vpack.c.bf16 %v5400, %v5397
        %v5954 = vpack.c.bf16 %v5408, %v5405
        %v5955 = vpack.c.bf16 %v5416, %v5413
        %v5956 = vpack.c.bf16 %v5424, %v5421
        %v5957 = vpack.c.bf16 %v5432, %v5429
        %v5958 = vpack.c.bf16 %v5440, %v5437
        %v5959 = vpack.c.bf16 %v5448, %v5445
        %v5960 = vpack.c.bf16 %v5489, %v5486
        %v5961 = vpack.c.bf16 %v5497, %v5494
        %v5962 = vpack.c.bf16 %v5505, %v5502
        %v5963 = vpack.c.bf16 %v5513, %v5510
        %v5964 = vpack.c.bf16 %v5521, %v5518
        %v5965 = vpack.c.bf16 %v5529, %v5526
        %v5966 = vpack.c.bf16 %v5537, %v5534
        %v5967 = vpack.c.bf16 %v5545, %v5542
        %v5968 = vpack.c.bf16 %v5586, %v5583
        %v5969 = vpack.c.bf16 %v5594, %v5591
        %v5970 = vpack.c.bf16 %v5602, %v5599
        %v5971 = vpack.c.bf16 %v5610, %v5607
        %v5972 = vpack.c.bf16 %v5618, %v5615
        %v5973 = vpack.c.bf16 %v5626, %v5623
        %v5974 = vpack.c.bf16 %v5634, %v5631
        %v5975 = vpack.c.bf16 %v5642, %v5639
        %v5976 = vpack.c.bf16 %v5683, %v5680
        %v5977 = vpack.c.bf16 %v5691, %v5688
        %v5978 = vpack.c.bf16 %v5699, %v5696
        %v5979 = vpack.c.bf16 %v5707, %v5704
        %v5980 = vpack.c.bf16 %v5715, %v5712
        %v5981 = vpack.c.bf16 %v5723, %v5720
        %v5982 = vpack.c.bf16 %v5731, %v5728
        %v5983 = vpack.c.bf16 %v5739, %v5736
        %v5984 = vpack.c.bf16 %v5780, %v5777
        %v5985 = vpack.c.bf16 %v5788, %v5785
        %v5986 = vpack.c.bf16 %v5796, %v5793
        %v5987 = vpack.c.bf16 %v5804, %v5801
        %v5988 = vpack.c.bf16 %v5812, %v5809
        %v5989 = vpack.c.bf16 %v5820, %v5817
        %v5990 = vpack.c.bf16 %v5828, %v5825
        %v5991 = vpack.c.bf16 %v5836, %v5833
        %v5992 = vpack.c.bf16 %v5877, %v5874
        %v5993 = vpack.c.bf16 %v5885, %v5882
        %v5994 = vpack.c.bf16 %v5893, %v5890
        %v5995 = vpack.c.bf16 %v5901, %v5898
        %v5996 = vpack.c.bf16 %v5909, %v5906
        %v5997 = vpack.c.bf16 %v5917, %v5914
        %v5998 = vpack.c.bf16 %v5925, %v5922
        %v5999 = vpack.c.bf16 %v5933, %v5930
        %v6000 = vld [vmem:[%s4] sm:$0xf]
        %v6001 = vld [vmem:[%s4 + $0x4] sm:$0xf]
        %v6002 = vld [vmem:[%s4 + $0x8] sm:$0xf]
        %v6003 = vld [vmem:[%s4 + $0xc] sm:$0xf]
        %v6004 = vld [vmem:[%s4 + $0x10] sm:$0xf]
        %v6005 = vld [vmem:[%s4 + $0x14] sm:$0xf]
        %v6006 = vld [vmem:[%s4 + $0x18] sm:$0xf]
        %v6007 = vld [vmem:[%s4 + $0x1c] sm:$0xf]
        %v6008 = vld [vmem:[%s4 + $0x20] sm:$0xf]
        %v6009 = vld [vmem:[%s4 + $0x24] sm:$0xf]
        %v6010 = vld [vmem:[%s4 + $0x28] sm:$0xf]
        %v6011 = vld [vmem:[%s4 + $0x2c] sm:$0xf]
        %v6012 = vld [vmem:[%s4 + $0x30] sm:$0xf]
        %v6013 = vld [vmem:[%s4 + $0x34] sm:$0xf]
        %v6014 = vld [vmem:[%s4 + $0x38] sm:$0xf]
        %v6015 = vld [vmem:[%s4 + $0x3c] sm:$0xf]
        %v6016 = vld [vmem:[%s4 + $0x40] sm:$0xf]
        %v6017 = vld [vmem:[%s4 + $0x44] sm:$0xf]
        %v6018 = vld [vmem:[%s4 + $0x48] sm:$0xf]
        %v6019 = vld [vmem:[%s4 + $0x4c] sm:$0xf]
        %v6020 = vld [vmem:[%s4 + $0x50] sm:$0xf]
        %v6021 = vld [vmem:[%s4 + $0x54] sm:$0xf]
        %v6022 = vld [vmem:[%s4 + $0x58] sm:$0xf]
        %v6023 = vld [vmem:[%s4 + $0x5c] sm:$0xf]
        %v6024 = vld [vmem:[%s4 + $0x60] sm:$0xf]
        %v6025 = vld [vmem:[%s4 + $0x64] sm:$0xf]
        %v6026 = vld [vmem:[%s4 + $0x68] sm:$0xf]
        %v6027 = vld [vmem:[%s4 + $0x6c] sm:$0xf]
        %v6028 = vld [vmem:[%s4 + $0x70] sm:$0xf]
        %v6029 = vld [vmem:[%s4 + $0x74] sm:$0xf]
        %v6030 = vld [vmem:[%s4 + $0x78] sm:$0xf]
        %v6031 = vld [vmem:[%s4 + $0x7c] sm:$0xf]
        %v6032 = vld [vmem:[%s4 + $0x80] sm:$0xf]
        %v6033 = vld [vmem:[%s4 + $0x84] sm:$0xf]
        %v6034 = vld [vmem:[%s4 + $0x88] sm:$0xf]
        %v6035 = vld [vmem:[%s4 + $0x8c] sm:$0xf]
        %v6036 = vld [vmem:[%s4 + $0x90] sm:$0xf]
        %v6037 = vld [vmem:[%s4 + $0x94] sm:$0xf]
        %v6038 = vld [vmem:[%s4 + $0x98] sm:$0xf]
        %v6039 = vld [vmem:[%s4 + $0x9c] sm:$0xf]
        %v6040 = vld [vmem:[%s4 + $0xa0] sm:$0xf]
        %v6041 = vld [vmem:[%s4 + $0xa4] sm:$0xf]
        %v6042 = vld [vmem:[%s4 + $0xa8] sm:$0xf]
        %v6043 = vld [vmem:[%s4 + $0xac] sm:$0xf]
        %v6044 = vld [vmem:[%s4 + $0xb0] sm:$0xf]
        %v6045 = vld [vmem:[%s4 + $0xb4] sm:$0xf]
        %v6046 = vld [vmem:[%s4 + $0xb8] sm:$0xf]
        %v6047 = vld [vmem:[%s4 + $0xbc] sm:$0xf]
        %v6048 = vld [vmem:[%s4 + $0xc0] sm:$0xf]
        %v6049 = vld [vmem:[%s4 + $0xc4] sm:$0xf]
        %v6050 = vld [vmem:[%s4 + $0xc8] sm:$0xf]
        %v6051 = vld [vmem:[%s4 + $0xcc] sm:$0xf]
        %v6052 = vld [vmem:[%s4 + $0xd0] sm:$0xf]
        %v6053 = vld [vmem:[%s4 + $0xd4] sm:$0xf]
        %v6054 = vld [vmem:[%s4 + $0xd8] sm:$0xf]
        %v6055 = vld [vmem:[%s4 + $0xdc] sm:$0xf]
        %v6056 = vld [vmem:[%s4 + $0xe0] sm:$0xf]
        %v6057 = vld [vmem:[%s4 + $0xe4] sm:$0xf]
        %v6058 = vld [vmem:[%s4 + $0xe8] sm:$0xf]
        %v6059 = vld [vmem:[%s4 + $0xec] sm:$0xf]
        %v6060 = vld [vmem:[%s4 + $0xf0] sm:$0xf]
        %v6061 = vld [vmem:[%s4 + $0xf4] sm:$0xf]
        %v6062 = vld [vmem:[%s4 + $0xf8] sm:$0xf]
        %v6063 = vld [vmem:[%s4 + $0xfc] sm:$0xf]
        %v6064 = vld [vmem:[%s4 + $0x100] sm:$0xf]
        %v6065 = vld [vmem:[%s4 + $0x104] sm:$0xf]
        %v6066 = vld [vmem:[%s4 + $0x108] sm:$0xf]
        %v6067 = vld [vmem:[%s4 + $0x10c] sm:$0xf]
        %v6068 = vld [vmem:[%s4 + $0x110] sm:$0xf]
        %v6069 = vld [vmem:[%s4 + $0x114] sm:$0xf]
        %v6070 = vld [vmem:[%s4 + $0x118] sm:$0xf]
        %v6071 = vld [vmem:[%s4 + $0x11c] sm:$0xf]
        %v6072 = vld [vmem:[%s4 + $0x120] sm:$0xf]
        %v6073 = vld [vmem:[%s4 + $0x124] sm:$0xf]
        %v6074 = vld [vmem:[%s4 + $0x128] sm:$0xf]
        %v6075 = vld [vmem:[%s4 + $0x12c] sm:$0xf]
        %v6076 = vld [vmem:[%s4 + $0x130] sm:$0xf]
        %v6077 = vld [vmem:[%s4 + $0x134] sm:$0xf]
        %v6078 = vld [vmem:[%s4 + $0x138] sm:$0xf]
        %v6079 = vld [vmem:[%s4 + $0x13c] sm:$0xf]
        %v6080 = vld [vmem:[%s4 + $0x140] sm:$0xf]
        %v6081 = vld [vmem:[%s4 + $0x144] sm:$0xf]
        %v6082 = vld [vmem:[%s4 + $0x148] sm:$0xf]
        %v6083 = vld [vmem:[%s4 + $0x14c] sm:$0xf]
        %v6084 = vld [vmem:[%s4 + $0x150] sm:$0xf]
        %v6085 = vld [vmem:[%s4 + $0x154] sm:$0xf]
        %v6086 = vld [vmem:[%s4 + $0x158] sm:$0xf]
        %v6087 = vld [vmem:[%s4 + $0x15c] sm:$0xf]
        %v6088 = vld [vmem:[%s4 + $0x160] sm:$0xf]
        %v6089 = vld [vmem:[%s4 + $0x164] sm:$0xf]
        %v6090 = vld [vmem:[%s4 + $0x168] sm:$0xf]
        %v6091 = vld [vmem:[%s4 + $0x16c] sm:$0xf]
        %v6092 = vld [vmem:[%s4 + $0x170] sm:$0xf]
        %v6093 = vld [vmem:[%s4 + $0x174] sm:$0xf]
        %v6094 = vld [vmem:[%s4 + $0x178] sm:$0xf]
        %v6095 = vld [vmem:[%s4 + $0x17c] sm:$0xf]
        %v6096 = vld [vmem:[%s4 + $0x180] sm:$0xf]
        %v6097 = vld [vmem:[%s4 + $0x184] sm:$0xf]
        %v6098 = vld [vmem:[%s4 + $0x188] sm:$0xf]
        %v6099 = vld [vmem:[%s4 + $0x18c] sm:$0xf]
        %v6100 = vld [vmem:[%s4 + $0x190] sm:$0xf]
        %v6101 = vld [vmem:[%s4 + $0x194] sm:$0xf]
        %v6102 = vld [vmem:[%s4 + $0x198] sm:$0xf]
        %v6103 = vld [vmem:[%s4 + $0x19c] sm:$0xf]
        %v6104 = vld [vmem:[%s4 + $0x1a0] sm:$0xf]
        %v6105 = vld [vmem:[%s4 + $0x1a4] sm:$0xf]
        %v6106 = vld [vmem:[%s4 + $0x1a8] sm:$0xf]
        %v6107 = vld [vmem:[%s4 + $0x1ac] sm:$0xf]
        %v6108 = vld [vmem:[%s4 + $0x1b0] sm:$0xf]
        %v6109 = vld [vmem:[%s4 + $0x1b4] sm:$0xf]
        %v6110 = vld [vmem:[%s4 + $0x1b8] sm:$0xf]
        %v6111 = vld [vmem:[%s4 + $0x1bc] sm:$0xf]
        %v6112 = vld [vmem:[%s4 + $0x1c0] sm:$0xf]
        %v6113 = vld [vmem:[%s4 + $0x1c4] sm:$0xf]
        %v6114 = vld [vmem:[%s4 + $0x1c8] sm:$0xf]
        %v6115 = vld [vmem:[%s4 + $0x1cc] sm:$0xf]
        %v6116 = vld [vmem:[%s4 + $0x1d0] sm:$0xf]
        %v6117 = vld [vmem:[%s4 + $0x1d4] sm:$0xf]
        %v6118 = vld [vmem:[%s4 + $0x1d8] sm:$0xf]
        %v6119 = vld [vmem:[%s4 + $0x1dc] sm:$0xf]
        %v6120 = vld [vmem:[%s4 + $0x1e0] sm:$0xf]
        %v6121 = vld [vmem:[%s4 + $0x1e4] sm:$0xf]
        %v6122 = vld [vmem:[%s4 + $0x1e8] sm:$0xf]
        %v6123 = vld [vmem:[%s4 + $0x1ec] sm:$0xf]
        %v6124 = vld [vmem:[%s4 + $0x1f0] sm:$0xf]
        %v6125 = vld [vmem:[%s4 + $0x1f4] sm:$0xf]
        %v6126 = vld [vmem:[%s4 + $0x1f8] sm:$0xf]
        %v6127 = vld [vmem:[%s4 + $0x1fc] sm:$0xf]
        %v6144 = vunpack.c.l.b16 %v6000
        %v6145 = vunpack.c.l.b16 %v6001
        %v6146 = vunpack.c.l.b16 %v6002
        %v6147 = vunpack.c.l.b16 %v6003
        %v6148 = vunpack.c.l.b16 %v6004
        %v6149 = vunpack.c.l.b16 %v6005
        %v6150 = vunpack.c.l.b16 %v6006
        %v6151 = vunpack.c.l.b16 %v6007
        %v6152 = vunpack.c.l.b16 %v6008
        %v6153 = vunpack.c.l.b16 %v6009
        %v6154 = vunpack.c.l.b16 %v6010
        %v6155 = vunpack.c.l.b16 %v6011
        %v6156 = vunpack.c.l.b16 %v6012
        %v6157 = vunpack.c.l.b16 %v6013
        %v6158 = vunpack.c.l.b16 %v6014
        %v6159 = vunpack.c.l.b16 %v6015
        %v6160 = vpack.c.b16 %v6145, %v6144
        %v6161 = vpack.c.b16 %v6147, %v6146
        %v6162 = vpack.c.b16 %v6149, %v6148
        %v6163 = vpack.c.b16 %v6151, %v6150
        %v6164 = vpack.c.b16 %v6153, %v6152
        %v6165 = vpack.c.b16 %v6155, %v6154
        %v6166 = vpack.c.b16 %v6157, %v6156
        %v6167 = vpack.c.b16 %v6159, %v6158
        %v6169 = vsel %vm1217, %v5936, 0
        %v6172 = vsel %vm1217, %v5937, 0
        %v6175 = vsel %vm1217, %v5938, 0
        %v6178 = vsel %vm1217, %v5939, 0
        %v6181 = vsel %vm1217, %v5940, 0
        %v6184 = vsel %vm1217, %v5941, 0
        %v6187 = vsel %vm1217, %v5942, 0
        %v6190 = vsel %vm1217, %v5943, 0
        %v6193 = vsel %vm1217, %v6160, 0
        %v6196 = vsel %vm1217, %v6161, 0
        %v6199 = vsel %vm1217, %v6162, 0
        %v6202 = vsel %vm1217, %v6163, 0
        %v6205 = vsel %vm1217, %v6164, 0
        %v6208 = vsel %vm1217, %v6165, 0
        %v6211 = vsel %vm1217, %v6166, 0
        %v6214 = vsel %vm1217, %v6167, 0
        %6216 = vmatprep.subr.bf16.mxu0 0
        %6217 = vmatpush1.bf16.xpose.msra.mxu0 %v6193
        %6218 = vmatprep.subr.bf16.mxu0 0
        %6219 = vmatpush1.bf16.xpose.msra.mxu0 %v6196
        %6220 = vmatprep.subr.bf16.mxu0 0
        %6221 = vmatpush1.bf16.xpose.msra.mxu0 %v6199
        %6222 = vmatprep.subr.bf16.mxu0 0
        %6223 = vmatpush1.bf16.xpose.msra.mxu0 %v6202
        %6224 = vmatprep.subr.bf16.mxu0 0
        %6225 = vmatpush1.bf16.xpose.msra.mxu0 %v6205
        %6226 = vmatprep.subr.bf16.mxu0 0
        %6227 = vmatpush1.bf16.xpose.msra.mxu0 %v6208
        %6228 = vmatprep.subr.bf16.mxu0 0
        %6229 = vmatpush1.bf16.xpose.msra.mxu0 %v6211
        %6230 = vmatprep.subr.bf16.mxu0 0
        %6231 = vmatpush1.bf16.xpose.msra.mxu0 %v6214
        %6232 = vmatprep.subr.bf16.mxu0 0
        %6233 = vmatpush1.bf16.xpose.msra.mxu0 0
        %6234 = vmatprep.subr.bf16.mxu0 0
        %6235 = vmatpush1.bf16.xpose.msra.mxu0 0
        %6236 = vmatprep.subr.bf16.mxu0 0
        %6237 = vmatpush1.bf16.xpose.msra.mxu0 0
        %6238 = vmatprep.subr.bf16.mxu0 0
        %6239 = vmatpush1.bf16.xpose.msra.mxu0 0
        %6240 = vmatprep.subr.bf16.mxu0 0
        %6241 = vmatpush1.bf16.xpose.msra.mxu0 0
        %6242 = vmatprep.subr.bf16.mxu0 0
        %6243 = vmatpush1.bf16.xpose.msra.mxu0 0
        %6244 = vmatprep.subr.bf16.mxu0 0
        %6245 = vmatpush1.bf16.xpose.msra.mxu0 0
        %6246 = vmatprep.subr.bf16.mxu0 0
        %6247 = vmatpush1.bf16.xpose.msra.mxu0 0
        %6248 = vmatprep.mubr.bf16.mxu0 0
        %6249 = vmatmul.mubr.bf16.gmra.mrb[0].mxu0 %v6169
        %v6250 = vpop.f32.mrb[0].mxu0
        %v6251 = vadd.f32 0.0, %v6250
        %v6252 = vpop.f32.mrb[0].mxu0
        %v6253 = vpop.f32.mrb[0].mxu0
        %v6254 = vadd.f32 0.0, %v6253
        %v6255 = vpop.f32.mrb[0].mxu0
        %6256 = vmatprep.mubr.bf16.mxu0 0
        %6257 = vmatmul.mubr.bf16.gmra.mrb[0].mxu0 %v6172
        %v6258 = vpop.f32.mrb[0].mxu0
        %v6259 = vadd.f32 0.0, %v6258
        %v6260 = vpop.f32.mrb[0].mxu0
        %v6261 = vpop.f32.mrb[0].mxu0
        %v6262 = vadd.f32 0.0, %v6261
        %v6263 = vpop.f32.mrb[0].mxu0
        %6264 = vmatprep.mubr.bf16.mxu0 0
        %6265 = vmatmul.mubr.bf16.gmra.mrb[0].mxu0 %v6175
        %v6266 = vpop.f32.mrb[0].mxu0
        %v6267 = vadd.f32 0.0, %v6266
        %v6268 = vpop.f32.mrb[0].mxu0
        %v6269 = vpop.f32.mrb[0].mxu0
        %v6270 = vadd.f32 0.0, %v6269
        %v6271 = vpop.f32.mrb[0].mxu0
        %6272 = vmatprep.mubr.bf16.mxu0 0
        %6273 = vmatmul.mubr.bf16.gmra.mrb[0].mxu0 %v6178
        %v6274 = vpop.f32.mrb[0].mxu0
        %v6275 = vadd.f32 0.0, %v6274
        %v6276 = vpop.f32.mrb[0].mxu0
        %v6277 = vpop.f32.mrb[0].mxu0
        %v6278 = vadd.f32 0.0, %v6277
        %v6279 = vpop.f32.mrb[0].mxu0
        %6280 = vmatprep.mubr.bf16.mxu0 0
        %6281 = vmatmul.mubr.bf16.gmra.mrb[0].mxu0 %v6181
        %v6282 = vpop.f32.mrb[0].mxu0
        %v6283 = vadd.f32 0.0, %v6282
        %v6284 = vpop.f32.mrb[0].mxu0
        %v6285 = vpop.f32.mrb[0].mxu0
        %v6286 = vadd.f32 0.0, %v6285
        %v6287 = vpop.f32.mrb[0].mxu0
        %6288 = vmatprep.mubr.bf16.mxu0 0
        %6289 = vmatmul.mubr.bf16.gmra.mrb[0].mxu0 %v6184
        %v6290 = vpop.f32.mrb[0].mxu0
        %v6291 = vadd.f32 0.0, %v6290
        %v6292 = vpop.f32.mrb[0].mxu0
        %v6293 = vpop.f32.mrb[0].mxu0
        %v6294 = vadd.f32 0.0, %v6293
        %v6295 = vpop.f32.mrb[0].mxu0
        %6296 = vmatprep.mubr.bf16.mxu0 0
        %6297 = vmatmul.mubr.bf16.gmra.mrb[0].mxu0 %v6187
        %v6298 = vpop.f32.mrb[0].mxu0
        %v6299 = vadd.f32 0.0, %v6298
        %v6300 = vpop.f32.mrb[0].mxu0
        %v6301 = vpop.f32.mrb[0].mxu0
        %v6302 = vadd.f32 0.0, %v6301
        %v6303 = vpop.f32.mrb[0].mxu0
        %6304 = vmatprep.mubr.bf16.mxu0 0
        %6305 = vmatmul.mubr.bf16.gmra.mrb[0].mxu0 %v6190
        %v6306 = vpop.f32.mrb[0].mxu0
        %v6307 = vadd.f32 0.0, %v6306
        %v6308 = vpop.f32.mrb[0].mxu0
        %v6309 = vpop.f32.mrb[0].mxu0
        %v6310 = vadd.f32 0.0, %v6309
        %v6311 = vpop.f32.mrb[0].mxu0
        %6312 = vdwg.mxu0
        %v6329 = vunpack.c.l.b16 %v6016
        %v6330 = vunpack.c.l.b16 %v6017
        %v6331 = vunpack.c.l.b16 %v6018
        %v6332 = vunpack.c.l.b16 %v6019
        %v6333 = vunpack.c.l.b16 %v6020
        %v6334 = vunpack.c.l.b16 %v6021
        %v6335 = vunpack.c.l.b16 %v6022
        %v6336 = vunpack.c.l.b16 %v6023
        %v6337 = vunpack.c.l.b16 %v6024
        %v6338 = vunpack.c.l.b16 %v6025
        %v6339 = vunpack.c.l.b16 %v6026
        %v6340 = vunpack.c.l.b16 %v6027
        %v6341 = vunpack.c.l.b16 %v6028
        %v6342 = vunpack.c.l.b16 %v6029
        %v6343 = vunpack.c.l.b16 %v6030
        %v6344 = vunpack.c.l.b16 %v6031
        %v6345 = vpack.c.b16 %v6330, %v6329
        %v6346 = vpack.c.b16 %v6332, %v6331
        %v6347 = vpack.c.b16 %v6334, %v6333
        %v6348 = vpack.c.b16 %v6336, %v6335
        %v6349 = vpack.c.b16 %v6338, %v6337
        %v6350 = vpack.c.b16 %v6340, %v6339
        %v6351 = vpack.c.b16 %v6342, %v6341
        %v6352 = vpack.c.b16 %v6344, %v6343
        %v6354 = vsel %vm1217, %v5944, 0
        %v6357 = vsel %vm1217, %v5945, 0
        %v6360 = vsel %vm1217, %v5946, 0
        %v6363 = vsel %vm1217, %v5947, 0
        %v6366 = vsel %vm1217, %v5948, 0
        %v6369 = vsel %vm1217, %v5949, 0
        %v6372 = vsel %vm1217, %v5950, 0
        %v6375 = vsel %vm1217, %v5951, 0
        %v6378 = vsel %vm1217, %v6345, 0
        %v6381 = vsel %vm1217, %v6346, 0
        %v6384 = vsel %vm1217, %v6347, 0
        %v6387 = vsel %vm1217, %v6348, 0
        %v6390 = vsel %vm1217, %v6349, 0
        %v6393 = vsel %vm1217, %v6350, 0
        %v6396 = vsel %vm1217, %v6351, 0
        %v6399 = vsel %vm1217, %v6352, 0
        %6401 = vmatprep.subr.bf16.mxu0 0
        %6402 = vmatpush1.bf16.xpose.msra.mxu0 %v6378
        %6403 = vmatprep.subr.bf16.mxu0 0
        %6404 = vmatpush1.bf16.xpose.msra.mxu0 %v6381
        %6405 = vmatprep.subr.bf16.mxu0 0
        %6406 = vmatpush1.bf16.xpose.msra.mxu0 %v6384
        %6407 = vmatprep.subr.bf16.mxu0 0
        %6408 = vmatpush1.bf16.xpose.msra.mxu0 %v6387
        %6409 = vmatprep.subr.bf16.mxu0 0
        %6410 = vmatpush1.bf16.xpose.msra.mxu0 %v6390
        %6411 = vmatprep.subr.bf16.mxu0 0
        %6412 = vmatpush1.bf16.xpose.msra.mxu0 %v6393
        %6413 = vmatprep.subr.bf16.mxu0 0
        %6414 = vmatpush1.bf16.xpose.msra.mxu0 %v6396
        %6415 = vmatprep.subr.bf16.mxu0 0
        %6416 = vmatpush1.bf16.xpose.msra.mxu0 %v6399
        %6417 = vmatprep.subr.bf16.mxu0 0
        %6418 = vmatpush1.bf16.xpose.msra.mxu0 0
        %6419 = vmatprep.subr.bf16.mxu0 0
        %6420 = vmatpush1.bf16.xpose.msra.mxu0 0
        %6421 = vmatprep.subr.bf16.mxu0 0
        %6422 = vmatpush1.bf16.xpose.msra.mxu0 0
        %6423 = vmatprep.subr.bf16.mxu0 0
        %6424 = vmatpush1.bf16.xpose.msra.mxu0 0
        %6425 = vmatprep.subr.bf16.mxu0 0
        %6426 = vmatpush1.bf16.xpose.msra.mxu0 0
        %6427 = vmatprep.subr.bf16.mxu0 0
        %6428 = vmatpush1.bf16.xpose.msra.mxu0 0
        %6429 = vmatprep.subr.bf16.mxu0 0
        %6430 = vmatpush1.bf16.xpose.msra.mxu0 0
        %6431 = vmatprep.subr.bf16.mxu0 0
        %6432 = vmatpush1.bf16.xpose.msra.mxu0 0
        %6433 = vmatprep.mubr.bf16.mxu0 0
        %6434 = vmatmul.mubr.bf16.gmra.mrb[0].mxu0 %v6354
        %v6435 = vpop.f32.mrb[0].mxu0
        %v6436 = vadd.f32 0.0, %v6435
        %v6437 = vpop.f32.mrb[0].mxu0
        %v6438 = vpop.f32.mrb[0].mxu0
        %v6439 = vadd.f32 0.0, %v6438
        %v6440 = vpop.f32.mrb[0].mxu0
        %6441 = vmatprep.mubr.bf16.mxu0 0
        %6442 = vmatmul.mubr.bf16.gmra.mrb[0].mxu0 %v6357
        %v6443 = vpop.f32.mrb[0].mxu0
        %v6444 = vadd.f32 0.0, %v6443
        %v6445 = vpop.f32.mrb[0].mxu0
        %v6446 = vpop.f32.mrb[0].mxu0
        %v6447 = vadd.f32 0.0, %v6446
        %v6448 = vpop.f32.mrb[0].mxu0
        %6449 = vmatprep.mubr.bf16.mxu0 0
        %6450 = vmatmul.mubr.bf16.gmra.mrb[0].mxu0 %v6360
        %v6451 = vpop.f32.mrb[0].mxu0
        %v6452 = vadd.f32 0.0, %v6451
        %v6453 = vpop.f32.mrb[0].mxu0
        %v6454 = vpop.f32.mrb[0].mxu0
        %v6455 = vadd.f32 0.0, %v6454
        %v6456 = vpop.f32.mrb[0].mxu0
        %6457 = vmatprep.mubr.bf16.mxu0 0
        %6458 = vmatmul.mubr.bf16.gmra.mrb[0].mxu0 %v6363
        %v6459 = vpop.f32.mrb[0].mxu0
        %v6460 = vadd.f32 0.0, %v6459
        %v6461 = vpop.f32.mrb[0].mxu0
        %v6462 = vpop.f32.mrb[0].mxu0
        %v6463 = vadd.f32 0.0, %v6462
        %v6464 = vpop.f32.mrb[0].mxu0
        %6465 = vmatprep.mubr.bf16.mxu0 0
        %6466 = vmatmul.mubr.bf16.gmra.mrb[0].mxu0 %v6366
        %v6467 = vpop.f32.mrb[0].mxu0
        %v6468 = vadd.f32 0.0, %v6467
        %v6469 = vpop.f32.mrb[0].mxu0
        %v6470 = vpop.f32.mrb[0].mxu0
        %v6471 = vadd.f32 0.0, %v6470
        %v6472 = vpop.f32.mrb[0].mxu0
        %6473 = vmatprep.mubr.bf16.mxu0 0
        %6474 = vmatmul.mubr.bf16.gmra.mrb[0].mxu0 %v6369
        %v6475 = vpop.f32.mrb[0].mxu0
        %v6476 = vadd.f32 0.0, %v6475
        %v6477 = vpop.f32.mrb[0].mxu0
        %v6478 = vpop.f32.mrb[0].mxu0
        %v6479 = vadd.f32 0.0, %v6478
        %v6480 = vpop.f32.mrb[0].mxu0
        %6481 = vmatprep.mubr.bf16.mxu0 0
        %6482 = vmatmul.mubr.bf16.gmra.mrb[0].mxu0 %v6372
        %v6483 = vpop.f32.mrb[0].mxu0
        %v6484 = vadd.f32 0.0, %v6483
        %v6485 = vpop.f32.mrb[0].mxu0
        %v6486 = vpop.f32.mrb[0].mxu0
        %v6487 = vadd.f32 0.0, %v6486
        %v6488 = vpop.f32.mrb[0].mxu0
        %6489 = vmatprep.mubr.bf16.mxu0 0
        %6490 = vmatmul.mubr.bf16.gmra.mrb[0].mxu0 %v6375
        %v6491 = vpop.f32.mrb[0].mxu0
        %v6492 = vadd.f32 0.0, %v6491
        %v6493 = vpop.f32.mrb[0].mxu0
        %v6494 = vpop.f32.mrb[0].mxu0
        %v6495 = vadd.f32 0.0, %v6494
        %v6496 = vpop.f32.mrb[0].mxu0
        %6497 = vdwg.mxu0
        %v6514 = vunpack.c.l.b16 %v6032
        %v6515 = vunpack.c.l.b16 %v6033
        %v6516 = vunpack.c.l.b16 %v6034
        %v6517 = vunpack.c.l.b16 %v6035
        %v6518 = vunpack.c.l.b16 %v6036
        %v6519 = vunpack.c.l.b16 %v6037
        %v6520 = vunpack.c.l.b16 %v6038
        %v6521 = vunpack.c.l.b16 %v6039
        %v6522 = vunpack.c.l.b16 %v6040
        %v6523 = vunpack.c.l.b16 %v6041
        %v6524 = vunpack.c.l.b16 %v6042
        %v6525 = vunpack.c.l.b16 %v6043
        %v6526 = vunpack.c.l.b16 %v6044
        %v6527 = vunpack.c.l.b16 %v6045
        %v6528 = vunpack.c.l.b16 %v6046
        %v6529 = vunpack.c.l.b16 %v6047
        %v6530 = vpack.c.b16 %v6515, %v6514
        %v6531 = vpack.c.b16 %v6517, %v6516
        %v6532 = vpack.c.b16 %v6519, %v6518
        %v6533 = vpack.c.b16 %v6521, %v6520
        %v6534 = vpack.c.b16 %v6523, %v6522
        %v6535 = vpack.c.b16 %v6525, %v6524
        %v6536 = vpack.c.b16 %v6527, %v6526
        %v6537 = vpack.c.b16 %v6529, %v6528
        %v6539 = vsel %vm1217, %v5952, 0
        %v6542 = vsel %vm1217, %v5953, 0
        %v6545 = vsel %vm1217, %v5954, 0
        %v6548 = vsel %vm1217, %v5955, 0
        %v6551 = vsel %vm1217, %v5956, 0
        %v6554 = vsel %vm1217, %v5957, 0
        %v6557 = vsel %vm1217, %v5958, 0
        %v6560 = vsel %vm1217, %v5959, 0
        %v6563 = vsel %vm1217, %v6530, 0
        %v6566 = vsel %vm1217, %v6531, 0
        %v6569 = vsel %vm1217, %v6532, 0
        %v6572 = vsel %vm1217, %v6533, 0
        %v6575 = vsel %vm1217, %v6534, 0
        %v6578 = vsel %vm1217, %v6535, 0
        %v6581 = vsel %vm1217, %v6536, 0
        %v6584 = vsel %vm1217, %v6537, 0
        %6586 = vmatprep.subr.bf16.mxu0 0
        %6587 = vmatpush1.bf16.xpose.msra.mxu0 %v6563
        %6588 = vmatprep.subr.bf16.mxu0 0
        %6589 = vmatpush1.bf16.xpose.msra.mxu0 %v6566
        %6590 = vmatprep.subr.bf16.mxu0 0
        %6591 = vmatpush1.bf16.xpose.msra.mxu0 %v6569
        %6592 = vmatprep.subr.bf16.mxu0 0
        %6593 = vmatpush1.bf16.xpose.msra.mxu0 %v6572
        %6594 = vmatprep.subr.bf16.mxu0 0
        %6595 = vmatpush1.bf16.xpose.msra.mxu0 %v6575
        %6596 = vmatprep.subr.bf16.mxu0 0
        %6597 = vmatpush1.bf16.xpose.msra.mxu0 %v6578
        %6598 = vmatprep.subr.bf16.mxu0 0
        %6599 = vmatpush1.bf16.xpose.msra.mxu0 %v6581
        %6600 = vmatprep.subr.bf16.mxu0 0
        %6601 = vmatpush1.bf16.xpose.msra.mxu0 %v6584
        %6602 = vmatprep.subr.bf16.mxu0 0
        %6603 = vmatpush1.bf16.xpose.msra.mxu0 0
        %6604 = vmatprep.subr.bf16.mxu0 0
        %6605 = vmatpush1.bf16.xpose.msra.mxu0 0
        %6606 = vmatprep.subr.bf16.mxu0 0
        %6607 = vmatpush1.bf16.xpose.msra.mxu0 0
        %6608 = vmatprep.subr.bf16.mxu0 0
        %6609 = vmatpush1.bf16.xpose.msra.mxu0 0
        %6610 = vmatprep.subr.bf16.mxu0 0
        %6611 = vmatpush1.bf16.xpose.msra.mxu0 0
        %6612 = vmatprep.subr.bf16.mxu0 0
        %6613 = vmatpush1.bf16.xpose.msra.mxu0 0
        %6614 = vmatprep.subr.bf16.mxu0 0
        %6615 = vmatpush1.bf16.xpose.msra.mxu0 0
        %6616 = vmatprep.subr.bf16.mxu0 0
        %6617 = vmatpush1.bf16.xpose.msra.mxu0 0
        %6618 = vmatprep.mubr.bf16.mxu0 0
        %6619 = vmatmul.mubr.bf16.gmra.mrb[0].mxu0 %v6539
        %v6620 = vpop.f32.mrb[0].mxu0
        %v6621 = vadd.f32 0.0, %v6620
        %v6622 = vpop.f32.mrb[0].mxu0
        %v6623 = vpop.f32.mrb[0].mxu0
        %v6624 = vadd.f32 0.0, %v6623
        %v6625 = vpop.f32.mrb[0].mxu0
        %6626 = vmatprep.mubr.bf16.mxu0 0
        %6627 = vmatmul.mubr.bf16.gmra.mrb[0].mxu0 %v6542
        %v6628 = vpop.f32.mrb[0].mxu0
        %v6629 = vadd.f32 0.0, %v6628
        %v6630 = vpop.f32.mrb[0].mxu0
        %v6631 = vpop.f32.mrb[0].mxu0
        %v6632 = vadd.f32 0.0, %v6631
        %v6633 = vpop.f32.mrb[0].mxu0
        %6634 = vmatprep.mubr.bf16.mxu0 0
        %6635 = vmatmul.mubr.bf16.gmra.mrb[0].mxu0 %v6545
        %v6636 = vpop.f32.mrb[0].mxu0
        %v6637 = vadd.f32 0.0, %v6636
        %v6638 = vpop.f32.mrb[0].mxu0
        %v6639 = vpop.f32.mrb[0].mxu0
        %v6640 = vadd.f32 0.0, %v6639
        %v6641 = vpop.f32.mrb[0].mxu0
        %6642 = vmatprep.mubr.bf16.mxu0 0
        %6643 = vmatmul.mubr.bf16.gmra.mrb[0].mxu0 %v6548
        %v6644 = vpop.f32.mrb[0].mxu0
        %v6645 = vadd.f32 0.0, %v6644
        %v6646 = vpop.f32.mrb[0].mxu0
        %v6647 = vpop.f32.mrb[0].mxu0
        %v6648 = vadd.f32 0.0, %v6647
        %v6649 = vpop.f32.mrb[0].mxu0
        %6650 = vmatprep.mubr.bf16.mxu0 0
        %6651 = vmatmul.mubr.bf16.gmra.mrb[0].mxu0 %v6551
        %v6652 = vpop.f32.mrb[0].mxu0
        %v6653 = vadd.f32 0.0, %v6652
        %v6654 = vpop.f32.mrb[0].mxu0
        %v6655 = vpop.f32.mrb[0].mxu0
        %v6656 = vadd.f32 0.0, %v6655
        %v6657 = vpop.f32.mrb[0].mxu0
        %6658 = vmatprep.mubr.bf16.mxu0 0
        %6659 = vmatmul.mubr.bf16.gmra.mrb[0].mxu0 %v6554
        %v6660 = vpop.f32.mrb[0].mxu0
        %v6661 = vadd.f32 0.0, %v6660
        %v6662 = vpop.f32.mrb[0].mxu0
        %v6663 = vpop.f32.mrb[0].mxu0
        %v6664 = vadd.f32 0.0, %v6663
        %v6665 = vpop.f32.mrb[0].mxu0
        %6666 = vmatprep.mubr.bf16.mxu0 0
        %6667 = vmatmul.mubr.bf16.gmra.mrb[0].mxu0 %v6557
        %v6668 = vpop.f32.mrb[0].mxu0
        %v6669 = vadd.f32 0.0, %v6668
        %v6670 = vpop.f32.mrb[0].mxu0
        %v6671 = vpop.f32.mrb[0].mxu0
        %v6672 = vadd.f32 0.0, %v6671
        %v6673 = vpop.f32.mrb[0].mxu0
        %6674 = vmatprep.mubr.bf16.mxu0 0
        %6675 = vmatmul.mubr.bf16.gmra.mrb[0].mxu0 %v6560
        %v6676 = vpop.f32.mrb[0].mxu0
        %v6677 = vadd.f32 0.0, %v6676
        %v6678 = vpop.f32.mrb[0].mxu0
        %v6679 = vpop.f32.mrb[0].mxu0
        %v6680 = vadd.f32 0.0, %v6679
        %v6681 = vpop.f32.mrb[0].mxu0
        %6682 = vdwg.mxu0
        %v6699 = vunpack.c.l.b16 %v6048
        %v6700 = vunpack.c.l.b16 %v6049
        %v6701 = vunpack.c.l.b16 %v6050
        %v6702 = vunpack.c.l.b16 %v6051
        %v6703 = vunpack.c.l.b16 %v6052
        %v6704 = vunpack.c.l.b16 %v6053
        %v6705 = vunpack.c.l.b16 %v6054
        %v6706 = vunpack.c.l.b16 %v6055
        %v6707 = vunpack.c.l.b16 %v6056
        %v6708 = vunpack.c.l.b16 %v6057
        %v6709 = vunpack.c.l.b16 %v6058
        %v6710 = vunpack.c.l.b16 %v6059
        %v6711 = vunpack.c.l.b16 %v6060
        %v6712 = vunpack.c.l.b16 %v6061
        %v6713 = vunpack.c.l.b16 %v6062
        %v6714 = vunpack.c.l.b16 %v6063
        %v6715 = vpack.c.b16 %v6700, %v6699
        %v6716 = vpack.c.b16 %v6702, %v6701
        %v6717 = vpack.c.b16 %v6704, %v6703
        %v6718 = vpack.c.b16 %v6706, %v6705
        %v6719 = vpack.c.b16 %v6708, %v6707
        %v6720 = vpack.c.b16 %v6710, %v6709
        %v6721 = vpack.c.b16 %v6712, %v6711
        %v6722 = vpack.c.b16 %v6714, %v6713
        %v6724 = vsel %vm1217, %v5960, 0
        %v6727 = vsel %vm1217, %v5961, 0
        %v6730 = vsel %vm1217, %v5962, 0
        %v6733 = vsel %vm1217, %v5963, 0
        %v6736 = vsel %vm1217, %v5964, 0
        %v6739 = vsel %vm1217, %v5965, 0
        %v6742 = vsel %vm1217, %v5966, 0
        %v6745 = vsel %vm1217, %v5967, 0
        %v6748 = vsel %vm1217, %v6715, 0
        %v6751 = vsel %vm1217, %v6716, 0
        %v6754 = vsel %vm1217, %v6717, 0
        %v6757 = vsel %vm1217, %v6718, 0
        %v6760 = vsel %vm1217, %v6719, 0
        %v6763 = vsel %vm1217, %v6720, 0
        %v6766 = vsel %vm1217, %v6721, 0
        %v6769 = vsel %vm1217, %v6722, 0
        %6771 = vmatprep.subr.bf16.mxu0 0
        %6772 = vmatpush1.bf16.xpose.msra.mxu0 %v6748
        %6773 = vmatprep.subr.bf16.mxu0 0
        %6774 = vmatpush1.bf16.xpose.msra.mxu0 %v6751
        %6775 = vmatprep.subr.bf16.mxu0 0
        %6776 = vmatpush1.bf16.xpose.msra.mxu0 %v6754
        %6777 = vmatprep.subr.bf16.mxu0 0
        %6778 = vmatpush1.bf16.xpose.msra.mxu0 %v6757
        %6779 = vmatprep.subr.bf16.mxu0 0
        %6780 = vmatpush1.bf16.xpose.msra.mxu0 %v6760
        %6781 = vmatprep.subr.bf16.mxu0 0
        %6782 = vmatpush1.bf16.xpose.msra.mxu0 %v6763
        %6783 = vmatprep.subr.bf16.mxu0 0
        %6784 = vmatpush1.bf16.xpose.msra.mxu0 %v6766
        %6785 = vmatprep.subr.bf16.mxu0 0
        %6786 = vmatpush1.bf16.xpose.msra.mxu0 %v6769
        %6787 = vmatprep.subr.bf16.mxu0 0
        %6788 = vmatpush1.bf16.xpose.msra.mxu0 0
        %6789 = vmatprep.subr.bf16.mxu0 0
        %6790 = vmatpush1.bf16.xpose.msra.mxu0 0
        %6791 = vmatprep.subr.bf16.mxu0 0
        %6792 = vmatpush1.bf16.xpose.msra.mxu0 0
        %6793 = vmatprep.subr.bf16.mxu0 0
        %6794 = vmatpush1.bf16.xpose.msra.mxu0 0
        %6795 = vmatprep.subr.bf16.mxu0 0
        %6796 = vmatpush1.bf16.xpose.msra.mxu0 0
        %6797 = vmatprep.subr.bf16.mxu0 0
        %6798 = vmatpush1.bf16.xpose.msra.mxu0 0
        %6799 = vmatprep.subr.bf16.mxu0 0
        %6800 = vmatpush1.bf16.xpose.msra.mxu0 0
        %6801 = vmatprep.subr.bf16.mxu0 0
        %6802 = vmatpush1.bf16.xpose.msra.mxu0 0
        %6803 = vmatprep.mubr.bf16.mxu0 0
        %6804 = vmatmul.mubr.bf16.gmra.mrb[0].mxu0 %v6724
        %v6805 = vpop.f32.mrb[0].mxu0
        %v6806 = vadd.f32 0.0, %v6805
        %v6807 = vpop.f32.mrb[0].mxu0
        %v6808 = vpop.f32.mrb[0].mxu0
        %v6809 = vadd.f32 0.0, %v6808
        %v6810 = vpop.f32.mrb[0].mxu0
        %6811 = vmatprep.mubr.bf16.mxu0 0
        %6812 = vmatmul.mubr.bf16.gmra.mrb[0].mxu0 %v6727
        %v6813 = vpop.f32.mrb[0].mxu0
        %v6814 = vadd.f32 0.0, %v6813
        %v6815 = vpop.f32.mrb[0].mxu0
        %v6816 = vpop.f32.mrb[0].mxu0
        %v6817 = vadd.f32 0.0, %v6816
        %v6818 = vpop.f32.mrb[0].mxu0
        %6819 = vmatprep.mubr.bf16.mxu0 0
        %6820 = vmatmul.mubr.bf16.gmra.mrb[0].mxu0 %v6730
        %v6821 = vpop.f32.mrb[0].mxu0
        %v6822 = vadd.f32 0.0, %v6821
        %v6823 = vpop.f32.mrb[0].mxu0
        %v6824 = vpop.f32.mrb[0].mxu0
        %v6825 = vadd.f32 0.0, %v6824
        %v6826 = vpop.f32.mrb[0].mxu0
        %6827 = vmatprep.mubr.bf16.mxu0 0
        %6828 = vmatmul.mubr.bf16.gmra.mrb[0].mxu0 %v6733
        %v6829 = vpop.f32.mrb[0].mxu0
        %v6830 = vadd.f32 0.0, %v6829
        %v6831 = vpop.f32.mrb[0].mxu0
        %v6832 = vpop.f32.mrb[0].mxu0
        %v6833 = vadd.f32 0.0, %v6832
        %v6834 = vpop.f32.mrb[0].mxu0
        %6835 = vmatprep.mubr.bf16.mxu0 0
        %6836 = vmatmul.mubr.bf16.gmra.mrb[0].mxu0 %v6736
        %v6837 = vpop.f32.mrb[0].mxu0
        %v6838 = vadd.f32 0.0, %v6837
        %v6839 = vpop.f32.mrb[0].mxu0
        %v6840 = vpop.f32.mrb[0].mxu0
        %v6841 = vadd.f32 0.0, %v6840
        %v6842 = vpop.f32.mrb[0].mxu0
        %6843 = vmatprep.mubr.bf16.mxu0 0
        %6844 = vmatmul.mubr.bf16.gmra.mrb[0].mxu0 %v6739
        %v6845 = vpop.f32.mrb[0].mxu0
        %v6846 = vadd.f32 0.0, %v6845
        %v6847 = vpop.f32.mrb[0].mxu0
        %v6848 = vpop.f32.mrb[0].mxu0
        %v6849 = vadd.f32 0.0, %v6848
        %v6850 = vpop.f32.mrb[0].mxu0
        %6851 = vmatprep.mubr.bf16.mxu0 0
        %6852 = vmatmul.mubr.bf16.gmra.mrb[0].mxu0 %v6742
        %v6853 = vpop.f32.mrb[0].mxu0
        %v6854 = vadd.f32 0.0, %v6853
        %v6855 = vpop.f32.mrb[0].mxu0
        %v6856 = vpop.f32.mrb[0].mxu0
        %v6857 = vadd.f32 0.0, %v6856
        %v6858 = vpop.f32.mrb[0].mxu0
        %6859 = vmatprep.mubr.bf16.mxu0 0
        %6860 = vmatmul.mubr.bf16.gmra.mrb[0].mxu0 %v6745
        %v6861 = vpop.f32.mrb[0].mxu0
        %v6862 = vadd.f32 0.0, %v6861
        %v6863 = vpop.f32.mrb[0].mxu0
        %v6864 = vpop.f32.mrb[0].mxu0
        %v6865 = vadd.f32 0.0, %v6864
        %v6866 = vpop.f32.mrb[0].mxu0
        %6867 = vdwg.mxu0
        %v6884 = vunpack.c.l.b16 %v6064
        %v6885 = vunpack.c.l.b16 %v6065
        %v6886 = vunpack.c.l.b16 %v6066
        %v6887 = vunpack.c.l.b16 %v6067
        %v6888 = vunpack.c.l.b16 %v6068
        %v6889 = vunpack.c.l.b16 %v6069
        %v6890 = vunpack.c.l.b16 %v6070
        %v6891 = vunpack.c.l.b16 %v6071
        %v6892 = vunpack.c.l.b16 %v6072
        %v6893 = vunpack.c.l.b16 %v6073
        %v6894 = vunpack.c.l.b16 %v6074
        %v6895 = vunpack.c.l.b16 %v6075
        %v6896 = vunpack.c.l.b16 %v6076
        %v6897 = vunpack.c.l.b16 %v6077
        %v6898 = vunpack.c.l.b16 %v6078
        %v6899 = vunpack.c.l.b16 %v6079
        %v6900 = vpack.c.b16 %v6885, %v6884
        %v6901 = vpack.c.b16 %v6887, %v6886
        %v6902 = vpack.c.b16 %v6889, %v6888
        %v6903 = vpack.c.b16 %v6891, %v6890
        %v6904 = vpack.c.b16 %v6893, %v6892
        %v6905 = vpack.c.b16 %v6895, %v6894
        %v6906 = vpack.c.b16 %v6897, %v6896
        %v6907 = vpack.c.b16 %v6899, %v6898
        %v6909 = vsel %vm1217, %v5968, 0
        %v6912 = vsel %vm1217, %v5969, 0
        %v6915 = vsel %vm1217, %v5970, 0
        %v6918 = vsel %vm1217, %v5971, 0
        %v6921 = vsel %vm1217, %v5972, 0
        %v6924 = vsel %vm1217, %v5973, 0
        %v6927 = vsel %vm1217, %v5974, 0
        %v6930 = vsel %vm1217, %v5975, 0
        %v6933 = vsel %vm1217, %v6900, 0
        %v6936 = vsel %vm1217, %v6901, 0
        %v6939 = vsel %vm1217, %v6902, 0
        %v6942 = vsel %vm1217, %v6903, 0
        %v6945 = vsel %vm1217, %v6904, 0
        %v6948 = vsel %vm1217, %v6905, 0
        %v6951 = vsel %vm1217, %v6906, 0
        %v6954 = vsel %vm1217, %v6907, 0
        %6956 = vmatprep.subr.bf16.mxu0 0
        %6957 = vmatpush1.bf16.xpose.msra.mxu0 %v6933
        %6958 = vmatprep.subr.bf16.mxu0 0
        %6959 = vmatpush1.bf16.xpose.msra.mxu0 %v6936
        %6960 = vmatprep.subr.bf16.mxu0 0
        %6961 = vmatpush1.bf16.xpose.msra.mxu0 %v6939
        %6962 = vmatprep.subr.bf16.mxu0 0
        %6963 = vmatpush1.bf16.xpose.msra.mxu0 %v6942
        %6964 = vmatprep.subr.bf16.mxu0 0
        %6965 = vmatpush1.bf16.xpose.msra.mxu0 %v6945
        %6966 = vmatprep.subr.bf16.mxu0 0
        %6967 = vmatpush1.bf16.xpose.msra.mxu0 %v6948
        %6968 = vmatprep.subr.bf16.mxu0 0
        %6969 = vmatpush1.bf16.xpose.msra.mxu0 %v6951
        %6970 = vmatprep.subr.bf16.mxu0 0
        %6971 = vmatpush1.bf16.xpose.msra.mxu0 %v6954
        %6972 = vmatprep.subr.bf16.mxu0 0
        %6973 = vmatpush1.bf16.xpose.msra.mxu0 0
        %6974 = vmatprep.subr.bf16.mxu0 0
        %6975 = vmatpush1.bf16.xpose.msra.mxu0 0
        %6976 = vmatprep.subr.bf16.mxu0 0
        %6977 = vmatpush1.bf16.xpose.msra.mxu0 0
        %6978 = vmatprep.subr.bf16.mxu0 0
        %6979 = vmatpush1.bf16.xpose.msra.mxu0 0
        %6980 = vmatprep.subr.bf16.mxu0 0
        %6981 = vmatpush1.bf16.xpose.msra.mxu0 0
        %6982 = vmatprep.subr.bf16.mxu0 0
        %6983 = vmatpush1.bf16.xpose.msra.mxu0 0
        %6984 = vmatprep.subr.bf16.mxu0 0
        %6985 = vmatpush1.bf16.xpose.msra.mxu0 0
        %6986 = vmatprep.subr.bf16.mxu0 0
        %6987 = vmatpush1.bf16.xpose.msra.mxu0 0
        %6988 = vmatprep.mubr.bf16.mxu0 0
        %6989 = vmatmul.mubr.bf16.gmra.mrb[0].mxu0 %v6909
        %v6990 = vpop.f32.mrb[0].mxu0
        %v6991 = vadd.f32 0.0, %v6990
        %v6992 = vpop.f32.mrb[0].mxu0
        %v6993 = vpop.f32.mrb[0].mxu0
        %v6994 = vadd.f32 0.0, %v6993
        %v6995 = vpop.f32.mrb[0].mxu0
        %6996 = vmatprep.mubr.bf16.mxu0 0
        %6997 = vmatmul.mubr.bf16.gmra.mrb[0].mxu0 %v6912
        %v6998 = vpop.f32.mrb[0].mxu0
        %v6999 = vadd.f32 0.0, %v6998
        %v7000 = vpop.f32.mrb[0].mxu0
        %v7001 = vpop.f32.mrb[0].mxu0
        %v7002 = vadd.f32 0.0, %v7001
        %v7003 = vpop.f32.mrb[0].mxu0
        %7004 = vmatprep.mubr.bf16.mxu0 0
        %7005 = vmatmul.mubr.bf16.gmra.mrb[0].mxu0 %v6915
        %v7006 = vpop.f32.mrb[0].mxu0
        %v7007 = vadd.f32 0.0, %v7006
        %v7008 = vpop.f32.mrb[0].mxu0
        %v7009 = vpop.f32.mrb[0].mxu0
        %v7010 = vadd.f32 0.0, %v7009
        %v7011 = vpop.f32.mrb[0].mxu0
        %7012 = vmatprep.mubr.bf16.mxu0 0
        %7013 = vmatmul.mubr.bf16.gmra.mrb[0].mxu0 %v6918
        %v7014 = vpop.f32.mrb[0].mxu0
        %v7015 = vadd.f32 0.0, %v7014
        %v7016 = vpop.f32.mrb[0].mxu0
        %v7017 = vpop.f32.mrb[0].mxu0
        %v7018 = vadd.f32 0.0, %v7017
        %v7019 = vpop.f32.mrb[0].mxu0
        %7020 = vmatprep.mubr.bf16.mxu0 0
        %7021 = vmatmul.mubr.bf16.gmra.mrb[0].mxu0 %v6921
        %v7022 = vpop.f32.mrb[0].mxu0
        %v7023 = vadd.f32 0.0, %v7022
        %v7024 = vpop.f32.mrb[0].mxu0
        %v7025 = vpop.f32.mrb[0].mxu0
        %v7026 = vadd.f32 0.0, %v7025
        %v7027 = vpop.f32.mrb[0].mxu0
        %7028 = vmatprep.mubr.bf16.mxu0 0
        %7029 = vmatmul.mubr.bf16.gmra.mrb[0].mxu0 %v6924
        %v7030 = vpop.f32.mrb[0].mxu0
        %v7031 = vadd.f32 0.0, %v7030
        %v7032 = vpop.f32.mrb[0].mxu0
        %v7033 = vpop.f32.mrb[0].mxu0
        %v7034 = vadd.f32 0.0, %v7033
        %v7035 = vpop.f32.mrb[0].mxu0
        %7036 = vmatprep.mubr.bf16.mxu0 0
        %7037 = vmatmul.mubr.bf16.gmra.mrb[0].mxu0 %v6927
        %v7038 = vpop.f32.mrb[0].mxu0
        %v7039 = vadd.f32 0.0, %v7038
        %v7040 = vpop.f32.mrb[0].mxu0
        %v7041 = vpop.f32.mrb[0].mxu0
        %v7042 = vadd.f32 0.0, %v7041
        %v7043 = vpop.f32.mrb[0].mxu0
        %7044 = vmatprep.mubr.bf16.mxu0 0
        %7045 = vmatmul.mubr.bf16.gmra.mrb[0].mxu0 %v6930
        %v7046 = vpop.f32.mrb[0].mxu0
        %v7047 = vadd.f32 0.0, %v7046
        %v7048 = vpop.f32.mrb[0].mxu0
        %v7049 = vpop.f32.mrb[0].mxu0
        %v7050 = vadd.f32 0.0, %v7049
        %v7051 = vpop.f32.mrb[0].mxu0
        %7052 = vdwg.mxu0
        %v7069 = vunpack.c.l.b16 %v6080
        %v7070 = vunpack.c.l.b16 %v6081
        %v7071 = vunpack.c.l.b16 %v6082
        %v7072 = vunpack.c.l.b16 %v6083
        %v7073 = vunpack.c.l.b16 %v6084
        %v7074 = vunpack.c.l.b16 %v6085
        %v7075 = vunpack.c.l.b16 %v6086
        %v7076 = vunpack.c.l.b16 %v6087
        %v7077 = vunpack.c.l.b16 %v6088
        %v7078 = vunpack.c.l.b16 %v6089
        %v7079 = vunpack.c.l.b16 %v6090
        %v7080 = vunpack.c.l.b16 %v6091
        %v7081 = vunpack.c.l.b16 %v6092
        %v7082 = vunpack.c.l.b16 %v6093
        %v7083 = vunpack.c.l.b16 %v6094
        %v7084 = vunpack.c.l.b16 %v6095
        %v7085 = vpack.c.b16 %v7070, %v7069
        %v7086 = vpack.c.b16 %v7072, %v7071
        %v7087 = vpack.c.b16 %v7074, %v7073
        %v7088 = vpack.c.b16 %v7076, %v7075
        %v7089 = vpack.c.b16 %v7078, %v7077
        %v7090 = vpack.c.b16 %v7080, %v7079
        %v7091 = vpack.c.b16 %v7082, %v7081
        %v7092 = vpack.c.b16 %v7084, %v7083
        %v7094 = vsel %vm1217, %v5976, 0
        %v7097 = vsel %vm1217, %v5977, 0
        %v7100 = vsel %vm1217, %v5978, 0
        %v7103 = vsel %vm1217, %v5979, 0
        %v7106 = vsel %vm1217, %v5980, 0
        %v7109 = vsel %vm1217, %v5981, 0
        %v7112 = vsel %vm1217, %v5982, 0
        %v7115 = vsel %vm1217, %v5983, 0
        %v7118 = vsel %vm1217, %v7085, 0
        %v7121 = vsel %vm1217, %v7086, 0
        %v7124 = vsel %vm1217, %v7087, 0
        %v7127 = vsel %vm1217, %v7088, 0
        %v7130 = vsel %vm1217, %v7089, 0
        %v7133 = vsel %vm1217, %v7090, 0
        %v7136 = vsel %vm1217, %v7091, 0
        %v7139 = vsel %vm1217, %v7092, 0
        %7141 = vmatprep.subr.bf16.mxu0 0
        %7142 = vmatpush1.bf16.xpose.msra.mxu0 %v7118
        %7143 = vmatprep.subr.bf16.mxu0 0
        %7144 = vmatpush1.bf16.xpose.msra.mxu0 %v7121
        %7145 = vmatprep.subr.bf16.mxu0 0
        %7146 = vmatpush1.bf16.xpose.msra.mxu0 %v7124
        %7147 = vmatprep.subr.bf16.mxu0 0
        %7148 = vmatpush1.bf16.xpose.msra.mxu0 %v7127
        %7149 = vmatprep.subr.bf16.mxu0 0
        %7150 = vmatpush1.bf16.xpose.msra.mxu0 %v7130
        %7151 = vmatprep.subr.bf16.mxu0 0
        %7152 = vmatpush1.bf16.xpose.msra.mxu0 %v7133
        %7153 = vmatprep.subr.bf16.mxu0 0
        %7154 = vmatpush1.bf16.xpose.msra.mxu0 %v7136
        %7155 = vmatprep.subr.bf16.mxu0 0
        %7156 = vmatpush1.bf16.xpose.msra.mxu0 %v7139
        %7157 = vmatprep.subr.bf16.mxu0 0
        %7158 = vmatpush1.bf16.xpose.msra.mxu0 0
        %7159 = vmatprep.subr.bf16.mxu0 0
        %7160 = vmatpush1.bf16.xpose.msra.mxu0 0
        %7161 = vmatprep.subr.bf16.mxu0 0
        %7162 = vmatpush1.bf16.xpose.msra.mxu0 0
        %7163 = vmatprep.subr.bf16.mxu0 0
        %7164 = vmatpush1.bf16.xpose.msra.mxu0 0
        %7165 = vmatprep.subr.bf16.mxu0 0
        %7166 = vmatpush1.bf16.xpose.msra.mxu0 0
        %7167 = vmatprep.subr.bf16.mxu0 0
        %7168 = vmatpush1.bf16.xpose.msra.mxu0 0
        %7169 = vmatprep.subr.bf16.mxu0 0
        %7170 = vmatpush1.bf16.xpose.msra.mxu0 0
        %7171 = vmatprep.subr.bf16.mxu0 0
        %7172 = vmatpush1.bf16.xpose.msra.mxu0 0
        %7173 = vmatprep.mubr.bf16.mxu0 0
        %7174 = vmatmul.mubr.bf16.gmra.mrb[0].mxu0 %v7094
        %v7175 = vpop.f32.mrb[0].mxu0
        %v7176 = vadd.f32 0.0, %v7175
        %v7177 = vpop.f32.mrb[0].mxu0
        %v7178 = vpop.f32.mrb[0].mxu0
        %v7179 = vadd.f32 0.0, %v7178
        %v7180 = vpop.f32.mrb[0].mxu0
        %7181 = vmatprep.mubr.bf16.mxu0 0
        %7182 = vmatmul.mubr.bf16.gmra.mrb[0].mxu0 %v7097
        %v7183 = vpop.f32.mrb[0].mxu0
        %v7184 = vadd.f32 0.0, %v7183
        %v7185 = vpop.f32.mrb[0].mxu0
        %v7186 = vpop.f32.mrb[0].mxu0
        %v7187 = vadd.f32 0.0, %v7186
        %v7188 = vpop.f32.mrb[0].mxu0
        %7189 = vmatprep.mubr.bf16.mxu0 0
        %7190 = vmatmul.mubr.bf16.gmra.mrb[0].mxu0 %v7100
        %v7191 = vpop.f32.mrb[0].mxu0
        %v7192 = vadd.f32 0.0, %v7191
        %v7193 = vpop.f32.mrb[0].mxu0
        %v7194 = vpop.f32.mrb[0].mxu0
        %v7195 = vadd.f32 0.0, %v7194
        %v7196 = vpop.f32.mrb[0].mxu0
        %7197 = vmatprep.mubr.bf16.mxu0 0
        %7198 = vmatmul.mubr.bf16.gmra.mrb[0].mxu0 %v7103
        %v7199 = vpop.f32.mrb[0].mxu0
        %v7200 = vadd.f32 0.0, %v7199
        %v7201 = vpop.f32.mrb[0].mxu0
        %v7202 = vpop.f32.mrb[0].mxu0
        %v7203 = vadd.f32 0.0, %v7202
        %v7204 = vpop.f32.mrb[0].mxu0
        %7205 = vmatprep.mubr.bf16.mxu0 0
        %7206 = vmatmul.mubr.bf16.gmra.mrb[0].mxu0 %v7106
        %v7207 = vpop.f32.mrb[0].mxu0
        %v7208 = vadd.f32 0.0, %v7207
        %v7209 = vpop.f32.mrb[0].mxu0
        %v7210 = vpop.f32.mrb[0].mxu0
        %v7211 = vadd.f32 0.0, %v7210
        %v7212 = vpop.f32.mrb[0].mxu0
        %7213 = vmatprep.mubr.bf16.mxu0 0
        %7214 = vmatmul.mubr.bf16.gmra.mrb[0].mxu0 %v7109
        %v7215 = vpop.f32.mrb[0].mxu0
        %v7216 = vadd.f32 0.0, %v7215
        %v7217 = vpop.f32.mrb[0].mxu0
        %v7218 = vpop.f32.mrb[0].mxu0
        %v7219 = vadd.f32 0.0, %v7218
        %v7220 = vpop.f32.mrb[0].mxu0
        %7221 = vmatprep.mubr.bf16.mxu0 0
        %7222 = vmatmul.mubr.bf16.gmra.mrb[0].mxu0 %v7112
        %v7223 = vpop.f32.mrb[0].mxu0
        %v7224 = vadd.f32 0.0, %v7223
        %v7225 = vpop.f32.mrb[0].mxu0
        %v7226 = vpop.f32.mrb[0].mxu0
        %v7227 = vadd.f32 0.0, %v7226
        %v7228 = vpop.f32.mrb[0].mxu0
        %7229 = vmatprep.mubr.bf16.mxu0 0
        %7230 = vmatmul.mubr.bf16.gmra.mrb[0].mxu0 %v7115
        %v7231 = vpop.f32.mrb[0].mxu0
        %v7232 = vadd.f32 0.0, %v7231
        %v7233 = vpop.f32.mrb[0].mxu0
        %v7234 = vpop.f32.mrb[0].mxu0
        %v7235 = vadd.f32 0.0, %v7234
        %v7236 = vpop.f32.mrb[0].mxu0
        %7237 = vdwg.mxu0
        %v7254 = vunpack.c.l.b16 %v6096
        %v7255 = vunpack.c.l.b16 %v6097
        %v7256 = vunpack.c.l.b16 %v6098
        %v7257 = vunpack.c.l.b16 %v6099
        %v7258 = vunpack.c.l.b16 %v6100
        %v7259 = vunpack.c.l.b16 %v6101
        %v7260 = vunpack.c.l.b16 %v6102
        %v7261 = vunpack.c.l.b16 %v6103
        %v7262 = vunpack.c.l.b16 %v6104
        %v7263 = vunpack.c.l.b16 %v6105
        %v7264 = vunpack.c.l.b16 %v6106
        %v7265 = vunpack.c.l.b16 %v6107
        %v7266 = vunpack.c.l.b16 %v6108
        %v7267 = vunpack.c.l.b16 %v6109
        %v7268 = vunpack.c.l.b16 %v6110
        %v7269 = vunpack.c.l.b16 %v6111
        %v7270 = vpack.c.b16 %v7255, %v7254
        %v7271 = vpack.c.b16 %v7257, %v7256
        %v7272 = vpack.c.b16 %v7259, %v7258
        %v7273 = vpack.c.b16 %v7261, %v7260
        %v7274 = vpack.c.b16 %v7263, %v7262
        %v7275 = vpack.c.b16 %v7265, %v7264
        %v7276 = vpack.c.b16 %v7267, %v7266
        %v7277 = vpack.c.b16 %v7269, %v7268
        %v7279 = vsel %vm1217, %v5984, 0
        %v7282 = vsel %vm1217, %v5985, 0
        %v7285 = vsel %vm1217, %v5986, 0
        %v7288 = vsel %vm1217, %v5987, 0
        %v7291 = vsel %vm1217, %v5988, 0
        %v7294 = vsel %vm1217, %v5989, 0
        %v7297 = vsel %vm1217, %v5990, 0
        %v7300 = vsel %vm1217, %v5991, 0
        %v7303 = vsel %vm1217, %v7270, 0
        %v7306 = vsel %vm1217, %v7271, 0
        %v7309 = vsel %vm1217, %v7272, 0
        %v7312 = vsel %vm1217, %v7273, 0
        %v7315 = vsel %vm1217, %v7274, 0
        %v7318 = vsel %vm1217, %v7275, 0
        %v7321 = vsel %vm1217, %v7276, 0
        %v7324 = vsel %vm1217, %v7277, 0
        %7326 = vmatprep.subr.bf16.mxu0 0
        %7327 = vmatpush1.bf16.xpose.msra.mxu0 %v7303
        %7328 = vmatprep.subr.bf16.mxu0 0
        %7329 = vmatpush1.bf16.xpose.msra.mxu0 %v7306
        %7330 = vmatprep.subr.bf16.mxu0 0
        %7331 = vmatpush1.bf16.xpose.msra.mxu0 %v7309
        %7332 = vmatprep.subr.bf16.mxu0 0
        %7333 = vmatpush1.bf16.xpose.msra.mxu0 %v7312
        %7334 = vmatprep.subr.bf16.mxu0 0
        %7335 = vmatpush1.bf16.xpose.msra.mxu0 %v7315
        %7336 = vmatprep.subr.bf16.mxu0 0
        %7337 = vmatpush1.bf16.xpose.msra.mxu0 %v7318
        %7338 = vmatprep.subr.bf16.mxu0 0
        %7339 = vmatpush1.bf16.xpose.msra.mxu0 %v7321
        %7340 = vmatprep.subr.bf16.mxu0 0
        %7341 = vmatpush1.bf16.xpose.msra.mxu0 %v7324
        %7342 = vmatprep.subr.bf16.mxu0 0
        %7343 = vmatpush1.bf16.xpose.msra.mxu0 0
        %7344 = vmatprep.subr.bf16.mxu0 0
        %7345 = vmatpush1.bf16.xpose.msra.mxu0 0
        %7346 = vmatprep.subr.bf16.mxu0 0
        %7347 = vmatpush1.bf16.xpose.msra.mxu0 0
        %7348 = vmatprep.subr.bf16.mxu0 0
        %7349 = vmatpush1.bf16.xpose.msra.mxu0 0
        %7350 = vmatprep.subr.bf16.mxu0 0
        %7351 = vmatpush1.bf16.xpose.msra.mxu0 0
        %7352 = vmatprep.subr.bf16.mxu0 0
        %7353 = vmatpush1.bf16.xpose.msra.mxu0 0
        %7354 = vmatprep.subr.bf16.mxu0 0
        %7355 = vmatpush1.bf16.xpose.msra.mxu0 0
        %7356 = vmatprep.subr.bf16.mxu0 0
        %7357 = vmatpush1.bf16.xpose.msra.mxu0 0
        %7358 = vmatprep.mubr.bf16.mxu0 0
        %7359 = vmatmul.mubr.bf16.gmra.mrb[0].mxu0 %v7279
        %v7360 = vpop.f32.mrb[0].mxu0
        %v7361 = vadd.f32 0.0, %v7360
        %v7362 = vpop.f32.mrb[0].mxu0
        %v7363 = vpop.f32.mrb[0].mxu0
        %v7364 = vadd.f32 0.0, %v7363
        %v7365 = vpop.f32.mrb[0].mxu0
        %7366 = vmatprep.mubr.bf16.mxu0 0
        %7367 = vmatmul.mubr.bf16.gmra.mrb[0].mxu0 %v7282
        %v7368 = vpop.f32.mrb[0].mxu0
        %v7369 = vadd.f32 0.0, %v7368
        %v7370 = vpop.f32.mrb[0].mxu0
        %v7371 = vpop.f32.mrb[0].mxu0
        %v7372 = vadd.f32 0.0, %v7371
        %v7373 = vpop.f32.mrb[0].mxu0
        %7374 = vmatprep.mubr.bf16.mxu0 0
        %7375 = vmatmul.mubr.bf16.gmra.mrb[0].mxu0 %v7285
        %v7376 = vpop.f32.mrb[0].mxu0
        %v7377 = vadd.f32 0.0, %v7376
        %v7378 = vpop.f32.mrb[0].mxu0
        %v7379 = vpop.f32.mrb[0].mxu0
        %v7380 = vadd.f32 0.0, %v7379
        %v7381 = vpop.f32.mrb[0].mxu0
        %7382 = vmatprep.mubr.bf16.mxu0 0
        %7383 = vmatmul.mubr.bf16.gmra.mrb[0].mxu0 %v7288
        %v7384 = vpop.f32.mrb[0].mxu0
        %v7385 = vadd.f32 0.0, %v7384
        %v7386 = vpop.f32.mrb[0].mxu0
        %v7387 = vpop.f32.mrb[0].mxu0
        %v7388 = vadd.f32 0.0, %v7387
        %v7389 = vpop.f32.mrb[0].mxu0
        %7390 = vmatprep.mubr.bf16.mxu0 0
        %7391 = vmatmul.mubr.bf16.gmra.mrb[0].mxu0 %v7291
        %v7392 = vpop.f32.mrb[0].mxu0
        %v7393 = vadd.f32 0.0, %v7392
        %v7394 = vpop.f32.mrb[0].mxu0
        %v7395 = vpop.f32.mrb[0].mxu0
        %v7396 = vadd.f32 0.0, %v7395
        %v7397 = vpop.f32.mrb[0].mxu0
        %7398 = vmatprep.mubr.bf16.mxu0 0
        %7399 = vmatmul.mubr.bf16.gmra.mrb[0].mxu0 %v7294
        %v7400 = vpop.f32.mrb[0].mxu0
        %v7401 = vadd.f32 0.0, %v7400
        %v7402 = vpop.f32.mrb[0].mxu0
        %v7403 = vpop.f32.mrb[0].mxu0
        %v7404 = vadd.f32 0.0, %v7403
        %v7405 = vpop.f32.mrb[0].mxu0
        %7406 = vmatprep.mubr.bf16.mxu0 0
        %7407 = vmatmul.mubr.bf16.gmra.mrb[0].mxu0 %v7297
        %v7408 = vpop.f32.mrb[0].mxu0
        %v7409 = vadd.f32 0.0, %v7408
        %v7410 = vpop.f32.mrb[0].mxu0
        %v7411 = vpop.f32.mrb[0].mxu0
        %v7412 = vadd.f32 0.0, %v7411
        %v7413 = vpop.f32.mrb[0].mxu0
        %7414 = vmatprep.mubr.bf16.mxu0 0
        %7415 = vmatmul.mubr.bf16.gmra.mrb[0].mxu0 %v7300
        %v7416 = vpop.f32.mrb[0].mxu0
        %v7417 = vadd.f32 0.0, %v7416
        %v7418 = vpop.f32.mrb[0].mxu0
        %v7419 = vpop.f32.mrb[0].mxu0
        %v7420 = vadd.f32 0.0, %v7419
        %v7421 = vpop.f32.mrb[0].mxu0
        %7422 = vdwg.mxu0
        %v7439 = vunpack.c.l.b16 %v6112
        %v7440 = vunpack.c.l.b16 %v6113
        %v7441 = vunpack.c.l.b16 %v6114
        %v7442 = vunpack.c.l.b16 %v6115
        %v7443 = vunpack.c.l.b16 %v6116
        %v7444 = vunpack.c.l.b16 %v6117
        %v7445 = vunpack.c.l.b16 %v6118
        %v7446 = vunpack.c.l.b16 %v6119
        %v7447 = vunpack.c.l.b16 %v6120
        %v7448 = vunpack.c.l.b16 %v6121
        %v7449 = vunpack.c.l.b16 %v6122
        %v7450 = vunpack.c.l.b16 %v6123
        %v7451 = vunpack.c.l.b16 %v6124
        %v7452 = vunpack.c.l.b16 %v6125
        %v7453 = vunpack.c.l.b16 %v6126
        %v7454 = vunpack.c.l.b16 %v6127
        %v7455 = vpack.c.b16 %v7440, %v7439
        %v7456 = vpack.c.b16 %v7442, %v7441
        %v7457 = vpack.c.b16 %v7444, %v7443
        %v7458 = vpack.c.b16 %v7446, %v7445
        %v7459 = vpack.c.b16 %v7448, %v7447
        %v7460 = vpack.c.b16 %v7450, %v7449
        %v7461 = vpack.c.b16 %v7452, %v7451
        %v7462 = vpack.c.b16 %v7454, %v7453
        %v7464 = vsel %vm1217, %v5992, 0
        %v7467 = vsel %vm1217, %v5993, 0
        %v7470 = vsel %vm1217, %v5994, 0
        %v7473 = vsel %vm1217, %v5995, 0
        %v7476 = vsel %vm1217, %v5996, 0
        %v7479 = vsel %vm1217, %v5997, 0
        %v7482 = vsel %vm1217, %v5998, 0
        %v7485 = vsel %vm1217, %v5999, 0
        %v7488 = vsel %vm1217, %v7455, 0
        %v7491 = vsel %vm1217, %v7456, 0
        %v7494 = vsel %vm1217, %v7457, 0
        %v7497 = vsel %vm1217, %v7458, 0
        %v7500 = vsel %vm1217, %v7459, 0
        %v7503 = vsel %vm1217, %v7460, 0
        %v7506 = vsel %vm1217, %v7461, 0
        %v7509 = vsel %vm1217, %v7462, 0
        %7511 = vmatprep.subr.bf16.mxu0 0
        %7512 = vmatpush1.bf16.xpose.msra.mxu0 %v7488
        %7513 = vmatprep.subr.bf16.mxu0 0
        %7514 = vmatpush1.bf16.xpose.msra.mxu0 %v7491
        %7515 = vmatprep.subr.bf16.mxu0 0
        %7516 = vmatpush1.bf16.xpose.msra.mxu0 %v7494
        %7517 = vmatprep.subr.bf16.mxu0 0
        %7518 = vmatpush1.bf16.xpose.msra.mxu0 %v7497
        %7519 = vmatprep.subr.bf16.mxu0 0
        %7520 = vmatpush1.bf16.xpose.msra.mxu0 %v7500
        %7521 = vmatprep.subr.bf16.mxu0 0
        %7522 = vmatpush1.bf16.xpose.msra.mxu0 %v7503
        %7523 = vmatprep.subr.bf16.mxu0 0
        %7524 = vmatpush1.bf16.xpose.msra.mxu0 %v7506
        %7525 = vmatprep.subr.bf16.mxu0 0
        %7526 = vmatpush1.bf16.xpose.msra.mxu0 %v7509
        %7527 = vmatprep.subr.bf16.mxu0 0
        %7528 = vmatpush1.bf16.xpose.msra.mxu0 0
        %7529 = vmatprep.subr.bf16.mxu0 0
        %7530 = vmatpush1.bf16.xpose.msra.mxu0 0
        %7531 = vmatprep.subr.bf16.mxu0 0
        %7532 = vmatpush1.bf16.xpose.msra.mxu0 0
        %7533 = vmatprep.subr.bf16.mxu0 0
        %7534 = vmatpush1.bf16.xpose.msra.mxu0 0
        %7535 = vmatprep.subr.bf16.mxu0 0
        %7536 = vmatpush1.bf16.xpose.msra.mxu0 0
        %7537 = vmatprep.subr.bf16.mxu0 0
        %7538 = vmatpush1.bf16.xpose.msra.mxu0 0
        %7539 = vmatprep.subr.bf16.mxu0 0
        %7540 = vmatpush1.bf16.xpose.msra.mxu0 0
        %7541 = vmatprep.subr.bf16.mxu0 0
        %7542 = vmatpush1.bf16.xpose.msra.mxu0 0
        %7543 = vmatprep.mubr.bf16.mxu0 0
        %7544 = vmatmul.mubr.bf16.gmra.mrb[0].mxu0 %v7464
        %v7545 = vpop.f32.mrb[0].mxu0
        %v7546 = vadd.f32 0.0, %v7545
        %v7547 = vpop.f32.mrb[0].mxu0
        %v7548 = vpop.f32.mrb[0].mxu0
        %v7549 = vadd.f32 0.0, %v7548
        %v7550 = vpop.f32.mrb[0].mxu0
        %7551 = vmatprep.mubr.bf16.mxu0 0
        %7552 = vmatmul.mubr.bf16.gmra.mrb[0].mxu0 %v7467
        %v7553 = vpop.f32.mrb[0].mxu0
        %v7554 = vadd.f32 0.0, %v7553
        %v7555 = vpop.f32.mrb[0].mxu0
        %v7556 = vpop.f32.mrb[0].mxu0
        %v7557 = vadd.f32 0.0, %v7556
        %v7558 = vpop.f32.mrb[0].mxu0
        %7559 = vmatprep.mubr.bf16.mxu0 0
        %7560 = vmatmul.mubr.bf16.gmra.mrb[0].mxu0 %v7470
        %v7561 = vpop.f32.mrb[0].mxu0
        %v7562 = vadd.f32 0.0, %v7561
        %v7563 = vpop.f32.mrb[0].mxu0
        %v7564 = vpop.f32.mrb[0].mxu0
        %v7565 = vadd.f32 0.0, %v7564
        %v7566 = vpop.f32.mrb[0].mxu0
        %7567 = vmatprep.mubr.bf16.mxu0 0
        %7568 = vmatmul.mubr.bf16.gmra.mrb[0].mxu0 %v7473
        %v7569 = vpop.f32.mrb[0].mxu0
        %v7570 = vadd.f32 0.0, %v7569
        %v7571 = vpop.f32.mrb[0].mxu0
        %v7572 = vpop.f32.mrb[0].mxu0
        %v7573 = vadd.f32 0.0, %v7572
        %v7574 = vpop.f32.mrb[0].mxu0
        %7575 = vmatprep.mubr.bf16.mxu0 0
        %7576 = vmatmul.mubr.bf16.gmra.mrb[0].mxu0 %v7476
        %v7577 = vpop.f32.mrb[0].mxu0
        %v7578 = vadd.f32 0.0, %v7577
        %v7579 = vpop.f32.mrb[0].mxu0
        %v7580 = vpop.f32.mrb[0].mxu0
        %v7581 = vadd.f32 0.0, %v7580
        %v7582 = vpop.f32.mrb[0].mxu0
        %7583 = vmatprep.mubr.bf16.mxu0 0
        %7584 = vmatmul.mubr.bf16.gmra.mrb[0].mxu0 %v7479
        %v7585 = vpop.f32.mrb[0].mxu0
        %v7586 = vadd.f32 0.0, %v7585
        %v7587 = vpop.f32.mrb[0].mxu0
        %v7588 = vpop.f32.mrb[0].mxu0
        %v7589 = vadd.f32 0.0, %v7588
        %v7590 = vpop.f32.mrb[0].mxu0
        %7591 = vmatprep.mubr.bf16.mxu0 0
        %7592 = vmatmul.mubr.bf16.gmra.mrb[0].mxu0 %v7482
        %v7593 = vpop.f32.mrb[0].mxu0
        %v7594 = vadd.f32 0.0, %v7593
        %v7595 = vpop.f32.mrb[0].mxu0
        %v7596 = vpop.f32.mrb[0].mxu0
        %v7597 = vadd.f32 0.0, %v7596
        %v7598 = vpop.f32.mrb[0].mxu0
        %7599 = vmatprep.mubr.bf16.mxu0 0
        %7600 = vmatmul.mubr.bf16.gmra.mrb[0].mxu0 %v7485
        %v7601 = vpop.f32.mrb[0].mxu0
        %v7602 = vadd.f32 0.0, %v7601
        %v7603 = vpop.f32.mrb[0].mxu0
        %v7604 = vpop.f32.mrb[0].mxu0
        %v7605 = vadd.f32 0.0, %v7604
        %v7606 = vpop.f32.mrb[0].mxu0
        %7607 = vdwg.mxu0
        %v7608 = vadd.f32 %v6251, %v6436
        %v7609 = vadd.f32 %v7608, %v6621
        %v7610 = vadd.f32 %v7609, %v6806
        %v7611 = vadd.f32 %v7610, %v6991
        %v7612 = vadd.f32 %v7611, %v7176
        %v7613 = vadd.f32 %v7612, %v7361
        %v7614 = vadd.f32 %v7613, %v7546
        %v7615 = vadd.f32 %v6254, %v6439
        %v7616 = vadd.f32 %v7615, %v6624
        %v7617 = vadd.f32 %v7616, %v6809
        %v7618 = vadd.f32 %v7617, %v6994
        %v7619 = vadd.f32 %v7618, %v7179
        %v7620 = vadd.f32 %v7619, %v7364
        %v7621 = vadd.f32 %v7620, %v7549
        %v7622 = vadd.f32 %v6259, %v6444
        %v7623 = vadd.f32 %v7622, %v6629
        %v7624 = vadd.f32 %v7623, %v6814
        %v7625 = vadd.f32 %v7624, %v6999
        %v7626 = vadd.f32 %v7625, %v7184
        %v7627 = vadd.f32 %v7626, %v7369
        %v7628 = vadd.f32 %v7627, %v7554
        %v7629 = vadd.f32 %v6262, %v6447
        %v7630 = vadd.f32 %v7629, %v6632
        %v7631 = vadd.f32 %v7630, %v6817
        %v7632 = vadd.f32 %v7631, %v7002
        %v7633 = vadd.f32 %v7632, %v7187
        %v7634 = vadd.f32 %v7633, %v7372
        %v7635 = vadd.f32 %v7634, %v7557
        %v7636 = vadd.f32 %v6267, %v6452
        %v7637 = vadd.f32 %v7636, %v6637
        %v7638 = vadd.f32 %v7637, %v6822
        %v7639 = vadd.f32 %v7638, %v7007
        %v7640 = vadd.f32 %v7639, %v7192
        %v7641 = vadd.f32 %v7640, %v7377
        %v7642 = vadd.f32 %v7641, %v7562
        %v7643 = vadd.f32 %v6270, %v6455
        %v7644 = vadd.f32 %v7643, %v6640
        %v7645 = vadd.f32 %v7644, %v6825
        %v7646 = vadd.f32 %v7645, %v7010
        %v7647 = vadd.f32 %v7646, %v7195
        %v7648 = vadd.f32 %v7647, %v7380
        %v7649 = vadd.f32 %v7648, %v7565
        %v7650 = vadd.f32 %v6275, %v6460
        %v7651 = vadd.f32 %v7650, %v6645
        %v7652 = vadd.f32 %v7651, %v6830
        %v7653 = vadd.f32 %v7652, %v7015
        %v7654 = vadd.f32 %v7653, %v7200
        %v7655 = vadd.f32 %v7654, %v7385
        %v7656 = vadd.f32 %v7655, %v7570
        %v7657 = vadd.f32 %v6278, %v6463
        %v7658 = vadd.f32 %v7657, %v6648
        %v7659 = vadd.f32 %v7658, %v6833
        %v7660 = vadd.f32 %v7659, %v7018
        %v7661 = vadd.f32 %v7660, %v7203
        %v7662 = vadd.f32 %v7661, %v7388
        %v7663 = vadd.f32 %v7662, %v7573
        %v7664 = vadd.f32 %v6283, %v6468
        %v7665 = vadd.f32 %v7664, %v6653
        %v7666 = vadd.f32 %v7665, %v6838
        %v7667 = vadd.f32 %v7666, %v7023
        %v7668 = vadd.f32 %v7667, %v7208
        %v7669 = vadd.f32 %v7668, %v7393
        %v7670 = vadd.f32 %v7669, %v7578
        %v7671 = vadd.f32 %v6286, %v6471
        %v7672 = vadd.f32 %v7671, %v6656
        %v7673 = vadd.f32 %v7672, %v6841
        %v7674 = vadd.f32 %v7673, %v7026
        %v7675 = vadd.f32 %v7674, %v7211
        %v7676 = vadd.f32 %v7675, %v7396
        %v7677 = vadd.f32 %v7676, %v7581
        %v7678 = vadd.f32 %v6291, %v6476
        %v7679 = vadd.f32 %v7678, %v6661
        %v7680 = vadd.f32 %v7679, %v6846
        %v7681 = vadd.f32 %v7680, %v7031
        %v7682 = vadd.f32 %v7681, %v7216
        %v7683 = vadd.f32 %v7682, %v7401
        %v7684 = vadd.f32 %v7683, %v7586
        %v7685 = vadd.f32 %v6294, %v6479
        %v7686 = vadd.f32 %v7685, %v6664
        %v7687 = vadd.f32 %v7686, %v6849
        %v7688 = vadd.f32 %v7687, %v7034
        %v7689 = vadd.f32 %v7688, %v7219
        %v7690 = vadd.f32 %v7689, %v7404
        %v7691 = vadd.f32 %v7690, %v7589
        %v7692 = vadd.f32 %v6299, %v6484
        %v7693 = vadd.f32 %v7692, %v6669
        %v7694 = vadd.f32 %v7693, %v6854
        %v7695 = vadd.f32 %v7694, %v7039
        %v7696 = vadd.f32 %v7695, %v7224
        %v7697 = vadd.f32 %v7696, %v7409
        %v7698 = vadd.f32 %v7697, %v7594
        %v7699 = vadd.f32 %v6302, %v6487
        %v7700 = vadd.f32 %v7699, %v6672
        %v7701 = vadd.f32 %v7700, %v6857
        %v7702 = vadd.f32 %v7701, %v7042
        %v7703 = vadd.f32 %v7702, %v7227
        %v7704 = vadd.f32 %v7703, %v7412
        %v7705 = vadd.f32 %v7704, %v7597
        %v7706 = vadd.f32 %v6307, %v6492
        %v7707 = vadd.f32 %v7706, %v6677
        %v7708 = vadd.f32 %v7707, %v6862
        %v7709 = vadd.f32 %v7708, %v7047
        %v7710 = vadd.f32 %v7709, %v7232
        %v7711 = vadd.f32 %v7710, %v7417
        %v7712 = vadd.f32 %v7711, %v7602
        %v7713 = vadd.f32 %v6310, %v6495
        %v7714 = vadd.f32 %v7713, %v6680
        %v7715 = vadd.f32 %v7714, %v6865
        %v7716 = vadd.f32 %v7715, %v7050
        %v7717 = vadd.f32 %v7716, %v7235
        %v7718 = vadd.f32 %v7717, %v7420
        %v7719 = vadd.f32 %v7718, %v7605
        %v7720 = vadd.f32 %v7614, %v372
        %v7721 = vadd.f32 %v7621, %v373
        %v7722 = vadd.f32 %v7628, %v374
        %v7723 = vadd.f32 %v7635, %v375
        %v7724 = vadd.f32 %v7642, %v376
        %v7725 = vadd.f32 %v7649, %v377
        %v7726 = vadd.f32 %v7656, %v378
        %v7727 = vadd.f32 %v7663, %v379
        %v7728 = vadd.f32 %v7670, %v380
        %v7729 = vadd.f32 %v7677, %v381
        %v7730 = vadd.f32 %v7684, %v382
        %v7731 = vadd.f32 %v7691, %v383
        %v7732 = vadd.f32 %v7698, %v384
        %v7733 = vadd.f32 %v7705, %v385
        %v7734 = vadd.f32 %v7712, %v386
        %v7735 = vadd.f32 %v7719, %v387
        %7736 = vadd.xlane.f32.xlu0 %v7720
        %v7737 = vpop.xlane.xlu0 %7736
        %7738 = vadd.xlane.f32.xlu0 %v7721
        %v7739 = vpop.xlane.xlu0 %7738
        %7740 = vadd.xlane.f32.xlu0 %v7722
        %v7741 = vpop.xlane.xlu0 %7740
        %7742 = vadd.xlane.f32.xlu0 %v7723
        %v7743 = vpop.xlane.xlu0 %7742
        %7744 = vadd.xlane.f32.xlu0 %v7724
        %v7745 = vpop.xlane.xlu0 %7744
        %7746 = vadd.xlane.f32.xlu0 %v7725
        %v7747 = vpop.xlane.xlu0 %7746
        %7748 = vadd.xlane.f32.xlu0 %v7726
        %v7749 = vpop.xlane.xlu0 %7748
        %7750 = vadd.xlane.f32.xlu0 %v7727
        %v7751 = vpop.xlane.xlu0 %7750
        %7752 = vadd.xlane.f32.xlu0 %v7728
        %v7753 = vpop.xlane.xlu0 %7752
        %7754 = vadd.xlane.f32.xlu0 %v7729
        %v7755 = vpop.xlane.xlu0 %7754
        %7756 = vadd.xlane.f32.xlu0 %v7730
        %v7757 = vpop.xlane.xlu0 %7756
        %7758 = vadd.xlane.f32.xlu0 %v7731
        %v7759 = vpop.xlane.xlu0 %7758
        %7760 = vadd.xlane.f32.xlu0 %v7732
        %v7761 = vpop.xlane.xlu0 %7760
        %7762 = vadd.xlane.f32.xlu0 %v7733
        %v7763 = vpop.xlane.xlu0 %7762
        %7764 = vadd.xlane.f32.xlu0 %v7734
        %v7765 = vpop.xlane.xlu0 %7764
        %7766 = vadd.xlane.f32.xlu0 %v7735
        %v7767 = vpop.xlane.xlu0 %7766
        %v7768 = vrcp.pop 128.0
        %v7769 = vmul.f32 %v7737, %v7768
        %v7770 = vmul.f32 %v7739, %v7768
        %v7771 = vmul.f32 %v7741, %v7768
        %v7772 = vmul.f32 %v7743, %v7768
        %v7773 = vmul.f32 %v7745, %v7768
        %v7774 = vmul.f32 %v7747, %v7768
        %v7775 = vmul.f32 %v7749, %v7768
        %v7776 = vmul.f32 %v7751, %v7768
        %v7777 = vmul.f32 %v7753, %v7768
        %v7778 = vmul.f32 %v7755, %v7768
        %v7779 = vmul.f32 %v7757, %v7768
        %v7780 = vmul.f32 %v7759, %v7768
        %v7781 = vmul.f32 %v7761, %v7768
        %v7782 = vmul.f32 %v7763, %v7768
        %v7783 = vmul.f32 %v7765, %v7768
        %v7784 = vmul.f32 %v7767, %v7768
        %v7785 = vsub.f32 %v7720, %v7769
        %v7786 = vsub.f32 %v7721, %v7770
        %v7787 = vsub.f32 %v7722, %v7771
        %v7788 = vsub.f32 %v7723, %v7772
        %v7789 = vsub.f32 %v7724, %v7773
        %v7790 = vsub.f32 %v7725, %v7774
        %v7791 = vsub.f32 %v7726, %v7775
        %v7792 = vsub.f32 %v7727, %v7776
        %v7793 = vsub.f32 %v7728, %v7777
        %v7794 = vsub.f32 %v7729, %v7778
        %v7795 = vsub.f32 %v7730, %v7779
        %v7796 = vsub.f32 %v7731, %v7780
        %v7797 = vsub.f32 %v7732, %v7781
        %v7798 = vsub.f32 %v7733, %v7782
        %v7799 = vsub.f32 %v7734, %v7783
        %v7800 = vsub.f32 %v7735, %v7784
        %v7801 = vmul.f32 %v7785, %v7785
        %v7802 = vmul.f32 %v7786, %v7786
        %v7803 = vmul.f32 %v7787, %v7787
        %v7804 = vmul.f32 %v7788, %v7788
        %v7805 = vmul.f32 %v7789, %v7789
        %v7806 = vmul.f32 %v7790, %v7790
        %v7807 = vmul.f32 %v7791, %v7791
        %v7808 = vmul.f32 %v7792, %v7792
        %v7809 = vmul.f32 %v7793, %v7793
        %v7810 = vmul.f32 %v7794, %v7794
        %v7811 = vmul.f32 %v7795, %v7795
        %v7812 = vmul.f32 %v7796, %v7796
        %v7813 = vmul.f32 %v7797, %v7797
        %v7814 = vmul.f32 %v7798, %v7798
        %v7815 = vmul.f32 %v7799, %v7799
        %v7816 = vmul.f32 %v7800, %v7800
        %7817 = vadd.xlane.f32.xlu0 %v7801
        %v7818 = vpop.xlane.xlu0 %7817
        %7819 = vadd.xlane.f32.xlu0 %v7802
        %v7820 = vpop.xlane.xlu0 %7819
        %7821 = vadd.xlane.f32.xlu0 %v7803
        %v7822 = vpop.xlane.xlu0 %7821
        %7823 = vadd.xlane.f32.xlu0 %v7804
        %v7824 = vpop.xlane.xlu0 %7823
        %7825 = vadd.xlane.f32.xlu0 %v7805
        %v7826 = vpop.xlane.xlu0 %7825
        %7827 = vadd.xlane.f32.xlu0 %v7806
        %v7828 = vpop.xlane.xlu0 %7827
        %7829 = vadd.xlane.f32.xlu0 %v7807
        %v7830 = vpop.xlane.xlu0 %7829
        %7831 = vadd.xlane.f32.xlu0 %v7808
        %v7832 = vpop.xlane.xlu0 %7831
        %7833 = vadd.xlane.f32.xlu0 %v7809
        %v7834 = vpop.xlane.xlu0 %7833
        %7835 = vadd.xlane.f32.xlu0 %v7810
        %v7836 = vpop.xlane.xlu0 %7835
        %7837 = vadd.xlane.f32.xlu0 %v7811
        %v7838 = vpop.xlane.xlu0 %7837
        %7839 = vadd.xlane.f32.xlu0 %v7812
        %v7840 = vpop.xlane.xlu0 %7839
        %7841 = vadd.xlane.f32.xlu0 %v7813
        %v7842 = vpop.xlane.xlu0 %7841
        %7843 = vadd.xlane.f32.xlu0 %v7814
        %v7844 = vpop.xlane.xlu0 %7843
        %7845 = vadd.xlane.f32.xlu0 %v7815
        %v7846 = vpop.xlane.xlu0 %7845
        %7847 = vadd.xlane.f32.xlu0 %v7816
        %v7848 = vpop.xlane.xlu0 %7847
        %v7849 = vmul.f32 %v7818, %v7768
        %v7850 = vmul.f32 %v7820, %v7768
        %v7851 = vmul.f32 %v7822, %v7768
        %v7852 = vmul.f32 %v7824, %v7768
        %v7853 = vmul.f32 %v7826, %v7768
        %v7854 = vmul.f32 %v7828, %v7768
        %v7855 = vmul.f32 %v7830, %v7768
        %v7856 = vmul.f32 %v7832, %v7768
        %v7857 = vmul.f32 %v7834, %v7768
        %v7858 = vmul.f32 %v7836, %v7768
        %v7859 = vmul.f32 %v7838, %v7768
        %v7860 = vmul.f32 %v7840, %v7768
        %v7861 = vmul.f32 %v7842, %v7768
        %v7862 = vmul.f32 %v7844, %v7768
        %v7863 = vmul.f32 %v7846, %v7768
        %v7864 = vmul.f32 %v7848, %v7768
        %v7865 = vadd.f32 %v7849, 1e-05
        %v7866 = vadd.f32 %v7850, 1e-05
        %v7867 = vadd.f32 %v7851, 1e-05
        %v7868 = vadd.f32 %v7852, 1e-05
        %v7869 = vadd.f32 %v7853, 1e-05
        %v7870 = vadd.f32 %v7854, 1e-05
        %v7871 = vadd.f32 %v7855, 1e-05
        %v7872 = vadd.f32 %v7856, 1e-05
        %v7873 = vadd.f32 %v7857, 1e-05
        %v7874 = vadd.f32 %v7858, 1e-05
        %v7875 = vadd.f32 %v7859, 1e-05
        %v7876 = vadd.f32 %v7860, 1e-05
        %v7877 = vadd.f32 %v7861, 1e-05
        %v7878 = vadd.f32 %v7862, 1e-05
        %v7879 = vadd.f32 %v7863, 1e-05
        %v7880 = vadd.f32 %v7864, 1e-05
        %v7881 = vrsqrt.pop %v7865
        %v7882 = vrsqrt.pop %v7866
        %v7883 = vrsqrt.pop %v7867
        %v7884 = vrsqrt.pop %v7868
        %v7885 = vrsqrt.pop %v7869
        %v7886 = vrsqrt.pop %v7870
        %v7887 = vrsqrt.pop %v7871
        %v7888 = vrsqrt.pop %v7872
        %v7889 = vrsqrt.pop %v7873
        %v7890 = vrsqrt.pop %v7874
        %v7891 = vrsqrt.pop %v7875
        %v7892 = vrsqrt.pop %v7876
        %v7893 = vrsqrt.pop %v7877
        %v7894 = vrsqrt.pop %v7878
        %v7895 = vrsqrt.pop %v7879
        %v7896 = vrsqrt.pop %v7880
        %v7897 = vmul.f32 %v7785, %v7881
        %v7898 = vmul.f32 %v7786, %v7882
        %v7899 = vmul.f32 %v7787, %v7883
        %v7900 = vmul.f32 %v7788, %v7884
        %v7901 = vmul.f32 %v7789, %v7885
        %v7902 = vmul.f32 %v7790, %v7886
        %v7903 = vmul.f32 %v7791, %v7887
        %v7904 = vmul.f32 %v7792, %v7888
        %v7905 = vmul.f32 %v7793, %v7889
        %v7906 = vmul.f32 %v7794, %v7890
        %v7907 = vmul.f32 %v7795, %v7891
        %v7908 = vmul.f32 %v7796, %v7892
        %v7909 = vmul.f32 %v7797, %v7893
        %v7910 = vmul.f32 %v7798, %v7894
        %v7911 = vmul.f32 %v7799, %v7895
        %v7912 = vmul.f32 %v7800, %v7896
        %v7913 = vld [vmem:[%s5] sm:$0x1]
        %v7915 = vlaneseq
        %v7916 = vshrl.u32 %v7915, 7
        %v7917 = vsub.s32 0, %v7916
        %v7918 = vrot.slane %v7913, %v7917
        %v7920 = vmul.f32 %v7897, %v7918
        %v7921 = vmul.f32 %v7898, %v7918
        %v7922 = vmul.f32 %v7899, %v7918
        %v7923 = vmul.f32 %v7900, %v7918
        %v7924 = vmul.f32 %v7901, %v7918
        %v7925 = vmul.f32 %v7902, %v7918
        %v7926 = vmul.f32 %v7903, %v7918
        %v7927 = vmul.f32 %v7904, %v7918
        %v7928 = vmul.f32 %v7905, %v7918
        %v7929 = vmul.f32 %v7906, %v7918
        %v7930 = vmul.f32 %v7907, %v7918
        %v7931 = vmul.f32 %v7908, %v7918
        %v7932 = vmul.f32 %v7909, %v7918
        %v7933 = vmul.f32 %v7910, %v7918
        %v7934 = vmul.f32 %v7911, %v7918
        %v7935 = vmul.f32 %v7912, %v7918
        %v7936 = vld [vmem:[%s6] sm:$0x1]
        %v7938 = vlaneseq
        %v7939 = vshrl.u32 %v7938, 7
        %v7940 = vsub.s32 0, %v7939
        %v7941 = vrot.slane %v7936, %v7940
        %v7943 = vadd.f32 %v7920, %v7941
        %v7944 = vadd.f32 %v7921, %v7941
        %v7945 = vadd.f32 %v7922, %v7941
        %v7946 = vadd.f32 %v7923, %v7941
        %v7947 = vadd.f32 %v7924, %v7941
        %v7948 = vadd.f32 %v7925, %v7941
        %v7949 = vadd.f32 %v7926, %v7941
        %v7950 = vadd.f32 %v7927, %v7941
        %v7951 = vadd.f32 %v7928, %v7941
        %v7952 = vadd.f32 %v7929, %v7941
        %v7953 = vadd.f32 %v7930, %v7941
        %v7954 = vadd.f32 %v7931, %v7941
        %v7955 = vadd.f32 %v7932, %v7941
        %v7956 = vadd.f32 %v7933, %v7941
        %v7957 = vadd.f32 %v7934, %v7941
        %v7958 = vadd.f32 %v7935, %v7941
        %7959 = vst [vmem:[%s370] sm:$0xff] %v7943
        %7960 = vst [vmem:[%s370 + $0x8] sm:$0xff] %v7944
        %7961 = vst [vmem:[%s370 + $0x10] sm:$0xff] %v7945
        %7962 = vst [vmem:[%s370 + $0x18] sm:$0xff] %v7946
        %7963 = vst [vmem:[%s370 + $0x20] sm:$0xff] %v7947
        %7964 = vst [vmem:[%s370 + $0x28] sm:$0xff] %v7948
        %7965 = vst [vmem:[%s370 + $0x30] sm:$0xff] %v7949
        %7966 = vst [vmem:[%s370 + $0x38] sm:$0xff] %v7950
        %7967 = vst [vmem:[%s370 + $0x40] sm:$0xff] %v7951
        %7968 = vst [vmem:[%s370 + $0x48] sm:$0xff] %v7952
        %7969 = vst [vmem:[%s370 + $0x50] sm:$0xff] %v7953
        %7970 = vst [vmem:[%s370 + $0x58] sm:$0xff] %v7954
        %7971 = vst [vmem:[%s370 + $0x60] sm:$0xff] %v7955
        %7972 = vst [vmem:[%s370 + $0x68] sm:$0xff] %v7956
        %7973 = vst [vmem:[%s370 + $0x70] sm:$0xff] %v7957
        %7974 = vst [vmem:[%s370 + $0x78] sm:$0xff] %v7958
        %s7975 = sand.u32 %s181, 1
        %s7976 = scalar_lea.sflag [#allocation4], %s7975
        %s7977 = sand.u32 %s181, 1
        %s7978 = smul.addr %s7977, 128
        %s7979 = scalar_lea.vmem [#allocation3], %s7978
        // Predicated region
        $region87: #{tpu_custom_call.1} parent=81 // pred_check
          %p7980 = pneg %p191
        $region88: #{tpu_custom_call.1} parent=81 // pred_check_branch
          %7982 = sbr.rel (%p7980) target = $region90
        $region89: #{tpu_custom_call.1} parent=81 // pred_region
          %s7984 = ssub.s32 2048, 2048
          %7985 = vsyncadd %s7976, %s7984
          %s7986 = smul.addr %s21, 128
          %s7987 = scalar_lea.hbm %s7, %s7986
          %s7988 = sshll.u32 %s7979, 4
          %s7989 = int_to_ptr.vmem [resolvable:$true] %s7988
          %7994 = dma.vmem_to_hbm [thread:$0]  %s7989, 2048, %s7987, %s7976, 128, 256, 8
        $region90: #{tpu_custom_call.1} parent=81 // pred_fallthru
          _
      $region82: #{tpu_custom_call.1} parent=5 // pred_fallthru
        _
      %p7995 = scmp.le.s32.totalorder 2, %s16
      // Predicated region
      $region91: #{tpu_custom_call.1} parent=5 // pred_check
        %p7996 = pneg %p7995
      $region92: #{tpu_custom_call.1} parent=5 // pred_check_branch
        %7998 = sbr.rel (%p7996) target = $region94
      $region93: #{tpu_custom_call.1} parent=5 // pred_region
        %s7999 = ssub.s32 %s16, 2
        // Predicated region
        $region95: #{tpu_custom_call.1} parent=93 // pred_check
          %p8000 = pneg %p197
        $region96: #{tpu_custom_call.1} parent=93 // pred_check_branch
          %8002 = sbr.rel (%p8000) target = $region98
        $region97: #{tpu_custom_call.1} parent=93 // pred_region
          %s8003 = sand.u32 %s182, 1
          %s8004 = scalar_lea.sflag [#allocation4], %s8003
          %s8005 = sand.u32 %s182, 1
          %s8006 = smul.addr %s8005, 128
          %s8007 = scalar_lea.vmem [#allocation3], %s8006
          %8008 = dma.done %s8004, 2048
        $region98: #{tpu_custom_call.1} parent=93 // pred_fallthru
          _
      $region94: #{tpu_custom_call.1} parent=5 // pred_fallthru
        _
    $region6: #{tpu_custom_call.1} parent=1 // loop_footer
      %s20 = sadd.s32 1, %s16
    $region7: #{tpu_custom_call.1} parent=1 // loop_footer_branch
      %15 = sbr.rel target = $region3
    $region8: #{tpu_custom_call.1} parent=1 // loop_exit
      _
    %8009 = vsyncpa [#allocation4], 1
    %s8010 = scalar_lea.sflag [#allocation4], 1
    %8011 = vsyncpa %s8010, 1

</llo_original>
